<compile_context>
chip_gen: v7x
topology: tpu7x:2x2x1
jax: 0.10.0
libtpu: 0.0.40
codegen_flags: <defaults>
</compile_context>

<pallas_src>
import math

import jax
import jax.numpy as jnp
from jax.experimental import pallas as pl
from jax.experimental.pallas import tpu as pltpu

# ---------------- configuration (small, consistent with the module) ---------
BATCH = 2
SEQ = 8
HIDDEN = 32
NUM_HEADS = 4
MLP_DIM = 64
HEAD_DIM = HIDDEN // NUM_HEADS
BS = BATCH * SEQ
LN_EPS = 1e-6          # norm_layer = partial(nn.LayerNorm, eps=1e-6)
NEG_INF = -1e30        # large finite negative (no inf-inf pitfalls in softmax)
HI = jax.lax.Precision.HIGHEST

# ---------------- constants-slab row layout (one (24, 128) f32 array) -------
ROW_LN1_G = 0
ROW_LN1_B = 1
ROW_B_IN = 2          # fused QKV bias, 3*HIDDEN = 96 valid lanes
ROW_BO = 3
ROW_LN2_G = 4
ROW_LN2_B = 5
ROW_B1 = 6            # MLP_DIM = 64 valid lanes
ROW_B2 = 7
ROW_BIAS = 8          # rows 8..23: (BS, BS) block-diagonal attention bias
SLAB_ROWS = ROW_BIAS + BS   # 24
SLAB_LANES = 128


# ----------------------------- kernel helpers --------------------------------
def _layernorm(v, gamma, beta):
    mu = jnp.mean(v, axis=-1, keepdims=True)
    var = jnp.mean((v - mu) ** 2, axis=-1, keepdims=True)   # biased var (PyTorch)
    return (v - mu) * jax.lax.rsqrt(var + LN_EPS) * gamma + beta


def _gelu_exact(x):
    # nn.GELU() default is the exact (erf) formulation.
    return 0.5 * x * (1.0 + jax.lax.erf(x * (1.0 / math.sqrt(2.0))))


# ----------------------------- kernel -----------------------------------------
def encoder_block_kernel(x_ref, slab_ref, w_in_ref, wo_ref, w1_ref, w2_ref, out_ref):
    x = x_ref[...].astype(jnp.float32)                        # (B*S, H)
    slab = slab_ref[...]                                      # (24, 128)

    ln1_g = slab[ROW_LN1_G:ROW_LN1_G + 1, :HIDDEN]            # (1, 32)
    ln1_b = slab[ROW_LN1_B:ROW_LN1_B + 1, :HIDDEN]
    b_in = slab[ROW_B_IN:ROW_B_IN + 1, :3 * HIDDEN]           # (1, 96)
    bo = slab[ROW_BO:ROW_BO + 1, :HIDDEN]
    ln2_g = slab[ROW_LN2_G:ROW_LN2_G + 1, :HIDDEN]
    ln2_b = slab[ROW_LN2_B:ROW_LN2_B + 1, :HIDDEN]
    b1 = slab[ROW_B1:ROW_B1 + 1, :MLP_DIM]                    # (1, 64)
    b2 = slab[ROW_B2:ROW_B2 + 1, :HIDDEN]
    attn_bias = slab[ROW_BIAS:ROW_BIAS + BS, :BS]             # (16, 16)

    # ----- ln_1 -----
    h = _layernorm(x, ln1_g, ln1_b)                           # (B*S, H)

    # ----- fused QKV in-projection (softmax scale pre-folded into Q cols) -----
    qkv = jnp.dot(h, w_in_ref[...], preferred_element_type=jnp.float32,
                  precision=HI) + b_in                        # (B*S, 3H)
    q = qkv[:, 0 * HIDDEN:1 * HIDDEN]
    k = qkv[:, 1 * HIDDEN:2 * HIDDEN]
    v = qkv[:, 2 * HIDDEN:3 * HIDDEN]

    # ----- self-attention: one (BS, BS) score tile per head; head outputs are
    # lane-concatenated and pushed through a single W_o matmul. -----
    heads = []
    for hh in range(NUM_HEADS):
        sl = slice(hh * HEAD_DIM, (hh + 1) * HEAD_DIM)
        qh, kh, vh = q[:, sl], k[:, sl], v[:, sl]             # (BS, hd)
        # Q @ K^T without materializing the transpose.
        scores = jax.lax.dot_general(
            qh, kh, (((1,), (1,)), ((), ())),
            preferred_element_type=jnp.float32, precision=HI) + attn_bias
        scores = scores - jnp.max(scores, axis=-1, keepdims=True)
        p = jnp.exp(scores)
        p = p * pl.reciprocal(jnp.sum(p, axis=-1, keepdims=True), approx=True)
        heads.append(jnp.dot(p, vh, preferred_element_type=jnp.float32,
                             precision=HI))                   # (BS, hd)
    attn = jnp.concatenate(heads, axis=1)                     # (BS, H) lane concat
    attn = jnp.dot(attn, wo_ref[...], preferred_element_type=jnp.float32,
                   precision=HI) + bo

    # dropout (eval) = identity; first residual
    x2 = attn + x                                             # (B*S, H)

    # ----- ln_2 + MLP -----
    y = _layernorm(x2, ln2_g, ln2_b)
    y = jnp.dot(y, w1_ref[...], preferred_element_type=jnp.float32,
                precision=HI) + b1
    y = _gelu_exact(y)
    y = jnp.dot(y, w2_ref[...], preferred_element_type=jnp.float32,
                precision=HI) + b2

    out_ref[...] = (x2 + y).astype(out_ref.dtype)


# --------------------------- wrapper -----------------------------------------
def encoder_block(x, prepared):
    """x: (B, S, H); prepared: output of prepare_params() (built once)."""
    B, S, H = x.shape
    assert (B, S, H) == (BATCH, SEQ, HIDDEN)

    x2d = x.reshape(B * S, H)   # free in XLA; merges B*S into the sublane dim

    vmem = pl.BlockSpec(memory_space=pltpu.MemorySpace.VMEM)  # whole array resident

    out2d = pl.pallas_call(
        encoder_block_kernel,
        out_shape=jax.ShapeDtypeStruct((B * S, H), x.dtype),
        in_specs=[vmem] * 6,
        out_specs=vmem,
    )(
        x2d,
        prepared["slab"],
        prepared["w_in"],
        prepared["wo"],
        prepared["w1"],
        prepared["w2"],
    )
    return out2d.reshape(B, S, H)


# ------------------- one-time parameter preparation --------------------------
def prepare_params(params):
    """Fold/concat/pack parameters ONCE so the per-call wrapper does no work."""
    scale = 1.0 / math.sqrt(HEAD_DIM)
    # Fused QKV in-projection with the softmax scale folded into the Q columns.
    w_in = jnp.concatenate(
        [params["wq"] * scale, params["wk"], params["wv"]], axis=1)      # (H, 3H)
    b_in = jnp.concatenate(
        [params["bq"] * scale, params["bk"], params["bv"]], axis=1)      # (1, 3H)

    # Block-diagonal additive attention bias over the flattened (B*S) tokens.
    row = jax.lax.broadcasted_iota(jnp.int32, (BS, BS), 0)
    col = jax.lax.broadcasted_iota(jnp.int32, (BS, BS), 1)
    attn_bias = jnp.where((row // SEQ) == (col // SEQ), 0.0, NEG_INF)    # (BS, BS)

    # Pack every small per-row constant + the bias into one (24, 128) slab.
    slab = jnp.zeros((SLAB_ROWS, SLAB_LANES), jnp.float32)
    slab = slab.at[ROW_LN1_G, :HIDDEN].set(params["ln1_g"][0])
    slab = slab.at[ROW_LN1_B, :HIDDEN].set(params["ln1_b"][0])
    slab = slab.at[ROW_B_IN, :3 * HIDDEN].set(b_in[0])
    slab = slab.at[ROW_BO, :HIDDEN].set(params["bo"][0])
    slab = slab.at[ROW_LN2_G, :HIDDEN].set(params["ln2_g"][0])
    slab = slab.at[ROW_LN2_B, :HIDDEN].set(params["ln2_b"][0])
    slab = slab.at[ROW_B1, :MLP_DIM].set(params["b1"][0])
    slab = slab.at[ROW_B2, :HIDDEN].set(params["b2"][0])
    slab = slab.at[ROW_BIAS:ROW_BIAS + BS, :BS].set(attn_bias)

    return {
        "slab": slab,
        "w_in": w_in,            # (H, 3H)
        "wo": params["wo"],      # (H, H)
        "w1": params["w1"],      # (H, MLP_DIM)
        "w2": params["w2"],      # (MLP_DIM, H)
    }


# --------------------- deterministic parameter init --------------------------
def init_params(key):
    ks = jax.random.split(key, 8)

    def xavier(k, fan_in, fan_out):
        bound = math.sqrt(6.0 / (fan_in + fan_out))
        return jax.random.uniform(k, (fan_in, fan_out), jnp.float32, -bound, bound)

    return {
        # LayerNorm 1
        "ln1_g": jnp.ones((1, HIDDEN), jnp.float32),
        "ln1_b": jnp.zeros((1, HIDDEN), jnp.float32),
        # MultiheadAttention in-projection (split into Q/K/V, stored (in, out))
        "wq": xavier(ks[0], HIDDEN, HIDDEN),
        "wk": xavier(ks[1], HIDDEN, HIDDEN),
        "wv": xavier(ks[2], HIDDEN, HIDDEN),
        "bq": jnp.zeros((1, HIDDEN), jnp.float32),
        "bk": jnp.zeros((1, HIDDEN), jnp.float32),
        "bv": jnp.zeros((1, HIDDEN), jnp.float32),
        # out-projection
        "wo": xavier(ks[3], HIDDEN, HIDDEN),
        "bo": jnp.zeros((1, HIDDEN), jnp.float32),
        # LayerNorm 2
        "ln2_g": jnp.ones((1, HIDDEN), jnp.float32),
        "ln2_b": jnp.zeros((1, HIDDEN), jnp.float32),
        # MLP block (xavier weights, tiny-std normal biases, as in MLPBlock)
        "w1": xavier(ks[4], HIDDEN, MLP_DIM),
        "b1": 1e-6 * jax.random.normal(ks[5], (1, MLP_DIM), jnp.float32),
        "w2": xavier(ks[6], MLP_DIM, HIDDEN),
        "b2": 1e-6 * jax.random.normal(ks[7], (1, HIDDEN), jnp.float32),
    }


if __name__ == "__main__":
    key = jax.random.PRNGKey(0)
    kx, kp = jax.random.split(key)
    x = jax.random.normal(kx, (BATCH, SEQ, HIDDEN), jnp.float32)
    params = init_params(kp)
    prepared = prepare_params(params)        # one-time fold/pack (not per call)

    out = encoder_block(x, prepared)
    jax.block_until_ready(out)
    assert out.shape == (BATCH, SEQ, HIDDEN)
    assert bool(jnp.all(jnp.isfinite(out))), "non-finite values in kernel output"
    print("KERNEL_OK")
</pallas_src>

<mosaic_0001>
module attributes {stable_mosaic.version = 11 : i64} {
  func.func @encoder_block_kernel(%arg0: memref<16x32xf32, #tpu.memory_space<vmem>>, %arg1: memref<24x128xf32, #tpu.memory_space<vmem>>, %arg2: memref<32x96xf32, #tpu.memory_space<vmem>>, %arg3: memref<32x32xf32, #tpu.memory_space<vmem>>, %arg4: memref<32x64xf32, #tpu.memory_space<vmem>>, %arg5: memref<64x32xf32, #tpu.memory_space<vmem>>, %arg6: memref<16x32xf32, #tpu.memory_space<vmem>>) attributes {dimension_semantics = [], scalar_prefetch = 0 : i64, scratch_operands = 0 : i64, tpu.core_type = #tpu.core_type<tc>} {
    %c0 = arith.constant 0 : index
    %c0_0 = arith.constant 0 : index
    %0 = vector.load %arg0[%c0, %c0_0] : memref<16x32xf32, #tpu.memory_space<vmem>>, vector<16x32xf32>
    %c0_1 = arith.constant 0 : index
    %c0_2 = arith.constant 0 : index
    %1 = vector.load %arg1[%c0_1, %c0_2] : memref<24x128xf32, #tpu.memory_space<vmem>>, vector<24x128xf32>
    %2 = vector.extract_strided_slice %1 {offsets = [0, 0], sizes = [1, 32], strides = [1, 1]} : vector<24x128xf32> to vector<1x32xf32>
    %3 = vector.extract_strided_slice %1 {offsets = [1, 0], sizes = [1, 32], strides = [1, 1]} : vector<24x128xf32> to vector<1x32xf32>
    %4 = vector.extract_strided_slice %1 {offsets = [2, 0], sizes = [1, 96], strides = [1, 1]} : vector<24x128xf32> to vector<1x96xf32>
    %5 = vector.extract_strided_slice %1 {offsets = [3, 0], sizes = [1, 32], strides = [1, 1]} : vector<24x128xf32> to vector<1x32xf32>
    %6 = vector.extract_strided_slice %1 {offsets = [4, 0], sizes = [1, 32], strides = [1, 1]} : vector<24x128xf32> to vector<1x32xf32>
    %7 = vector.extract_strided_slice %1 {offsets = [5, 0], sizes = [1, 32], strides = [1, 1]} : vector<24x128xf32> to vector<1x32xf32>
    %8 = vector.extract_strided_slice %1 {offsets = [6, 0], sizes = [1, 64], strides = [1, 1]} : vector<24x128xf32> to vector<1x64xf32>
    %9 = vector.extract_strided_slice %1 {offsets = [7, 0], sizes = [1, 32], strides = [1, 1]} : vector<24x128xf32> to vector<1x32xf32>
    %10 = vector.extract_strided_slice %1 {offsets = [8, 0], sizes = [16, 16], strides = [1, 1]} : vector<24x128xf32> to vector<16x16xf32>
    %cst = arith.constant dense<0.000000e+00> : vector<16xf32>
    %11 = vector.multi_reduction <add>, %0, %cst [1] : vector<16x32xf32> to vector<16xf32>
    %12 = vector.shape_cast %11 : vector<16xf32> to vector<16x1xf32>
    %cst_3 = arith.constant 3.200000e+01 : f32
    %13 = vector.broadcast %cst_3 : f32 to vector<16x1xf32>
    %14 = arith.divf %12, %13 : vector<16x1xf32>
    %15 = vector.broadcast %14 : vector<16x1xf32> to vector<16x32xf32>
    %16 = arith.subf %0, %15 : vector<16x32xf32>
    %17 = arith.mulf %16, %16 : vector<16x32xf32>
    %cst_4 = arith.constant dense<0.000000e+00> : vector<16xf32>
    %18 = vector.multi_reduction <add>, %17, %cst_4 [1] : vector<16x32xf32> to vector<16xf32>
    %19 = vector.shape_cast %18 : vector<16xf32> to vector<16x1xf32>
    %cst_5 = arith.constant 3.200000e+01 : f32
    %20 = vector.broadcast %cst_5 : f32 to vector<16x1xf32>
    %21 = arith.divf %19, %20 : vector<16x1xf32>
    %22 = vector.broadcast %14 : vector<16x1xf32> to vector<16x32xf32>
    %23 = arith.subf %0, %22 : vector<16x32xf32>
    %cst_6 = arith.constant 9.99999997E-7 : f32
    %24 = vector.broadcast %cst_6 : f32 to vector<16x1xf32>
    %25 = arith.addf %21, %24 : vector<16x1xf32>
    %26 = math.rsqrt %25 : vector<16x1xf32>
    %27 = vector.broadcast %26 : vector<16x1xf32> to vector<16x32xf32>
    %28 = arith.mulf %23, %27 : vector<16x32xf32>
    %29 = vector.broadcast %2 : vector<1x32xf32> to vector<16x32xf32>
    %30 = arith.mulf %28, %29 : vector<16x32xf32>
    %31 = vector.broadcast %3 : vector<1x32xf32> to vector<16x32xf32>
    %32 = arith.addf %30, %31 : vector<16x32xf32>
    %c0_7 = arith.constant 0 : index
    %c0_8 = arith.constant 0 : index
    %33 = vector.load %arg2[%c0_7, %c0_8] : memref<32x96xf32, #tpu.memory_space<vmem>>, vector<32x96xf32>
    %cst_9 = arith.constant dense<0.000000e+00> : vector<16x96xf32>
    %34 = tpu.matmul %32, %33, %cst_9 {dimension_numbers = #tpu.dot_dimension_numbers<[1], [0], [0], [1], [0, 0, 1, 1], [], []>, precision = #tpu.contract_precision<fp32>} : vector<16x32xf32>, vector<32x96xf32>, vector<16x96xf32> -> vector<16x96xf32>
    %35 = vector.broadcast %4 : vector<1x96xf32> to vector<16x96xf32>
    %36 = arith.addf %34, %35 : vector<16x96xf32>
    %37 = vector.extract_strided_slice %36 {offsets = [0, 0], sizes = [16, 32], strides = [1, 1]} : vector<16x96xf32> to vector<16x32xf32>
    %38 = vector.extract_strided_slice %36 {offsets = [0, 32], sizes = [16, 32], strides = [1, 1]} : vector<16x96xf32> to vector<16x32xf32>
    %39 = vector.extract_strided_slice %36 {offsets = [0, 64], sizes = [16, 32], strides = [1, 1]} : vector<16x96xf32> to vector<16x32xf32>
    %40 = vector.extract_strided_slice %37 {offsets = [0, 0], sizes = [16, 8], strides = [1, 1]} : vector<16x32xf32> to vector<16x8xf32>
    %41 = vector.extract_strided_slice %38 {offsets = [0, 0], sizes = [16, 8], strides = [1, 1]} : vector<16x32xf32> to vector<16x8xf32>
    %42 = vector.extract_strided_slice %39 {offsets = [0, 0], sizes = [16, 8], strides = [1, 1]} : vector<16x32xf32> to vector<16x8xf32>
    %cst_10 = arith.constant dense<0.000000e+00> : vector<16x16xf32>
    %43 = tpu.matmul %40, %41, %cst_10 {dimension_numbers = #tpu.dot_dimension_numbers<[1], [1], [0], [0], [0, 0, 1, 0], [], []>, precision = #tpu.contract_precision<fp32>} : vector<16x8xf32>, vector<16x8xf32>, vector<16x16xf32> -> vector<16x16xf32>
    %44 = arith.addf %43, %10 : vector<16x16xf32>
    %cst_11 = arith.constant dense<0xFF800000> : vector<16xf32>
    %45 = vector.multi_reduction <maximumf>, %44, %cst_11 [1] : vector<16x16xf32> to vector<16xf32>
    %46 = vector.shape_cast %45 : vector<16xf32> to vector<16x1xf32>
    %47 = vector.broadcast %46 : vector<16x1xf32> to vector<16x16xf32>
    %48 = arith.subf %44, %47 : vector<16x16xf32>
    %49 = math.exp %48 : vector<16x16xf32>
    %cst_12 = arith.constant dense<0.000000e+00> : vector<16xf32>
    %50 = vector.multi_reduction <add>, %49, %cst_12 [1] : vector<16x16xf32> to vector<16xf32>
    %51 = vector.shape_cast %50 : vector<16xf32> to vector<16x1xf32>
    %52 = tpu.reciprocal %51 {approx = true} : vector<16x1xf32> -> vector<16x1xf32>
    %53 = vector.broadcast %52 : vector<16x1xf32> to vector<16x16xf32>
    %54 = arith.mulf %49, %53 : vector<16x16xf32>
    %cst_13 = arith.constant dense<0.000000e+00> : vector<16x8xf32>
    %55 = tpu.matmul %54, %42, %cst_13 {dimension_numbers = #tpu.dot_dimension_numbers<[1], [0], [0], [1], [0, 0, 1, 1], [], []>, precision = #tpu.contract_precision<fp32>} : vector<16x16xf32>, vector<16x8xf32>, vector<16x8xf32> -> vector<16x8xf32>
    %56 = vector.extract_strided_slice %37 {offsets = [0, 8], sizes = [16, 8], strides = [1, 1]} : vector<16x32xf32> to vector<16x8xf32>
    %57 = vector.extract_strided_slice %38 {offsets = [0, 8], sizes = [16, 8], strides = [1, 1]} : vector<16x32xf32> to vector<16x8xf32>
    %58 = vector.extract_strided_slice %39 {offsets = [0, 8], sizes = [16, 8], strides = [1, 1]} : vector<16x32xf32> to vector<16x8xf32>
    %cst_14 = arith.constant dense<0.000000e+00> : vector<16x16xf32>
    %59 = tpu.matmul %56, %57, %cst_14 {dimension_numbers = #tpu.dot_dimension_numbers<[1], [1], [0], [0], [0, 0, 1, 0], [], []>, precision = #tpu.contract_precision<fp32>} : vector<16x8xf32>, vector<16x8xf32>, vector<16x16xf32> -> vector<16x16xf32>
    %60 = arith.addf %59, %10 : vector<16x16xf32>
    %cst_15 = arith.constant dense<0xFF800000> : vector<16xf32>
    %61 = vector.multi_reduction <maximumf>, %60, %cst_15 [1] : vector<16x16xf32> to vector<16xf32>
    %62 = vector.shape_cast %61 : vector<16xf32> to vector<16x1xf32>
    %63 = vector.broadcast %62 : vector<16x1xf32> to vector<16x16xf32>
    %64 = arith.subf %60, %63 : vector<16x16xf32>
    %65 = math.exp %64 : vector<16x16xf32>
    %cst_16 = arith.constant dense<0.000000e+00> : vector<16xf32>
    %66 = vector.multi_reduction <add>, %65, %cst_16 [1] : vector<16x16xf32> to vector<16xf32>
    %67 = vector.shape_cast %66 : vector<16xf32> to vector<16x1xf32>
    %68 = tpu.reciprocal %67 {approx = true} : vector<16x1xf32> -> vector<16x1xf32>
    %69 = vector.broadcast %68 : vector<16x1xf32> to vector<16x16xf32>
    %70 = arith.mulf %65, %69 : vector<16x16xf32>
    %cst_17 = arith.constant dense<0.000000e+00> : vector<16x8xf32>
    %71 = tpu.matmul %70, %58, %cst_17 {dimension_numbers = #tpu.dot_dimension_numbers<[1], [0], [0], [1], [0, 0, 1, 1], [], []>, precision = #tpu.contract_precision<fp32>} : vector<16x16xf32>, vector<16x8xf32>, vector<16x8xf32> -> vector<16x8xf32>
    %72 = vector.extract_strided_slice %37 {offsets = [0, 16], sizes = [16, 8], strides = [1, 1]} : vector<16x32xf32> to vector<16x8xf32>
    %73 = vector.extract_strided_slice %38 {offsets = [0, 16], sizes = [16, 8], strides = [1, 1]} : vector<16x32xf32> to vector<16x8xf32>
    %74 = vector.extract_strided_slice %39 {offsets = [0, 16], sizes = [16, 8], strides = [1, 1]} : vector<16x32xf32> to vector<16x8xf32>
    %cst_18 = arith.constant dense<0.000000e+00> : vector<16x16xf32>
    %75 = tpu.matmul %72, %73, %cst_18 {dimension_numbers = #tpu.dot_dimension_numbers<[1], [1], [0], [0], [0, 0, 1, 0], [], []>, precision = #tpu.contract_precision<fp32>} : vector<16x8xf32>, vector<16x8xf32>, vector<16x16xf32> -> vector<16x16xf32>
    %76 = arith.addf %75, %10 : vector<16x16xf32>
    %cst_19 = arith.constant dense<0xFF800000> : vector<16xf32>
    %77 = vector.multi_reduction <maximumf>, %76, %cst_19 [1] : vector<16x16xf32> to vector<16xf32>
    %78 = vector.shape_cast %77 : vector<16xf32> to vector<16x1xf32>
    %79 = vector.broadcast %78 : vector<16x1xf32> to vector<16x16xf32>
    %80 = arith.subf %76, %79 : vector<16x16xf32>
    %81 = math.exp %80 : vector<16x16xf32>
    %cst_20 = arith.constant dense<0.000000e+00> : vector<16xf32>
    %82 = vector.multi_reduction <add>, %81, %cst_20 [1] : vector<16x16xf32> to vector<16xf32>
    %83 = vector.shape_cast %82 : vector<16xf32> to vector<16x1xf32>
    %84 = tpu.reciprocal %83 {approx = true} : vector<16x1xf32> -> vector<16x1xf32>
    %85 = vector.broadcast %84 : vector<16x1xf32> to vector<16x16xf32>
    %86 = arith.mulf %81, %85 : vector<16x16xf32>
    %cst_21 = arith.constant dense<0.000000e+00> : vector<16x8xf32>
    %87 = tpu.matmul %86, %74, %cst_21 {dimension_numbers = #tpu.dot_dimension_numbers<[1], [0], [0], [1], [0, 0, 1, 1], [], []>, precision = #tpu.contract_precision<fp32>} : vector<16x16xf32>, vector<16x8xf32>, vector<16x8xf32> -> vector<16x8xf32>
    %88 = vector.extract_strided_slice %37 {offsets = [0, 24], sizes = [16, 8], strides = [1, 1]} : vector<16x32xf32> to vector<16x8xf32>
    %89 = vector.extract_strided_slice %38 {offsets = [0, 24], sizes = [16, 8], strides = [1, 1]} : vector<16x32xf32> to vector<16x8xf32>
    %90 = vector.extract_strided_slice %39 {offsets = [0, 24], sizes = [16, 8], strides = [1, 1]} : vector<16x32xf32> to vector<16x8xf32>
    %cst_22 = arith.constant dense<0.000000e+00> : vector<16x16xf32>
    %91 = tpu.matmul %88, %89, %cst_22 {dimension_numbers = #tpu.dot_dimension_numbers<[1], [1], [0], [0], [0, 0, 1, 0], [], []>, precision = #tpu.contract_precision<fp32>} : vector<16x8xf32>, vector<16x8xf32>, vector<16x16xf32> -> vector<16x16xf32>
    %92 = arith.addf %91, %10 : vector<16x16xf32>
    %cst_23 = arith.constant dense<0xFF800000> : vector<16xf32>
    %93 = vector.multi_reduction <maximumf>, %92, %cst_23 [1] : vector<16x16xf32> to vector<16xf32>
    %94 = vector.shape_cast %93 : vector<16xf32> to vector<16x1xf32>
    %95 = vector.broadcast %94 : vector<16x1xf32> to vector<16x16xf32>
    %96 = arith.subf %92, %95 : vector<16x16xf32>
    %97 = math.exp %96 : vector<16x16xf32>
    %cst_24 = arith.constant dense<0.000000e+00> : vector<16xf32>
    %98 = vector.multi_reduction <add>, %97, %cst_24 [1] : vector<16x16xf32> to vector<16xf32>
    %99 = vector.shape_cast %98 : vector<16xf32> to vector<16x1xf32>
    %100 = tpu.reciprocal %99 {approx = true} : vector<16x1xf32> -> vector<16x1xf32>
    %101 = vector.broadcast %100 : vector<16x1xf32> to vector<16x16xf32>
    %102 = arith.mulf %97, %101 : vector<16x16xf32>
    %cst_25 = arith.constant dense<0.000000e+00> : vector<16x8xf32>
    %103 = tpu.matmul %102, %90, %cst_25 {dimension_numbers = #tpu.dot_dimension_numbers<[1], [0], [0], [1], [0, 0, 1, 1], [], []>, precision = #tpu.contract_precision<fp32>} : vector<16x16xf32>, vector<16x8xf32>, vector<16x8xf32> -> vector<16x8xf32>
    %104 = tpu.concatenate %55, %71, %87, %103 in 1 : vector<16x8xf32>, vector<16x8xf32>, vector<16x8xf32>, vector<16x8xf32> -> vector<16x32xf32>
    %c0_26 = arith.constant 0 : index
    %c0_27 = arith.constant 0 : index
    %105 = vector.load %arg3[%c0_26, %c0_27] : memref<32x32xf32, #tpu.memory_space<vmem>>, vector<32x32xf32>
    %cst_28 = arith.constant dense<0.000000e+00> : vector<16x32xf32>
    %106 = tpu.matmul %104, %105, %cst_28 {dimension_numbers = #tpu.dot_dimension_numbers<[1], [0], [0], [1], [0, 0, 1, 1], [], []>, precision = #tpu.contract_precision<fp32>} : vector<16x32xf32>, vector<32x32xf32>, vector<16x32xf32> -> vector<16x32xf32>
    %107 = vector.broadcast %5 : vector<1x32xf32> to vector<16x32xf32>
    %108 = arith.addf %106, %107 : vector<16x32xf32>
    %109 = arith.addf %108, %0 : vector<16x32xf32>
    %cst_29 = arith.constant dense<0.000000e+00> : vector<16xf32>
    %110 = vector.multi_reduction <add>, %109, %cst_29 [1] : vector<16x32xf32> to vector<16xf32>
    %111 = vector.shape_cast %110 : vector<16xf32> to vector<16x1xf32>
    %cst_30 = arith.constant 3.200000e+01 : f32
    %112 = vector.broadcast %cst_30 : f32 to vector<16x1xf32>
    %113 = arith.divf %111, %112 : vector<16x1xf32>
    %114 = vector.broadcast %113 : vector<16x1xf32> to vector<16x32xf32>
    %115 = arith.subf %109, %114 : vector<16x32xf32>
    %116 = arith.mulf %115, %115 : vector<16x32xf32>
    %cst_31 = arith.constant dense<0.000000e+00> : vector<16xf32>
    %117 = vector.multi_reduction <add>, %116, %cst_31 [1] : vector<16x32xf32> to vector<16xf32>
    %118 = vector.shape_cast %117 : vector<16xf32> to vector<16x1xf32>
    %cst_32 = arith.constant 3.200000e+01 : f32
    %119 = vector.broadcast %cst_32 : f32 to vector<16x1xf32>
    %120 = arith.divf %118, %119 : vector<16x1xf32>
    %121 = vector.broadcast %113 : vector<16x1xf32> to vector<16x32xf32>
    %122 = arith.subf %109, %121 : vector<16x32xf32>
    %cst_33 = arith.constant 9.99999997E-7 : f32
    %123 = vector.broadcast %cst_33 : f32 to vector<16x1xf32>
    %124 = arith.addf %120, %123 : vector<16x1xf32>
    %125 = math.rsqrt %124 : vector<16x1xf32>
    %126 = vector.broadcast %125 : vector<16x1xf32> to vector<16x32xf32>
    %127 = arith.mulf %122, %126 : vector<16x32xf32>
    %128 = vector.broadcast %6 : vector<1x32xf32> to vector<16x32xf32>
    %129 = arith.mulf %127, %128 : vector<16x32xf32>
    %130 = vector.broadcast %7 : vector<1x32xf32> to vector<16x32xf32>
    %131 = arith.addf %129, %130 : vector<16x32xf32>
    %c0_34 = arith.constant 0 : index
    %c0_35 = arith.constant 0 : index
    %132 = vector.load %arg4[%c0_34, %c0_35] : memref<32x64xf32, #tpu.memory_space<vmem>>, vector<32x64xf32>
    %cst_36 = arith.constant dense<0.000000e+00> : vector<16x64xf32>
    %133 = tpu.matmul %131, %132, %cst_36 {dimension_numbers = #tpu.dot_dimension_numbers<[1], [0], [0], [1], [0, 0, 1, 1], [], []>, precision = #tpu.contract_precision<fp32>} : vector<16x32xf32>, vector<32x64xf32>, vector<16x64xf32> -> vector<16x64xf32>
    %134 = vector.broadcast %8 : vector<1x64xf32> to vector<16x64xf32>
    %135 = arith.addf %133, %134 : vector<16x64xf32>
    %cst_37 = arith.constant 5.000000e-01 : f32
    %136 = vector.broadcast %cst_37 : f32 to vector<16x64xf32>
    %137 = arith.mulf %136, %135 : vector<16x64xf32>
    %cst_38 = arith.constant 0.707106769 : f32
    %138 = vector.broadcast %cst_38 : f32 to vector<16x64xf32>
    %139 = arith.mulf %135, %138 : vector<16x64xf32>
    %140 = math.erf %139 : vector<16x64xf32>
    %cst_39 = arith.constant 1.000000e+00 : f32
    %141 = vector.broadcast %cst_39 : f32 to vector<16x64xf32>
    %142 = arith.addf %141, %140 : vector<16x64xf32>
    %143 = arith.mulf %137, %142 : vector<16x64xf32>
    %c0_40 = arith.constant 0 : index
    %c0_41 = arith.constant 0 : index
    %144 = vector.load %arg5[%c0_40, %c0_41] : memref<64x32xf32, #tpu.memory_space<vmem>>, vector<64x32xf32>
    %cst_42 = arith.constant dense<0.000000e+00> : vector<16x32xf32>
    %145 = tpu.matmul %143, %144, %cst_42 {dimension_numbers = #tpu.dot_dimension_numbers<[1], [0], [0], [1], [0, 0, 1, 1], [], []>, precision = #tpu.contract_precision<fp32>} : vector<16x64xf32>, vector<64x32xf32>, vector<16x32xf32> -> vector<16x32xf32>
    %146 = vector.broadcast %9 : vector<1x32xf32> to vector<16x32xf32>
    %147 = arith.addf %145, %146 : vector<16x32xf32>
    %148 = arith.addf %109, %147 : vector<16x32xf32>
    %c0_43 = arith.constant 0 : index
    %c0_44 = arith.constant 0 : index
    %149 = vector.load %arg6[%c0_43, %c0_44] : memref<16x32xf32, #tpu.memory_space<vmem>>, vector<16x32xf32>
    tpu.vector_store %arg6[%c0_43, %c0_44], %148 {strides = array<i32>} : memref<16x32xf32, #tpu.memory_space<vmem>>, vector<16x32xf32>,
    return
  }
}

</mosaic_0001>

<llo_original>
// kernel: tpu_custom_call.1
$region0: #{tpu_custom_call.1}
  #allocation0 [shape = 'u32[]', space=smem, size = 0x4, offset = 0x4, fixed_abs, tag = 'smem constant byte address 0x4 - core index']
  #allocation1 [shape = 'u32[144,128]{1,0:T(1,128)}', space=vmem, size = 0x12000, scoped, tag = 'internal scratch']
  %s0 = inlined_call_operand.hbm [shape: f32[16,32], index: 0, kind: input, shape index: {}]
  %s1 = inlined_call_operand.hbm [shape: f32[24,128], index: 1, kind: input, shape index: {}]
  %s2 = inlined_call_operand.vmem [shape: f32[32,96], index: 2, kind: input, shape index: {}]
  %s3 = inlined_call_operand.vmem [shape: f32[32,32], index: 3, kind: input, shape index: {}]
  %s4 = inlined_call_operand.vmem [shape: f32[32,64], index: 4, kind: input, shape index: {}]
  %s5 = inlined_call_operand.vmem [shape: f32[64,32], index: 5, kind: input, shape index: {}]
  %s6 = inlined_call_operand.hbm [shape: f32[16,32], index: 6, kind: output, shape index: {}]
  %s7 = sld [smem:[#allocation0]]
  $region42: #{tpu_custom_call.1} parent=0
    _
  %s9 = ssub.s32 1, %s7
  %s10 = scalar_select 0, %s9, %s7
  $region1: #{tpu_custom_call.1} parent=0
    #allocation2 [shape = 'u8[8192]{0}', space=vmem, size = 0x2000, scoped, tag = 'input window, operand 0, single buffered']
    #allocation3 [shape = 's32[1]{0}', space=sflag, size = 0x4, scoped, tag = 'scoped memory for tpu_custom_call.1']
    #allocation4 [shape = 's32[1]{0}', space=sflag, size = 0x4, scoped, tag = 'scoped memory for tpu_custom_call.1']
    #allocation5 [shape = 'u8[12288]{0}', space=vmem, size = 0x3000, scoped, tag = 'input window, operand 1, single buffered']
    #allocation6 [shape = 's32[1]{0}', space=sflag, size = 0x4, scoped, tag = 'scoped memory for tpu_custom_call.1']
    #allocation7 [shape = 'u8[8192]{0}', space=vmem, size = 0x2000, scoped, tag = 'output window, operand 0, single buffered']
    %11 = vsyncpa [#allocation3], 0
    %12 = vsyncpa [#allocation6], 0
    %13 = vsyncpa [#allocation4], 0
    // Predicated region
    $region2: #{tpu_custom_call.1} parent=1 // pred_check
      _
    $region3: #{tpu_custom_call.1} parent=1 // pred_check_branch
      %15 = sbr.rel (0) target = $region5
    $region4: #{tpu_custom_call.1} parent=1 // pred_region
      %s17 = ssub.s32 256, 256
      %18 = vsyncadd [#allocation3], %s17
      %s19 = sshll.u32 [#allocation2], 4
      %s20 = int_to_ptr.vmem [resolvable:$true] %s19
      %25 = dma.hbm_to_vmem [thread:$0]  %s0, 256, %s20, [#allocation3], 128, 128, 8
    $region5: #{tpu_custom_call.1} parent=1 // pred_fallthru
      _
    // Predicated region
    $region6: #{tpu_custom_call.1} parent=1 // pred_check
      _
    $region7: #{tpu_custom_call.1} parent=1 // pred_check_branch
      %27 = sbr.rel (0) target = $region9
    $region8: #{tpu_custom_call.1} parent=1 // pred_region
      %s29 = ssub.s32 384, 384
      %30 = vsyncadd [#allocation6], %s29
      %s31 = sshll.u32 [#allocation5], 4
      %s32 = int_to_ptr.vmem [resolvable:$true] %s31
      %37 = dma.hbm_to_vmem [thread:$0]  %s1, 384, %s32, [#allocation6], 128, 128, 8
    $region9: #{tpu_custom_call.1} parent=1 // pred_fallthru
      _
    // Predicated region
    $region10: #{tpu_custom_call.1} parent=1 // pred_check
      _
    $region11: #{tpu_custom_call.1} parent=1 // pred_check_branch
      %39 = sbr.rel (0) target = $region13
    $region12: #{tpu_custom_call.1} parent=1 // pred_region
      _
    $region13: #{tpu_custom_call.1} parent=1 // pred_fallthru
      _
    // Predicated region
    $region14: #{tpu_custom_call.1} parent=1 // pred_check
      _
    $region15: #{tpu_custom_call.1} parent=1 // pred_check_branch
      %41 = sbr.rel (0) target = $region17
    $region16: #{tpu_custom_call.1} parent=1 // pred_region
      _
    $region17: #{tpu_custom_call.1} parent=1 // pred_fallthru
      _
    // Predicated region
    $region18: #{tpu_custom_call.1} parent=1 // pred_check
      _
    $region19: #{tpu_custom_call.1} parent=1 // pred_check_branch
      %43 = sbr.rel (0) target = $region21
    $region20: #{tpu_custom_call.1} parent=1 // pred_region
      _
    $region21: #{tpu_custom_call.1} parent=1 // pred_fallthru
      _
    // Predicated region
    $region22: #{tpu_custom_call.1} parent=1 // pred_check
      _
    $region23: #{tpu_custom_call.1} parent=1 // pred_check_branch
      %45 = sbr.rel (0) target = $region25
    $region24: #{tpu_custom_call.1} parent=1 // pred_region
      _
    $region25: #{tpu_custom_call.1} parent=1 // pred_fallthru
      _
    // Predicated region
    $region26: #{tpu_custom_call.1} parent=1 // pred_check
      _
    $region27: #{tpu_custom_call.1} parent=1 // pred_check_branch
      %47 = sbr.rel (0) target = $region29
    $region28: #{tpu_custom_call.1} parent=1 // pred_region
      %48 = dma.done [#allocation3], 256
    $region29: #{tpu_custom_call.1} parent=1 // pred_fallthru
      _
    // Predicated region
    $region30: #{tpu_custom_call.1} parent=1 // pred_check
      _
    $region31: #{tpu_custom_call.1} parent=1 // pred_check_branch
      %50 = sbr.rel (0) target = $region33
    $region32: #{tpu_custom_call.1} parent=1 // pred_region
      %51 = dma.done [#allocation6], 384
    $region33: #{tpu_custom_call.1} parent=1 // pred_fallthru
      _
    %v52 = vld [vmem:[#allocation2] sm:$0xff]
    %v53 = vld [vmem:[#allocation2 + $0x8] sm:$0xff]
    %v54 = vld [vmem:[#allocation5] sm:$0xff]
    %v55 = vld [vmem:[#allocation5 + $0x8] sm:$0xff]
    %v56 = vld [vmem:[#allocation5 + $0x10] sm:$0xff]
    %vm57 = vcmask 261120
    %v58 = vsel %vm57, %v52, 0.0
    %59 = vadd.xlane.f32.xlu0 %v58
    %v60 = vpop.xlane.xlu0 %59
    %v61 = vsel %vm57, %v53, 0.0
    %62 = vadd.xlane.f32.xlu0 %v61
    %v63 = vpop.xlane.xlu0 %62
    %v64 = vrcp.pop 32.0
    %v65 = vmul.f32 %v60, %v64
    %v66 = vmul.f32 %v63, %v64
    %v67 = vsub.f32 %v52, %v65
    %v68 = vsub.f32 %v53, %v66
    %v69 = vmul.f32 %v67, %v67
    %v70 = vmul.f32 %v68, %v68
    %v71 = vsel %vm57, %v69, 0.0
    %72 = vadd.xlane.f32.xlu0 %v71
    %v73 = vpop.xlane.xlu0 %72
    %v74 = vsel %vm57, %v70, 0.0
    %75 = vadd.xlane.f32.xlu0 %v74
    %v76 = vpop.xlane.xlu0 %75
    %v77 = vmul.f32 %v73, %v64
    %v78 = vmul.f32 %v76, %v64
    %v79 = vadd.f32 %v77, 1e-06
    %v80 = vadd.f32 %v78, 1e-06
    %v81 = vrsqrt.pop %v79
    %v82 = vrsqrt.pop %v80
    %v83 = vmul.f32 %v67, %v81
    %v84 = vmul.f32 %v68, %v82
    %v85 = vlaneseq
    %v86 = vshrl.u32 %v85, 7
    %v87 = vsub.s32 0, %v86
    %v88 = vrot.slane %v54, %v87
    %v89 = vmul.f32 %v83, %v88
    %v90 = vmul.f32 %v84, %v88
    %v91 = vlaneseq
    %v92 = vshrl.u32 %v91, 7
    %v93 = vsub.s32 1, %v92
    %v94 = vrot.slane %v54, %v93
    %v95 = vadd.f32 %v89, %v94
    %v96 = vadd.f32 %v90, %v94
    %v97 = vld [vmem:[%s2] sm:$0xff]
    %v98 = vld [vmem:[%s2 + $0x8] sm:$0xff]
    %v99 = vld [vmem:[%s2 + $0x10] sm:$0xff]
    %v100 = vld [vmem:[%s2 + $0x18] sm:$0xff]
    %v101 = vlaneseq
    %v102 = vshrl.u32 %v101, 7
    %v103 = vsub.s32 2, %v102
    %v104 = vrot.slane %v54, %v103
    %v106 = vsel %vm57, %v95, 0
    %v109 = vsel %vm57, %v96, 0
    %111 = vmatprep.subr.mxu0 0.0
    %v112 = vand.u32 %v97, 4294901760
    %113 = vmatpush1.msra.mxu0 %v112
    %114 = vmatprep.subr.mxu0 0.0
    %v115 = vand.u32 %v98, 4294901760
    %116 = vmatpush1.msra.mxu0 %v115
    %117 = vmatprep.subr.mxu0 0.0
    %v118 = vand.u32 %v99, 4294901760
    %119 = vmatpush1.msra.mxu0 %v118
    %120 = vmatprep.subr.mxu0 0.0
    %v121 = vand.u32 %v100, 4294901760
    %122 = vmatpush1.msra.mxu0 %v121
    %123 = vmatprep.subr.mxu0 0.0
    %124 = vmatpush1.msra.mxu0 0.0
    %125 = vmatprep.subr.mxu0 0.0
    %126 = vmatpush1.msra.mxu0 0.0
    %127 = vmatprep.subr.mxu0 0.0
    %128 = vmatpush1.msra.mxu0 0.0
    %129 = vmatprep.subr.mxu0 0.0
    %130 = vmatpush1.msra.mxu0 0.0
    %131 = vmatprep.subr.mxu0 0.0
    %132 = vmatpush1.msra.mxu0 0.0
    %133 = vmatprep.subr.mxu0 0.0
    %134 = vmatpush1.msra.mxu0 0.0
    %135 = vmatprep.subr.mxu0 0.0
    %136 = vmatpush1.msra.mxu0 0.0
    %137 = vmatprep.subr.mxu0 0.0
    %138 = vmatpush1.msra.mxu0 0.0
    %139 = vmatprep.subr.mxu0 0.0
    %140 = vmatpush1.msra.mxu0 0.0
    %141 = vmatprep.subr.mxu0 0.0
    %142 = vmatpush1.msra.mxu0 0.0
    %143 = vmatprep.subr.mxu0 0.0
    %144 = vmatpush1.msra.mxu0 0.0
    %145 = vmatprep.subr.mxu0 0.0
    %146 = vmatpush1.msra.mxu0 0.0
    %147 = vmatprep.subr.mxu0 0.0
    %148 = vmatpush1.msra.mxu0 0.0
    %149 = vmatprep.subr.mxu0 0.0
    %150 = vmatpush1.msra.mxu0 0.0
    %151 = vmatprep.subr.mxu0 0.0
    %152 = vmatpush1.msra.mxu0 0.0
    %153 = vmatprep.subr.mxu0 0.0
    %154 = vmatpush1.msra.mxu0 0.0
    %155 = vmatprep.subr.mxu0 0.0
    %156 = vmatpush1.msra.mxu0 0.0
    %157 = vmatprep.subr.mxu0 0.0
    %158 = vmatpush1.msra.mxu0 0.0
    %159 = vmatprep.subr.mxu0 0.0
    %160 = vmatpush1.msra.mxu0 0.0
    %161 = vmatprep.subr.mxu0 0.0
    %162 = vmatpush1.msra.mxu0 0.0
    %163 = vmatprep.subr.mxu0 0.0
    %164 = vmatpush1.msra.mxu0 0.0
    %165 = vmatprep.subr.mxu0 0.0
    %166 = vmatpush1.msra.mxu0 0.0
    %167 = vmatprep.subr.mxu0 0.0
    %168 = vmatpush1.msra.mxu0 0.0
    %169 = vmatprep.subr.mxu0 0.0
    %170 = vmatpush1.msra.mxu0 0.0
    %171 = vmatprep.subr.mxu0 0.0
    %172 = vmatpush1.msra.mxu0 0.0
    %173 = vmatprep.subr.mxu0 0.0
    %174 = vmatpush1.msra.mxu0 0.0
    %175 = vmatprep.subr.mxu0 0.0
    %176 = vmatpush1.msra.mxu0 0.0
    %177 = vmatprep.subr.mxu0 0.0
    %178 = vmatpush1.msra.mxu0 0.0
    %179 = vmatprep.mubr.f32.mxu0 0.0
    %v180 = vand.u32 %v106, 4294901760
    %v181 = vsub.f32 %v106, %v180
    %v182 = vand.u32 %v181, 4294901760
    %v183 = vsub.f32 %v181, %v182
    %v184 = vand.u32 %v183, 4294901760
    %185 = vmatmul.mubr.f32.gmra.mrb[0].mxu0 %v184
    %v186 = vpop.f32.mrb[0].mxu0
    %v187 = vadd.f32 %v104, %v186
    %v188 = vpop.f32.mrb[0].mxu0
    %189 = vmatprep.mubr.f32.mxu0 0.0
    %v190 = vand.u32 %v109, 4294901760
    %v191 = vsub.f32 %v109, %v190
    %v192 = vand.u32 %v191, 4294901760
    %v193 = vsub.f32 %v191, %v192
    %v194 = vand.u32 %v193, 4294901760
    %195 = vmatmul.mubr.f32.gmra.mrb[0].mxu0 %v194
    %v196 = vpop.f32.mrb[0].mxu0
    %v197 = vadd.f32 %v104, %v196
    %v198 = vpop.f32.mrb[0].mxu0
    %199 = vdwg.mxu0
    %200 = vmatprep.subr.mxu0 0.0
    %v201 = vand.u32 %v97, 4294901760
    %v202 = vsub.f32 %v97, %v201
    %v203 = vand.u32 %v202, 4294901760
    %v204 = vsub.f32 %v202, %v203
    %v205 = vand.u32 %v204, 4294901760
    %206 = vmatpush1.msra.mxu0 %v205
    %207 = vmatprep.subr.mxu0 0.0
    %v208 = vand.u32 %v98, 4294901760
    %v209 = vsub.f32 %v98, %v208
    %v210 = vand.u32 %v209, 4294901760
    %v211 = vsub.f32 %v209, %v210
    %v212 = vand.u32 %v211, 4294901760
    %213 = vmatpush1.msra.mxu0 %v212
    %214 = vmatprep.subr.mxu0 0.0
    %v215 = vand.u32 %v99, 4294901760
    %v216 = vsub.f32 %v99, %v215
    %v217 = vand.u32 %v216, 4294901760
    %v218 = vsub.f32 %v216, %v217
    %v219 = vand.u32 %v218, 4294901760
    %220 = vmatpush1.msra.mxu0 %v219
    %221 = vmatprep.subr.mxu0 0.0
    %v222 = vand.u32 %v100, 4294901760
    %v223 = vsub.f32 %v100, %v222
    %v224 = vand.u32 %v223, 4294901760
    %v225 = vsub.f32 %v223, %v224
    %v226 = vand.u32 %v225, 4294901760
    %227 = vmatpush1.msra.mxu0 %v226
    %228 = vmatprep.subr.mxu0 0.0
    %229 = vmatpush1.msra.mxu0 0.0
    %230 = vmatprep.subr.mxu0 0.0
    %231 = vmatpush1.msra.mxu0 0.0
    %232 = vmatprep.subr.mxu0 0.0
    %233 = vmatpush1.msra.mxu0 0.0
    %234 = vmatprep.subr.mxu0 0.0
    %235 = vmatpush1.msra.mxu0 0.0
    %236 = vmatprep.subr.mxu0 0.0
    %237 = vmatpush1.msra.mxu0 0.0
    %238 = vmatprep.subr.mxu0 0.0
    %239 = vmatpush1.msra.mxu0 0.0
    %240 = vmatprep.subr.mxu0 0.0
    %241 = vmatpush1.msra.mxu0 0.0
    %242 = vmatprep.subr.mxu0 0.0
    %243 = vmatpush1.msra.mxu0 0.0
    %244 = vmatprep.subr.mxu0 0.0
    %245 = vmatpush1.msra.mxu0 0.0
    %246 = vmatprep.subr.mxu0 0.0
    %247 = vmatpush1.msra.mxu0 0.0
    %248 = vmatprep.subr.mxu0 0.0
    %249 = vmatpush1.msra.mxu0 0.0
    %250 = vmatprep.subr.mxu0 0.0
    %251 = vmatpush1.msra.mxu0 0.0
    %252 = vmatprep.subr.mxu0 0.0
    %253 = vmatpush1.msra.mxu0 0.0
    %254 = vmatprep.subr.mxu0 0.0
    %255 = vmatpush1.msra.mxu0 0.0
    %256 = vmatprep.subr.mxu0 0.0
    %257 = vmatpush1.msra.mxu0 0.0
    %258 = vmatprep.subr.mxu0 0.0
    %259 = vmatpush1.msra.mxu0 0.0
    %260 = vmatprep.subr.mxu0 0.0
    %261 = vmatpush1.msra.mxu0 0.0
    %262 = vmatprep.subr.mxu0 0.0
    %263 = vmatpush1.msra.mxu0 0.0
    %264 = vmatprep.subr.mxu0 0.0
    %265 = vmatpush1.msra.mxu0 0.0
    %266 = vmatprep.subr.mxu0 0.0
    %267 = vmatpush1.msra.mxu0 0.0
    %268 = vmatprep.subr.mxu0 0.0
    %269 = vmatpush1.msra.mxu0 0.0
    %270 = vmatprep.subr.mxu0 0.0
    %271 = vmatpush1.msra.mxu0 0.0
    %272 = vmatprep.subr.mxu0 0.0
    %273 = vmatpush1.msra.mxu0 0.0
    %274 = vmatprep.subr.mxu0 0.0
    %275 = vmatpush1.msra.mxu0 0.0
    %276 = vmatprep.subr.mxu0 0.0
    %277 = vmatpush1.msra.mxu0 0.0
    %278 = vmatprep.subr.mxu0 0.0
    %279 = vmatpush1.msra.mxu0 0.0
    %280 = vmatprep.subr.mxu0 0.0
    %281 = vmatpush1.msra.mxu0 0.0
    %282 = vmatprep.subr.mxu0 0.0
    %283 = vmatpush1.msra.mxu0 0.0
    %284 = vmatprep.mubr.f32.mxu0 0.0
    %v285 = vand.u32 %v106, 4294901760
    %286 = vmatmul.mubr.f32.gmra.mrb[0].mxu0 %v285
    %v287 = vpop.f32.mrb[0].mxu0
    %v288 = vadd.f32 %v187, %v287
    %v289 = vpop.f32.mrb[0].mxu0
    %290 = vmatprep.mubr.f32.mxu0 0.0
    %v291 = vand.u32 %v109, 4294901760
    %292 = vmatmul.mubr.f32.gmra.mrb[0].mxu0 %v291
    %v293 = vpop.f32.mrb[0].mxu0
    %v294 = vadd.f32 %v197, %v293
    %v295 = vpop.f32.mrb[0].mxu0
    %296 = vdwg.mxu0
    %297 = vmatprep.subr.mxu0 0.0
    %v298 = vand.u32 %v97, 4294901760
    %v299 = vsub.f32 %v97, %v298
    %300 = vmatpush1.msra.mxu0 %v299
    %301 = vmatprep.subr.mxu0 0.0
    %v302 = vand.u32 %v98, 4294901760
    %v303 = vsub.f32 %v98, %v302
    %304 = vmatpush1.msra.mxu0 %v303
    %305 = vmatprep.subr.mxu0 0.0
    %v306 = vand.u32 %v99, 4294901760
    %v307 = vsub.f32 %v99, %v306
    %308 = vmatpush1.msra.mxu0 %v307
    %309 = vmatprep.subr.mxu0 0.0
    %v310 = vand.u32 %v100, 4294901760
    %v311 = vsub.f32 %v100, %v310
    %312 = vmatpush1.msra.mxu0 %v311
    %313 = vmatprep.subr.mxu0 0.0
    %314 = vmatpush1.msra.mxu0 0.0
    %315 = vmatprep.subr.mxu0 0.0
    %316 = vmatpush1.msra.mxu0 0.0
    %317 = vmatprep.subr.mxu0 0.0
    %318 = vmatpush1.msra.mxu0 0.0
    %319 = vmatprep.subr.mxu0 0.0
    %320 = vmatpush1.msra.mxu0 0.0
    %321 = vmatprep.subr.mxu0 0.0
    %322 = vmatpush1.msra.mxu0 0.0
    %323 = vmatprep.subr.mxu0 0.0
    %324 = vmatpush1.msra.mxu0 0.0
    %325 = vmatprep.subr.mxu0 0.0
    %326 = vmatpush1.msra.mxu0 0.0
    %327 = vmatprep.subr.mxu0 0.0
    %328 = vmatpush1.msra.mxu0 0.0
    %329 = vmatprep.subr.mxu0 0.0
    %330 = vmatpush1.msra.mxu0 0.0
    %331 = vmatprep.subr.mxu0 0.0
    %332 = vmatpush1.msra.mxu0 0.0
    %333 = vmatprep.subr.mxu0 0.0
    %334 = vmatpush1.msra.mxu0 0.0
    %335 = vmatprep.subr.mxu0 0.0
    %336 = vmatpush1.msra.mxu0 0.0
    %337 = vmatprep.subr.mxu0 0.0
    %338 = vmatpush1.msra.mxu0 0.0
    %339 = vmatprep.subr.mxu0 0.0
    %340 = vmatpush1.msra.mxu0 0.0
    %341 = vmatprep.subr.mxu0 0.0
    %342 = vmatpush1.msra.mxu0 0.0
    %343 = vmatprep.subr.mxu0 0.0
    %344 = vmatpush1.msra.mxu0 0.0
    %345 = vmatprep.subr.mxu0 0.0
    %346 = vmatpush1.msra.mxu0 0.0
    %347 = vmatprep.subr.mxu0 0.0
    %348 = vmatpush1.msra.mxu0 0.0
    %349 = vmatprep.subr.mxu0 0.0
    %350 = vmatpush1.msra.mxu0 0.0
    %351 = vmatprep.subr.mxu0 0.0
    %352 = vmatpush1.msra.mxu0 0.0
    %353 = vmatprep.subr.mxu0 0.0
    %354 = vmatpush1.msra.mxu0 0.0
    %355 = vmatprep.subr.mxu0 0.0
    %356 = vmatpush1.msra.mxu0 0.0
    %357 = vmatprep.subr.mxu0 0.0
    %358 = vmatpush1.msra.mxu0 0.0
    %359 = vmatprep.subr.mxu0 0.0
    %360 = vmatpush1.msra.mxu0 0.0
    %361 = vmatprep.subr.mxu0 0.0
    %362 = vmatpush1.msra.mxu0 0.0
    %363 = vmatprep.subr.mxu0 0.0
    %364 = vmatpush1.msra.mxu0 0.0
    %365 = vmatprep.subr.mxu0 0.0
    %366 = vmatpush1.msra.mxu0 0.0
    %367 = vmatprep.subr.mxu0 0.0
    %368 = vmatpush1.msra.mxu0 0.0
    %369 = vmatprep.mubr.f32.mxu0 0.0
    %v370 = vand.u32 %v106, 4294901760
    %v371 = vsub.f32 %v106, %v370
    %372 = vmatmul.mubr.f32.gmra.mrb[0].mxu0 %v371
    %v373 = vpop.f32.mrb[0].mxu0
    %v374 = vadd.f32 %v288, %v373
    %v375 = vpop.f32.mrb[0].mxu0
    %376 = vmatprep.mubr.f32.mxu0 0.0
    %v377 = vand.u32 %v109, 4294901760
    %v378 = vsub.f32 %v109, %v377
    %379 = vmatmul.mubr.f32.gmra.mrb[0].mxu0 %v378
    %v380 = vpop.f32.mrb[0].mxu0
    %v381 = vadd.f32 %v294, %v380
    %v382 = vpop.f32.mrb[0].mxu0
    %383 = vdwg.mxu0
    %384 = vmatprep.subr.mxu0 0.0
    %v385 = vand.u32 %v97, 4294901760
    %386 = vmatpush1.msra.mxu0 %v385
    %387 = vmatprep.subr.mxu0 0.0
    %v388 = vand.u32 %v98, 4294901760
    %389 = vmatpush1.msra.mxu0 %v388
    %390 = vmatprep.subr.mxu0 0.0
    %v391 = vand.u32 %v99, 4294901760
    %392 = vmatpush1.msra.mxu0 %v391
    %393 = vmatprep.subr.mxu0 0.0
    %v394 = vand.u32 %v100, 4294901760
    %395 = vmatpush1.msra.mxu0 %v394
    %396 = vmatprep.subr.mxu0 0.0
    %397 = vmatpush1.msra.mxu0 0.0
    %398 = vmatprep.subr.mxu0 0.0
    %399 = vmatpush1.msra.mxu0 0.0
    %400 = vmatprep.subr.mxu0 0.0
    %401 = vmatpush1.msra.mxu0 0.0
    %402 = vmatprep.subr.mxu0 0.0
    %403 = vmatpush1.msra.mxu0 0.0
    %404 = vmatprep.subr.mxu0 0.0
    %405 = vmatpush1.msra.mxu0 0.0
    %406 = vmatprep.subr.mxu0 0.0
    %407 = vmatpush1.msra.mxu0 0.0
    %408 = vmatprep.subr.mxu0 0.0
    %409 = vmatpush1.msra.mxu0 0.0
    %410 = vmatprep.subr.mxu0 0.0
    %411 = vmatpush1.msra.mxu0 0.0
    %412 = vmatprep.subr.mxu0 0.0
    %413 = vmatpush1.msra.mxu0 0.0
    %414 = vmatprep.subr.mxu0 0.0
    %415 = vmatpush1.msra.mxu0 0.0
    %416 = vmatprep.subr.mxu0 0.0
    %417 = vmatpush1.msra.mxu0 0.0
    %418 = vmatprep.subr.mxu0 0.0
    %419 = vmatpush1.msra.mxu0 0.0
    %420 = vmatprep.subr.mxu0 0.0
    %421 = vmatpush1.msra.mxu0 0.0
    %422 = vmatprep.subr.mxu0 0.0
    %423 = vmatpush1.msra.mxu0 0.0
    %424 = vmatprep.subr.mxu0 0.0
    %425 = vmatpush1.msra.mxu0 0.0
    %426 = vmatprep.subr.mxu0 0.0
    %427 = vmatpush1.msra.mxu0 0.0
    %428 = vmatprep.subr.mxu0 0.0
    %429 = vmatpush1.msra.mxu0 0.0
    %430 = vmatprep.subr.mxu0 0.0
    %431 = vmatpush1.msra.mxu0 0.0
    %432 = vmatprep.subr.mxu0 0.0
    %433 = vmatpush1.msra.mxu0 0.0
    %434 = vmatprep.subr.mxu0 0.0
    %435 = vmatpush1.msra.mxu0 0.0
    %436 = vmatprep.subr.mxu0 0.0
    %437 = vmatpush1.msra.mxu0 0.0
    %438 = vmatprep.subr.mxu0 0.0
    %439 = vmatpush1.msra.mxu0 0.0
    %440 = vmatprep.subr.mxu0 0.0
    %441 = vmatpush1.msra.mxu0 0.0
    %442 = vmatprep.subr.mxu0 0.0
    %443 = vmatpush1.msra.mxu0 0.0
    %444 = vmatprep.subr.mxu0 0.0
    %445 = vmatpush1.msra.mxu0 0.0
    %446 = vmatprep.subr.mxu0 0.0
    %447 = vmatpush1.msra.mxu0 0.0
    %448 = vmatprep.subr.mxu0 0.0
    %449 = vmatpush1.msra.mxu0 0.0
    %450 = vmatprep.subr.mxu0 0.0
    %451 = vmatpush1.msra.mxu0 0.0
    %452 = vmatprep.mubr.f32.mxu0 0.0
    %v453 = vand.u32 %v106, 4294901760
    %v454 = vsub.f32 %v106, %v453
    %v455 = vand.u32 %v454, 4294901760
    %456 = vmatmul.mubr.f32.gmra.mrb[0].mxu0 %v455
    %v457 = vpop.f32.mrb[0].mxu0
    %v458 = vadd.f32 %v374, %v457
    %v459 = vpop.f32.mrb[0].mxu0
    %460 = vmatprep.mubr.f32.mxu0 0.0
    %v461 = vand.u32 %v109, 4294901760
    %v462 = vsub.f32 %v109, %v461
    %v463 = vand.u32 %v462, 4294901760
    %464 = vmatmul.mubr.f32.gmra.mrb[0].mxu0 %v463
    %v465 = vpop.f32.mrb[0].mxu0
    %v466 = vadd.f32 %v381, %v465
    %v467 = vpop.f32.mrb[0].mxu0
    %468 = vdwg.mxu0
    %469 = vmatprep.subr.mxu0 0.0
    %v470 = vand.u32 %v97, 4294901760
    %v471 = vsub.f32 %v97, %v470
    %v472 = vand.u32 %v471, 4294901760
    %473 = vmatpush1.msra.mxu0 %v472
    %474 = vmatprep.subr.mxu0 0.0
    %v475 = vand.u32 %v98, 4294901760
    %v476 = vsub.f32 %v98, %v475
    %v477 = vand.u32 %v476, 4294901760
    %478 = vmatpush1.msra.mxu0 %v477
    %479 = vmatprep.subr.mxu0 0.0
    %v480 = vand.u32 %v99, 4294901760
    %v481 = vsub.f32 %v99, %v480
    %v482 = vand.u32 %v481, 4294901760
    %483 = vmatpush1.msra.mxu0 %v482
    %484 = vmatprep.subr.mxu0 0.0
    %v485 = vand.u32 %v100, 4294901760
    %v486 = vsub.f32 %v100, %v485
    %v487 = vand.u32 %v486, 4294901760
    %488 = vmatpush1.msra.mxu0 %v487
    %489 = vmatprep.subr.mxu0 0.0
    %490 = vmatpush1.msra.mxu0 0.0
    %491 = vmatprep.subr.mxu0 0.0
    %492 = vmatpush1.msra.mxu0 0.0
    %493 = vmatprep.subr.mxu0 0.0
    %494 = vmatpush1.msra.mxu0 0.0
    %495 = vmatprep.subr.mxu0 0.0
    %496 = vmatpush1.msra.mxu0 0.0
    %497 = vmatprep.subr.mxu0 0.0
    %498 = vmatpush1.msra.mxu0 0.0
    %499 = vmatprep.subr.mxu0 0.0
    %500 = vmatpush1.msra.mxu0 0.0
    %501 = vmatprep.subr.mxu0 0.0
    %502 = vmatpush1.msra.mxu0 0.0
    %503 = vmatprep.subr.mxu0 0.0
    %504 = vmatpush1.msra.mxu0 0.0
    %505 = vmatprep.subr.mxu0 0.0
    %506 = vmatpush1.msra.mxu0 0.0
    %507 = vmatprep.subr.mxu0 0.0
    %508 = vmatpush1.msra.mxu0 0.0
    %509 = vmatprep.subr.mxu0 0.0
    %510 = vmatpush1.msra.mxu0 0.0
    %511 = vmatprep.subr.mxu0 0.0
    %512 = vmatpush1.msra.mxu0 0.0
    %513 = vmatprep.subr.mxu0 0.0
    %514 = vmatpush1.msra.mxu0 0.0
    %515 = vmatprep.subr.mxu0 0.0
    %516 = vmatpush1.msra.mxu0 0.0
    %517 = vmatprep.subr.mxu0 0.0
    %518 = vmatpush1.msra.mxu0 0.0
    %519 = vmatprep.subr.mxu0 0.0
    %520 = vmatpush1.msra.mxu0 0.0
    %521 = vmatprep.subr.mxu0 0.0
    %522 = vmatpush1.msra.mxu0 0.0
    %523 = vmatprep.subr.mxu0 0.0
    %524 = vmatpush1.msra.mxu0 0.0
    %525 = vmatprep.subr.mxu0 0.0
    %526 = vmatpush1.msra.mxu0 0.0
    %527 = vmatprep.subr.mxu0 0.0
    %528 = vmatpush1.msra.mxu0 0.0
    %529 = vmatprep.subr.mxu0 0.0
    %530 = vmatpush1.msra.mxu0 0.0
    %531 = vmatprep.subr.mxu0 0.0
    %532 = vmatpush1.msra.mxu0 0.0
    %533 = vmatprep.subr.mxu0 0.0
    %534 = vmatpush1.msra.mxu0 0.0
    %535 = vmatprep.subr.mxu0 0.0
    %536 = vmatpush1.msra.mxu0 0.0
    %537 = vmatprep.subr.mxu0 0.0
    %538 = vmatpush1.msra.mxu0 0.0
    %539 = vmatprep.subr.mxu0 0.0
    %540 = vmatpush1.msra.mxu0 0.0
    %541 = vmatprep.subr.mxu0 0.0
    %542 = vmatpush1.msra.mxu0 0.0
    %543 = vmatprep.subr.mxu0 0.0
    %544 = vmatpush1.msra.mxu0 0.0
    %545 = vmatprep.mubr.f32.mxu0 0.0
    %v546 = vand.u32 %v106, 4294901760
    %547 = vmatmul.mubr.f32.gmra.mrb[0].mxu0 %v546
    %v548 = vpop.f32.mrb[0].mxu0
    %v549 = vadd.f32 %v458, %v548
    %v550 = vpop.f32.mrb[0].mxu0
    %551 = vmatprep.mubr.f32.mxu0 0.0
    %v552 = vand.u32 %v109, 4294901760
    %553 = vmatmul.mubr.f32.gmra.mrb[0].mxu0 %v552
    %v554 = vpop.f32.mrb[0].mxu0
    %v555 = vadd.f32 %v466, %v554
    %v556 = vpop.f32.mrb[0].mxu0
    %557 = vdwg.mxu0
    %558 = vmatprep.subr.mxu0 0.0
    %v559 = vand.u32 %v97, 4294901760
    %560 = vmatpush1.msra.mxu0 %v559
    %561 = vmatprep.subr.mxu0 0.0
    %v562 = vand.u32 %v98, 4294901760
    %563 = vmatpush1.msra.mxu0 %v562
    %564 = vmatprep.subr.mxu0 0.0
    %v565 = vand.u32 %v99, 4294901760
    %566 = vmatpush1.msra.mxu0 %v565
    %567 = vmatprep.subr.mxu0 0.0
    %v568 = vand.u32 %v100, 4294901760
    %569 = vmatpush1.msra.mxu0 %v568
    %570 = vmatprep.subr.mxu0 0.0
    %571 = vmatpush1.msra.mxu0 0.0
    %572 = vmatprep.subr.mxu0 0.0
    %573 = vmatpush1.msra.mxu0 0.0
    %574 = vmatprep.subr.mxu0 0.0
    %575 = vmatpush1.msra.mxu0 0.0
    %576 = vmatprep.subr.mxu0 0.0
    %577 = vmatpush1.msra.mxu0 0.0
    %578 = vmatprep.subr.mxu0 0.0
    %579 = vmatpush1.msra.mxu0 0.0
    %580 = vmatprep.subr.mxu0 0.0
    %581 = vmatpush1.msra.mxu0 0.0
    %582 = vmatprep.subr.mxu0 0.0
    %583 = vmatpush1.msra.mxu0 0.0
    %584 = vmatprep.subr.mxu0 0.0
    %585 = vmatpush1.msra.mxu0 0.0
    %586 = vmatprep.subr.mxu0 0.0
    %587 = vmatpush1.msra.mxu0 0.0
    %588 = vmatprep.subr.mxu0 0.0
    %589 = vmatpush1.msra.mxu0 0.0
    %590 = vmatprep.subr.mxu0 0.0
    %591 = vmatpush1.msra.mxu0 0.0
    %592 = vmatprep.subr.mxu0 0.0
    %593 = vmatpush1.msra.mxu0 0.0
    %594 = vmatprep.subr.mxu0 0.0
    %595 = vmatpush1.msra.mxu0 0.0
    %596 = vmatprep.subr.mxu0 0.0
    %597 = vmatpush1.msra.mxu0 0.0
    %598 = vmatprep.subr.mxu0 0.0
    %599 = vmatpush1.msra.mxu0 0.0
    %600 = vmatprep.subr.mxu0 0.0
    %601 = vmatpush1.msra.mxu0 0.0
    %602 = vmatprep.subr.mxu0 0.0
    %603 = vmatpush1.msra.mxu0 0.0
    %604 = vmatprep.subr.mxu0 0.0
    %605 = vmatpush1.msra.mxu0 0.0
    %606 = vmatprep.subr.mxu0 0.0
    %607 = vmatpush1.msra.mxu0 0.0
    %608 = vmatprep.subr.mxu0 0.0
    %609 = vmatpush1.msra.mxu0 0.0
    %610 = vmatprep.subr.mxu0 0.0
    %611 = vmatpush1.msra.mxu0 0.0
    %612 = vmatprep.subr.mxu0 0.0
    %613 = vmatpush1.msra.mxu0 0.0
    %614 = vmatprep.subr.mxu0 0.0
    %615 = vmatpush1.msra.mxu0 0.0
    %616 = vmatprep.subr.mxu0 0.0
    %617 = vmatpush1.msra.mxu0 0.0
    %618 = vmatprep.subr.mxu0 0.0
    %619 = vmatpush1.msra.mxu0 0.0
    %620 = vmatprep.subr.mxu0 0.0
    %621 = vmatpush1.msra.mxu0 0.0
    %622 = vmatprep.subr.mxu0 0.0
    %623 = vmatpush1.msra.mxu0 0.0
    %624 = vmatprep.subr.mxu0 0.0
    %625 = vmatpush1.msra.mxu0 0.0
    %626 = vmatprep.mubr.f32.mxu0 0.0
    %v627 = vand.u32 %v106, 4294901760
    %628 = vmatmul.mubr.f32.gmra.mrb[0].mxu0 %v627
    %v629 = vpop.f32.mrb[0].mxu0
    %v630 = vadd.f32 %v549, %v629
    %v631 = vpop.f32.mrb[0].mxu0
    %632 = vmatprep.mubr.f32.mxu0 0.0
    %v633 = vand.u32 %v109, 4294901760
    %634 = vmatmul.mubr.f32.gmra.mrb[0].mxu0 %v633
    %v635 = vpop.f32.mrb[0].mxu0
    %v636 = vadd.f32 %v555, %v635
    %v637 = vpop.f32.mrb[0].mxu0
    %638 = vdwg.mxu0
    %641 = vrot.lane.b32.xlu0 %v630, 96
    %v642 = vpop.permute.xlu0 %641
    %643 = vrot.lane.b32.xlu0 %v636, 96
    %v644 = vpop.permute.xlu0 %643
    %vm645 = vcmask 64512
    %v646 = vsel %vm645, %v630, 0
    %v648 = vsel %vm645, %v636, 0
    %v650 = vsel %vm645, %v642, 0
    %v652 = vsel %vm645, %v644, 0
    %654 = vmatprep.subr.mxu0 0.0
    %v655 = vand.u32 %v650, 4294901760
    %656 = vmatpush1.xpose.msra.mxu0 %v655
    %657 = vmatprep.subr.mxu0 0.0
    %v658 = vand.u32 %v652, 4294901760
    %659 = vmatpush1.xpose.msra.mxu0 %v658
    %660 = vmatprep.subr.mxu0 0.0
    %661 = vmatpush1.xpose.msra.mxu0 0.0
    %662 = vmatprep.subr.mxu0 0.0
    %663 = vmatpush1.xpose.msra.mxu0 0.0
    %664 = vmatprep.subr.mxu0 0.0
    %665 = vmatpush1.xpose.msra.mxu0 0.0
    %666 = vmatprep.subr.mxu0 0.0
    %667 = vmatpush1.xpose.msra.mxu0 0.0
    %668 = vmatprep.subr.mxu0 0.0
    %669 = vmatpush1.xpose.msra.mxu0 0.0
    %670 = vmatprep.subr.mxu0 0.0
    %671 = vmatpush1.xpose.msra.mxu0 0.0
    %672 = vmatprep.subr.mxu0 0.0
    %673 = vmatpush1.xpose.msra.mxu0 0.0
    %674 = vmatprep.subr.mxu0 0.0
    %675 = vmatpush1.xpose.msra.mxu0 0.0
    %676 = vmatprep.subr.mxu0 0.0
    %677 = vmatpush1.xpose.msra.mxu0 0.0
    %678 = vmatprep.subr.mxu0 0.0
    %679 = vmatpush1.xpose.msra.mxu0 0.0
    %680 = vmatprep.subr.mxu0 0.0
    %681 = vmatpush1.xpose.msra.mxu0 0.0
    %682 = vmatprep.subr.mxu0 0.0
    %683 = vmatpush1.xpose.msra.mxu0 0.0
    %684 = vmatprep.subr.mxu0 0.0
    %685 = vmatpush1.xpose.msra.mxu0 0.0
    %686 = vmatprep.subr.mxu0 0.0
    %687 = vmatpush1.xpose.msra.mxu0 0.0
    %688 = vmatprep.subr.mxu0 0.0
    %689 = vmatpush1.xpose.msra.mxu0 0.0
    %690 = vmatprep.subr.mxu0 0.0
    %691 = vmatpush1.xpose.msra.mxu0 0.0
    %692 = vmatprep.subr.mxu0 0.0
    %693 = vmatpush1.xpose.msra.mxu0 0.0
    %694 = vmatprep.subr.mxu0 0.0
    %695 = vmatpush1.xpose.msra.mxu0 0.0
    %696 = vmatprep.subr.mxu0 0.0
    %697 = vmatpush1.xpose.msra.mxu0 0.0
    %698 = vmatprep.subr.mxu0 0.0
    %699 = vmatpush1.xpose.msra.mxu0 0.0
    %700 = vmatprep.subr.mxu0 0.0
    %701 = vmatpush1.xpose.msra.mxu0 0.0
    %702 = vmatprep.subr.mxu0 0.0
    %703 = vmatpush1.xpose.msra.mxu0 0.0
    %704 = vmatprep.subr.mxu0 0.0
    %705 = vmatpush1.xpose.msra.mxu0 0.0
    %706 = vmatprep.subr.mxu0 0.0
    %707 = vmatpush1.xpose.msra.mxu0 0.0
    %708 = vmatprep.subr.mxu0 0.0
    %709 = vmatpush1.xpose.msra.mxu0 0.0
    %710 = vmatprep.subr.mxu0 0.0
    %711 = vmatpush1.xpose.msra.mxu0 0.0
    %712 = vmatprep.subr.mxu0 0.0
    %713 = vmatpush1.xpose.msra.mxu0 0.0
    %714 = vmatprep.subr.mxu0 0.0
    %715 = vmatpush1.xpose.msra.mxu0 0.0
    %716 = vmatprep.subr.mxu0 0.0
    %717 = vmatpush1.xpose.msra.mxu0 0.0
    %718 = vmatprep.subr.mxu0 0.0
    %719 = vmatpush1.xpose.msra.mxu0 0.0
    %720 = vmatprep.mubr.f32.mxu0 0.0
    %v721 = vand.u32 %v646, 4294901760
    %v722 = vsub.f32 %v646, %v721
    %v723 = vand.u32 %v722, 4294901760
    %v724 = vsub.f32 %v722, %v723
    %v725 = vand.u32 %v724, 4294901760
    %726 = vmatmul.mubr.f32.gmra.mrb[0].mxu0 %v725
    %v727 = vpop.f32.mrb[0].mxu0
    %v728 = vadd.f32 %v55, %v727
    %v729 = vpop.f32.mrb[0].mxu0
    %730 = vmatprep.mubr.f32.mxu0 0.0
    %v731 = vand.u32 %v648, 4294901760
    %v732 = vsub.f32 %v648, %v731
    %v733 = vand.u32 %v732, 4294901760
    %v734 = vsub.f32 %v732, %v733
    %v735 = vand.u32 %v734, 4294901760
    %736 = vmatmul.mubr.f32.gmra.mrb[0].mxu0 %v735
    %v737 = vpop.f32.mrb[0].mxu0
    %v738 = vadd.f32 %v56, %v737
    %v739 = vpop.f32.mrb[0].mxu0
    %740 = vdwg.mxu0
    %741 = vmatprep.subr.mxu0 0.0
    %v742 = vand.u32 %v650, 4294901760
    %v743 = vsub.f32 %v650, %v742
    %v744 = vand.u32 %v743, 4294901760
    %v745 = vsub.f32 %v743, %v744
    %v746 = vand.u32 %v745, 4294901760
    %747 = vmatpush1.xpose.msra.mxu0 %v746
    %748 = vmatprep.subr.mxu0 0.0
    %v749 = vand.u32 %v652, 4294901760
    %v750 = vsub.f32 %v652, %v749
    %v751 = vand.u32 %v750, 4294901760
    %v752 = vsub.f32 %v750, %v751
    %v753 = vand.u32 %v752, 4294901760
    %754 = vmatpush1.xpose.msra.mxu0 %v753
    %755 = vmatprep.subr.mxu0 0.0
    %756 = vmatpush1.xpose.msra.mxu0 0.0
    %757 = vmatprep.subr.mxu0 0.0
    %758 = vmatpush1.xpose.msra.mxu0 0.0
    %759 = vmatprep.subr.mxu0 0.0
    %760 = vmatpush1.xpose.msra.mxu0 0.0
    %761 = vmatprep.subr.mxu0 0.0
    %762 = vmatpush1.xpose.msra.mxu0 0.0
    %763 = vmatprep.subr.mxu0 0.0
    %764 = vmatpush1.xpose.msra.mxu0 0.0
    %765 = vmatprep.subr.mxu0 0.0
    %766 = vmatpush1.xpose.msra.mxu0 0.0
    %767 = vmatprep.subr.mxu0 0.0
    %768 = vmatpush1.xpose.msra.mxu0 0.0
    %769 = vmatprep.subr.mxu0 0.0
    %770 = vmatpush1.xpose.msra.mxu0 0.0
    %771 = vmatprep.subr.mxu0 0.0
    %772 = vmatpush1.xpose.msra.mxu0 0.0
    %773 = vmatprep.subr.mxu0 0.0
    %774 = vmatpush1.xpose.msra.mxu0 0.0
    %775 = vmatprep.subr.mxu0 0.0
    %776 = vmatpush1.xpose.msra.mxu0 0.0
    %777 = vmatprep.subr.mxu0 0.0
    %778 = vmatpush1.xpose.msra.mxu0 0.0
    %779 = vmatprep.subr.mxu0 0.0
    %780 = vmatpush1.xpose.msra.mxu0 0.0
    %781 = vmatprep.subr.mxu0 0.0
    %782 = vmatpush1.xpose.msra.mxu0 0.0
    %783 = vmatprep.subr.mxu0 0.0
    %784 = vmatpush1.xpose.msra.mxu0 0.0
    %785 = vmatprep.subr.mxu0 0.0
    %786 = vmatpush1.xpose.msra.mxu0 0.0
    %787 = vmatprep.subr.mxu0 0.0
    %788 = vmatpush1.xpose.msra.mxu0 0.0
    %789 = vmatprep.subr.mxu0 0.0
    %790 = vmatpush1.xpose.msra.mxu0 0.0
    %791 = vmatprep.subr.mxu0 0.0
    %792 = vmatpush1.xpose.msra.mxu0 0.0
    %793 = vmatprep.subr.mxu0 0.0
    %794 = vmatpush1.xpose.msra.mxu0 0.0
    %795 = vmatprep.subr.mxu0 0.0
    %796 = vmatpush1.xpose.msra.mxu0 0.0
    %797 = vmatprep.subr.mxu0 0.0
    %798 = vmatpush1.xpose.msra.mxu0 0.0
    %799 = vmatprep.subr.mxu0 0.0
    %800 = vmatpush1.xpose.msra.mxu0 0.0
    %801 = vmatprep.subr.mxu0 0.0
    %802 = vmatpush1.xpose.msra.mxu0 0.0
    %803 = vmatprep.subr.mxu0 0.0
    %804 = vmatpush1.xpose.msra.mxu0 0.0
    %805 = vmatprep.subr.mxu0 0.0
    %806 = vmatpush1.xpose.msra.mxu0 0.0
    %807 = vmatprep.subr.mxu0 0.0
    %808 = vmatpush1.xpose.msra.mxu0 0.0
    %809 = vmatprep.subr.mxu0 0.0
    %810 = vmatpush1.xpose.msra.mxu0 0.0
    %811 = vmatprep.subr.mxu0 0.0
    %812 = vmatpush1.xpose.msra.mxu0 0.0
    %813 = vmatprep.subr.mxu0 0.0
    %814 = vmatpush1.xpose.msra.mxu0 0.0
    %815 = vmatprep.mubr.f32.mxu0 0.0
    %v816 = vand.u32 %v646, 4294901760
    %817 = vmatmul.mubr.f32.gmra.mrb[0].mxu0 %v816
    %v818 = vpop.f32.mrb[0].mxu0
    %v819 = vadd.f32 %v728, %v818
    %v820 = vpop.f32.mrb[0].mxu0
    %821 = vmatprep.mubr.f32.mxu0 0.0
    %v822 = vand.u32 %v648, 4294901760
    %823 = vmatmul.mubr.f32.gmra.mrb[0].mxu0 %v822
    %v824 = vpop.f32.mrb[0].mxu0
    %v825 = vadd.f32 %v738, %v824
    %v826 = vpop.f32.mrb[0].mxu0
    %827 = vdwg.mxu0
    %828 = vmatprep.subr.mxu0 0.0
    %v829 = vand.u32 %v650, 4294901760
    %v830 = vsub.f32 %v650, %v829
    %831 = vmatpush1.xpose.msra.mxu0 %v830
    %832 = vmatprep.subr.mxu0 0.0
    %v833 = vand.u32 %v652, 4294901760
    %v834 = vsub.f32 %v652, %v833
    %835 = vmatpush1.xpose.msra.mxu0 %v834
    %836 = vmatprep.subr.mxu0 0.0
    %837 = vmatpush1.xpose.msra.mxu0 0.0
    %838 = vmatprep.subr.mxu0 0.0
    %839 = vmatpush1.xpose.msra.mxu0 0.0
    %840 = vmatprep.subr.mxu0 0.0
    %841 = vmatpush1.xpose.msra.mxu0 0.0
    %842 = vmatprep.subr.mxu0 0.0
    %843 = vmatpush1.xpose.msra.mxu0 0.0
    %844 = vmatprep.subr.mxu0 0.0
    %845 = vmatpush1.xpose.msra.mxu0 0.0
    %846 = vmatprep.subr.mxu0 0.0
    %847 = vmatpush1.xpose.msra.mxu0 0.0
    %848 = vmatprep.subr.mxu0 0.0
    %849 = vmatpush1.xpose.msra.mxu0 0.0
    %850 = vmatprep.subr.mxu0 0.0
    %851 = vmatpush1.xpose.msra.mxu0 0.0
    %852 = vmatprep.subr.mxu0 0.0
    %853 = vmatpush1.xpose.msra.mxu0 0.0
    %854 = vmatprep.subr.mxu0 0.0
    %855 = vmatpush1.xpose.msra.mxu0 0.0
    %856 = vmatprep.subr.mxu0 0.0
    %857 = vmatpush1.xpose.msra.mxu0 0.0
    %858 = vmatprep.subr.mxu0 0.0
    %859 = vmatpush1.xpose.msra.mxu0 0.0
    %860 = vmatprep.subr.mxu0 0.0
    %861 = vmatpush1.xpose.msra.mxu0 0.0
    %862 = vmatprep.subr.mxu0 0.0
    %863 = vmatpush1.xpose.msra.mxu0 0.0
    %864 = vmatprep.subr.mxu0 0.0
    %865 = vmatpush1.xpose.msra.mxu0 0.0
    %866 = vmatprep.subr.mxu0 0.0
    %867 = vmatpush1.xpose.msra.mxu0 0.0
    %868 = vmatprep.subr.mxu0 0.0
    %869 = vmatpush1.xpose.msra.mxu0 0.0
    %870 = vmatprep.subr.mxu0 0.0
    %871 = vmatpush1.xpose.msra.mxu0 0.0
    %872 = vmatprep.subr.mxu0 0.0
    %873 = vmatpush1.xpose.msra.mxu0 0.0
    %874 = vmatprep.subr.mxu0 0.0
    %875 = vmatpush1.xpose.msra.mxu0 0.0
    %876 = vmatprep.subr.mxu0 0.0
    %877 = vmatpush1.xpose.msra.mxu0 0.0
    %878 = vmatprep.subr.mxu0 0.0
    %879 = vmatpush1.xpose.msra.mxu0 0.0
    %880 = vmatprep.subr.mxu0 0.0
    %881 = vmatpush1.xpose.msra.mxu0 0.0
    %882 = vmatprep.subr.mxu0 0.0
    %883 = vmatpush1.xpose.msra.mxu0 0.0
    %884 = vmatprep.subr.mxu0 0.0
    %885 = vmatpush1.xpose.msra.mxu0 0.0
    %886 = vmatprep.subr.mxu0 0.0
    %887 = vmatpush1.xpose.msra.mxu0 0.0
    %888 = vmatprep.subr.mxu0 0.0
    %889 = vmatpush1.xpose.msra.mxu0 0.0
    %890 = vmatprep.subr.mxu0 0.0
    %891 = vmatpush1.xpose.msra.mxu0 0.0
    %892 = vmatprep.subr.mxu0 0.0
    %893 = vmatpush1.xpose.msra.mxu0 0.0
    %894 = vmatprep.subr.mxu0 0.0
    %895 = vmatpush1.xpose.msra.mxu0 0.0
    %896 = vmatprep.mubr.f32.mxu0 0.0
    %v897 = vand.u32 %v646, 4294901760
    %v898 = vsub.f32 %v646, %v897
    %899 = vmatmul.mubr.f32.gmra.mrb[0].mxu0 %v898
    %v900 = vpop.f32.mrb[0].mxu0
    %v901 = vadd.f32 %v819, %v900
    %v902 = vpop.f32.mrb[0].mxu0
    %903 = vmatprep.mubr.f32.mxu0 0.0
    %v904 = vand.u32 %v648, 4294901760
    %v905 = vsub.f32 %v648, %v904
    %906 = vmatmul.mubr.f32.gmra.mrb[0].mxu0 %v905
    %v907 = vpop.f32.mrb[0].mxu0
    %v908 = vadd.f32 %v825, %v907
    %v909 = vpop.f32.mrb[0].mxu0
    %910 = vdwg.mxu0
    %911 = vmatprep.subr.mxu0 0.0
    %v912 = vand.u32 %v650, 4294901760
    %913 = vmatpush1.xpose.msra.mxu0 %v912
    %914 = vmatprep.subr.mxu0 0.0
    %v915 = vand.u32 %v652, 4294901760
    %916 = vmatpush1.xpose.msra.mxu0 %v915
    %917 = vmatprep.subr.mxu0 0.0
    %918 = vmatpush1.xpose.msra.mxu0 0.0
    %919 = vmatprep.subr.mxu0 0.0
    %920 = vmatpush1.xpose.msra.mxu0 0.0
    %921 = vmatprep.subr.mxu0 0.0
    %922 = vmatpush1.xpose.msra.mxu0 0.0
    %923 = vmatprep.subr.mxu0 0.0
    %924 = vmatpush1.xpose.msra.mxu0 0.0
    %925 = vmatprep.subr.mxu0 0.0
    %926 = vmatpush1.xpose.msra.mxu0 0.0
    %927 = vmatprep.subr.mxu0 0.0
    %928 = vmatpush1.xpose.msra.mxu0 0.0
    %929 = vmatprep.subr.mxu0 0.0
    %930 = vmatpush1.xpose.msra.mxu0 0.0
    %931 = vmatprep.subr.mxu0 0.0
    %932 = vmatpush1.xpose.msra.mxu0 0.0
    %933 = vmatprep.subr.mxu0 0.0
    %934 = vmatpush1.xpose.msra.mxu0 0.0
    %935 = vmatprep.subr.mxu0 0.0
    %936 = vmatpush1.xpose.msra.mxu0 0.0
    %937 = vmatprep.subr.mxu0 0.0
    %938 = vmatpush1.xpose.msra.mxu0 0.0
    %939 = vmatprep.subr.mxu0 0.0
    %940 = vmatpush1.xpose.msra.mxu0 0.0
    %941 = vmatprep.subr.mxu0 0.0
    %942 = vmatpush1.xpose.msra.mxu0 0.0
    %943 = vmatprep.subr.mxu0 0.0
    %944 = vmatpush1.xpose.msra.mxu0 0.0
    %945 = vmatprep.subr.mxu0 0.0
    %946 = vmatpush1.xpose.msra.mxu0 0.0
    %947 = vmatprep.subr.mxu0 0.0
    %948 = vmatpush1.xpose.msra.mxu0 0.0
    %949 = vmatprep.subr.mxu0 0.0
    %950 = vmatpush1.xpose.msra.mxu0 0.0
    %951 = vmatprep.subr.mxu0 0.0
    %952 = vmatpush1.xpose.msra.mxu0 0.0
    %953 = vmatprep.subr.mxu0 0.0
    %954 = vmatpush1.xpose.msra.mxu0 0.0
    %955 = vmatprep.subr.mxu0 0.0
    %956 = vmatpush1.xpose.msra.mxu0 0.0
    %957 = vmatprep.subr.mxu0 0.0
    %958 = vmatpush1.xpose.msra.mxu0 0.0
    %959 = vmatprep.subr.mxu0 0.0
    %960 = vmatpush1.xpose.msra.mxu0 0.0
    %961 = vmatprep.subr.mxu0 0.0
    %962 = vmatpush1.xpose.msra.mxu0 0.0
    %963 = vmatprep.subr.mxu0 0.0
    %964 = vmatpush1.xpose.msra.mxu0 0.0
    %965 = vmatprep.subr.mxu0 0.0
    %966 = vmatpush1.xpose.msra.mxu0 0.0
    %967 = vmatprep.subr.mxu0 0.0
    %968 = vmatpush1.xpose.msra.mxu0 0.0
    %969 = vmatprep.subr.mxu0 0.0
    %970 = vmatpush1.xpose.msra.mxu0 0.0
    %971 = vmatprep.subr.mxu0 0.0
    %972 = vmatpush1.xpose.msra.mxu0 0.0
    %973 = vmatprep.subr.mxu0 0.0
    %974 = vmatpush1.xpose.msra.mxu0 0.0
    %975 = vmatprep.subr.mxu0 0.0
    %976 = vmatpush1.xpose.msra.mxu0 0.0
    %977 = vmatprep.mubr.f32.mxu0 0.0
    %v978 = vand.u32 %v646, 4294901760
    %v979 = vsub.f32 %v646, %v978
    %v980 = vand.u32 %v979, 4294901760
    %981 = vmatmul.mubr.f32.gmra.mrb[0].mxu0 %v980
    %v982 = vpop.f32.mrb[0].mxu0
    %v983 = vadd.f32 %v901, %v982
    %v984 = vpop.f32.mrb[0].mxu0
    %985 = vmatprep.mubr.f32.mxu0 0.0
    %v986 = vand.u32 %v648, 4294901760
    %v987 = vsub.f32 %v648, %v986
    %v988 = vand.u32 %v987, 4294901760
    %989 = vmatmul.mubr.f32.gmra.mrb[0].mxu0 %v988
    %v990 = vpop.f32.mrb[0].mxu0
    %v991 = vadd.f32 %v908, %v990
    %v992 = vpop.f32.mrb[0].mxu0
    %993 = vdwg.mxu0
    %994 = vmatprep.subr.mxu0 0.0
    %v995 = vand.u32 %v650, 4294901760
    %v996 = vsub.f32 %v650, %v995
    %v997 = vand.u32 %v996, 4294901760
    %998 = vmatpush1.xpose.msra.mxu0 %v997
    %999 = vmatprep.subr.mxu0 0.0
    %v1000 = vand.u32 %v652, 4294901760
    %v1001 = vsub.f32 %v652, %v1000
    %v1002 = vand.u32 %v1001, 4294901760
    %1003 = vmatpush1.xpose.msra.mxu0 %v1002
    %1004 = vmatprep.subr.mxu0 0.0
    %1005 = vmatpush1.xpose.msra.mxu0 0.0
    %1006 = vmatprep.subr.mxu0 0.0
    %1007 = vmatpush1.xpose.msra.mxu0 0.0
    %1008 = vmatprep.subr.mxu0 0.0
    %1009 = vmatpush1.xpose.msra.mxu0 0.0
    %1010 = vmatprep.subr.mxu0 0.0
    %1011 = vmatpush1.xpose.msra.mxu0 0.0
    %1012 = vmatprep.subr.mxu0 0.0
    %1013 = vmatpush1.xpose.msra.mxu0 0.0
    %1014 = vmatprep.subr.mxu0 0.0
    %1015 = vmatpush1.xpose.msra.mxu0 0.0
    %1016 = vmatprep.subr.mxu0 0.0
    %1017 = vmatpush1.xpose.msra.mxu0 0.0
    %1018 = vmatprep.subr.mxu0 0.0
    %1019 = vmatpush1.xpose.msra.mxu0 0.0
    %1020 = vmatprep.subr.mxu0 0.0
    %1021 = vmatpush1.xpose.msra.mxu0 0.0
    %1022 = vmatprep.subr.mxu0 0.0
    %1023 = vmatpush1.xpose.msra.mxu0 0.0
    %1024 = vmatprep.subr.mxu0 0.0
    %1025 = vmatpush1.xpose.msra.mxu0 0.0
    %1026 = vmatprep.subr.mxu0 0.0
    %1027 = vmatpush1.xpose.msra.mxu0 0.0
    %1028 = vmatprep.subr.mxu0 0.0
    %1029 = vmatpush1.xpose.msra.mxu0 0.0
    %1030 = vmatprep.subr.mxu0 0.0
    %1031 = vmatpush1.xpose.msra.mxu0 0.0
    %1032 = vmatprep.subr.mxu0 0.0
    %1033 = vmatpush1.xpose.msra.mxu0 0.0
    %1034 = vmatprep.subr.mxu0 0.0
    %1035 = vmatpush1.xpose.msra.mxu0 0.0
    %1036 = vmatprep.subr.mxu0 0.0
    %1037 = vmatpush1.xpose.msra.mxu0 0.0
    %1038 = vmatprep.subr.mxu0 0.0
    %1039 = vmatpush1.xpose.msra.mxu0 0.0
    %1040 = vmatprep.subr.mxu0 0.0
    %1041 = vmatpush1.xpose.msra.mxu0 0.0
    %1042 = vmatprep.subr.mxu0 0.0
    %1043 = vmatpush1.xpose.msra.mxu0 0.0
    %1044 = vmatprep.subr.mxu0 0.0
    %1045 = vmatpush1.xpose.msra.mxu0 0.0
    %1046 = vmatprep.subr.mxu0 0.0
    %1047 = vmatpush1.xpose.msra.mxu0 0.0
    %1048 = vmatprep.subr.mxu0 0.0
    %1049 = vmatpush1.xpose.msra.mxu0 0.0
    %1050 = vmatprep.subr.mxu0 0.0
    %1051 = vmatpush1.xpose.msra.mxu0 0.0
    %1052 = vmatprep.subr.mxu0 0.0
    %1053 = vmatpush1.xpose.msra.mxu0 0.0
    %1054 = vmatprep.subr.mxu0 0.0
    %1055 = vmatpush1.xpose.msra.mxu0 0.0
    %1056 = vmatprep.subr.mxu0 0.0
    %1057 = vmatpush1.xpose.msra.mxu0 0.0
    %1058 = vmatprep.subr.mxu0 0.0
    %1059 = vmatpush1.xpose.msra.mxu0 0.0
    %1060 = vmatprep.subr.mxu0 0.0
    %1061 = vmatpush1.xpose.msra.mxu0 0.0
    %1062 = vmatprep.subr.mxu0 0.0
    %1063 = vmatpush1.xpose.msra.mxu0 0.0
    %1064 = vmatprep.mubr.f32.mxu0 0.0
    %v1065 = vand.u32 %v646, 4294901760
    %1066 = vmatmul.mubr.f32.gmra.mrb[0].mxu0 %v1065
    %v1067 = vpop.f32.mrb[0].mxu0
    %v1068 = vadd.f32 %v983, %v1067
    %v1069 = vpop.f32.mrb[0].mxu0
    %1070 = vmatprep.mubr.f32.mxu0 0.0
    %v1071 = vand.u32 %v648, 4294901760
    %1072 = vmatmul.mubr.f32.gmra.mrb[0].mxu0 %v1071
    %v1073 = vpop.f32.mrb[0].mxu0
    %v1074 = vadd.f32 %v991, %v1073
    %v1075 = vpop.f32.mrb[0].mxu0
    %1076 = vdwg.mxu0
    %1077 = vmatprep.subr.mxu0 0.0
    %v1078 = vand.u32 %v650, 4294901760
    %1079 = vmatpush1.xpose.msra.mxu0 %v1078
    %1080 = vmatprep.subr.mxu0 0.0
    %v1081 = vand.u32 %v652, 4294901760
    %1082 = vmatpush1.xpose.msra.mxu0 %v1081
    %1083 = vmatprep.subr.mxu0 0.0
    %1084 = vmatpush1.xpose.msra.mxu0 0.0
    %1085 = vmatprep.subr.mxu0 0.0
    %1086 = vmatpush1.xpose.msra.mxu0 0.0
    %1087 = vmatprep.subr.mxu0 0.0
    %1088 = vmatpush1.xpose.msra.mxu0 0.0
    %1089 = vmatprep.subr.mxu0 0.0
    %1090 = vmatpush1.xpose.msra.mxu0 0.0
    %1091 = vmatprep.subr.mxu0 0.0
    %1092 = vmatpush1.xpose.msra.mxu0 0.0
    %1093 = vmatprep.subr.mxu0 0.0
    %1094 = vmatpush1.xpose.msra.mxu0 0.0
    %1095 = vmatprep.subr.mxu0 0.0
    %1096 = vmatpush1.xpose.msra.mxu0 0.0
    %1097 = vmatprep.subr.mxu0 0.0
    %1098 = vmatpush1.xpose.msra.mxu0 0.0
    %1099 = vmatprep.subr.mxu0 0.0
    %1100 = vmatpush1.xpose.msra.mxu0 0.0
    %1101 = vmatprep.subr.mxu0 0.0
    %1102 = vmatpush1.xpose.msra.mxu0 0.0
    %1103 = vmatprep.subr.mxu0 0.0
    %1104 = vmatpush1.xpose.msra.mxu0 0.0
    %1105 = vmatprep.subr.mxu0 0.0
    %1106 = vmatpush1.xpose.msra.mxu0 0.0
    %1107 = vmatprep.subr.mxu0 0.0
    %1108 = vmatpush1.xpose.msra.mxu0 0.0
    %1109 = vmatprep.subr.mxu0 0.0
    %1110 = vmatpush1.xpose.msra.mxu0 0.0
    %1111 = vmatprep.subr.mxu0 0.0
    %1112 = vmatpush1.xpose.msra.mxu0 0.0
    %1113 = vmatprep.subr.mxu0 0.0
    %1114 = vmatpush1.xpose.msra.mxu0 0.0
    %1115 = vmatprep.subr.mxu0 0.0
    %1116 = vmatpush1.xpose.msra.mxu0 0.0
    %1117 = vmatprep.subr.mxu0 0.0
    %1118 = vmatpush1.xpose.msra.mxu0 0.0
    %1119 = vmatprep.subr.mxu0 0.0
    %1120 = vmatpush1.xpose.msra.mxu0 0.0
    %1121 = vmatprep.subr.mxu0 0.0
    %1122 = vmatpush1.xpose.msra.mxu0 0.0
    %1123 = vmatprep.subr.mxu0 0.0
    %1124 = vmatpush1.xpose.msra.mxu0 0.0
    %1125 = vmatprep.subr.mxu0 0.0
    %1126 = vmatpush1.xpose.msra.mxu0 0.0
    %1127 = vmatprep.subr.mxu0 0.0
    %1128 = vmatpush1.xpose.msra.mxu0 0.0
    %1129 = vmatprep.subr.mxu0 0.0
    %1130 = vmatpush1.xpose.msra.mxu0 0.0
    %1131 = vmatprep.subr.mxu0 0.0
    %1132 = vmatpush1.xpose.msra.mxu0 0.0
    %1133 = vmatprep.subr.mxu0 0.0
    %1134 = vmatpush1.xpose.msra.mxu0 0.0
    %1135 = vmatprep.subr.mxu0 0.0
    %1136 = vmatpush1.xpose.msra.mxu0 0.0
    %1137 = vmatprep.subr.mxu0 0.0
    %1138 = vmatpush1.xpose.msra.mxu0 0.0
    %1139 = vmatprep.subr.mxu0 0.0
    %1140 = vmatpush1.xpose.msra.mxu0 0.0
    %1141 = vmatprep.subr.mxu0 0.0
    %1142 = vmatpush1.xpose.msra.mxu0 0.0
    %1143 = vmatprep.mubr.f32.mxu0 0.0
    %v1144 = vand.u32 %v646, 4294901760
    %1145 = vmatmul.mubr.f32.gmra.mrb[0].mxu0 %v1144
    %v1146 = vpop.f32.mrb[0].mxu0
    %v1147 = vadd.f32 %v1068, %v1146
    %v1148 = vpop.f32.mrb[0].mxu0
    %1149 = vmatprep.mubr.f32.mxu0 0.0
    %v1150 = vand.u32 %v648, 4294901760
    %1151 = vmatmul.mubr.f32.gmra.mrb[0].mxu0 %v1150
    %v1152 = vpop.f32.mrb[0].mxu0
    %v1153 = vadd.f32 %v1074, %v1152
    %v1154 = vpop.f32.mrb[0].mxu0
    %1155 = vdwg.mxu0
    %vm1156 = vcmask 130048
    %v1157 = vsel %vm1156, %v1147, -inf
    %1158 = vmax.xlane.f32.xlu0 %v1157
    %v1159 = vpop.xlane.xlu0 %1158
    %v1160 = vsel %vm1156, %v1153, -inf
    %1161 = vmax.xlane.f32.xlu0 %v1160
    %v1162 = vpop.xlane.xlu0 %1161
    %v1163 = vsub.f32 %v1147, %v1159
    %v1164 = vsub.f32 %v1153, %v1162
    %v1165 = vmul.f32 %v1163, 1.442695
    %v1166 = vpow.pop %v1165
    %v1167 = vmul.f32 %v1164, 1.442695
    %v1168 = vpow.pop %v1167
    %v1169 = vsel %vm1156, %v1166, 0.0
    %1170 = vadd.xlane.f32.xlu0 %v1169
    %v1171 = vpop.xlane.xlu0 %1170
    %v1172 = vsel %vm1156, %v1168, 0.0
    %1173 = vadd.xlane.f32.xlu0 %v1172
    %v1174 = vpop.xlane.xlu0 %1173
    %v1175 = vrcp.pop %v1171
    %v1176 = vrcp.pop %v1174
    %v1177 = vmul.f32 %v1166, %v1175
    %v1178 = vmul.f32 %v1168, %v1176
    %1179 = vrot.lane.b32.xlu0 %v630, 64
    %v1180 = vpop.permute.xlu0 %1179
    %1181 = vrot.lane.b32.xlu0 %v636, 64
    %v1182 = vpop.permute.xlu0 %1181
    %v1186 = vsel %vm1156, %v1177, 0
    %v1189 = vsel %vm1156, %v1178, 0
    %1191 = vmatprep.subr.mxu0 0.0
    %v1192 = vand.u32 %v1180, 4294901760
    %1193 = vmatpush1.msra.mxu0 %v1192
    %1194 = vmatprep.subr.mxu0 0.0
    %v1195 = vand.u32 %v1182, 4294901760
    %1196 = vmatpush1.msra.mxu0 %v1195
    %1197 = vmatprep.subr.mxu0 0.0
    %1198 = vmatpush1.msra.mxu0 0.0
    %1199 = vmatprep.subr.mxu0 0.0
    %1200 = vmatpush1.msra.mxu0 0.0
    %1201 = vmatprep.subr.mxu0 0.0
    %1202 = vmatpush1.msra.mxu0 0.0
    %1203 = vmatprep.subr.mxu0 0.0
    %1204 = vmatpush1.msra.mxu0 0.0
    %1205 = vmatprep.subr.mxu0 0.0
    %1206 = vmatpush1.msra.mxu0 0.0
    %1207 = vmatprep.subr.mxu0 0.0
    %1208 = vmatpush1.msra.mxu0 0.0
    %1209 = vmatprep.subr.mxu0 0.0
    %1210 = vmatpush1.msra.mxu0 0.0
    %1211 = vmatprep.subr.mxu0 0.0
    %1212 = vmatpush1.msra.mxu0 0.0
    %1213 = vmatprep.subr.mxu0 0.0
    %1214 = vmatpush1.msra.mxu0 0.0
    %1215 = vmatprep.subr.mxu0 0.0
    %1216 = vmatpush1.msra.mxu0 0.0
    %1217 = vmatprep.subr.mxu0 0.0
    %1218 = vmatpush1.msra.mxu0 0.0
    %1219 = vmatprep.subr.mxu0 0.0
    %1220 = vmatpush1.msra.mxu0 0.0
    %1221 = vmatprep.subr.mxu0 0.0
    %1222 = vmatpush1.msra.mxu0 0.0
    %1223 = vmatprep.subr.mxu0 0.0
    %1224 = vmatpush1.msra.mxu0 0.0
    %1225 = vmatprep.subr.mxu0 0.0
    %1226 = vmatpush1.msra.mxu0 0.0
    %1227 = vmatprep.subr.mxu0 0.0
    %1228 = vmatpush1.msra.mxu0 0.0
    %1229 = vmatprep.subr.mxu0 0.0
    %1230 = vmatpush1.msra.mxu0 0.0
    %1231 = vmatprep.subr.mxu0 0.0
    %1232 = vmatpush1.msra.mxu0 0.0
    %1233 = vmatprep.subr.mxu0 0.0
    %1234 = vmatpush1.msra.mxu0 0.0
    %1235 = vmatprep.subr.mxu0 0.0
    %1236 = vmatpush1.msra.mxu0 0.0
    %1237 = vmatprep.subr.mxu0 0.0
    %1238 = vmatpush1.msra.mxu0 0.0
    %1239 = vmatprep.subr.mxu0 0.0
    %1240 = vmatpush1.msra.mxu0 0.0
    %1241 = vmatprep.subr.mxu0 0.0
    %1242 = vmatpush1.msra.mxu0 0.0
    %1243 = vmatprep.subr.mxu0 0.0
    %1244 = vmatpush1.msra.mxu0 0.0
    %1245 = vmatprep.subr.mxu0 0.0
    %1246 = vmatpush1.msra.mxu0 0.0
    %1247 = vmatprep.subr.mxu0 0.0
    %1248 = vmatpush1.msra.mxu0 0.0
    %1249 = vmatprep.subr.mxu0 0.0
    %1250 = vmatpush1.msra.mxu0 0.0
    %1251 = vmatprep.subr.mxu0 0.0
    %1252 = vmatpush1.msra.mxu0 0.0
    %1253 = vmatprep.subr.mxu0 0.0
    %1254 = vmatpush1.msra.mxu0 0.0
    %1255 = vmatprep.subr.mxu0 0.0
    %1256 = vmatpush1.msra.mxu0 0.0
    %1257 = vmatprep.mubr.f32.mxu0 0.0
    %v1258 = vand.u32 %v1186, 4294901760
    %v1259 = vsub.f32 %v1186, %v1258
    %v1260 = vand.u32 %v1259, 4294901760
    %v1261 = vsub.f32 %v1259, %v1260
    %v1262 = vand.u32 %v1261, 4294901760
    %1263 = vmatmul.mubr.f32.gmra.mrb[0].mxu0 %v1262
    %v1264 = vpop.f32.mrb[0].mxu0
    %v1265 = vadd.f32 0.0, %v1264
    %v1266 = vpop.f32.mrb[0].mxu0
    %1267 = vmatprep.mubr.f32.mxu0 0.0
    %v1268 = vand.u32 %v1189, 4294901760
    %v1269 = vsub.f32 %v1189, %v1268
    %v1270 = vand.u32 %v1269, 4294901760
    %v1271 = vsub.f32 %v1269, %v1270
    %v1272 = vand.u32 %v1271, 4294901760
    %1273 = vmatmul.mubr.f32.gmra.mrb[0].mxu0 %v1272
    %v1274 = vpop.f32.mrb[0].mxu0
    %v1275 = vadd.f32 0.0, %v1274
    %v1276 = vpop.f32.mrb[0].mxu0
    %1277 = vdwg.mxu0
    %1278 = vmatprep.subr.mxu0 0.0
    %v1279 = vand.u32 %v1180, 4294901760
    %v1280 = vsub.f32 %v1180, %v1279
    %v1281 = vand.u32 %v1280, 4294901760
    %v1282 = vsub.f32 %v1280, %v1281
    %v1283 = vand.u32 %v1282, 4294901760
    %1284 = vmatpush1.msra.mxu0 %v1283
    %1285 = vmatprep.subr.mxu0 0.0
    %v1286 = vand.u32 %v1182, 4294901760
    %v1287 = vsub.f32 %v1182, %v1286
    %v1288 = vand.u32 %v1287, 4294901760
    %v1289 = vsub.f32 %v1287, %v1288
    %v1290 = vand.u32 %v1289, 4294901760
    %1291 = vmatpush1.msra.mxu0 %v1290
    %1292 = vmatprep.subr.mxu0 0.0
    %1293 = vmatpush1.msra.mxu0 0.0
    %1294 = vmatprep.subr.mxu0 0.0
    %1295 = vmatpush1.msra.mxu0 0.0
    %1296 = vmatprep.subr.mxu0 0.0
    %1297 = vmatpush1.msra.mxu0 0.0
    %1298 = vmatprep.subr.mxu0 0.0
    %1299 = vmatpush1.msra.mxu0 0.0
    %1300 = vmatprep.subr.mxu0 0.0
    %1301 = vmatpush1.msra.mxu0 0.0
    %1302 = vmatprep.subr.mxu0 0.0
    %1303 = vmatpush1.msra.mxu0 0.0
    %1304 = vmatprep.subr.mxu0 0.0
    %1305 = vmatpush1.msra.mxu0 0.0
    %1306 = vmatprep.subr.mxu0 0.0
    %1307 = vmatpush1.msra.mxu0 0.0
    %1308 = vmatprep.subr.mxu0 0.0
    %1309 = vmatpush1.msra.mxu0 0.0
    %1310 = vmatprep.subr.mxu0 0.0
    %1311 = vmatpush1.msra.mxu0 0.0
    %1312 = vmatprep.subr.mxu0 0.0
    %1313 = vmatpush1.msra.mxu0 0.0
    %1314 = vmatprep.subr.mxu0 0.0
    %1315 = vmatpush1.msra.mxu0 0.0
    %1316 = vmatprep.subr.mxu0 0.0
    %1317 = vmatpush1.msra.mxu0 0.0
    %1318 = vmatprep.subr.mxu0 0.0
    %1319 = vmatpush1.msra.mxu0 0.0
    %1320 = vmatprep.subr.mxu0 0.0
    %1321 = vmatpush1.msra.mxu0 0.0
    %1322 = vmatprep.subr.mxu0 0.0
    %1323 = vmatpush1.msra.mxu0 0.0
    %1324 = vmatprep.subr.mxu0 0.0
    %1325 = vmatpush1.msra.mxu0 0.0
    %1326 = vmatprep.subr.mxu0 0.0
    %1327 = vmatpush1.msra.mxu0 0.0
    %1328 = vmatprep.subr.mxu0 0.0
    %1329 = vmatpush1.msra.mxu0 0.0
    %1330 = vmatprep.subr.mxu0 0.0
    %1331 = vmatpush1.msra.mxu0 0.0
    %1332 = vmatprep.subr.mxu0 0.0
    %1333 = vmatpush1.msra.mxu0 0.0
    %1334 = vmatprep.subr.mxu0 0.0
    %1335 = vmatpush1.msra.mxu0 0.0
    %1336 = vmatprep.subr.mxu0 0.0
    %1337 = vmatpush1.msra.mxu0 0.0
    %1338 = vmatprep.subr.mxu0 0.0
    %1339 = vmatpush1.msra.mxu0 0.0
    %1340 = vmatprep.subr.mxu0 0.0
    %1341 = vmatpush1.msra.mxu0 0.0
    %1342 = vmatprep.subr.mxu0 0.0
    %1343 = vmatpush1.msra.mxu0 0.0
    %1344 = vmatprep.subr.mxu0 0.0
    %1345 = vmatpush1.msra.mxu0 0.0
    %1346 = vmatprep.subr.mxu0 0.0
    %1347 = vmatpush1.msra.mxu0 0.0
    %1348 = vmatprep.subr.mxu0 0.0
    %1349 = vmatpush1.msra.mxu0 0.0
    %1350 = vmatprep.subr.mxu0 0.0
    %1351 = vmatpush1.msra.mxu0 0.0
    %1352 = vmatprep.mubr.f32.mxu0 0.0
    %v1353 = vand.u32 %v1186, 4294901760
    %1354 = vmatmul.mubr.f32.gmra.mrb[0].mxu0 %v1353
    %v1355 = vpop.f32.mrb[0].mxu0
    %v1356 = vadd.f32 %v1265, %v1355
    %v1357 = vpop.f32.mrb[0].mxu0
    %1358 = vmatprep.mubr.f32.mxu0 0.0
    %v1359 = vand.u32 %v1189, 4294901760
    %1360 = vmatmul.mubr.f32.gmra.mrb[0].mxu0 %v1359
    %v1361 = vpop.f32.mrb[0].mxu0
    %v1362 = vadd.f32 %v1275, %v1361
    %v1363 = vpop.f32.mrb[0].mxu0
    %1364 = vdwg.mxu0
    %1365 = vmatprep.subr.mxu0 0.0
    %v1366 = vand.u32 %v1180, 4294901760
    %v1367 = vsub.f32 %v1180, %v1366
    %1368 = vmatpush1.msra.mxu0 %v1367
    %1369 = vmatprep.subr.mxu0 0.0
    %v1370 = vand.u32 %v1182, 4294901760
    %v1371 = vsub.f32 %v1182, %v1370
    %1372 = vmatpush1.msra.mxu0 %v1371
    %1373 = vmatprep.subr.mxu0 0.0
    %1374 = vmatpush1.msra.mxu0 0.0
    %1375 = vmatprep.subr.mxu0 0.0
    %1376 = vmatpush1.msra.mxu0 0.0
    %1377 = vmatprep.subr.mxu0 0.0
    %1378 = vmatpush1.msra.mxu0 0.0
    %1379 = vmatprep.subr.mxu0 0.0
    %1380 = vmatpush1.msra.mxu0 0.0
    %1381 = vmatprep.subr.mxu0 0.0
    %1382 = vmatpush1.msra.mxu0 0.0
    %1383 = vmatprep.subr.mxu0 0.0
    %1384 = vmatpush1.msra.mxu0 0.0
    %1385 = vmatprep.subr.mxu0 0.0
    %1386 = vmatpush1.msra.mxu0 0.0
    %1387 = vmatprep.subr.mxu0 0.0
    %1388 = vmatpush1.msra.mxu0 0.0
    %1389 = vmatprep.subr.mxu0 0.0
    %1390 = vmatpush1.msra.mxu0 0.0
    %1391 = vmatprep.subr.mxu0 0.0
    %1392 = vmatpush1.msra.mxu0 0.0
    %1393 = vmatprep.subr.mxu0 0.0
    %1394 = vmatpush1.msra.mxu0 0.0
    %1395 = vmatprep.subr.mxu0 0.0
    %1396 = vmatpush1.msra.mxu0 0.0
    %1397 = vmatprep.subr.mxu0 0.0
    %1398 = vmatpush1.msra.mxu0 0.0
    %1399 = vmatprep.subr.mxu0 0.0
    %1400 = vmatpush1.msra.mxu0 0.0
    %1401 = vmatprep.subr.mxu0 0.0
    %1402 = vmatpush1.msra.mxu0 0.0
    %1403 = vmatprep.subr.mxu0 0.0
    %1404 = vmatpush1.msra.mxu0 0.0
    %1405 = vmatprep.subr.mxu0 0.0
    %1406 = vmatpush1.msra.mxu0 0.0
    %1407 = vmatprep.subr.mxu0 0.0
    %1408 = vmatpush1.msra.mxu0 0.0
    %1409 = vmatprep.subr.mxu0 0.0
    %1410 = vmatpush1.msra.mxu0 0.0
    %1411 = vmatprep.subr.mxu0 0.0
    %1412 = vmatpush1.msra.mxu0 0.0
    %1413 = vmatprep.subr.mxu0 0.0
    %1414 = vmatpush1.msra.mxu0 0.0
    %1415 = vmatprep.subr.mxu0 0.0
    %1416 = vmatpush1.msra.mxu0 0.0
    %1417 = vmatprep.subr.mxu0 0.0
    %1418 = vmatpush1.msra.mxu0 0.0
    %1419 = vmatprep.subr.mxu0 0.0
    %1420 = vmatpush1.msra.mxu0 0.0
    %1421 = vmatprep.subr.mxu0 0.0
    %1422 = vmatpush1.msra.mxu0 0.0
    %1423 = vmatprep.subr.mxu0 0.0
    %1424 = vmatpush1.msra.mxu0 0.0
    %1425 = vmatprep.subr.mxu0 0.0
    %1426 = vmatpush1.msra.mxu0 0.0
    %1427 = vmatprep.subr.mxu0 0.0
    %1428 = vmatpush1.msra.mxu0 0.0
    %1429 = vmatprep.subr.mxu0 0.0
    %1430 = vmatpush1.msra.mxu0 0.0
    %1431 = vmatprep.subr.mxu0 0.0
    %1432 = vmatpush1.msra.mxu0 0.0
    %1433 = vmatprep.mubr.f32.mxu0 0.0
    %v1434 = vand.u32 %v1186, 4294901760
    %v1435 = vsub.f32 %v1186, %v1434
    %1436 = vmatmul.mubr.f32.gmra.mrb[0].mxu0 %v1435
    %v1437 = vpop.f32.mrb[0].mxu0
    %v1438 = vadd.f32 %v1356, %v1437
    %v1439 = vpop.f32.mrb[0].mxu0
    %1440 = vmatprep.mubr.f32.mxu0 0.0
    %v1441 = vand.u32 %v1189, 4294901760
    %v1442 = vsub.f32 %v1189, %v1441
    %1443 = vmatmul.mubr.f32.gmra.mrb[0].mxu0 %v1442
    %v1444 = vpop.f32.mrb[0].mxu0
    %v1445 = vadd.f32 %v1362, %v1444
    %v1446 = vpop.f32.mrb[0].mxu0
    %1447 = vdwg.mxu0
    %1448 = vmatprep.subr.mxu0 0.0
    %v1449 = vand.u32 %v1180, 4294901760
    %1450 = vmatpush1.msra.mxu0 %v1449
    %1451 = vmatprep.subr.mxu0 0.0
    %v1452 = vand.u32 %v1182, 4294901760
    %1453 = vmatpush1.msra.mxu0 %v1452
    %1454 = vmatprep.subr.mxu0 0.0
    %1455 = vmatpush1.msra.mxu0 0.0
    %1456 = vmatprep.subr.mxu0 0.0
    %1457 = vmatpush1.msra.mxu0 0.0
    %1458 = vmatprep.subr.mxu0 0.0
    %1459 = vmatpush1.msra.mxu0 0.0
    %1460 = vmatprep.subr.mxu0 0.0
    %1461 = vmatpush1.msra.mxu0 0.0
    %1462 = vmatprep.subr.mxu0 0.0
    %1463 = vmatpush1.msra.mxu0 0.0
    %1464 = vmatprep.subr.mxu0 0.0
    %1465 = vmatpush1.msra.mxu0 0.0
    %1466 = vmatprep.subr.mxu0 0.0
    %1467 = vmatpush1.msra.mxu0 0.0
    %1468 = vmatprep.subr.mxu0 0.0
    %1469 = vmatpush1.msra.mxu0 0.0
    %1470 = vmatprep.subr.mxu0 0.0
    %1471 = vmatpush1.msra.mxu0 0.0
    %1472 = vmatprep.subr.mxu0 0.0
    %1473 = vmatpush1.msra.mxu0 0.0
    %1474 = vmatprep.subr.mxu0 0.0
    %1475 = vmatpush1.msra.mxu0 0.0
    %1476 = vmatprep.subr.mxu0 0.0
    %1477 = vmatpush1.msra.mxu0 0.0
    %1478 = vmatprep.subr.mxu0 0.0
    %1479 = vmatpush1.msra.mxu0 0.0
    %1480 = vmatprep.subr.mxu0 0.0
    %1481 = vmatpush1.msra.mxu0 0.0
    %1482 = vmatprep.subr.mxu0 0.0
    %1483 = vmatpush1.msra.mxu0 0.0
    %1484 = vmatprep.subr.mxu0 0.0
    %1485 = vmatpush1.msra.mxu0 0.0
    %1486 = vmatprep.subr.mxu0 0.0
    %1487 = vmatpush1.msra.mxu0 0.0
    %1488 = vmatprep.subr.mxu0 0.0
    %1489 = vmatpush1.msra.mxu0 0.0
    %1490 = vmatprep.subr.mxu0 0.0
    %1491 = vmatpush1.msra.mxu0 0.0
    %1492 = vmatprep.subr.mxu0 0.0
    %1493 = vmatpush1.msra.mxu0 0.0
    %1494 = vmatprep.subr.mxu0 0.0
    %1495 = vmatpush1.msra.mxu0 0.0
    %1496 = vmatprep.subr.mxu0 0.0
    %1497 = vmatpush1.msra.mxu0 0.0
    %1498 = vmatprep.subr.mxu0 0.0
    %1499 = vmatpush1.msra.mxu0 0.0
    %1500 = vmatprep.subr.mxu0 0.0
    %1501 = vmatpush1.msra.mxu0 0.0
    %1502 = vmatprep.subr.mxu0 0.0
    %1503 = vmatpush1.msra.mxu0 0.0
    %1504 = vmatprep.subr.mxu0 0.0
    %1505 = vmatpush1.msra.mxu0 0.0
    %1506 = vmatprep.subr.mxu0 0.0
    %1507 = vmatpush1.msra.mxu0 0.0
    %1508 = vmatprep.subr.mxu0 0.0
    %1509 = vmatpush1.msra.mxu0 0.0
    %1510 = vmatprep.subr.mxu0 0.0
    %1511 = vmatpush1.msra.mxu0 0.0
    %1512 = vmatprep.subr.mxu0 0.0
    %1513 = vmatpush1.msra.mxu0 0.0
    %1514 = vmatprep.mubr.f32.mxu0 0.0
    %v1515 = vand.u32 %v1186, 4294901760
    %v1516 = vsub.f32 %v1186, %v1515
    %v1517 = vand.u32 %v1516, 4294901760
    %1518 = vmatmul.mubr.f32.gmra.mrb[0].mxu0 %v1517
    %v1519 = vpop.f32.mrb[0].mxu0
    %v1520 = vadd.f32 %v1438, %v1519
    %v1521 = vpop.f32.mrb[0].mxu0
    %1522 = vmatprep.mubr.f32.mxu0 0.0
    %v1523 = vand.u32 %v1189, 4294901760
    %v1524 = vsub.f32 %v1189, %v1523
    %v1525 = vand.u32 %v1524, 4294901760
    %1526 = vmatmul.mubr.f32.gmra.mrb[0].mxu0 %v1525
    %v1527 = vpop.f32.mrb[0].mxu0
    %v1528 = vadd.f32 %v1445, %v1527
    %v1529 = vpop.f32.mrb[0].mxu0
    %1530 = vdwg.mxu0
    %1531 = vmatprep.subr.mxu0 0.0
    %v1532 = vand.u32 %v1180, 4294901760
    %v1533 = vsub.f32 %v1180, %v1532
    %v1534 = vand.u32 %v1533, 4294901760
    %1535 = vmatpush1.msra.mxu0 %v1534
    %1536 = vmatprep.subr.mxu0 0.0
    %v1537 = vand.u32 %v1182, 4294901760
    %v1538 = vsub.f32 %v1182, %v1537
    %v1539 = vand.u32 %v1538, 4294901760
    %1540 = vmatpush1.msra.mxu0 %v1539
    %1541 = vmatprep.subr.mxu0 0.0
    %1542 = vmatpush1.msra.mxu0 0.0
    %1543 = vmatprep.subr.mxu0 0.0
    %1544 = vmatpush1.msra.mxu0 0.0
    %1545 = vmatprep.subr.mxu0 0.0
    %1546 = vmatpush1.msra.mxu0 0.0
    %1547 = vmatprep.subr.mxu0 0.0
    %1548 = vmatpush1.msra.mxu0 0.0
    %1549 = vmatprep.subr.mxu0 0.0
    %1550 = vmatpush1.msra.mxu0 0.0
    %1551 = vmatprep.subr.mxu0 0.0
    %1552 = vmatpush1.msra.mxu0 0.0
    %1553 = vmatprep.subr.mxu0 0.0
    %1554 = vmatpush1.msra.mxu0 0.0
    %1555 = vmatprep.subr.mxu0 0.0
    %1556 = vmatpush1.msra.mxu0 0.0
    %1557 = vmatprep.subr.mxu0 0.0
    %1558 = vmatpush1.msra.mxu0 0.0
    %1559 = vmatprep.subr.mxu0 0.0
    %1560 = vmatpush1.msra.mxu0 0.0
    %1561 = vmatprep.subr.mxu0 0.0
    %1562 = vmatpush1.msra.mxu0 0.0
    %1563 = vmatprep.subr.mxu0 0.0
    %1564 = vmatpush1.msra.mxu0 0.0
    %1565 = vmatprep.subr.mxu0 0.0
    %1566 = vmatpush1.msra.mxu0 0.0
    %1567 = vmatprep.subr.mxu0 0.0
    %1568 = vmatpush1.msra.mxu0 0.0
    %1569 = vmatprep.subr.mxu0 0.0
    %1570 = vmatpush1.msra.mxu0 0.0
    %1571 = vmatprep.subr.mxu0 0.0
    %1572 = vmatpush1.msra.mxu0 0.0
    %1573 = vmatprep.subr.mxu0 0.0
    %1574 = vmatpush1.msra.mxu0 0.0
    %1575 = vmatprep.subr.mxu0 0.0
    %1576 = vmatpush1.msra.mxu0 0.0
    %1577 = vmatprep.subr.mxu0 0.0
    %1578 = vmatpush1.msra.mxu0 0.0
    %1579 = vmatprep.subr.mxu0 0.0
    %1580 = vmatpush1.msra.mxu0 0.0
    %1581 = vmatprep.subr.mxu0 0.0
    %1582 = vmatpush1.msra.mxu0 0.0
    %1583 = vmatprep.subr.mxu0 0.0
    %1584 = vmatpush1.msra.mxu0 0.0
    %1585 = vmatprep.subr.mxu0 0.0
    %1586 = vmatpush1.msra.mxu0 0.0
    %1587 = vmatprep.subr.mxu0 0.0
    %1588 = vmatpush1.msra.mxu0 0.0
    %1589 = vmatprep.subr.mxu0 0.0
    %1590 = vmatpush1.msra.mxu0 0.0
    %1591 = vmatprep.subr.mxu0 0.0
    %1592 = vmatpush1.msra.mxu0 0.0
    %1593 = vmatprep.subr.mxu0 0.0
    %1594 = vmatpush1.msra.mxu0 0.0
    %1595 = vmatprep.subr.mxu0 0.0
    %1596 = vmatpush1.msra.mxu0 0.0
    %1597 = vmatprep.subr.mxu0 0.0
    %1598 = vmatpush1.msra.mxu0 0.0
    %1599 = vmatprep.subr.mxu0 0.0
    %1600 = vmatpush1.msra.mxu0 0.0
    %1601 = vmatprep.mubr.f32.mxu0 0.0
    %v1602 = vand.u32 %v1186, 4294901760
    %1603 = vmatmul.mubr.f32.gmra.mrb[0].mxu0 %v1602
    %v1604 = vpop.f32.mrb[0].mxu0
    %v1605 = vadd.f32 %v1520, %v1604
    %v1606 = vpop.f32.mrb[0].mxu0
    %1607 = vmatprep.mubr.f32.mxu0 0.0
    %v1608 = vand.u32 %v1189, 4294901760
    %1609 = vmatmul.mubr.f32.gmra.mrb[0].mxu0 %v1608
    %v1610 = vpop.f32.mrb[0].mxu0
    %v1611 = vadd.f32 %v1528, %v1610
    %v1612 = vpop.f32.mrb[0].mxu0
    %1613 = vdwg.mxu0
    %1614 = vmatprep.subr.mxu0 0.0
    %v1615 = vand.u32 %v1180, 4294901760
    %1616 = vmatpush1.msra.mxu0 %v1615
    %1617 = vmatprep.subr.mxu0 0.0
    %v1618 = vand.u32 %v1182, 4294901760
    %1619 = vmatpush1.msra.mxu0 %v1618
    %1620 = vmatprep.subr.mxu0 0.0
    %1621 = vmatpush1.msra.mxu0 0.0
    %1622 = vmatprep.subr.mxu0 0.0
    %1623 = vmatpush1.msra.mxu0 0.0
    %1624 = vmatprep.subr.mxu0 0.0
    %1625 = vmatpush1.msra.mxu0 0.0
    %1626 = vmatprep.subr.mxu0 0.0
    %1627 = vmatpush1.msra.mxu0 0.0
    %1628 = vmatprep.subr.mxu0 0.0
    %1629 = vmatpush1.msra.mxu0 0.0
    %1630 = vmatprep.subr.mxu0 0.0
    %1631 = vmatpush1.msra.mxu0 0.0
    %1632 = vmatprep.subr.mxu0 0.0
    %1633 = vmatpush1.msra.mxu0 0.0
    %1634 = vmatprep.subr.mxu0 0.0
    %1635 = vmatpush1.msra.mxu0 0.0
    %1636 = vmatprep.subr.mxu0 0.0
    %1637 = vmatpush1.msra.mxu0 0.0
    %1638 = vmatprep.subr.mxu0 0.0
    %1639 = vmatpush1.msra.mxu0 0.0
    %1640 = vmatprep.subr.mxu0 0.0
    %1641 = vmatpush1.msra.mxu0 0.0
    %1642 = vmatprep.subr.mxu0 0.0
    %1643 = vmatpush1.msra.mxu0 0.0
    %1644 = vmatprep.subr.mxu0 0.0
    %1645 = vmatpush1.msra.mxu0 0.0
    %1646 = vmatprep.subr.mxu0 0.0
    %1647 = vmatpush1.msra.mxu0 0.0
    %1648 = vmatprep.subr.mxu0 0.0
    %1649 = vmatpush1.msra.mxu0 0.0
    %1650 = vmatprep.subr.mxu0 0.0
    %1651 = vmatpush1.msra.mxu0 0.0
    %1652 = vmatprep.subr.mxu0 0.0
    %1653 = vmatpush1.msra.mxu0 0.0
    %1654 = vmatprep.subr.mxu0 0.0
    %1655 = vmatpush1.msra.mxu0 0.0
    %1656 = vmatprep.subr.mxu0 0.0
    %1657 = vmatpush1.msra.mxu0 0.0
    %1658 = vmatprep.subr.mxu0 0.0
    %1659 = vmatpush1.msra.mxu0 0.0
    %1660 = vmatprep.subr.mxu0 0.0
    %1661 = vmatpush1.msra.mxu0 0.0
    %1662 = vmatprep.subr.mxu0 0.0
    %1663 = vmatpush1.msra.mxu0 0.0
    %1664 = vmatprep.subr.mxu0 0.0
    %1665 = vmatpush1.msra.mxu0 0.0
    %1666 = vmatprep.subr.mxu0 0.0
    %1667 = vmatpush1.msra.mxu0 0.0
    %1668 = vmatprep.subr.mxu0 0.0
    %1669 = vmatpush1.msra.mxu0 0.0
    %1670 = vmatprep.subr.mxu0 0.0
    %1671 = vmatpush1.msra.mxu0 0.0
    %1672 = vmatprep.subr.mxu0 0.0
    %1673 = vmatpush1.msra.mxu0 0.0
    %1674 = vmatprep.subr.mxu0 0.0
    %1675 = vmatpush1.msra.mxu0 0.0
    %1676 = vmatprep.subr.mxu0 0.0
    %1677 = vmatpush1.msra.mxu0 0.0
    %1678 = vmatprep.subr.mxu0 0.0
    %1679 = vmatpush1.msra.mxu0 0.0
    %1680 = vmatprep.mubr.f32.mxu0 0.0
    %v1681 = vand.u32 %v1186, 4294901760
    %1682 = vmatmul.mubr.f32.gmra.mrb[0].mxu0 %v1681
    %v1683 = vpop.f32.mrb[0].mxu0
    %v1684 = vadd.f32 %v1605, %v1683
    %v1685 = vpop.f32.mrb[0].mxu0
    %1686 = vmatprep.mubr.f32.mxu0 0.0
    %v1687 = vand.u32 %v1189, 4294901760
    %1688 = vmatmul.mubr.f32.gmra.mrb[0].mxu0 %v1687
    %v1689 = vpop.f32.mrb[0].mxu0
    %v1690 = vadd.f32 %v1611, %v1689
    %v1691 = vpop.f32.mrb[0].mxu0
    %1692 = vdwg.mxu0
    %1693 = vrot.lane.b32.xlu0 %v630, 120
    %v1694 = vpop.permute.xlu0 %1693
    %1695 = vrot.lane.b32.xlu0 %v636, 120
    %v1696 = vpop.permute.xlu0 %1695
    %1697 = vrot.lane.b32.xlu0 %v630, 88
    %v1698 = vpop.permute.xlu0 %1697
    %1699 = vrot.lane.b32.xlu0 %v636, 88
    %v1700 = vpop.permute.xlu0 %1699
    %v1701 = vsel %vm645, %v1694, 0
    %v1703 = vsel %vm645, %v1696, 0
    %v1705 = vsel %vm645, %v1698, 0
    %v1707 = vsel %vm645, %v1700, 0
    %1709 = vmatprep.subr.mxu0 0.0
    %v1710 = vand.u32 %v1705, 4294901760
    %1711 = vmatpush1.xpose.msra.mxu0 %v1710
    %1712 = vmatprep.subr.mxu0 0.0
    %v1713 = vand.u32 %v1707, 4294901760
    %1714 = vmatpush1.xpose.msra.mxu0 %v1713
    %1715 = vmatprep.subr.mxu0 0.0
    %1716 = vmatpush1.xpose.msra.mxu0 0.0
    %1717 = vmatprep.subr.mxu0 0.0
    %1718 = vmatpush1.xpose.msra.mxu0 0.0
    %1719 = vmatprep.subr.mxu0 0.0
    %1720 = vmatpush1.xpose.msra.mxu0 0.0
    %1721 = vmatprep.subr.mxu0 0.0
    %1722 = vmatpush1.xpose.msra.mxu0 0.0
    %1723 = vmatprep.subr.mxu0 0.0
    %1724 = vmatpush1.xpose.msra.mxu0 0.0
    %1725 = vmatprep.subr.mxu0 0.0
    %1726 = vmatpush1.xpose.msra.mxu0 0.0
    %1727 = vmatprep.subr.mxu0 0.0
    %1728 = vmatpush1.xpose.msra.mxu0 0.0
    %1729 = vmatprep.subr.mxu0 0.0
    %1730 = vmatpush1.xpose.msra.mxu0 0.0
    %1731 = vmatprep.subr.mxu0 0.0
    %1732 = vmatpush1.xpose.msra.mxu0 0.0
    %1733 = vmatprep.subr.mxu0 0.0
    %1734 = vmatpush1.xpose.msra.mxu0 0.0
    %1735 = vmatprep.subr.mxu0 0.0
    %1736 = vmatpush1.xpose.msra.mxu0 0.0
    %1737 = vmatprep.subr.mxu0 0.0
    %1738 = vmatpush1.xpose.msra.mxu0 0.0
    %1739 = vmatprep.subr.mxu0 0.0
    %1740 = vmatpush1.xpose.msra.mxu0 0.0
    %1741 = vmatprep.subr.mxu0 0.0
    %1742 = vmatpush1.xpose.msra.mxu0 0.0
    %1743 = vmatprep.subr.mxu0 0.0
    %1744 = vmatpush1.xpose.msra.mxu0 0.0
    %1745 = vmatprep.subr.mxu0 0.0
    %1746 = vmatpush1.xpose.msra.mxu0 0.0
    %1747 = vmatprep.subr.mxu0 0.0
    %1748 = vmatpush1.xpose.msra.mxu0 0.0
    %1749 = vmatprep.subr.mxu0 0.0
    %1750 = vmatpush1.xpose.msra.mxu0 0.0
    %1751 = vmatprep.subr.mxu0 0.0
    %1752 = vmatpush1.xpose.msra.mxu0 0.0
    %1753 = vmatprep.subr.mxu0 0.0
    %1754 = vmatpush1.xpose.msra.mxu0 0.0
    %1755 = vmatprep.subr.mxu0 0.0
    %1756 = vmatpush1.xpose.msra.mxu0 0.0
    %1757 = vmatprep.subr.mxu0 0.0
    %1758 = vmatpush1.xpose.msra.mxu0 0.0
    %1759 = vmatprep.subr.mxu0 0.0
    %1760 = vmatpush1.xpose.msra.mxu0 0.0
    %1761 = vmatprep.subr.mxu0 0.0
    %1762 = vmatpush1.xpose.msra.mxu0 0.0
    %1763 = vmatprep.subr.mxu0 0.0
    %1764 = vmatpush1.xpose.msra.mxu0 0.0
    %1765 = vmatprep.subr.mxu0 0.0
    %1766 = vmatpush1.xpose.msra.mxu0 0.0
    %1767 = vmatprep.subr.mxu0 0.0
    %1768 = vmatpush1.xpose.msra.mxu0 0.0
    %1769 = vmatprep.subr.mxu0 0.0
    %1770 = vmatpush1.xpose.msra.mxu0 0.0
    %1771 = vmatprep.subr.mxu0 0.0
    %1772 = vmatpush1.xpose.msra.mxu0 0.0
    %1773 = vmatprep.subr.mxu0 0.0
    %1774 = vmatpush1.xpose.msra.mxu0 0.0
    %1775 = vmatprep.mubr.f32.mxu0 0.0
    %v1776 = vand.u32 %v1701, 4294901760
    %v1777 = vsub.f32 %v1701, %v1776
    %v1778 = vand.u32 %v1777, 4294901760
    %v1779 = vsub.f32 %v1777, %v1778
    %v1780 = vand.u32 %v1779, 4294901760
    %1781 = vmatmul.mubr.f32.gmra.mrb[0].mxu0 %v1780
    %v1782 = vpop.f32.mrb[0].mxu0
    %v1783 = vadd.f32 %v55, %v1782
    %v1784 = vpop.f32.mrb[0].mxu0
    %1785 = vmatprep.mubr.f32.mxu0 0.0
    %v1786 = vand.u32 %v1703, 4294901760
    %v1787 = vsub.f32 %v1703, %v1786
    %v1788 = vand.u32 %v1787, 4294901760
    %v1789 = vsub.f32 %v1787, %v1788
    %v1790 = vand.u32 %v1789, 4294901760
    %1791 = vmatmul.mubr.f32.gmra.mrb[0].mxu0 %v1790
    %v1792 = vpop.f32.mrb[0].mxu0
    %v1793 = vadd.f32 %v56, %v1792
    %v1794 = vpop.f32.mrb[0].mxu0
    %1795 = vdwg.mxu0
    %1796 = vmatprep.subr.mxu0 0.0
    %v1797 = vand.u32 %v1705, 4294901760
    %v1798 = vsub.f32 %v1705, %v1797
    %v1799 = vand.u32 %v1798, 4294901760
    %v1800 = vsub.f32 %v1798, %v1799
    %v1801 = vand.u32 %v1800, 4294901760
    %1802 = vmatpush1.xpose.msra.mxu0 %v1801
    %1803 = vmatprep.subr.mxu0 0.0
    %v1804 = vand.u32 %v1707, 4294901760
    %v1805 = vsub.f32 %v1707, %v1804
    %v1806 = vand.u32 %v1805, 4294901760
    %v1807 = vsub.f32 %v1805, %v1806
    %v1808 = vand.u32 %v1807, 4294901760
    %1809 = vmatpush1.xpose.msra.mxu0 %v1808
    %1810 = vmatprep.subr.mxu0 0.0
    %1811 = vmatpush1.xpose.msra.mxu0 0.0
    %1812 = vmatprep.subr.mxu0 0.0
    %1813 = vmatpush1.xpose.msra.mxu0 0.0
    %1814 = vmatprep.subr.mxu0 0.0
    %1815 = vmatpush1.xpose.msra.mxu0 0.0
    %1816 = vmatprep.subr.mxu0 0.0
    %1817 = vmatpush1.xpose.msra.mxu0 0.0
    %1818 = vmatprep.subr.mxu0 0.0
    %1819 = vmatpush1.xpose.msra.mxu0 0.0
    %1820 = vmatprep.subr.mxu0 0.0
    %1821 = vmatpush1.xpose.msra.mxu0 0.0
    %1822 = vmatprep.subr.mxu0 0.0
    %1823 = vmatpush1.xpose.msra.mxu0 0.0
    %1824 = vmatprep.subr.mxu0 0.0
    %1825 = vmatpush1.xpose.msra.mxu0 0.0
    %1826 = vmatprep.subr.mxu0 0.0
    %1827 = vmatpush1.xpose.msra.mxu0 0.0
    %1828 = vmatprep.subr.mxu0 0.0
    %1829 = vmatpush1.xpose.msra.mxu0 0.0
    %1830 = vmatprep.subr.mxu0 0.0
    %1831 = vmatpush1.xpose.msra.mxu0 0.0
    %1832 = vmatprep.subr.mxu0 0.0
    %1833 = vmatpush1.xpose.msra.mxu0 0.0
    %1834 = vmatprep.subr.mxu0 0.0
    %1835 = vmatpush1.xpose.msra.mxu0 0.0
    %1836 = vmatprep.subr.mxu0 0.0
    %1837 = vmatpush1.xpose.msra.mxu0 0.0
    %1838 = vmatprep.subr.mxu0 0.0
    %1839 = vmatpush1.xpose.msra.mxu0 0.0
    %1840 = vmatprep.subr.mxu0 0.0
    %1841 = vmatpush1.xpose.msra.mxu0 0.0
    %1842 = vmatprep.subr.mxu0 0.0
    %1843 = vmatpush1.xpose.msra.mxu0 0.0
    %1844 = vmatprep.subr.mxu0 0.0
    %1845 = vmatpush1.xpose.msra.mxu0 0.0
    %1846 = vmatprep.subr.mxu0 0.0
    %1847 = vmatpush1.xpose.msra.mxu0 0.0
    %1848 = vmatprep.subr.mxu0 0.0
    %1849 = vmatpush1.xpose.msra.mxu0 0.0
    %1850 = vmatprep.subr.mxu0 0.0
    %1851 = vmatpush1.xpose.msra.mxu0 0.0
    %1852 = vmatprep.subr.mxu0 0.0
    %1853 = vmatpush1.xpose.msra.mxu0 0.0
    %1854 = vmatprep.subr.mxu0 0.0
    %1855 = vmatpush1.xpose.msra.mxu0 0.0
    %1856 = vmatprep.subr.mxu0 0.0
    %1857 = vmatpush1.xpose.msra.mxu0 0.0
    %1858 = vmatprep.subr.mxu0 0.0
    %1859 = vmatpush1.xpose.msra.mxu0 0.0
    %1860 = vmatprep.subr.mxu0 0.0
    %1861 = vmatpush1.xpose.msra.mxu0 0.0
    %1862 = vmatprep.subr.mxu0 0.0
    %1863 = vmatpush1.xpose.msra.mxu0 0.0
    %1864 = vmatprep.subr.mxu0 0.0
    %1865 = vmatpush1.xpose.msra.mxu0 0.0
    %1866 = vmatprep.subr.mxu0 0.0
    %1867 = vmatpush1.xpose.msra.mxu0 0.0
    %1868 = vmatprep.subr.mxu0 0.0
    %1869 = vmatpush1.xpose.msra.mxu0 0.0
    %1870 = vmatprep.mubr.f32.mxu0 0.0
    %v1871 = vand.u32 %v1701, 4294901760
    %1872 = vmatmul.mubr.f32.gmra.mrb[0].mxu0 %v1871
    %v1873 = vpop.f32.mrb[0].mxu0
    %v1874 = vadd.f32 %v1783, %v1873
    %v1875 = vpop.f32.mrb[0].mxu0
    %1876 = vmatprep.mubr.f32.mxu0 0.0
    %v1877 = vand.u32 %v1703, 4294901760
    %1878 = vmatmul.mubr.f32.gmra.mrb[0].mxu0 %v1877
    %v1879 = vpop.f32.mrb[0].mxu0
    %v1880 = vadd.f32 %v1793, %v1879
    %v1881 = vpop.f32.mrb[0].mxu0
    %1882 = vdwg.mxu0
    %1883 = vmatprep.subr.mxu0 0.0
    %v1884 = vand.u32 %v1705, 4294901760
    %v1885 = vsub.f32 %v1705, %v1884
    %1886 = vmatpush1.xpose.msra.mxu0 %v1885
    %1887 = vmatprep.subr.mxu0 0.0
    %v1888 = vand.u32 %v1707, 4294901760
    %v1889 = vsub.f32 %v1707, %v1888
    %1890 = vmatpush1.xpose.msra.mxu0 %v1889
    %1891 = vmatprep.subr.mxu0 0.0
    %1892 = vmatpush1.xpose.msra.mxu0 0.0
    %1893 = vmatprep.subr.mxu0 0.0
    %1894 = vmatpush1.xpose.msra.mxu0 0.0
    %1895 = vmatprep.subr.mxu0 0.0
    %1896 = vmatpush1.xpose.msra.mxu0 0.0
    %1897 = vmatprep.subr.mxu0 0.0
    %1898 = vmatpush1.xpose.msra.mxu0 0.0
    %1899 = vmatprep.subr.mxu0 0.0
    %1900 = vmatpush1.xpose.msra.mxu0 0.0
    %1901 = vmatprep.subr.mxu0 0.0
    %1902 = vmatpush1.xpose.msra.mxu0 0.0
    %1903 = vmatprep.subr.mxu0 0.0
    %1904 = vmatpush1.xpose.msra.mxu0 0.0
    %1905 = vmatprep.subr.mxu0 0.0
    %1906 = vmatpush1.xpose.msra.mxu0 0.0
    %1907 = vmatprep.subr.mxu0 0.0
    %1908 = vmatpush1.xpose.msra.mxu0 0.0
    %1909 = vmatprep.subr.mxu0 0.0
    %1910 = vmatpush1.xpose.msra.mxu0 0.0
    %1911 = vmatprep.subr.mxu0 0.0
    %1912 = vmatpush1.xpose.msra.mxu0 0.0
    %1913 = vmatprep.subr.mxu0 0.0
    %1914 = vmatpush1.xpose.msra.mxu0 0.0
    %1915 = vmatprep.subr.mxu0 0.0
    %1916 = vmatpush1.xpose.msra.mxu0 0.0
    %1917 = vmatprep.subr.mxu0 0.0
    %1918 = vmatpush1.xpose.msra.mxu0 0.0
    %1919 = vmatprep.subr.mxu0 0.0
    %1920 = vmatpush1.xpose.msra.mxu0 0.0
    %1921 = vmatprep.subr.mxu0 0.0
    %1922 = vmatpush1.xpose.msra.mxu0 0.0
    %1923 = vmatprep.subr.mxu0 0.0
    %1924 = vmatpush1.xpose.msra.mxu0 0.0
    %1925 = vmatprep.subr.mxu0 0.0
    %1926 = vmatpush1.xpose.msra.mxu0 0.0
    %1927 = vmatprep.subr.mxu0 0.0
    %1928 = vmatpush1.xpose.msra.mxu0 0.0
    %1929 = vmatprep.subr.mxu0 0.0
    %1930 = vmatpush1.xpose.msra.mxu0 0.0
    %1931 = vmatprep.subr.mxu0 0.0
    %1932 = vmatpush1.xpose.msra.mxu0 0.0
    %1933 = vmatprep.subr.mxu0 0.0
    %1934 = vmatpush1.xpose.msra.mxu0 0.0
    %1935 = vmatprep.subr.mxu0 0.0
    %1936 = vmatpush1.xpose.msra.mxu0 0.0
    %1937 = vmatprep.subr.mxu0 0.0
    %1938 = vmatpush1.xpose.msra.mxu0 0.0
    %1939 = vmatprep.subr.mxu0 0.0
    %1940 = vmatpush1.xpose.msra.mxu0 0.0
    %1941 = vmatprep.subr.mxu0 0.0
    %1942 = vmatpush1.xpose.msra.mxu0 0.0
    %1943 = vmatprep.subr.mxu0 0.0
    %1944 = vmatpush1.xpose.msra.mxu0 0.0
    %1945 = vmatprep.subr.mxu0 0.0
    %1946 = vmatpush1.xpose.msra.mxu0 0.0
    %1947 = vmatprep.subr.mxu0 0.0
    %1948 = vmatpush1.xpose.msra.mxu0 0.0
    %1949 = vmatprep.subr.mxu0 0.0
    %1950 = vmatpush1.xpose.msra.mxu0 0.0
    %1951 = vmatprep.mubr.f32.mxu0 0.0
    %v1952 = vand.u32 %v1701, 4294901760
    %v1953 = vsub.f32 %v1701, %v1952
    %1954 = vmatmul.mubr.f32.gmra.mrb[0].mxu0 %v1953
    %v1955 = vpop.f32.mrb[0].mxu0
    %v1956 = vadd.f32 %v1874, %v1955
    %v1957 = vpop.f32.mrb[0].mxu0
    %1958 = vmatprep.mubr.f32.mxu0 0.0
    %v1959 = vand.u32 %v1703, 4294901760
    %v1960 = vsub.f32 %v1703, %v1959
    %1961 = vmatmul.mubr.f32.gmra.mrb[0].mxu0 %v1960
    %v1962 = vpop.f32.mrb[0].mxu0
    %v1963 = vadd.f32 %v1880, %v1962
    %v1964 = vpop.f32.mrb[0].mxu0
    %1965 = vdwg.mxu0
    %1966 = vmatprep.subr.mxu0 0.0
    %v1967 = vand.u32 %v1705, 4294901760
    %1968 = vmatpush1.xpose.msra.mxu0 %v1967
    %1969 = vmatprep.subr.mxu0 0.0
    %v1970 = vand.u32 %v1707, 4294901760
    %1971 = vmatpush1.xpose.msra.mxu0 %v1970
    %1972 = vmatprep.subr.mxu0 0.0
    %1973 = vmatpush1.xpose.msra.mxu0 0.0
    %1974 = vmatprep.subr.mxu0 0.0
    %1975 = vmatpush1.xpose.msra.mxu0 0.0
    %1976 = vmatprep.subr.mxu0 0.0
    %1977 = vmatpush1.xpose.msra.mxu0 0.0
    %1978 = vmatprep.subr.mxu0 0.0
    %1979 = vmatpush1.xpose.msra.mxu0 0.0
    %1980 = vmatprep.subr.mxu0 0.0
    %1981 = vmatpush1.xpose.msra.mxu0 0.0
    %1982 = vmatprep.subr.mxu0 0.0
    %1983 = vmatpush1.xpose.msra.mxu0 0.0
    %1984 = vmatprep.subr.mxu0 0.0
    %1985 = vmatpush1.xpose.msra.mxu0 0.0
    %1986 = vmatprep.subr.mxu0 0.0
    %1987 = vmatpush1.xpose.msra.mxu0 0.0
    %1988 = vmatprep.subr.mxu0 0.0
    %1989 = vmatpush1.xpose.msra.mxu0 0.0
    %1990 = vmatprep.subr.mxu0 0.0
    %1991 = vmatpush1.xpose.msra.mxu0 0.0
    %1992 = vmatprep.subr.mxu0 0.0
    %1993 = vmatpush1.xpose.msra.mxu0 0.0
    %1994 = vmatprep.subr.mxu0 0.0
    %1995 = vmatpush1.xpose.msra.mxu0 0.0
    %1996 = vmatprep.subr.mxu0 0.0
    %1997 = vmatpush1.xpose.msra.mxu0 0.0
    %1998 = vmatprep.subr.mxu0 0.0
    %1999 = vmatpush1.xpose.msra.mxu0 0.0
    %2000 = vmatprep.subr.mxu0 0.0
    %2001 = vmatpush1.xpose.msra.mxu0 0.0
    %2002 = vmatprep.subr.mxu0 0.0
    %2003 = vmatpush1.xpose.msra.mxu0 0.0
    %2004 = vmatprep.subr.mxu0 0.0
    %2005 = vmatpush1.xpose.msra.mxu0 0.0
    %2006 = vmatprep.subr.mxu0 0.0
    %2007 = vmatpush1.xpose.msra.mxu0 0.0
    %2008 = vmatprep.subr.mxu0 0.0
    %2009 = vmatpush1.xpose.msra.mxu0 0.0
    %2010 = vmatprep.subr.mxu0 0.0
    %2011 = vmatpush1.xpose.msra.mxu0 0.0
    %2012 = vmatprep.subr.mxu0 0.0
    %2013 = vmatpush1.xpose.msra.mxu0 0.0
    %2014 = vmatprep.subr.mxu0 0.0
    %2015 = vmatpush1.xpose.msra.mxu0 0.0
    %2016 = vmatprep.subr.mxu0 0.0
    %2017 = vmatpush1.xpose.msra.mxu0 0.0
    %2018 = vmatprep.subr.mxu0 0.0
    %2019 = vmatpush1.xpose.msra.mxu0 0.0
    %2020 = vmatprep.subr.mxu0 0.0
    %2021 = vmatpush1.xpose.msra.mxu0 0.0
    %2022 = vmatprep.subr.mxu0 0.0
    %2023 = vmatpush1.xpose.msra.mxu0 0.0
    %2024 = vmatprep.subr.mxu0 0.0
    %2025 = vmatpush1.xpose.msra.mxu0 0.0
    %2026 = vmatprep.subr.mxu0 0.0
    %2027 = vmatpush1.xpose.msra.mxu0 0.0
    %2028 = vmatprep.subr.mxu0 0.0
    %2029 = vmatpush1.xpose.msra.mxu0 0.0
    %2030 = vmatprep.subr.mxu0 0.0
    %2031 = vmatpush1.xpose.msra.mxu0 0.0
    %2032 = vmatprep.mubr.f32.mxu0 0.0
    %v2033 = vand.u32 %v1701, 4294901760
    %v2034 = vsub.f32 %v1701, %v2033
    %v2035 = vand.u32 %v2034, 4294901760
    %2036 = vmatmul.mubr.f32.gmra.mrb[0].mxu0 %v2035
    %v2037 = vpop.f32.mrb[0].mxu0
    %v2038 = vadd.f32 %v1956, %v2037
    %v2039 = vpop.f32.mrb[0].mxu0
    %2040 = vmatprep.mubr.f32.mxu0 0.0
    %v2041 = vand.u32 %v1703, 4294901760
    %v2042 = vsub.f32 %v1703, %v2041
    %v2043 = vand.u32 %v2042, 4294901760
    %2044 = vmatmul.mubr.f32.gmra.mrb[0].mxu0 %v2043
    %v2045 = vpop.f32.mrb[0].mxu0
    %v2046 = vadd.f32 %v1963, %v2045
    %v2047 = vpop.f32.mrb[0].mxu0
    %2048 = vdwg.mxu0
    %2049 = vmatprep.subr.mxu0 0.0
    %v2050 = vand.u32 %v1705, 4294901760
    %v2051 = vsub.f32 %v1705, %v2050
    %v2052 = vand.u32 %v2051, 4294901760
    %2053 = vmatpush1.xpose.msra.mxu0 %v2052
    %2054 = vmatprep.subr.mxu0 0.0
    %v2055 = vand.u32 %v1707, 4294901760
    %v2056 = vsub.f32 %v1707, %v2055
    %v2057 = vand.u32 %v2056, 4294901760
    %2058 = vmatpush1.xpose.msra.mxu0 %v2057
    %2059 = vmatprep.subr.mxu0 0.0
    %2060 = vmatpush1.xpose.msra.mxu0 0.0
    %2061 = vmatprep.subr.mxu0 0.0
    %2062 = vmatpush1.xpose.msra.mxu0 0.0
    %2063 = vmatprep.subr.mxu0 0.0
    %2064 = vmatpush1.xpose.msra.mxu0 0.0
    %2065 = vmatprep.subr.mxu0 0.0
    %2066 = vmatpush1.xpose.msra.mxu0 0.0
    %2067 = vmatprep.subr.mxu0 0.0
    %2068 = vmatpush1.xpose.msra.mxu0 0.0
    %2069 = vmatprep.subr.mxu0 0.0
    %2070 = vmatpush1.xpose.msra.mxu0 0.0
    %2071 = vmatprep.subr.mxu0 0.0
    %2072 = vmatpush1.xpose.msra.mxu0 0.0
    %2073 = vmatprep.subr.mxu0 0.0
    %2074 = vmatpush1.xpose.msra.mxu0 0.0
    %2075 = vmatprep.subr.mxu0 0.0
    %2076 = vmatpush1.xpose.msra.mxu0 0.0
    %2077 = vmatprep.subr.mxu0 0.0
    %2078 = vmatpush1.xpose.msra.mxu0 0.0
    %2079 = vmatprep.subr.mxu0 0.0
    %2080 = vmatpush1.xpose.msra.mxu0 0.0
    %2081 = vmatprep.subr.mxu0 0.0
    %2082 = vmatpush1.xpose.msra.mxu0 0.0
    %2083 = vmatprep.subr.mxu0 0.0
    %2084 = vmatpush1.xpose.msra.mxu0 0.0
    %2085 = vmatprep.subr.mxu0 0.0
    %2086 = vmatpush1.xpose.msra.mxu0 0.0
    %2087 = vmatprep.subr.mxu0 0.0
    %2088 = vmatpush1.xpose.msra.mxu0 0.0
    %2089 = vmatprep.subr.mxu0 0.0
    %2090 = vmatpush1.xpose.msra.mxu0 0.0
    %2091 = vmatprep.subr.mxu0 0.0
    %2092 = vmatpush1.xpose.msra.mxu0 0.0
    %2093 = vmatprep.subr.mxu0 0.0
    %2094 = vmatpush1.xpose.msra.mxu0 0.0
    %2095 = vmatprep.subr.mxu0 0.0
    %2096 = vmatpush1.xpose.msra.mxu0 0.0
    %2097 = vmatprep.subr.mxu0 0.0
    %2098 = vmatpush1.xpose.msra.mxu0 0.0
    %2099 = vmatprep.subr.mxu0 0.0
    %2100 = vmatpush1.xpose.msra.mxu0 0.0
    %2101 = vmatprep.subr.mxu0 0.0
    %2102 = vmatpush1.xpose.msra.mxu0 0.0
    %2103 = vmatprep.subr.mxu0 0.0
    %2104 = vmatpush1.xpose.msra.mxu0 0.0
    %2105 = vmatprep.subr.mxu0 0.0
    %2106 = vmatpush1.xpose.msra.mxu0 0.0
    %2107 = vmatprep.subr.mxu0 0.0
    %2108 = vmatpush1.xpose.msra.mxu0 0.0
    %2109 = vmatprep.subr.mxu0 0.0
    %2110 = vmatpush1.xpose.msra.mxu0 0.0
    %2111 = vmatprep.subr.mxu0 0.0
    %2112 = vmatpush1.xpose.msra.mxu0 0.0
    %2113 = vmatprep.subr.mxu0 0.0
    %2114 = vmatpush1.xpose.msra.mxu0 0.0
    %2115 = vmatprep.subr.mxu0 0.0
    %2116 = vmatpush1.xpose.msra.mxu0 0.0
    %2117 = vmatprep.subr.mxu0 0.0
    %2118 = vmatpush1.xpose.msra.mxu0 0.0
    %2119 = vmatprep.mubr.f32.mxu0 0.0
    %v2120 = vand.u32 %v1701, 4294901760
    %2121 = vmatmul.mubr.f32.gmra.mrb[0].mxu0 %v2120
    %v2122 = vpop.f32.mrb[0].mxu0
    %v2123 = vadd.f32 %v2038, %v2122
    %v2124 = vpop.f32.mrb[0].mxu0
    %2125 = vmatprep.mubr.f32.mxu0 0.0
    %v2126 = vand.u32 %v1703, 4294901760
    %2127 = vmatmul.mubr.f32.gmra.mrb[0].mxu0 %v2126
    %v2128 = vpop.f32.mrb[0].mxu0
    %v2129 = vadd.f32 %v2046, %v2128
    %v2130 = vpop.f32.mrb[0].mxu0
    %2131 = vdwg.mxu0
    %2132 = vmatprep.subr.mxu0 0.0
    %v2133 = vand.u32 %v1705, 4294901760
    %2134 = vmatpush1.xpose.msra.mxu0 %v2133
    %2135 = vmatprep.subr.mxu0 0.0
    %v2136 = vand.u32 %v1707, 4294901760
    %2137 = vmatpush1.xpose.msra.mxu0 %v2136
    %2138 = vmatprep.subr.mxu0 0.0
    %2139 = vmatpush1.xpose.msra.mxu0 0.0
    %2140 = vmatprep.subr.mxu0 0.0
    %2141 = vmatpush1.xpose.msra.mxu0 0.0
    %2142 = vmatprep.subr.mxu0 0.0
    %2143 = vmatpush1.xpose.msra.mxu0 0.0
    %2144 = vmatprep.subr.mxu0 0.0
    %2145 = vmatpush1.xpose.msra.mxu0 0.0
    %2146 = vmatprep.subr.mxu0 0.0
    %2147 = vmatpush1.xpose.msra.mxu0 0.0
    %2148 = vmatprep.subr.mxu0 0.0
    %2149 = vmatpush1.xpose.msra.mxu0 0.0
    %2150 = vmatprep.subr.mxu0 0.0
    %2151 = vmatpush1.xpose.msra.mxu0 0.0
    %2152 = vmatprep.subr.mxu0 0.0
    %2153 = vmatpush1.xpose.msra.mxu0 0.0
    %2154 = vmatprep.subr.mxu0 0.0
    %2155 = vmatpush1.xpose.msra.mxu0 0.0
    %2156 = vmatprep.subr.mxu0 0.0
    %2157 = vmatpush1.xpose.msra.mxu0 0.0
    %2158 = vmatprep.subr.mxu0 0.0
    %2159 = vmatpush1.xpose.msra.mxu0 0.0
    %2160 = vmatprep.subr.mxu0 0.0
    %2161 = vmatpush1.xpose.msra.mxu0 0.0
    %2162 = vmatprep.subr.mxu0 0.0
    %2163 = vmatpush1.xpose.msra.mxu0 0.0
    %2164 = vmatprep.subr.mxu0 0.0
    %2165 = vmatpush1.xpose.msra.mxu0 0.0
    %2166 = vmatprep.subr.mxu0 0.0
    %2167 = vmatpush1.xpose.msra.mxu0 0.0
    %2168 = vmatprep.subr.mxu0 0.0
    %2169 = vmatpush1.xpose.msra.mxu0 0.0
    %2170 = vmatprep.subr.mxu0 0.0
    %2171 = vmatpush1.xpose.msra.mxu0 0.0
    %2172 = vmatprep.subr.mxu0 0.0
    %2173 = vmatpush1.xpose.msra.mxu0 0.0
    %2174 = vmatprep.subr.mxu0 0.0
    %2175 = vmatpush1.xpose.msra.mxu0 0.0
    %2176 = vmatprep.subr.mxu0 0.0
    %2177 = vmatpush1.xpose.msra.mxu0 0.0
    %2178 = vmatprep.subr.mxu0 0.0
    %2179 = vmatpush1.xpose.msra.mxu0 0.0
    %2180 = vmatprep.subr.mxu0 0.0
    %2181 = vmatpush1.xpose.msra.mxu0 0.0
    %2182 = vmatprep.subr.mxu0 0.0
    %2183 = vmatpush1.xpose.msra.mxu0 0.0
    %2184 = vmatprep.subr.mxu0 0.0
    %2185 = vmatpush1.xpose.msra.mxu0 0.0
    %2186 = vmatprep.subr.mxu0 0.0
    %2187 = vmatpush1.xpose.msra.mxu0 0.0
    %2188 = vmatprep.subr.mxu0 0.0
    %2189 = vmatpush1.xpose.msra.mxu0 0.0
    %2190 = vmatprep.subr.mxu0 0.0
    %2191 = vmatpush1.xpose.msra.mxu0 0.0
    %2192 = vmatprep.subr.mxu0 0.0
    %2193 = vmatpush1.xpose.msra.mxu0 0.0
    %2194 = vmatprep.subr.mxu0 0.0
    %2195 = vmatpush1.xpose.msra.mxu0 0.0
    %2196 = vmatprep.subr.mxu0 0.0
    %2197 = vmatpush1.xpose.msra.mxu0 0.0
    %2198 = vmatprep.mubr.f32.mxu0 0.0
    %v2199 = vand.u32 %v1701, 4294901760
    %2200 = vmatmul.mubr.f32.gmra.mrb[0].mxu0 %v2199
    %v2201 = vpop.f32.mrb[0].mxu0
    %v2202 = vadd.f32 %v2123, %v2201
    %v2203 = vpop.f32.mrb[0].mxu0
    %2204 = vmatprep.mubr.f32.mxu0 0.0
    %v2205 = vand.u32 %v1703, 4294901760
    %2206 = vmatmul.mubr.f32.gmra.mrb[0].mxu0 %v2205
    %v2207 = vpop.f32.mrb[0].mxu0
    %v2208 = vadd.f32 %v2129, %v2207
    %v2209 = vpop.f32.mrb[0].mxu0
    %2210 = vdwg.mxu0
    %v2211 = vsel %vm1156, %v2202, -inf
    %2212 = vmax.xlane.f32.xlu0 %v2211
    %v2213 = vpop.xlane.xlu0 %2212
    %v2214 = vsel %vm1156, %v2208, -inf
    %2215 = vmax.xlane.f32.xlu0 %v2214
    %v2216 = vpop.xlane.xlu0 %2215
    %v2217 = vsub.f32 %v2202, %v2213
    %v2218 = vsub.f32 %v2208, %v2216
    %v2219 = vmul.f32 %v2217, 1.442695
    %v2220 = vpow.pop %v2219
    %v2221 = vmul.f32 %v2218, 1.442695
    %v2222 = vpow.pop %v2221
    %v2223 = vsel %vm1156, %v2220, 0.0
    %2224 = vadd.xlane.f32.xlu0 %v2223
    %v2225 = vpop.xlane.xlu0 %2224
    %v2226 = vsel %vm1156, %v2222, 0.0
    %2227 = vadd.xlane.f32.xlu0 %v2226
    %v2228 = vpop.xlane.xlu0 %2227
    %v2229 = vrcp.pop %v2225
    %v2230 = vrcp.pop %v2228
    %v2231 = vmul.f32 %v2220, %v2229
    %v2232 = vmul.f32 %v2222, %v2230
    %2233 = vrot.lane.b32.xlu0 %v630, 56
    %v2234 = vpop.permute.xlu0 %2233
    %2235 = vrot.lane.b32.xlu0 %v636, 56
    %v2236 = vpop.permute.xlu0 %2235
    %v2240 = vsel %vm1156, %v2231, 0
    %v2243 = vsel %vm1156, %v2232, 0
    %2245 = vmatprep.subr.mxu0 0.0
    %v2246 = vand.u32 %v2234, 4294901760
    %2247 = vmatpush1.msra.mxu0 %v2246
    %2248 = vmatprep.subr.mxu0 0.0
    %v2249 = vand.u32 %v2236, 4294901760
    %2250 = vmatpush1.msra.mxu0 %v2249
    %2251 = vmatprep.subr.mxu0 0.0
    %2252 = vmatpush1.msra.mxu0 0.0
    %2253 = vmatprep.subr.mxu0 0.0
    %2254 = vmatpush1.msra.mxu0 0.0
    %2255 = vmatprep.subr.mxu0 0.0
    %2256 = vmatpush1.msra.mxu0 0.0
    %2257 = vmatprep.subr.mxu0 0.0
    %2258 = vmatpush1.msra.mxu0 0.0
    %2259 = vmatprep.subr.mxu0 0.0
    %2260 = vmatpush1.msra.mxu0 0.0
    %2261 = vmatprep.subr.mxu0 0.0
    %2262 = vmatpush1.msra.mxu0 0.0
    %2263 = vmatprep.subr.mxu0 0.0
    %2264 = vmatpush1.msra.mxu0 0.0
    %2265 = vmatprep.subr.mxu0 0.0
    %2266 = vmatpush1.msra.mxu0 0.0
    %2267 = vmatprep.subr.mxu0 0.0
    %2268 = vmatpush1.msra.mxu0 0.0
    %2269 = vmatprep.subr.mxu0 0.0
    %2270 = vmatpush1.msra.mxu0 0.0
    %2271 = vmatprep.subr.mxu0 0.0
    %2272 = vmatpush1.msra.mxu0 0.0
    %2273 = vmatprep.subr.mxu0 0.0
    %2274 = vmatpush1.msra.mxu0 0.0
    %2275 = vmatprep.subr.mxu0 0.0
    %2276 = vmatpush1.msra.mxu0 0.0
    %2277 = vmatprep.subr.mxu0 0.0
    %2278 = vmatpush1.msra.mxu0 0.0
    %2279 = vmatprep.subr.mxu0 0.0
    %2280 = vmatpush1.msra.mxu0 0.0
    %2281 = vmatprep.subr.mxu0 0.0
    %2282 = vmatpush1.msra.mxu0 0.0
    %2283 = vmatprep.subr.mxu0 0.0
    %2284 = vmatpush1.msra.mxu0 0.0
    %2285 = vmatprep.subr.mxu0 0.0
    %2286 = vmatpush1.msra.mxu0 0.0
    %2287 = vmatprep.subr.mxu0 0.0
    %2288 = vmatpush1.msra.mxu0 0.0
    %2289 = vmatprep.subr.mxu0 0.0
    %2290 = vmatpush1.msra.mxu0 0.0
    %2291 = vmatprep.subr.mxu0 0.0
    %2292 = vmatpush1.msra.mxu0 0.0
    %2293 = vmatprep.subr.mxu0 0.0
    %2294 = vmatpush1.msra.mxu0 0.0
    %2295 = vmatprep.subr.mxu0 0.0
    %2296 = vmatpush1.msra.mxu0 0.0
    %2297 = vmatprep.subr.mxu0 0.0
    %2298 = vmatpush1.msra.mxu0 0.0
    %2299 = vmatprep.subr.mxu0 0.0
    %2300 = vmatpush1.msra.mxu0 0.0
    %2301 = vmatprep.subr.mxu0 0.0
    %2302 = vmatpush1.msra.mxu0 0.0
    %2303 = vmatprep.subr.mxu0 0.0
    %2304 = vmatpush1.msra.mxu0 0.0
    %2305 = vmatprep.subr.mxu0 0.0
    %2306 = vmatpush1.msra.mxu0 0.0
    %2307 = vmatprep.subr.mxu0 0.0
    %2308 = vmatpush1.msra.mxu0 0.0
    %2309 = vmatprep.subr.mxu0 0.0
    %2310 = vmatpush1.msra.mxu0 0.0
    %2311 = vmatprep.mubr.f32.mxu0 0.0
    %v2312 = vand.u32 %v2240, 4294901760
    %v2313 = vsub.f32 %v2240, %v2312
    %v2314 = vand.u32 %v2313, 4294901760
    %v2315 = vsub.f32 %v2313, %v2314
    %v2316 = vand.u32 %v2315, 4294901760
    %2317 = vmatmul.mubr.f32.gmra.mrb[0].mxu0 %v2316
    %v2318 = vpop.f32.mrb[0].mxu0
    %v2319 = vadd.f32 0.0, %v2318
    %v2320 = vpop.f32.mrb[0].mxu0
    %2321 = vmatprep.mubr.f32.mxu0 0.0
    %v2322 = vand.u32 %v2243, 4294901760
    %v2323 = vsub.f32 %v2243, %v2322
    %v2324 = vand.u32 %v2323, 4294901760
    %v2325 = vsub.f32 %v2323, %v2324
    %v2326 = vand.u32 %v2325, 4294901760
    %2327 = vmatmul.mubr.f32.gmra.mrb[0].mxu0 %v2326
    %v2328 = vpop.f32.mrb[0].mxu0
    %v2329 = vadd.f32 0.0, %v2328
    %v2330 = vpop.f32.mrb[0].mxu0
    %2331 = vdwg.mxu0
    %2332 = vmatprep.subr.mxu0 0.0
    %v2333 = vand.u32 %v2234, 4294901760
    %v2334 = vsub.f32 %v2234, %v2333
    %v2335 = vand.u32 %v2334, 4294901760
    %v2336 = vsub.f32 %v2334, %v2335
    %v2337 = vand.u32 %v2336, 4294901760
    %2338 = vmatpush1.msra.mxu0 %v2337
    %2339 = vmatprep.subr.mxu0 0.0
    %v2340 = vand.u32 %v2236, 4294901760
    %v2341 = vsub.f32 %v2236, %v2340
    %v2342 = vand.u32 %v2341, 4294901760
    %v2343 = vsub.f32 %v2341, %v2342
    %v2344 = vand.u32 %v2343, 4294901760
    %2345 = vmatpush1.msra.mxu0 %v2344
    %2346 = vmatprep.subr.mxu0 0.0
    %2347 = vmatpush1.msra.mxu0 0.0
    %2348 = vmatprep.subr.mxu0 0.0
    %2349 = vmatpush1.msra.mxu0 0.0
    %2350 = vmatprep.subr.mxu0 0.0
    %2351 = vmatpush1.msra.mxu0 0.0
    %2352 = vmatprep.subr.mxu0 0.0
    %2353 = vmatpush1.msra.mxu0 0.0
    %2354 = vmatprep.subr.mxu0 0.0
    %2355 = vmatpush1.msra.mxu0 0.0
    %2356 = vmatprep.subr.mxu0 0.0
    %2357 = vmatpush1.msra.mxu0 0.0
    %2358 = vmatprep.subr.mxu0 0.0
    %2359 = vmatpush1.msra.mxu0 0.0
    %2360 = vmatprep.subr.mxu0 0.0
    %2361 = vmatpush1.msra.mxu0 0.0
    %2362 = vmatprep.subr.mxu0 0.0
    %2363 = vmatpush1.msra.mxu0 0.0
    %2364 = vmatprep.subr.mxu0 0.0
    %2365 = vmatpush1.msra.mxu0 0.0
    %2366 = vmatprep.subr.mxu0 0.0
    %2367 = vmatpush1.msra.mxu0 0.0
    %2368 = vmatprep.subr.mxu0 0.0
    %2369 = vmatpush1.msra.mxu0 0.0
    %2370 = vmatprep.subr.mxu0 0.0
    %2371 = vmatpush1.msra.mxu0 0.0
    %2372 = vmatprep.subr.mxu0 0.0
    %2373 = vmatpush1.msra.mxu0 0.0
    %2374 = vmatprep.subr.mxu0 0.0
    %2375 = vmatpush1.msra.mxu0 0.0
    %2376 = vmatprep.subr.mxu0 0.0
    %2377 = vmatpush1.msra.mxu0 0.0
    %2378 = vmatprep.subr.mxu0 0.0
    %2379 = vmatpush1.msra.mxu0 0.0
    %2380 = vmatprep.subr.mxu0 0.0
    %2381 = vmatpush1.msra.mxu0 0.0
    %2382 = vmatprep.subr.mxu0 0.0
    %2383 = vmatpush1.msra.mxu0 0.0
    %2384 = vmatprep.subr.mxu0 0.0
    %2385 = vmatpush1.msra.mxu0 0.0
    %2386 = vmatprep.subr.mxu0 0.0
    %2387 = vmatpush1.msra.mxu0 0.0
    %2388 = vmatprep.subr.mxu0 0.0
    %2389 = vmatpush1.msra.mxu0 0.0
    %2390 = vmatprep.subr.mxu0 0.0
    %2391 = vmatpush1.msra.mxu0 0.0
    %2392 = vmatprep.subr.mxu0 0.0
    %2393 = vmatpush1.msra.mxu0 0.0
    %2394 = vmatprep.subr.mxu0 0.0
    %2395 = vmatpush1.msra.mxu0 0.0
    %2396 = vmatprep.subr.mxu0 0.0
    %2397 = vmatpush1.msra.mxu0 0.0
    %2398 = vmatprep.subr.mxu0 0.0
    %2399 = vmatpush1.msra.mxu0 0.0
    %2400 = vmatprep.subr.mxu0 0.0
    %2401 = vmatpush1.msra.mxu0 0.0
    %2402 = vmatprep.subr.mxu0 0.0
    %2403 = vmatpush1.msra.mxu0 0.0
    %2404 = vmatprep.subr.mxu0 0.0
    %2405 = vmatpush1.msra.mxu0 0.0
    %2406 = vmatprep.mubr.f32.mxu0 0.0
    %v2407 = vand.u32 %v2240, 4294901760
    %2408 = vmatmul.mubr.f32.gmra.mrb[0].mxu0 %v2407
    %v2409 = vpop.f32.mrb[0].mxu0
    %v2410 = vadd.f32 %v2319, %v2409
    %v2411 = vpop.f32.mrb[0].mxu0
    %2412 = vmatprep.mubr.f32.mxu0 0.0
    %v2413 = vand.u32 %v2243, 4294901760
    %2414 = vmatmul.mubr.f32.gmra.mrb[0].mxu0 %v2413
    %v2415 = vpop.f32.mrb[0].mxu0
    %v2416 = vadd.f32 %v2329, %v2415
    %v2417 = vpop.f32.mrb[0].mxu0
    %2418 = vdwg.mxu0
    %2419 = vmatprep.subr.mxu0 0.0
    %v2420 = vand.u32 %v2234, 4294901760
    %v2421 = vsub.f32 %v2234, %v2420
    %2422 = vmatpush1.msra.mxu0 %v2421
    %2423 = vmatprep.subr.mxu0 0.0
    %v2424 = vand.u32 %v2236, 4294901760
    %v2425 = vsub.f32 %v2236, %v2424
    %2426 = vmatpush1.msra.mxu0 %v2425
    %2427 = vmatprep.subr.mxu0 0.0
    %2428 = vmatpush1.msra.mxu0 0.0
    %2429 = vmatprep.subr.mxu0 0.0
    %2430 = vmatpush1.msra.mxu0 0.0
    %2431 = vmatprep.subr.mxu0 0.0
    %2432 = vmatpush1.msra.mxu0 0.0
    %2433 = vmatprep.subr.mxu0 0.0
    %2434 = vmatpush1.msra.mxu0 0.0
    %2435 = vmatprep.subr.mxu0 0.0
    %2436 = vmatpush1.msra.mxu0 0.0
    %2437 = vmatprep.subr.mxu0 0.0
    %2438 = vmatpush1.msra.mxu0 0.0
    %2439 = vmatprep.subr.mxu0 0.0
    %2440 = vmatpush1.msra.mxu0 0.0
    %2441 = vmatprep.subr.mxu0 0.0
    %2442 = vmatpush1.msra.mxu0 0.0
    %2443 = vmatprep.subr.mxu0 0.0
    %2444 = vmatpush1.msra.mxu0 0.0
    %2445 = vmatprep.subr.mxu0 0.0
    %2446 = vmatpush1.msra.mxu0 0.0
    %2447 = vmatprep.subr.mxu0 0.0
    %2448 = vmatpush1.msra.mxu0 0.0
    %2449 = vmatprep.subr.mxu0 0.0
    %2450 = vmatpush1.msra.mxu0 0.0
    %2451 = vmatprep.subr.mxu0 0.0
    %2452 = vmatpush1.msra.mxu0 0.0
    %2453 = vmatprep.subr.mxu0 0.0
    %2454 = vmatpush1.msra.mxu0 0.0
    %2455 = vmatprep.subr.mxu0 0.0
    %2456 = vmatpush1.msra.mxu0 0.0
    %2457 = vmatprep.subr.mxu0 0.0
    %2458 = vmatpush1.msra.mxu0 0.0
    %2459 = vmatprep.subr.mxu0 0.0
    %2460 = vmatpush1.msra.mxu0 0.0
    %2461 = vmatprep.subr.mxu0 0.0
    %2462 = vmatpush1.msra.mxu0 0.0
    %2463 = vmatprep.subr.mxu0 0.0
    %2464 = vmatpush1.msra.mxu0 0.0
    %2465 = vmatprep.subr.mxu0 0.0
    %2466 = vmatpush1.msra.mxu0 0.0
    %2467 = vmatprep.subr.mxu0 0.0
    %2468 = vmatpush1.msra.mxu0 0.0
    %2469 = vmatprep.subr.mxu0 0.0
    %2470 = vmatpush1.msra.mxu0 0.0
    %2471 = vmatprep.subr.mxu0 0.0
    %2472 = vmatpush1.msra.mxu0 0.0
    %2473 = vmatprep.subr.mxu0 0.0
    %2474 = vmatpush1.msra.mxu0 0.0
    %2475 = vmatprep.subr.mxu0 0.0
    %2476 = vmatpush1.msra.mxu0 0.0
    %2477 = vmatprep.subr.mxu0 0.0
    %2478 = vmatpush1.msra.mxu0 0.0
    %2479 = vmatprep.subr.mxu0 0.0
    %2480 = vmatpush1.msra.mxu0 0.0
    %2481 = vmatprep.subr.mxu0 0.0
    %2482 = vmatpush1.msra.mxu0 0.0
    %2483 = vmatprep.subr.mxu0 0.0
    %2484 = vmatpush1.msra.mxu0 0.0
    %2485 = vmatprep.subr.mxu0 0.0
    %2486 = vmatpush1.msra.mxu0 0.0
    %2487 = vmatprep.mubr.f32.mxu0 0.0
    %v2488 = vand.u32 %v2240, 4294901760
    %v2489 = vsub.f32 %v2240, %v2488
    %2490 = vmatmul.mubr.f32.gmra.mrb[0].mxu0 %v2489
    %v2491 = vpop.f32.mrb[0].mxu0
    %v2492 = vadd.f32 %v2410, %v2491
    %v2493 = vpop.f32.mrb[0].mxu0
    %2494 = vmatprep.mubr.f32.mxu0 0.0
    %v2495 = vand.u32 %v2243, 4294901760
    %v2496 = vsub.f32 %v2243, %v2495
    %2497 = vmatmul.mubr.f32.gmra.mrb[0].mxu0 %v2496
    %v2498 = vpop.f32.mrb[0].mxu0
    %v2499 = vadd.f32 %v2416, %v2498
    %v2500 = vpop.f32.mrb[0].mxu0
    %2501 = vdwg.mxu0
    %2502 = vmatprep.subr.mxu0 0.0
    %v2503 = vand.u32 %v2234, 4294901760
    %2504 = vmatpush1.msra.mxu0 %v2503
    %2505 = vmatprep.subr.mxu0 0.0
    %v2506 = vand.u32 %v2236, 4294901760
    %2507 = vmatpush1.msra.mxu0 %v2506
    %2508 = vmatprep.subr.mxu0 0.0
    %2509 = vmatpush1.msra.mxu0 0.0
    %2510 = vmatprep.subr.mxu0 0.0
    %2511 = vmatpush1.msra.mxu0 0.0
    %2512 = vmatprep.subr.mxu0 0.0
    %2513 = vmatpush1.msra.mxu0 0.0
    %2514 = vmatprep.subr.mxu0 0.0
    %2515 = vmatpush1.msra.mxu0 0.0
    %2516 = vmatprep.subr.mxu0 0.0
    %2517 = vmatpush1.msra.mxu0 0.0
    %2518 = vmatprep.subr.mxu0 0.0
    %2519 = vmatpush1.msra.mxu0 0.0
    %2520 = vmatprep.subr.mxu0 0.0
    %2521 = vmatpush1.msra.mxu0 0.0
    %2522 = vmatprep.subr.mxu0 0.0
    %2523 = vmatpush1.msra.mxu0 0.0
    %2524 = vmatprep.subr.mxu0 0.0
    %2525 = vmatpush1.msra.mxu0 0.0
    %2526 = vmatprep.subr.mxu0 0.0
    %2527 = vmatpush1.msra.mxu0 0.0
    %2528 = vmatprep.subr.mxu0 0.0
    %2529 = vmatpush1.msra.mxu0 0.0
    %2530 = vmatprep.subr.mxu0 0.0
    %2531 = vmatpush1.msra.mxu0 0.0
    %2532 = vmatprep.subr.mxu0 0.0
    %2533 = vmatpush1.msra.mxu0 0.0
    %2534 = vmatprep.subr.mxu0 0.0
    %2535 = vmatpush1.msra.mxu0 0.0
    %2536 = vmatprep.subr.mxu0 0.0
    %2537 = vmatpush1.msra.mxu0 0.0
    %2538 = vmatprep.subr.mxu0 0.0
    %2539 = vmatpush1.msra.mxu0 0.0
    %2540 = vmatprep.subr.mxu0 0.0
    %2541 = vmatpush1.msra.mxu0 0.0
    %2542 = vmatprep.subr.mxu0 0.0
    %2543 = vmatpush1.msra.mxu0 0.0
    %2544 = vmatprep.subr.mxu0 0.0
    %2545 = vmatpush1.msra.mxu0 0.0
    %2546 = vmatprep.subr.mxu0 0.0
    %2547 = vmatpush1.msra.mxu0 0.0
    %2548 = vmatprep.subr.mxu0 0.0
    %2549 = vmatpush1.msra.mxu0 0.0
    %2550 = vmatprep.subr.mxu0 0.0
    %2551 = vmatpush1.msra.mxu0 0.0
    %2552 = vmatprep.subr.mxu0 0.0
    %2553 = vmatpush1.msra.mxu0 0.0
    %2554 = vmatprep.subr.mxu0 0.0
    %2555 = vmatpush1.msra.mxu0 0.0
    %2556 = vmatprep.subr.mxu0 0.0
    %2557 = vmatpush1.msra.mxu0 0.0
    %2558 = vmatprep.subr.mxu0 0.0
    %2559 = vmatpush1.msra.mxu0 0.0
    %2560 = vmatprep.subr.mxu0 0.0
    %2561 = vmatpush1.msra.mxu0 0.0
    %2562 = vmatprep.subr.mxu0 0.0
    %2563 = vmatpush1.msra.mxu0 0.0
    %2564 = vmatprep.subr.mxu0 0.0
    %2565 = vmatpush1.msra.mxu0 0.0
    %2566 = vmatprep.subr.mxu0 0.0
    %2567 = vmatpush1.msra.mxu0 0.0
    %2568 = vmatprep.mubr.f32.mxu0 0.0
    %v2569 = vand.u32 %v2240, 4294901760
    %v2570 = vsub.f32 %v2240, %v2569
    %v2571 = vand.u32 %v2570, 4294901760
    %2572 = vmatmul.mubr.f32.gmra.mrb[0].mxu0 %v2571
    %v2573 = vpop.f32.mrb[0].mxu0
    %v2574 = vadd.f32 %v2492, %v2573
    %v2575 = vpop.f32.mrb[0].mxu0
    %2576 = vmatprep.mubr.f32.mxu0 0.0
    %v2577 = vand.u32 %v2243, 4294901760
    %v2578 = vsub.f32 %v2243, %v2577
    %v2579 = vand.u32 %v2578, 4294901760
    %2580 = vmatmul.mubr.f32.gmra.mrb[0].mxu0 %v2579
    %v2581 = vpop.f32.mrb[0].mxu0
    %v2582 = vadd.f32 %v2499, %v2581
    %v2583 = vpop.f32.mrb[0].mxu0
    %2584 = vdwg.mxu0
    %2585 = vmatprep.subr.mxu0 0.0
    %v2586 = vand.u32 %v2234, 4294901760
    %v2587 = vsub.f32 %v2234, %v2586
    %v2588 = vand.u32 %v2587, 4294901760
    %2589 = vmatpush1.msra.mxu0 %v2588
    %2590 = vmatprep.subr.mxu0 0.0
    %v2591 = vand.u32 %v2236, 4294901760
    %v2592 = vsub.f32 %v2236, %v2591
    %v2593 = vand.u32 %v2592, 4294901760
    %2594 = vmatpush1.msra.mxu0 %v2593
    %2595 = vmatprep.subr.mxu0 0.0
    %2596 = vmatpush1.msra.mxu0 0.0
    %2597 = vmatprep.subr.mxu0 0.0
    %2598 = vmatpush1.msra.mxu0 0.0
    %2599 = vmatprep.subr.mxu0 0.0
    %2600 = vmatpush1.msra.mxu0 0.0
    %2601 = vmatprep.subr.mxu0 0.0
    %2602 = vmatpush1.msra.mxu0 0.0
    %2603 = vmatprep.subr.mxu0 0.0
    %2604 = vmatpush1.msra.mxu0 0.0
    %2605 = vmatprep.subr.mxu0 0.0
    %2606 = vmatpush1.msra.mxu0 0.0
    %2607 = vmatprep.subr.mxu0 0.0
    %2608 = vmatpush1.msra.mxu0 0.0
    %2609 = vmatprep.subr.mxu0 0.0
    %2610 = vmatpush1.msra.mxu0 0.0
    %2611 = vmatprep.subr.mxu0 0.0
    %2612 = vmatpush1.msra.mxu0 0.0
    %2613 = vmatprep.subr.mxu0 0.0
    %2614 = vmatpush1.msra.mxu0 0.0
    %2615 = vmatprep.subr.mxu0 0.0
    %2616 = vmatpush1.msra.mxu0 0.0
    %2617 = vmatprep.subr.mxu0 0.0
    %2618 = vmatpush1.msra.mxu0 0.0
    %2619 = vmatprep.subr.mxu0 0.0
    %2620 = vmatpush1.msra.mxu0 0.0
    %2621 = vmatprep.subr.mxu0 0.0
    %2622 = vmatpush1.msra.mxu0 0.0
    %2623 = vmatprep.subr.mxu0 0.0
    %2624 = vmatpush1.msra.mxu0 0.0
    %2625 = vmatprep.subr.mxu0 0.0
    %2626 = vmatpush1.msra.mxu0 0.0
    %2627 = vmatprep.subr.mxu0 0.0
    %2628 = vmatpush1.msra.mxu0 0.0
    %2629 = vmatprep.subr.mxu0 0.0
    %2630 = vmatpush1.msra.mxu0 0.0
    %2631 = vmatprep.subr.mxu0 0.0
    %2632 = vmatpush1.msra.mxu0 0.0
    %2633 = vmatprep.subr.mxu0 0.0
    %2634 = vmatpush1.msra.mxu0 0.0
    %2635 = vmatprep.subr.mxu0 0.0
    %2636 = vmatpush1.msra.mxu0 0.0
    %2637 = vmatprep.subr.mxu0 0.0
    %2638 = vmatpush1.msra.mxu0 0.0
    %2639 = vmatprep.subr.mxu0 0.0
    %2640 = vmatpush1.msra.mxu0 0.0
    %2641 = vmatprep.subr.mxu0 0.0
    %2642 = vmatpush1.msra.mxu0 0.0
    %2643 = vmatprep.subr.mxu0 0.0
    %2644 = vmatpush1.msra.mxu0 0.0
    %2645 = vmatprep.subr.mxu0 0.0
    %2646 = vmatpush1.msra.mxu0 0.0
    %2647 = vmatprep.subr.mxu0 0.0
    %2648 = vmatpush1.msra.mxu0 0.0
    %2649 = vmatprep.subr.mxu0 0.0
    %2650 = vmatpush1.msra.mxu0 0.0
    %2651 = vmatprep.subr.mxu0 0.0
    %2652 = vmatpush1.msra.mxu0 0.0
    %2653 = vmatprep.subr.mxu0 0.0
    %2654 = vmatpush1.msra.mxu0 0.0
    %2655 = vmatprep.mubr.f32.mxu0 0.0
    %v2656 = vand.u32 %v2240, 4294901760
    %2657 = vmatmul.mubr.f32.gmra.mrb[0].mxu0 %v2656
    %v2658 = vpop.f32.mrb[0].mxu0
    %v2659 = vadd.f32 %v2574, %v2658
    %v2660 = vpop.f32.mrb[0].mxu0
    %2661 = vmatprep.mubr.f32.mxu0 0.0
    %v2662 = vand.u32 %v2243, 4294901760
    %2663 = vmatmul.mubr.f32.gmra.mrb[0].mxu0 %v2662
    %v2664 = vpop.f32.mrb[0].mxu0
    %v2665 = vadd.f32 %v2582, %v2664
    %v2666 = vpop.f32.mrb[0].mxu0
    %2667 = vdwg.mxu0
    %2668 = vmatprep.subr.mxu0 0.0
    %v2669 = vand.u32 %v2234, 4294901760
    %2670 = vmatpush1.msra.mxu0 %v2669
    %2671 = vmatprep.subr.mxu0 0.0
    %v2672 = vand.u32 %v2236, 4294901760
    %2673 = vmatpush1.msra.mxu0 %v2672
    %2674 = vmatprep.subr.mxu0 0.0
    %2675 = vmatpush1.msra.mxu0 0.0
    %2676 = vmatprep.subr.mxu0 0.0
    %2677 = vmatpush1.msra.mxu0 0.0
    %2678 = vmatprep.subr.mxu0 0.0
    %2679 = vmatpush1.msra.mxu0 0.0
    %2680 = vmatprep.subr.mxu0 0.0
    %2681 = vmatpush1.msra.mxu0 0.0
    %2682 = vmatprep.subr.mxu0 0.0
    %2683 = vmatpush1.msra.mxu0 0.0
    %2684 = vmatprep.subr.mxu0 0.0
    %2685 = vmatpush1.msra.mxu0 0.0
    %2686 = vmatprep.subr.mxu0 0.0
    %2687 = vmatpush1.msra.mxu0 0.0
    %2688 = vmatprep.subr.mxu0 0.0
    %2689 = vmatpush1.msra.mxu0 0.0
    %2690 = vmatprep.subr.mxu0 0.0
    %2691 = vmatpush1.msra.mxu0 0.0
    %2692 = vmatprep.subr.mxu0 0.0
    %2693 = vmatpush1.msra.mxu0 0.0
    %2694 = vmatprep.subr.mxu0 0.0
    %2695 = vmatpush1.msra.mxu0 0.0
    %2696 = vmatprep.subr.mxu0 0.0
    %2697 = vmatpush1.msra.mxu0 0.0
    %2698 = vmatprep.subr.mxu0 0.0
    %2699 = vmatpush1.msra.mxu0 0.0
    %2700 = vmatprep.subr.mxu0 0.0
    %2701 = vmatpush1.msra.mxu0 0.0
    %2702 = vmatprep.subr.mxu0 0.0
    %2703 = vmatpush1.msra.mxu0 0.0
    %2704 = vmatprep.subr.mxu0 0.0
    %2705 = vmatpush1.msra.mxu0 0.0
    %2706 = vmatprep.subr.mxu0 0.0
    %2707 = vmatpush1.msra.mxu0 0.0
    %2708 = vmatprep.subr.mxu0 0.0
    %2709 = vmatpush1.msra.mxu0 0.0
    %2710 = vmatprep.subr.mxu0 0.0
    %2711 = vmatpush1.msra.mxu0 0.0
    %2712 = vmatprep.subr.mxu0 0.0
    %2713 = vmatpush1.msra.mxu0 0.0
    %2714 = vmatprep.subr.mxu0 0.0
    %2715 = vmatpush1.msra.mxu0 0.0
    %2716 = vmatprep.subr.mxu0 0.0
    %2717 = vmatpush1.msra.mxu0 0.0
    %2718 = vmatprep.subr.mxu0 0.0
    %2719 = vmatpush1.msra.mxu0 0.0
    %2720 = vmatprep.subr.mxu0 0.0
    %2721 = vmatpush1.msra.mxu0 0.0
    %2722 = vmatprep.subr.mxu0 0.0
    %2723 = vmatpush1.msra.mxu0 0.0
    %2724 = vmatprep.subr.mxu0 0.0
    %2725 = vmatpush1.msra.mxu0 0.0
    %2726 = vmatprep.subr.mxu0 0.0
    %2727 = vmatpush1.msra.mxu0 0.0
    %2728 = vmatprep.subr.mxu0 0.0
    %2729 = vmatpush1.msra.mxu0 0.0
    %2730 = vmatprep.subr.mxu0 0.0
    %2731 = vmatpush1.msra.mxu0 0.0
    %2732 = vmatprep.subr.mxu0 0.0
    %2733 = vmatpush1.msra.mxu0 0.0
    %2734 = vmatprep.mubr.f32.mxu0 0.0
    %v2735 = vand.u32 %v2240, 4294901760
    %2736 = vmatmul.mubr.f32.gmra.mrb[0].mxu0 %v2735
    %v2737 = vpop.f32.mrb[0].mxu0
    %v2738 = vadd.f32 %v2659, %v2737
    %v2739 = vpop.f32.mrb[0].mxu0
    %2740 = vmatprep.mubr.f32.mxu0 0.0
    %v2741 = vand.u32 %v2243, 4294901760
    %2742 = vmatmul.mubr.f32.gmra.mrb[0].mxu0 %v2741
    %v2743 = vpop.f32.mrb[0].mxu0
    %v2744 = vadd.f32 %v2665, %v2743
    %v2745 = vpop.f32.mrb[0].mxu0
    %2746 = vdwg.mxu0
    %2747 = vrot.lane.b32.xlu0 %v630, 112
    %v2748 = vpop.permute.xlu0 %2747
    %2749 = vrot.lane.b32.xlu0 %v636, 112
    %v2750 = vpop.permute.xlu0 %2749
    %2751 = vrot.lane.b32.xlu0 %v630, 80
    %v2752 = vpop.permute.xlu0 %2751
    %2753 = vrot.lane.b32.xlu0 %v636, 80
    %v2754 = vpop.permute.xlu0 %2753
    %v2755 = vsel %vm645, %v2748, 0
    %v2757 = vsel %vm645, %v2750, 0
    %v2759 = vsel %vm645, %v2752, 0
    %v2761 = vsel %vm645, %v2754, 0
    %2763 = vmatprep.subr.mxu0 0.0
    %v2764 = vand.u32 %v2759, 4294901760
    %2765 = vmatpush1.xpose.msra.mxu0 %v2764
    %2766 = vmatprep.subr.mxu0 0.0
    %v2767 = vand.u32 %v2761, 4294901760
    %2768 = vmatpush1.xpose.msra.mxu0 %v2767
    %2769 = vmatprep.subr.mxu0 0.0
    %2770 = vmatpush1.xpose.msra.mxu0 0.0
    %2771 = vmatprep.subr.mxu0 0.0
    %2772 = vmatpush1.xpose.msra.mxu0 0.0
    %2773 = vmatprep.subr.mxu0 0.0
    %2774 = vmatpush1.xpose.msra.mxu0 0.0
    %2775 = vmatprep.subr.mxu0 0.0
    %2776 = vmatpush1.xpose.msra.mxu0 0.0
    %2777 = vmatprep.subr.mxu0 0.0
    %2778 = vmatpush1.xpose.msra.mxu0 0.0
    %2779 = vmatprep.subr.mxu0 0.0
    %2780 = vmatpush1.xpose.msra.mxu0 0.0
    %2781 = vmatprep.subr.mxu0 0.0
    %2782 = vmatpush1.xpose.msra.mxu0 0.0
    %2783 = vmatprep.subr.mxu0 0.0
    %2784 = vmatpush1.xpose.msra.mxu0 0.0
    %2785 = vmatprep.subr.mxu0 0.0
    %2786 = vmatpush1.xpose.msra.mxu0 0.0
    %2787 = vmatprep.subr.mxu0 0.0
    %2788 = vmatpush1.xpose.msra.mxu0 0.0
    %2789 = vmatprep.subr.mxu0 0.0
    %2790 = vmatpush1.xpose.msra.mxu0 0.0
    %2791 = vmatprep.subr.mxu0 0.0
    %2792 = vmatpush1.xpose.msra.mxu0 0.0
    %2793 = vmatprep.subr.mxu0 0.0
    %2794 = vmatpush1.xpose.msra.mxu0 0.0
    %2795 = vmatprep.subr.mxu0 0.0
    %2796 = vmatpush1.xpose.msra.mxu0 0.0
    %2797 = vmatprep.subr.mxu0 0.0
    %2798 = vmatpush1.xpose.msra.mxu0 0.0
    %2799 = vmatprep.subr.mxu0 0.0
    %2800 = vmatpush1.xpose.msra.mxu0 0.0
    %2801 = vmatprep.subr.mxu0 0.0
    %2802 = vmatpush1.xpose.msra.mxu0 0.0
    %2803 = vmatprep.subr.mxu0 0.0
    %2804 = vmatpush1.xpose.msra.mxu0 0.0
    %2805 = vmatprep.subr.mxu0 0.0
    %2806 = vmatpush1.xpose.msra.mxu0 0.0
    %2807 = vmatprep.subr.mxu0 0.0
    %2808 = vmatpush1.xpose.msra.mxu0 0.0
    %2809 = vmatprep.subr.mxu0 0.0
    %2810 = vmatpush1.xpose.msra.mxu0 0.0
    %2811 = vmatprep.subr.mxu0 0.0
    %2812 = vmatpush1.xpose.msra.mxu0 0.0
    %2813 = vmatprep.subr.mxu0 0.0
    %2814 = vmatpush1.xpose.msra.mxu0 0.0
    %2815 = vmatprep.subr.mxu0 0.0
    %2816 = vmatpush1.xpose.msra.mxu0 0.0
    %2817 = vmatprep.subr.mxu0 0.0
    %2818 = vmatpush1.xpose.msra.mxu0 0.0
    %2819 = vmatprep.subr.mxu0 0.0
    %2820 = vmatpush1.xpose.msra.mxu0 0.0
    %2821 = vmatprep.subr.mxu0 0.0
    %2822 = vmatpush1.xpose.msra.mxu0 0.0
    %2823 = vmatprep.subr.mxu0 0.0
    %2824 = vmatpush1.xpose.msra.mxu0 0.0
    %2825 = vmatprep.subr.mxu0 0.0
    %2826 = vmatpush1.xpose.msra.mxu0 0.0
    %2827 = vmatprep.subr.mxu0 0.0
    %2828 = vmatpush1.xpose.msra.mxu0 0.0
    %2829 = vmatprep.mubr.f32.mxu0 0.0
    %v2830 = vand.u32 %v2755, 4294901760
    %v2831 = vsub.f32 %v2755, %v2830
    %v2832 = vand.u32 %v2831, 4294901760
    %v2833 = vsub.f32 %v2831, %v2832
    %v2834 = vand.u32 %v2833, 4294901760
    %2835 = vmatmul.mubr.f32.gmra.mrb[0].mxu0 %v2834
    %v2836 = vpop.f32.mrb[0].mxu0
    %v2837 = vadd.f32 %v55, %v2836
    %v2838 = vpop.f32.mrb[0].mxu0
    %2839 = vmatprep.mubr.f32.mxu0 0.0
    %v2840 = vand.u32 %v2757, 4294901760
    %v2841 = vsub.f32 %v2757, %v2840
    %v2842 = vand.u32 %v2841, 4294901760
    %v2843 = vsub.f32 %v2841, %v2842
    %v2844 = vand.u32 %v2843, 4294901760
    %2845 = vmatmul.mubr.f32.gmra.mrb[0].mxu0 %v2844
    %v2846 = vpop.f32.mrb[0].mxu0
    %v2847 = vadd.f32 %v56, %v2846
    %v2848 = vpop.f32.mrb[0].mxu0
    %2849 = vdwg.mxu0
    %2850 = vmatprep.subr.mxu0 0.0
    %v2851 = vand.u32 %v2759, 4294901760
    %v2852 = vsub.f32 %v2759, %v2851
    %v2853 = vand.u32 %v2852, 4294901760
    %v2854 = vsub.f32 %v2852, %v2853
    %v2855 = vand.u32 %v2854, 4294901760
    %2856 = vmatpush1.xpose.msra.mxu0 %v2855
    %2857 = vmatprep.subr.mxu0 0.0
    %v2858 = vand.u32 %v2761, 4294901760
    %v2859 = vsub.f32 %v2761, %v2858
    %v2860 = vand.u32 %v2859, 4294901760
    %v2861 = vsub.f32 %v2859, %v2860
    %v2862 = vand.u32 %v2861, 4294901760
    %2863 = vmatpush1.xpose.msra.mxu0 %v2862
    %2864 = vmatprep.subr.mxu0 0.0
    %2865 = vmatpush1.xpose.msra.mxu0 0.0
    %2866 = vmatprep.subr.mxu0 0.0
    %2867 = vmatpush1.xpose.msra.mxu0 0.0
    %2868 = vmatprep.subr.mxu0 0.0
    %2869 = vmatpush1.xpose.msra.mxu0 0.0
    %2870 = vmatprep.subr.mxu0 0.0
    %2871 = vmatpush1.xpose.msra.mxu0 0.0
    %2872 = vmatprep.subr.mxu0 0.0
    %2873 = vmatpush1.xpose.msra.mxu0 0.0
    %2874 = vmatprep.subr.mxu0 0.0
    %2875 = vmatpush1.xpose.msra.mxu0 0.0
    %2876 = vmatprep.subr.mxu0 0.0
    %2877 = vmatpush1.xpose.msra.mxu0 0.0
    %2878 = vmatprep.subr.mxu0 0.0
    %2879 = vmatpush1.xpose.msra.mxu0 0.0
    %2880 = vmatprep.subr.mxu0 0.0
    %2881 = vmatpush1.xpose.msra.mxu0 0.0
    %2882 = vmatprep.subr.mxu0 0.0
    %2883 = vmatpush1.xpose.msra.mxu0 0.0
    %2884 = vmatprep.subr.mxu0 0.0
    %2885 = vmatpush1.xpose.msra.mxu0 0.0
    %2886 = vmatprep.subr.mxu0 0.0
    %2887 = vmatpush1.xpose.msra.mxu0 0.0
    %2888 = vmatprep.subr.mxu0 0.0
    %2889 = vmatpush1.xpose.msra.mxu0 0.0
    %2890 = vmatprep.subr.mxu0 0.0
    %2891 = vmatpush1.xpose.msra.mxu0 0.0
    %2892 = vmatprep.subr.mxu0 0.0
    %2893 = vmatpush1.xpose.msra.mxu0 0.0
    %2894 = vmatprep.subr.mxu0 0.0
    %2895 = vmatpush1.xpose.msra.mxu0 0.0
    %2896 = vmatprep.subr.mxu0 0.0
    %2897 = vmatpush1.xpose.msra.mxu0 0.0
    %2898 = vmatprep.subr.mxu0 0.0
    %2899 = vmatpush1.xpose.msra.mxu0 0.0
    %2900 = vmatprep.subr.mxu0 0.0
    %2901 = vmatpush1.xpose.msra.mxu0 0.0
    %2902 = vmatprep.subr.mxu0 0.0
    %2903 = vmatpush1.xpose.msra.mxu0 0.0
    %2904 = vmatprep.subr.mxu0 0.0
    %2905 = vmatpush1.xpose.msra.mxu0 0.0
    %2906 = vmatprep.subr.mxu0 0.0
    %2907 = vmatpush1.xpose.msra.mxu0 0.0
    %2908 = vmatprep.subr.mxu0 0.0
    %2909 = vmatpush1.xpose.msra.mxu0 0.0
    %2910 = vmatprep.subr.mxu0 0.0
    %2911 = vmatpush1.xpose.msra.mxu0 0.0
    %2912 = vmatprep.subr.mxu0 0.0
    %2913 = vmatpush1.xpose.msra.mxu0 0.0
    %2914 = vmatprep.subr.mxu0 0.0
    %2915 = vmatpush1.xpose.msra.mxu0 0.0
    %2916 = vmatprep.subr.mxu0 0.0
    %2917 = vmatpush1.xpose.msra.mxu0 0.0
    %2918 = vmatprep.subr.mxu0 0.0
    %2919 = vmatpush1.xpose.msra.mxu0 0.0
    %2920 = vmatprep.subr.mxu0 0.0
    %2921 = vmatpush1.xpose.msra.mxu0 0.0
    %2922 = vmatprep.subr.mxu0 0.0
    %2923 = vmatpush1.xpose.msra.mxu0 0.0
    %2924 = vmatprep.mubr.f32.mxu0 0.0
    %v2925 = vand.u32 %v2755, 4294901760
    %2926 = vmatmul.mubr.f32.gmra.mrb[0].mxu0 %v2925
    %v2927 = vpop.f32.mrb[0].mxu0
    %v2928 = vadd.f32 %v2837, %v2927
    %v2929 = vpop.f32.mrb[0].mxu0
    %2930 = vmatprep.mubr.f32.mxu0 0.0
    %v2931 = vand.u32 %v2757, 4294901760
    %2932 = vmatmul.mubr.f32.gmra.mrb[0].mxu0 %v2931
    %v2933 = vpop.f32.mrb[0].mxu0
    %v2934 = vadd.f32 %v2847, %v2933
    %v2935 = vpop.f32.mrb[0].mxu0
    %2936 = vdwg.mxu0
    %2937 = vmatprep.subr.mxu0 0.0
    %v2938 = vand.u32 %v2759, 4294901760
    %v2939 = vsub.f32 %v2759, %v2938
    %2940 = vmatpush1.xpose.msra.mxu0 %v2939
    %2941 = vmatprep.subr.mxu0 0.0
    %v2942 = vand.u32 %v2761, 4294901760
    %v2943 = vsub.f32 %v2761, %v2942
    %2944 = vmatpush1.xpose.msra.mxu0 %v2943
    %2945 = vmatprep.subr.mxu0 0.0
    %2946 = vmatpush1.xpose.msra.mxu0 0.0
    %2947 = vmatprep.subr.mxu0 0.0
    %2948 = vmatpush1.xpose.msra.mxu0 0.0
    %2949 = vmatprep.subr.mxu0 0.0
    %2950 = vmatpush1.xpose.msra.mxu0 0.0
    %2951 = vmatprep.subr.mxu0 0.0
    %2952 = vmatpush1.xpose.msra.mxu0 0.0
    %2953 = vmatprep.subr.mxu0 0.0
    %2954 = vmatpush1.xpose.msra.mxu0 0.0
    %2955 = vmatprep.subr.mxu0 0.0
    %2956 = vmatpush1.xpose.msra.mxu0 0.0
    %2957 = vmatprep.subr.mxu0 0.0
    %2958 = vmatpush1.xpose.msra.mxu0 0.0
    %2959 = vmatprep.subr.mxu0 0.0
    %2960 = vmatpush1.xpose.msra.mxu0 0.0
    %2961 = vmatprep.subr.mxu0 0.0
    %2962 = vmatpush1.xpose.msra.mxu0 0.0
    %2963 = vmatprep.subr.mxu0 0.0
    %2964 = vmatpush1.xpose.msra.mxu0 0.0
    %2965 = vmatprep.subr.mxu0 0.0
    %2966 = vmatpush1.xpose.msra.mxu0 0.0
    %2967 = vmatprep.subr.mxu0 0.0
    %2968 = vmatpush1.xpose.msra.mxu0 0.0
    %2969 = vmatprep.subr.mxu0 0.0
    %2970 = vmatpush1.xpose.msra.mxu0 0.0
    %2971 = vmatprep.subr.mxu0 0.0
    %2972 = vmatpush1.xpose.msra.mxu0 0.0
    %2973 = vmatprep.subr.mxu0 0.0
    %2974 = vmatpush1.xpose.msra.mxu0 0.0
    %2975 = vmatprep.subr.mxu0 0.0
    %2976 = vmatpush1.xpose.msra.mxu0 0.0
    %2977 = vmatprep.subr.mxu0 0.0
    %2978 = vmatpush1.xpose.msra.mxu0 0.0
    %2979 = vmatprep.subr.mxu0 0.0
    %2980 = vmatpush1.xpose.msra.mxu0 0.0
    %2981 = vmatprep.subr.mxu0 0.0
    %2982 = vmatpush1.xpose.msra.mxu0 0.0
    %2983 = vmatprep.subr.mxu0 0.0
    %2984 = vmatpush1.xpose.msra.mxu0 0.0
    %2985 = vmatprep.subr.mxu0 0.0
    %2986 = vmatpush1.xpose.msra.mxu0 0.0
    %2987 = vmatprep.subr.mxu0 0.0
    %2988 = vmatpush1.xpose.msra.mxu0 0.0
    %2989 = vmatprep.subr.mxu0 0.0
    %2990 = vmatpush1.xpose.msra.mxu0 0.0
    %2991 = vmatprep.subr.mxu0 0.0
    %2992 = vmatpush1.xpose.msra.mxu0 0.0
    %2993 = vmatprep.subr.mxu0 0.0
    %2994 = vmatpush1.xpose.msra.mxu0 0.0
    %2995 = vmatprep.subr.mxu0 0.0
    %2996 = vmatpush1.xpose.msra.mxu0 0.0
    %2997 = vmatprep.subr.mxu0 0.0
    %2998 = vmatpush1.xpose.msra.mxu0 0.0
    %2999 = vmatprep.subr.mxu0 0.0
    %3000 = vmatpush1.xpose.msra.mxu0 0.0
    %3001 = vmatprep.subr.mxu0 0.0
    %3002 = vmatpush1.xpose.msra.mxu0 0.0
    %3003 = vmatprep.subr.mxu0 0.0
    %3004 = vmatpush1.xpose.msra.mxu0 0.0
    %3005 = vmatprep.mubr.f32.mxu0 0.0
    %v3006 = vand.u32 %v2755, 4294901760
    %v3007 = vsub.f32 %v2755, %v3006
    %3008 = vmatmul.mubr.f32.gmra.mrb[0].mxu0 %v3007
    %v3009 = vpop.f32.mrb[0].mxu0
    %v3010 = vadd.f32 %v2928, %v3009
    %v3011 = vpop.f32.mrb[0].mxu0
    %3012 = vmatprep.mubr.f32.mxu0 0.0
    %v3013 = vand.u32 %v2757, 4294901760
    %v3014 = vsub.f32 %v2757, %v3013
    %3015 = vmatmul.mubr.f32.gmra.mrb[0].mxu0 %v3014
    %v3016 = vpop.f32.mrb[0].mxu0
    %v3017 = vadd.f32 %v2934, %v3016
    %v3018 = vpop.f32.mrb[0].mxu0
    %3019 = vdwg.mxu0
    %3020 = vmatprep.subr.mxu0 0.0
    %v3021 = vand.u32 %v2759, 4294901760
    %3022 = vmatpush1.xpose.msra.mxu0 %v3021
    %3023 = vmatprep.subr.mxu0 0.0
    %v3024 = vand.u32 %v2761, 4294901760
    %3025 = vmatpush1.xpose.msra.mxu0 %v3024
    %3026 = vmatprep.subr.mxu0 0.0
    %3027 = vmatpush1.xpose.msra.mxu0 0.0
    %3028 = vmatprep.subr.mxu0 0.0
    %3029 = vmatpush1.xpose.msra.mxu0 0.0
    %3030 = vmatprep.subr.mxu0 0.0
    %3031 = vmatpush1.xpose.msra.mxu0 0.0
    %3032 = vmatprep.subr.mxu0 0.0
    %3033 = vmatpush1.xpose.msra.mxu0 0.0
    %3034 = vmatprep.subr.mxu0 0.0
    %3035 = vmatpush1.xpose.msra.mxu0 0.0
    %3036 = vmatprep.subr.mxu0 0.0
    %3037 = vmatpush1.xpose.msra.mxu0 0.0
    %3038 = vmatprep.subr.mxu0 0.0
    %3039 = vmatpush1.xpose.msra.mxu0 0.0
    %3040 = vmatprep.subr.mxu0 0.0
    %3041 = vmatpush1.xpose.msra.mxu0 0.0
    %3042 = vmatprep.subr.mxu0 0.0
    %3043 = vmatpush1.xpose.msra.mxu0 0.0
    %3044 = vmatprep.subr.mxu0 0.0
    %3045 = vmatpush1.xpose.msra.mxu0 0.0
    %3046 = vmatprep.subr.mxu0 0.0
    %3047 = vmatpush1.xpose.msra.mxu0 0.0
    %3048 = vmatprep.subr.mxu0 0.0
    %3049 = vmatpush1.xpose.msra.mxu0 0.0
    %3050 = vmatprep.subr.mxu0 0.0
    %3051 = vmatpush1.xpose.msra.mxu0 0.0
    %3052 = vmatprep.subr.mxu0 0.0
    %3053 = vmatpush1.xpose.msra.mxu0 0.0
    %3054 = vmatprep.subr.mxu0 0.0
    %3055 = vmatpush1.xpose.msra.mxu0 0.0
    %3056 = vmatprep.subr.mxu0 0.0
    %3057 = vmatpush1.xpose.msra.mxu0 0.0
    %3058 = vmatprep.subr.mxu0 0.0
    %3059 = vmatpush1.xpose.msra.mxu0 0.0
    %3060 = vmatprep.subr.mxu0 0.0
    %3061 = vmatpush1.xpose.msra.mxu0 0.0
    %3062 = vmatprep.subr.mxu0 0.0
    %3063 = vmatpush1.xpose.msra.mxu0 0.0
    %3064 = vmatprep.subr.mxu0 0.0
    %3065 = vmatpush1.xpose.msra.mxu0 0.0
    %3066 = vmatprep.subr.mxu0 0.0
    %3067 = vmatpush1.xpose.msra.mxu0 0.0
    %3068 = vmatprep.subr.mxu0 0.0
    %3069 = vmatpush1.xpose.msra.mxu0 0.0
    %3070 = vmatprep.subr.mxu0 0.0
    %3071 = vmatpush1.xpose.msra.mxu0 0.0
    %3072 = vmatprep.subr.mxu0 0.0
    %3073 = vmatpush1.xpose.msra.mxu0 0.0
    %3074 = vmatprep.subr.mxu0 0.0
    %3075 = vmatpush1.xpose.msra.mxu0 0.0
    %3076 = vmatprep.subr.mxu0 0.0
    %3077 = vmatpush1.xpose.msra.mxu0 0.0
    %3078 = vmatprep.subr.mxu0 0.0
    %3079 = vmatpush1.xpose.msra.mxu0 0.0
    %3080 = vmatprep.subr.mxu0 0.0
    %3081 = vmatpush1.xpose.msra.mxu0 0.0
    %3082 = vmatprep.subr.mxu0 0.0
    %3083 = vmatpush1.xpose.msra.mxu0 0.0
    %3084 = vmatprep.subr.mxu0 0.0
    %3085 = vmatpush1.xpose.msra.mxu0 0.0
    %3086 = vmatprep.mubr.f32.mxu0 0.0
    %v3087 = vand.u32 %v2755, 4294901760
    %v3088 = vsub.f32 %v2755, %v3087
    %v3089 = vand.u32 %v3088, 4294901760
    %3090 = vmatmul.mubr.f32.gmra.mrb[0].mxu0 %v3089
    %v3091 = vpop.f32.mrb[0].mxu0
    %v3092 = vadd.f32 %v3010, %v3091
    %v3093 = vpop.f32.mrb[0].mxu0
    %3094 = vmatprep.mubr.f32.mxu0 0.0
    %v3095 = vand.u32 %v2757, 4294901760
    %v3096 = vsub.f32 %v2757, %v3095
    %v3097 = vand.u32 %v3096, 4294901760
    %3098 = vmatmul.mubr.f32.gmra.mrb[0].mxu0 %v3097
    %v3099 = vpop.f32.mrb[0].mxu0
    %v3100 = vadd.f32 %v3017, %v3099
    %v3101 = vpop.f32.mrb[0].mxu0
    %3102 = vdwg.mxu0
    %3103 = vmatprep.subr.mxu0 0.0
    %v3104 = vand.u32 %v2759, 4294901760
    %v3105 = vsub.f32 %v2759, %v3104
    %v3106 = vand.u32 %v3105, 4294901760
    %3107 = vmatpush1.xpose.msra.mxu0 %v3106
    %3108 = vmatprep.subr.mxu0 0.0
    %v3109 = vand.u32 %v2761, 4294901760
    %v3110 = vsub.f32 %v2761, %v3109
    %v3111 = vand.u32 %v3110, 4294901760
    %3112 = vmatpush1.xpose.msra.mxu0 %v3111
    %3113 = vmatprep.subr.mxu0 0.0
    %3114 = vmatpush1.xpose.msra.mxu0 0.0
    %3115 = vmatprep.subr.mxu0 0.0
    %3116 = vmatpush1.xpose.msra.mxu0 0.0
    %3117 = vmatprep.subr.mxu0 0.0
    %3118 = vmatpush1.xpose.msra.mxu0 0.0
    %3119 = vmatprep.subr.mxu0 0.0
    %3120 = vmatpush1.xpose.msra.mxu0 0.0
    %3121 = vmatprep.subr.mxu0 0.0
    %3122 = vmatpush1.xpose.msra.mxu0 0.0
    %3123 = vmatprep.subr.mxu0 0.0
    %3124 = vmatpush1.xpose.msra.mxu0 0.0
    %3125 = vmatprep.subr.mxu0 0.0
    %3126 = vmatpush1.xpose.msra.mxu0 0.0
    %3127 = vmatprep.subr.mxu0 0.0
    %3128 = vmatpush1.xpose.msra.mxu0 0.0
    %3129 = vmatprep.subr.mxu0 0.0
    %3130 = vmatpush1.xpose.msra.mxu0 0.0
    %3131 = vmatprep.subr.mxu0 0.0
    %3132 = vmatpush1.xpose.msra.mxu0 0.0
    %3133 = vmatprep.subr.mxu0 0.0
    %3134 = vmatpush1.xpose.msra.mxu0 0.0
    %3135 = vmatprep.subr.mxu0 0.0
    %3136 = vmatpush1.xpose.msra.mxu0 0.0
    %3137 = vmatprep.subr.mxu0 0.0
    %3138 = vmatpush1.xpose.msra.mxu0 0.0
    %3139 = vmatprep.subr.mxu0 0.0
    %3140 = vmatpush1.xpose.msra.mxu0 0.0
    %3141 = vmatprep.subr.mxu0 0.0
    %3142 = vmatpush1.xpose.msra.mxu0 0.0
    %3143 = vmatprep.subr.mxu0 0.0
    %3144 = vmatpush1.xpose.msra.mxu0 0.0
    %3145 = vmatprep.subr.mxu0 0.0
    %3146 = vmatpush1.xpose.msra.mxu0 0.0
    %3147 = vmatprep.subr.mxu0 0.0
    %3148 = vmatpush1.xpose.msra.mxu0 0.0
    %3149 = vmatprep.subr.mxu0 0.0
    %3150 = vmatpush1.xpose.msra.mxu0 0.0
    %3151 = vmatprep.subr.mxu0 0.0
    %3152 = vmatpush1.xpose.msra.mxu0 0.0
    %3153 = vmatprep.subr.mxu0 0.0
    %3154 = vmatpush1.xpose.msra.mxu0 0.0
    %3155 = vmatprep.subr.mxu0 0.0
    %3156 = vmatpush1.xpose.msra.mxu0 0.0
    %3157 = vmatprep.subr.mxu0 0.0
    %3158 = vmatpush1.xpose.msra.mxu0 0.0
    %3159 = vmatprep.subr.mxu0 0.0
    %3160 = vmatpush1.xpose.msra.mxu0 0.0
    %3161 = vmatprep.subr.mxu0 0.0
    %3162 = vmatpush1.xpose.msra.mxu0 0.0
    %3163 = vmatprep.subr.mxu0 0.0
    %3164 = vmatpush1.xpose.msra.mxu0 0.0
    %3165 = vmatprep.subr.mxu0 0.0
    %3166 = vmatpush1.xpose.msra.mxu0 0.0
    %3167 = vmatprep.subr.mxu0 0.0
    %3168 = vmatpush1.xpose.msra.mxu0 0.0
    %3169 = vmatprep.subr.mxu0 0.0
    %3170 = vmatpush1.xpose.msra.mxu0 0.0
    %3171 = vmatprep.subr.mxu0 0.0
    %3172 = vmatpush1.xpose.msra.mxu0 0.0
    %3173 = vmatprep.mubr.f32.mxu0 0.0
    %v3174 = vand.u32 %v2755, 4294901760
    %3175 = vmatmul.mubr.f32.gmra.mrb[0].mxu0 %v3174
    %v3176 = vpop.f32.mrb[0].mxu0
    %v3177 = vadd.f32 %v3092, %v3176
    %v3178 = vpop.f32.mrb[0].mxu0
    %3179 = vmatprep.mubr.f32.mxu0 0.0
    %v3180 = vand.u32 %v2757, 4294901760
    %3181 = vmatmul.mubr.f32.gmra.mrb[0].mxu0 %v3180
    %v3182 = vpop.f32.mrb[0].mxu0
    %v3183 = vadd.f32 %v3100, %v3182
    %v3184 = vpop.f32.mrb[0].mxu0
    %3185 = vdwg.mxu0
    %3186 = vmatprep.subr.mxu0 0.0
    %v3187 = vand.u32 %v2759, 4294901760
    %3188 = vmatpush1.xpose.msra.mxu0 %v3187
    %3189 = vmatprep.subr.mxu0 0.0
    %v3190 = vand.u32 %v2761, 4294901760
    %3191 = vmatpush1.xpose.msra.mxu0 %v3190
    %3192 = vmatprep.subr.mxu0 0.0
    %3193 = vmatpush1.xpose.msra.mxu0 0.0
    %3194 = vmatprep.subr.mxu0 0.0
    %3195 = vmatpush1.xpose.msra.mxu0 0.0
    %3196 = vmatprep.subr.mxu0 0.0
    %3197 = vmatpush1.xpose.msra.mxu0 0.0
    %3198 = vmatprep.subr.mxu0 0.0
    %3199 = vmatpush1.xpose.msra.mxu0 0.0
    %3200 = vmatprep.subr.mxu0 0.0
    %3201 = vmatpush1.xpose.msra.mxu0 0.0
    %3202 = vmatprep.subr.mxu0 0.0
    %3203 = vmatpush1.xpose.msra.mxu0 0.0
    %3204 = vmatprep.subr.mxu0 0.0
    %3205 = vmatpush1.xpose.msra.mxu0 0.0
    %3206 = vmatprep.subr.mxu0 0.0
    %3207 = vmatpush1.xpose.msra.mxu0 0.0
    %3208 = vmatprep.subr.mxu0 0.0
    %3209 = vmatpush1.xpose.msra.mxu0 0.0
    %3210 = vmatprep.subr.mxu0 0.0
    %3211 = vmatpush1.xpose.msra.mxu0 0.0
    %3212 = vmatprep.subr.mxu0 0.0
    %3213 = vmatpush1.xpose.msra.mxu0 0.0
    %3214 = vmatprep.subr.mxu0 0.0
    %3215 = vmatpush1.xpose.msra.mxu0 0.0
    %3216 = vmatprep.subr.mxu0 0.0
    %3217 = vmatpush1.xpose.msra.mxu0 0.0
    %3218 = vmatprep.subr.mxu0 0.0
    %3219 = vmatpush1.xpose.msra.mxu0 0.0
    %3220 = vmatprep.subr.mxu0 0.0
    %3221 = vmatpush1.xpose.msra.mxu0 0.0
    %3222 = vmatprep.subr.mxu0 0.0
    %3223 = vmatpush1.xpose.msra.mxu0 0.0
    %3224 = vmatprep.subr.mxu0 0.0
    %3225 = vmatpush1.xpose.msra.mxu0 0.0
    %3226 = vmatprep.subr.mxu0 0.0
    %3227 = vmatpush1.xpose.msra.mxu0 0.0
    %3228 = vmatprep.subr.mxu0 0.0
    %3229 = vmatpush1.xpose.msra.mxu0 0.0
    %3230 = vmatprep.subr.mxu0 0.0
    %3231 = vmatpush1.xpose.msra.mxu0 0.0
    %3232 = vmatprep.subr.mxu0 0.0
    %3233 = vmatpush1.xpose.msra.mxu0 0.0
    %3234 = vmatprep.subr.mxu0 0.0
    %3235 = vmatpush1.xpose.msra.mxu0 0.0
    %3236 = vmatprep.subr.mxu0 0.0
    %3237 = vmatpush1.xpose.msra.mxu0 0.0
    %3238 = vmatprep.subr.mxu0 0.0
    %3239 = vmatpush1.xpose.msra.mxu0 0.0
    %3240 = vmatprep.subr.mxu0 0.0
    %3241 = vmatpush1.xpose.msra.mxu0 0.0
    %3242 = vmatprep.subr.mxu0 0.0
    %3243 = vmatpush1.xpose.msra.mxu0 0.0
    %3244 = vmatprep.subr.mxu0 0.0
    %3245 = vmatpush1.xpose.msra.mxu0 0.0
    %3246 = vmatprep.subr.mxu0 0.0
    %3247 = vmatpush1.xpose.msra.mxu0 0.0
    %3248 = vmatprep.subr.mxu0 0.0
    %3249 = vmatpush1.xpose.msra.mxu0 0.0
    %3250 = vmatprep.subr.mxu0 0.0
    %3251 = vmatpush1.xpose.msra.mxu0 0.0
    %3252 = vmatprep.mubr.f32.mxu0 0.0
    %v3253 = vand.u32 %v2755, 4294901760
    %3254 = vmatmul.mubr.f32.gmra.mrb[0].mxu0 %v3253
    %v3255 = vpop.f32.mrb[0].mxu0
    %v3256 = vadd.f32 %v3177, %v3255
    %v3257 = vpop.f32.mrb[0].mxu0
    %3258 = vmatprep.mubr.f32.mxu0 0.0
    %v3259 = vand.u32 %v2757, 4294901760
    %3260 = vmatmul.mubr.f32.gmra.mrb[0].mxu0 %v3259
    %v3261 = vpop.f32.mrb[0].mxu0
    %v3262 = vadd.f32 %v3183, %v3261
    %v3263 = vpop.f32.mrb[0].mxu0
    %3264 = vdwg.mxu0
    %v3265 = vsel %vm1156, %v3256, -inf
    %3266 = vmax.xlane.f32.xlu0 %v3265
    %v3267 = vpop.xlane.xlu0 %3266
    %v3268 = vsel %vm1156, %v3262, -inf
    %3269 = vmax.xlane.f32.xlu0 %v3268
    %v3270 = vpop.xlane.xlu0 %3269
    %v3271 = vsub.f32 %v3256, %v3267
    %v3272 = vsub.f32 %v3262, %v3270
    %v3273 = vmul.f32 %v3271, 1.442695
    %v3274 = vpow.pop %v3273
    %v3275 = vmul.f32 %v3272, 1.442695
    %v3276 = vpow.pop %v3275
    %v3277 = vsel %vm1156, %v3274, 0.0
    %3278 = vadd.xlane.f32.xlu0 %v3277
    %v3279 = vpop.xlane.xlu0 %3278
    %v3280 = vsel %vm1156, %v3276, 0.0
    %3281 = vadd.xlane.f32.xlu0 %v3280
    %v3282 = vpop.xlane.xlu0 %3281
    %v3283 = vrcp.pop %v3279
    %v3284 = vrcp.pop %v3282
    %v3285 = vmul.f32 %v3274, %v3283
    %v3286 = vmul.f32 %v3276, %v3284
    %3287 = vrot.lane.b32.xlu0 %v630, 48
    %v3288 = vpop.permute.xlu0 %3287
    %3289 = vrot.lane.b32.xlu0 %v636, 48
    %v3290 = vpop.permute.xlu0 %3289
    %v3294 = vsel %vm1156, %v3285, 0
    %v3297 = vsel %vm1156, %v3286, 0
    %3299 = vmatprep.subr.mxu0 0.0
    %v3300 = vand.u32 %v3288, 4294901760
    %3301 = vmatpush1.msra.mxu0 %v3300
    %3302 = vmatprep.subr.mxu0 0.0
    %v3303 = vand.u32 %v3290, 4294901760
    %3304 = vmatpush1.msra.mxu0 %v3303
    %3305 = vmatprep.subr.mxu0 0.0
    %3306 = vmatpush1.msra.mxu0 0.0
    %3307 = vmatprep.subr.mxu0 0.0
    %3308 = vmatpush1.msra.mxu0 0.0
    %3309 = vmatprep.subr.mxu0 0.0
    %3310 = vmatpush1.msra.mxu0 0.0
    %3311 = vmatprep.subr.mxu0 0.0
    %3312 = vmatpush1.msra.mxu0 0.0
    %3313 = vmatprep.subr.mxu0 0.0
    %3314 = vmatpush1.msra.mxu0 0.0
    %3315 = vmatprep.subr.mxu0 0.0
    %3316 = vmatpush1.msra.mxu0 0.0
    %3317 = vmatprep.subr.mxu0 0.0
    %3318 = vmatpush1.msra.mxu0 0.0
    %3319 = vmatprep.subr.mxu0 0.0
    %3320 = vmatpush1.msra.mxu0 0.0
    %3321 = vmatprep.subr.mxu0 0.0
    %3322 = vmatpush1.msra.mxu0 0.0
    %3323 = vmatprep.subr.mxu0 0.0
    %3324 = vmatpush1.msra.mxu0 0.0
    %3325 = vmatprep.subr.mxu0 0.0
    %3326 = vmatpush1.msra.mxu0 0.0
    %3327 = vmatprep.subr.mxu0 0.0
    %3328 = vmatpush1.msra.mxu0 0.0
    %3329 = vmatprep.subr.mxu0 0.0
    %3330 = vmatpush1.msra.mxu0 0.0
    %3331 = vmatprep.subr.mxu0 0.0
    %3332 = vmatpush1.msra.mxu0 0.0
    %3333 = vmatprep.subr.mxu0 0.0
    %3334 = vmatpush1.msra.mxu0 0.0
    %3335 = vmatprep.subr.mxu0 0.0
    %3336 = vmatpush1.msra.mxu0 0.0
    %3337 = vmatprep.subr.mxu0 0.0
    %3338 = vmatpush1.msra.mxu0 0.0
    %3339 = vmatprep.subr.mxu0 0.0
    %3340 = vmatpush1.msra.mxu0 0.0
    %3341 = vmatprep.subr.mxu0 0.0
    %3342 = vmatpush1.msra.mxu0 0.0
    %3343 = vmatprep.subr.mxu0 0.0
    %3344 = vmatpush1.msra.mxu0 0.0
    %3345 = vmatprep.subr.mxu0 0.0
    %3346 = vmatpush1.msra.mxu0 0.0
    %3347 = vmatprep.subr.mxu0 0.0
    %3348 = vmatpush1.msra.mxu0 0.0
    %3349 = vmatprep.subr.mxu0 0.0
    %3350 = vmatpush1.msra.mxu0 0.0
    %3351 = vmatprep.subr.mxu0 0.0
    %3352 = vmatpush1.msra.mxu0 0.0
    %3353 = vmatprep.subr.mxu0 0.0
    %3354 = vmatpush1.msra.mxu0 0.0
    %3355 = vmatprep.subr.mxu0 0.0
    %3356 = vmatpush1.msra.mxu0 0.0
    %3357 = vmatprep.subr.mxu0 0.0
    %3358 = vmatpush1.msra.mxu0 0.0
    %3359 = vmatprep.subr.mxu0 0.0
    %3360 = vmatpush1.msra.mxu0 0.0
    %3361 = vmatprep.subr.mxu0 0.0
    %3362 = vmatpush1.msra.mxu0 0.0
    %3363 = vmatprep.subr.mxu0 0.0
    %3364 = vmatpush1.msra.mxu0 0.0
    %3365 = vmatprep.mubr.f32.mxu0 0.0
    %v3366 = vand.u32 %v3294, 4294901760
    %v3367 = vsub.f32 %v3294, %v3366
    %v3368 = vand.u32 %v3367, 4294901760
    %v3369 = vsub.f32 %v3367, %v3368
    %v3370 = vand.u32 %v3369, 4294901760
    %3371 = vmatmul.mubr.f32.gmra.mrb[0].mxu0 %v3370
    %v3372 = vpop.f32.mrb[0].mxu0
    %v3373 = vadd.f32 0.0, %v3372
    %v3374 = vpop.f32.mrb[0].mxu0
    %3375 = vmatprep.mubr.f32.mxu0 0.0
    %v3376 = vand.u32 %v3297, 4294901760
    %v3377 = vsub.f32 %v3297, %v3376
    %v3378 = vand.u32 %v3377, 4294901760
    %v3379 = vsub.f32 %v3377, %v3378
    %v3380 = vand.u32 %v3379, 4294901760
    %3381 = vmatmul.mubr.f32.gmra.mrb[0].mxu0 %v3380
    %v3382 = vpop.f32.mrb[0].mxu0
    %v3383 = vadd.f32 0.0, %v3382
    %v3384 = vpop.f32.mrb[0].mxu0
    %3385 = vdwg.mxu0
    %3386 = vmatprep.subr.mxu0 0.0
    %v3387 = vand.u32 %v3288, 4294901760
    %v3388 = vsub.f32 %v3288, %v3387
    %v3389 = vand.u32 %v3388, 4294901760
    %v3390 = vsub.f32 %v3388, %v3389
    %v3391 = vand.u32 %v3390, 4294901760
    %3392 = vmatpush1.msra.mxu0 %v3391
    %3393 = vmatprep.subr.mxu0 0.0
    %v3394 = vand.u32 %v3290, 4294901760
    %v3395 = vsub.f32 %v3290, %v3394
    %v3396 = vand.u32 %v3395, 4294901760
    %v3397 = vsub.f32 %v3395, %v3396
    %v3398 = vand.u32 %v3397, 4294901760
    %3399 = vmatpush1.msra.mxu0 %v3398
    %3400 = vmatprep.subr.mxu0 0.0
    %3401 = vmatpush1.msra.mxu0 0.0
    %3402 = vmatprep.subr.mxu0 0.0
    %3403 = vmatpush1.msra.mxu0 0.0
    %3404 = vmatprep.subr.mxu0 0.0
    %3405 = vmatpush1.msra.mxu0 0.0
    %3406 = vmatprep.subr.mxu0 0.0
    %3407 = vmatpush1.msra.mxu0 0.0
    %3408 = vmatprep.subr.mxu0 0.0
    %3409 = vmatpush1.msra.mxu0 0.0
    %3410 = vmatprep.subr.mxu0 0.0
    %3411 = vmatpush1.msra.mxu0 0.0
    %3412 = vmatprep.subr.mxu0 0.0
    %3413 = vmatpush1.msra.mxu0 0.0
    %3414 = vmatprep.subr.mxu0 0.0
    %3415 = vmatpush1.msra.mxu0 0.0
    %3416 = vmatprep.subr.mxu0 0.0
    %3417 = vmatpush1.msra.mxu0 0.0
    %3418 = vmatprep.subr.mxu0 0.0
    %3419 = vmatpush1.msra.mxu0 0.0
    %3420 = vmatprep.subr.mxu0 0.0
    %3421 = vmatpush1.msra.mxu0 0.0
    %3422 = vmatprep.subr.mxu0 0.0
    %3423 = vmatpush1.msra.mxu0 0.0
    %3424 = vmatprep.subr.mxu0 0.0
    %3425 = vmatpush1.msra.mxu0 0.0
    %3426 = vmatprep.subr.mxu0 0.0
    %3427 = vmatpush1.msra.mxu0 0.0
    %3428 = vmatprep.subr.mxu0 0.0
    %3429 = vmatpush1.msra.mxu0 0.0
    %3430 = vmatprep.subr.mxu0 0.0
    %3431 = vmatpush1.msra.mxu0 0.0
    %3432 = vmatprep.subr.mxu0 0.0
    %3433 = vmatpush1.msra.mxu0 0.0
    %3434 = vmatprep.subr.mxu0 0.0
    %3435 = vmatpush1.msra.mxu0 0.0
    %3436 = vmatprep.subr.mxu0 0.0
    %3437 = vmatpush1.msra.mxu0 0.0
    %3438 = vmatprep.subr.mxu0 0.0
    %3439 = vmatpush1.msra.mxu0 0.0
    %3440 = vmatprep.subr.mxu0 0.0
    %3441 = vmatpush1.msra.mxu0 0.0
    %3442 = vmatprep.subr.mxu0 0.0
    %3443 = vmatpush1.msra.mxu0 0.0
    %3444 = vmatprep.subr.mxu0 0.0
    %3445 = vmatpush1.msra.mxu0 0.0
    %3446 = vmatprep.subr.mxu0 0.0
    %3447 = vmatpush1.msra.mxu0 0.0
    %3448 = vmatprep.subr.mxu0 0.0
    %3449 = vmatpush1.msra.mxu0 0.0
    %3450 = vmatprep.subr.mxu0 0.0
    %3451 = vmatpush1.msra.mxu0 0.0
    %3452 = vmatprep.subr.mxu0 0.0
    %3453 = vmatpush1.msra.mxu0 0.0
    %3454 = vmatprep.subr.mxu0 0.0
    %3455 = vmatpush1.msra.mxu0 0.0
    %3456 = vmatprep.subr.mxu0 0.0
    %3457 = vmatpush1.msra.mxu0 0.0
    %3458 = vmatprep.subr.mxu0 0.0
    %3459 = vmatpush1.msra.mxu0 0.0
    %3460 = vmatprep.mubr.f32.mxu0 0.0
    %v3461 = vand.u32 %v3294, 4294901760
    %3462 = vmatmul.mubr.f32.gmra.mrb[0].mxu0 %v3461
    %v3463 = vpop.f32.mrb[0].mxu0
    %v3464 = vadd.f32 %v3373, %v3463
    %v3465 = vpop.f32.mrb[0].mxu0
    %3466 = vmatprep.mubr.f32.mxu0 0.0
    %v3467 = vand.u32 %v3297, 4294901760
    %3468 = vmatmul.mubr.f32.gmra.mrb[0].mxu0 %v3467
    %v3469 = vpop.f32.mrb[0].mxu0
    %v3470 = vadd.f32 %v3383, %v3469
    %v3471 = vpop.f32.mrb[0].mxu0
    %3472 = vdwg.mxu0
    %3473 = vmatprep.subr.mxu0 0.0
    %v3474 = vand.u32 %v3288, 4294901760
    %v3475 = vsub.f32 %v3288, %v3474
    %3476 = vmatpush1.msra.mxu0 %v3475
    %3477 = vmatprep.subr.mxu0 0.0
    %v3478 = vand.u32 %v3290, 4294901760
    %v3479 = vsub.f32 %v3290, %v3478
    %3480 = vmatpush1.msra.mxu0 %v3479
    %3481 = vmatprep.subr.mxu0 0.0
    %3482 = vmatpush1.msra.mxu0 0.0
    %3483 = vmatprep.subr.mxu0 0.0
    %3484 = vmatpush1.msra.mxu0 0.0
    %3485 = vmatprep.subr.mxu0 0.0
    %3486 = vmatpush1.msra.mxu0 0.0
    %3487 = vmatprep.subr.mxu0 0.0
    %3488 = vmatpush1.msra.mxu0 0.0
    %3489 = vmatprep.subr.mxu0 0.0
    %3490 = vmatpush1.msra.mxu0 0.0
    %3491 = vmatprep.subr.mxu0 0.0
    %3492 = vmatpush1.msra.mxu0 0.0
    %3493 = vmatprep.subr.mxu0 0.0
    %3494 = vmatpush1.msra.mxu0 0.0
    %3495 = vmatprep.subr.mxu0 0.0
    %3496 = vmatpush1.msra.mxu0 0.0
    %3497 = vmatprep.subr.mxu0 0.0
    %3498 = vmatpush1.msra.mxu0 0.0
    %3499 = vmatprep.subr.mxu0 0.0
    %3500 = vmatpush1.msra.mxu0 0.0
    %3501 = vmatprep.subr.mxu0 0.0
    %3502 = vmatpush1.msra.mxu0 0.0
    %3503 = vmatprep.subr.mxu0 0.0
    %3504 = vmatpush1.msra.mxu0 0.0
    %3505 = vmatprep.subr.mxu0 0.0
    %3506 = vmatpush1.msra.mxu0 0.0
    %3507 = vmatprep.subr.mxu0 0.0
    %3508 = vmatpush1.msra.mxu0 0.0
    %3509 = vmatprep.subr.mxu0 0.0
    %3510 = vmatpush1.msra.mxu0 0.0
    %3511 = vmatprep.subr.mxu0 0.0
    %3512 = vmatpush1.msra.mxu0 0.0
    %3513 = vmatprep.subr.mxu0 0.0
    %3514 = vmatpush1.msra.mxu0 0.0
    %3515 = vmatprep.subr.mxu0 0.0
    %3516 = vmatpush1.msra.mxu0 0.0
    %3517 = vmatprep.subr.mxu0 0.0
    %3518 = vmatpush1.msra.mxu0 0.0
    %3519 = vmatprep.subr.mxu0 0.0
    %3520 = vmatpush1.msra.mxu0 0.0
    %3521 = vmatprep.subr.mxu0 0.0
    %3522 = vmatpush1.msra.mxu0 0.0
    %3523 = vmatprep.subr.mxu0 0.0
    %3524 = vmatpush1.msra.mxu0 0.0
    %3525 = vmatprep.subr.mxu0 0.0
    %3526 = vmatpush1.msra.mxu0 0.0
    %3527 = vmatprep.subr.mxu0 0.0
    %3528 = vmatpush1.msra.mxu0 0.0
    %3529 = vmatprep.subr.mxu0 0.0
    %3530 = vmatpush1.msra.mxu0 0.0
    %3531 = vmatprep.subr.mxu0 0.0
    %3532 = vmatpush1.msra.mxu0 0.0
    %3533 = vmatprep.subr.mxu0 0.0
    %3534 = vmatpush1.msra.mxu0 0.0
    %3535 = vmatprep.subr.mxu0 0.0
    %3536 = vmatpush1.msra.mxu0 0.0
    %3537 = vmatprep.subr.mxu0 0.0
    %3538 = vmatpush1.msra.mxu0 0.0
    %3539 = vmatprep.subr.mxu0 0.0
    %3540 = vmatpush1.msra.mxu0 0.0
    %3541 = vmatprep.mubr.f32.mxu0 0.0
    %v3542 = vand.u32 %v3294, 4294901760
    %v3543 = vsub.f32 %v3294, %v3542
    %3544 = vmatmul.mubr.f32.gmra.mrb[0].mxu0 %v3543
    %v3545 = vpop.f32.mrb[0].mxu0
    %v3546 = vadd.f32 %v3464, %v3545
    %v3547 = vpop.f32.mrb[0].mxu0
    %3548 = vmatprep.mubr.f32.mxu0 0.0
    %v3549 = vand.u32 %v3297, 4294901760
    %v3550 = vsub.f32 %v3297, %v3549
    %3551 = vmatmul.mubr.f32.gmra.mrb[0].mxu0 %v3550
    %v3552 = vpop.f32.mrb[0].mxu0
    %v3553 = vadd.f32 %v3470, %v3552
    %v3554 = vpop.f32.mrb[0].mxu0
    %3555 = vdwg.mxu0
    %3556 = vmatprep.subr.mxu0 0.0
    %v3557 = vand.u32 %v3288, 4294901760
    %3558 = vmatpush1.msra.mxu0 %v3557
    %3559 = vmatprep.subr.mxu0 0.0
    %v3560 = vand.u32 %v3290, 4294901760
    %3561 = vmatpush1.msra.mxu0 %v3560
    %3562 = vmatprep.subr.mxu0 0.0
    %3563 = vmatpush1.msra.mxu0 0.0
    %3564 = vmatprep.subr.mxu0 0.0
    %3565 = vmatpush1.msra.mxu0 0.0
    %3566 = vmatprep.subr.mxu0 0.0
    %3567 = vmatpush1.msra.mxu0 0.0
    %3568 = vmatprep.subr.mxu0 0.0
    %3569 = vmatpush1.msra.mxu0 0.0
    %3570 = vmatprep.subr.mxu0 0.0
    %3571 = vmatpush1.msra.mxu0 0.0
    %3572 = vmatprep.subr.mxu0 0.0
    %3573 = vmatpush1.msra.mxu0 0.0
    %3574 = vmatprep.subr.mxu0 0.0
    %3575 = vmatpush1.msra.mxu0 0.0
    %3576 = vmatprep.subr.mxu0 0.0
    %3577 = vmatpush1.msra.mxu0 0.0
    %3578 = vmatprep.subr.mxu0 0.0
    %3579 = vmatpush1.msra.mxu0 0.0
    %3580 = vmatprep.subr.mxu0 0.0
    %3581 = vmatpush1.msra.mxu0 0.0
    %3582 = vmatprep.subr.mxu0 0.0
    %3583 = vmatpush1.msra.mxu0 0.0
    %3584 = vmatprep.subr.mxu0 0.0
    %3585 = vmatpush1.msra.mxu0 0.0
    %3586 = vmatprep.subr.mxu0 0.0
    %3587 = vmatpush1.msra.mxu0 0.0
    %3588 = vmatprep.subr.mxu0 0.0
    %3589 = vmatpush1.msra.mxu0 0.0
    %3590 = vmatprep.subr.mxu0 0.0
    %3591 = vmatpush1.msra.mxu0 0.0
    %3592 = vmatprep.subr.mxu0 0.0
    %3593 = vmatpush1.msra.mxu0 0.0
    %3594 = vmatprep.subr.mxu0 0.0
    %3595 = vmatpush1.msra.mxu0 0.0
    %3596 = vmatprep.subr.mxu0 0.0
    %3597 = vmatpush1.msra.mxu0 0.0
    %3598 = vmatprep.subr.mxu0 0.0
    %3599 = vmatpush1.msra.mxu0 0.0
    %3600 = vmatprep.subr.mxu0 0.0
    %3601 = vmatpush1.msra.mxu0 0.0
    %3602 = vmatprep.subr.mxu0 0.0
    %3603 = vmatpush1.msra.mxu0 0.0
    %3604 = vmatprep.subr.mxu0 0.0
    %3605 = vmatpush1.msra.mxu0 0.0
    %3606 = vmatprep.subr.mxu0 0.0
    %3607 = vmatpush1.msra.mxu0 0.0
    %3608 = vmatprep.subr.mxu0 0.0
    %3609 = vmatpush1.msra.mxu0 0.0
    %3610 = vmatprep.subr.mxu0 0.0
    %3611 = vmatpush1.msra.mxu0 0.0
    %3612 = vmatprep.subr.mxu0 0.0
    %3613 = vmatpush1.msra.mxu0 0.0
    %3614 = vmatprep.subr.mxu0 0.0
    %3615 = vmatpush1.msra.mxu0 0.0
    %3616 = vmatprep.subr.mxu0 0.0
    %3617 = vmatpush1.msra.mxu0 0.0
    %3618 = vmatprep.subr.mxu0 0.0
    %3619 = vmatpush1.msra.mxu0 0.0
    %3620 = vmatprep.subr.mxu0 0.0
    %3621 = vmatpush1.msra.mxu0 0.0
    %3622 = vmatprep.mubr.f32.mxu0 0.0
    %v3623 = vand.u32 %v3294, 4294901760
    %v3624 = vsub.f32 %v3294, %v3623
    %v3625 = vand.u32 %v3624, 4294901760
    %3626 = vmatmul.mubr.f32.gmra.mrb[0].mxu0 %v3625
    %v3627 = vpop.f32.mrb[0].mxu0
    %v3628 = vadd.f32 %v3546, %v3627
    %v3629 = vpop.f32.mrb[0].mxu0
    %3630 = vmatprep.mubr.f32.mxu0 0.0
    %v3631 = vand.u32 %v3297, 4294901760
    %v3632 = vsub.f32 %v3297, %v3631
    %v3633 = vand.u32 %v3632, 4294901760
    %3634 = vmatmul.mubr.f32.gmra.mrb[0].mxu0 %v3633
    %v3635 = vpop.f32.mrb[0].mxu0
    %v3636 = vadd.f32 %v3553, %v3635
    %v3637 = vpop.f32.mrb[0].mxu0
    %3638 = vdwg.mxu0
    %3639 = vmatprep.subr.mxu0 0.0
    %v3640 = vand.u32 %v3288, 4294901760
    %v3641 = vsub.f32 %v3288, %v3640
    %v3642 = vand.u32 %v3641, 4294901760
    %3643 = vmatpush1.msra.mxu0 %v3642
    %3644 = vmatprep.subr.mxu0 0.0
    %v3645 = vand.u32 %v3290, 4294901760
    %v3646 = vsub.f32 %v3290, %v3645
    %v3647 = vand.u32 %v3646, 4294901760
    %3648 = vmatpush1.msra.mxu0 %v3647
    %3649 = vmatprep.subr.mxu0 0.0
    %3650 = vmatpush1.msra.mxu0 0.0
    %3651 = vmatprep.subr.mxu0 0.0
    %3652 = vmatpush1.msra.mxu0 0.0
    %3653 = vmatprep.subr.mxu0 0.0
    %3654 = vmatpush1.msra.mxu0 0.0
    %3655 = vmatprep.subr.mxu0 0.0
    %3656 = vmatpush1.msra.mxu0 0.0
    %3657 = vmatprep.subr.mxu0 0.0
    %3658 = vmatpush1.msra.mxu0 0.0
    %3659 = vmatprep.subr.mxu0 0.0
    %3660 = vmatpush1.msra.mxu0 0.0
    %3661 = vmatprep.subr.mxu0 0.0
    %3662 = vmatpush1.msra.mxu0 0.0
    %3663 = vmatprep.subr.mxu0 0.0
    %3664 = vmatpush1.msra.mxu0 0.0
    %3665 = vmatprep.subr.mxu0 0.0
    %3666 = vmatpush1.msra.mxu0 0.0
    %3667 = vmatprep.subr.mxu0 0.0
    %3668 = vmatpush1.msra.mxu0 0.0
    %3669 = vmatprep.subr.mxu0 0.0
    %3670 = vmatpush1.msra.mxu0 0.0
    %3671 = vmatprep.subr.mxu0 0.0
    %3672 = vmatpush1.msra.mxu0 0.0
    %3673 = vmatprep.subr.mxu0 0.0
    %3674 = vmatpush1.msra.mxu0 0.0
    %3675 = vmatprep.subr.mxu0 0.0
    %3676 = vmatpush1.msra.mxu0 0.0
    %3677 = vmatprep.subr.mxu0 0.0
    %3678 = vmatpush1.msra.mxu0 0.0
    %3679 = vmatprep.subr.mxu0 0.0
    %3680 = vmatpush1.msra.mxu0 0.0
    %3681 = vmatprep.subr.mxu0 0.0
    %3682 = vmatpush1.msra.mxu0 0.0
    %3683 = vmatprep.subr.mxu0 0.0
    %3684 = vmatpush1.msra.mxu0 0.0
    %3685 = vmatprep.subr.mxu0 0.0
    %3686 = vmatpush1.msra.mxu0 0.0
    %3687 = vmatprep.subr.mxu0 0.0
    %3688 = vmatpush1.msra.mxu0 0.0
    %3689 = vmatprep.subr.mxu0 0.0
    %3690 = vmatpush1.msra.mxu0 0.0
    %3691 = vmatprep.subr.mxu0 0.0
    %3692 = vmatpush1.msra.mxu0 0.0
    %3693 = vmatprep.subr.mxu0 0.0
    %3694 = vmatpush1.msra.mxu0 0.0
    %3695 = vmatprep.subr.mxu0 0.0
    %3696 = vmatpush1.msra.mxu0 0.0
    %3697 = vmatprep.subr.mxu0 0.0
    %3698 = vmatpush1.msra.mxu0 0.0
    %3699 = vmatprep.subr.mxu0 0.0
    %3700 = vmatpush1.msra.mxu0 0.0
    %3701 = vmatprep.subr.mxu0 0.0
    %3702 = vmatpush1.msra.mxu0 0.0
    %3703 = vmatprep.subr.mxu0 0.0
    %3704 = vmatpush1.msra.mxu0 0.0
    %3705 = vmatprep.subr.mxu0 0.0
    %3706 = vmatpush1.msra.mxu0 0.0
    %3707 = vmatprep.subr.mxu0 0.0
    %3708 = vmatpush1.msra.mxu0 0.0
    %3709 = vmatprep.mubr.f32.mxu0 0.0
    %v3710 = vand.u32 %v3294, 4294901760
    %3711 = vmatmul.mubr.f32.gmra.mrb[0].mxu0 %v3710
    %v3712 = vpop.f32.mrb[0].mxu0
    %v3713 = vadd.f32 %v3628, %v3712
    %v3714 = vpop.f32.mrb[0].mxu0
    %3715 = vmatprep.mubr.f32.mxu0 0.0
    %v3716 = vand.u32 %v3297, 4294901760
    %3717 = vmatmul.mubr.f32.gmra.mrb[0].mxu0 %v3716
    %v3718 = vpop.f32.mrb[0].mxu0
    %v3719 = vadd.f32 %v3636, %v3718
    %v3720 = vpop.f32.mrb[0].mxu0
    %3721 = vdwg.mxu0
    %3722 = vmatprep.subr.mxu0 0.0
    %v3723 = vand.u32 %v3288, 4294901760
    %3724 = vmatpush1.msra.mxu0 %v3723
    %3725 = vmatprep.subr.mxu0 0.0
    %v3726 = vand.u32 %v3290, 4294901760
    %3727 = vmatpush1.msra.mxu0 %v3726
    %3728 = vmatprep.subr.mxu0 0.0
    %3729 = vmatpush1.msra.mxu0 0.0
    %3730 = vmatprep.subr.mxu0 0.0
    %3731 = vmatpush1.msra.mxu0 0.0
    %3732 = vmatprep.subr.mxu0 0.0
    %3733 = vmatpush1.msra.mxu0 0.0
    %3734 = vmatprep.subr.mxu0 0.0
    %3735 = vmatpush1.msra.mxu0 0.0
    %3736 = vmatprep.subr.mxu0 0.0
    %3737 = vmatpush1.msra.mxu0 0.0
    %3738 = vmatprep.subr.mxu0 0.0
    %3739 = vmatpush1.msra.mxu0 0.0
    %3740 = vmatprep.subr.mxu0 0.0
    %3741 = vmatpush1.msra.mxu0 0.0
    %3742 = vmatprep.subr.mxu0 0.0
    %3743 = vmatpush1.msra.mxu0 0.0
    %3744 = vmatprep.subr.mxu0 0.0
    %3745 = vmatpush1.msra.mxu0 0.0
    %3746 = vmatprep.subr.mxu0 0.0
    %3747 = vmatpush1.msra.mxu0 0.0
    %3748 = vmatprep.subr.mxu0 0.0
    %3749 = vmatpush1.msra.mxu0 0.0
    %3750 = vmatprep.subr.mxu0 0.0
    %3751 = vmatpush1.msra.mxu0 0.0
    %3752 = vmatprep.subr.mxu0 0.0
    %3753 = vmatpush1.msra.mxu0 0.0
    %3754 = vmatprep.subr.mxu0 0.0
    %3755 = vmatpush1.msra.mxu0 0.0
    %3756 = vmatprep.subr.mxu0 0.0
    %3757 = vmatpush1.msra.mxu0 0.0
    %3758 = vmatprep.subr.mxu0 0.0
    %3759 = vmatpush1.msra.mxu0 0.0
    %3760 = vmatprep.subr.mxu0 0.0
    %3761 = vmatpush1.msra.mxu0 0.0
    %3762 = vmatprep.subr.mxu0 0.0
    %3763 = vmatpush1.msra.mxu0 0.0
    %3764 = vmatprep.subr.mxu0 0.0
    %3765 = vmatpush1.msra.mxu0 0.0
    %3766 = vmatprep.subr.mxu0 0.0
    %3767 = vmatpush1.msra.mxu0 0.0
    %3768 = vmatprep.subr.mxu0 0.0
    %3769 = vmatpush1.msra.mxu0 0.0
    %3770 = vmatprep.subr.mxu0 0.0
    %3771 = vmatpush1.msra.mxu0 0.0
    %3772 = vmatprep.subr.mxu0 0.0
    %3773 = vmatpush1.msra.mxu0 0.0
    %3774 = vmatprep.subr.mxu0 0.0
    %3775 = vmatpush1.msra.mxu0 0.0
    %3776 = vmatprep.subr.mxu0 0.0
    %3777 = vmatpush1.msra.mxu0 0.0
    %3778 = vmatprep.subr.mxu0 0.0
    %3779 = vmatpush1.msra.mxu0 0.0
    %3780 = vmatprep.subr.mxu0 0.0
    %3781 = vmatpush1.msra.mxu0 0.0
    %3782 = vmatprep.subr.mxu0 0.0
    %3783 = vmatpush1.msra.mxu0 0.0
    %3784 = vmatprep.subr.mxu0 0.0
    %3785 = vmatpush1.msra.mxu0 0.0
    %3786 = vmatprep.subr.mxu0 0.0
    %3787 = vmatpush1.msra.mxu0 0.0
    %3788 = vmatprep.mubr.f32.mxu0 0.0
    %v3789 = vand.u32 %v3294, 4294901760
    %3790 = vmatmul.mubr.f32.gmra.mrb[0].mxu0 %v3789
    %v3791 = vpop.f32.mrb[0].mxu0
    %v3792 = vadd.f32 %v3713, %v3791
    %v3793 = vpop.f32.mrb[0].mxu0
    %3794 = vmatprep.mubr.f32.mxu0 0.0
    %v3795 = vand.u32 %v3297, 4294901760
    %3796 = vmatmul.mubr.f32.gmra.mrb[0].mxu0 %v3795
    %v3797 = vpop.f32.mrb[0].mxu0
    %v3798 = vadd.f32 %v3719, %v3797
    %v3799 = vpop.f32.mrb[0].mxu0
    %3800 = vdwg.mxu0
    %3801 = vrot.lane.b32.xlu0 %v630, 104
    %v3802 = vpop.permute.xlu0 %3801
    %3803 = vrot.lane.b32.xlu0 %v636, 104
    %v3804 = vpop.permute.xlu0 %3803
    %3805 = vrot.lane.b32.xlu0 %v630, 72
    %v3806 = vpop.permute.xlu0 %3805
    %3807 = vrot.lane.b32.xlu0 %v636, 72
    %v3808 = vpop.permute.xlu0 %3807
    %v3809 = vsel %vm645, %v3802, 0
    %v3811 = vsel %vm645, %v3804, 0
    %v3813 = vsel %vm645, %v3806, 0
    %v3815 = vsel %vm645, %v3808, 0
    %3817 = vmatprep.subr.mxu0 0.0
    %v3818 = vand.u32 %v3813, 4294901760
    %3819 = vmatpush1.xpose.msra.mxu0 %v3818
    %3820 = vmatprep.subr.mxu0 0.0
    %v3821 = vand.u32 %v3815, 4294901760
    %3822 = vmatpush1.xpose.msra.mxu0 %v3821
    %3823 = vmatprep.subr.mxu0 0.0
    %3824 = vmatpush1.xpose.msra.mxu0 0.0
    %3825 = vmatprep.subr.mxu0 0.0
    %3826 = vmatpush1.xpose.msra.mxu0 0.0
    %3827 = vmatprep.subr.mxu0 0.0
    %3828 = vmatpush1.xpose.msra.mxu0 0.0
    %3829 = vmatprep.subr.mxu0 0.0
    %3830 = vmatpush1.xpose.msra.mxu0 0.0
    %3831 = vmatprep.subr.mxu0 0.0
    %3832 = vmatpush1.xpose.msra.mxu0 0.0
    %3833 = vmatprep.subr.mxu0 0.0
    %3834 = vmatpush1.xpose.msra.mxu0 0.0
    %3835 = vmatprep.subr.mxu0 0.0
    %3836 = vmatpush1.xpose.msra.mxu0 0.0
    %3837 = vmatprep.subr.mxu0 0.0
    %3838 = vmatpush1.xpose.msra.mxu0 0.0
    %3839 = vmatprep.subr.mxu0 0.0
    %3840 = vmatpush1.xpose.msra.mxu0 0.0
    %3841 = vmatprep.subr.mxu0 0.0
    %3842 = vmatpush1.xpose.msra.mxu0 0.0
    %3843 = vmatprep.subr.mxu0 0.0
    %3844 = vmatpush1.xpose.msra.mxu0 0.0
    %3845 = vmatprep.subr.mxu0 0.0
    %3846 = vmatpush1.xpose.msra.mxu0 0.0
    %3847 = vmatprep.subr.mxu0 0.0
    %3848 = vmatpush1.xpose.msra.mxu0 0.0
    %3849 = vmatprep.subr.mxu0 0.0
    %3850 = vmatpush1.xpose.msra.mxu0 0.0
    %3851 = vmatprep.subr.mxu0 0.0
    %3852 = vmatpush1.xpose.msra.mxu0 0.0
    %3853 = vmatprep.subr.mxu0 0.0
    %3854 = vmatpush1.xpose.msra.mxu0 0.0
    %3855 = vmatprep.subr.mxu0 0.0
    %3856 = vmatpush1.xpose.msra.mxu0 0.0
    %3857 = vmatprep.subr.mxu0 0.0
    %3858 = vmatpush1.xpose.msra.mxu0 0.0
    %3859 = vmatprep.subr.mxu0 0.0
    %3860 = vmatpush1.xpose.msra.mxu0 0.0
    %3861 = vmatprep.subr.mxu0 0.0
    %3862 = vmatpush1.xpose.msra.mxu0 0.0
    %3863 = vmatprep.subr.mxu0 0.0
    %3864 = vmatpush1.xpose.msra.mxu0 0.0
    %3865 = vmatprep.subr.mxu0 0.0
    %3866 = vmatpush1.xpose.msra.mxu0 0.0
    %3867 = vmatprep.subr.mxu0 0.0
    %3868 = vmatpush1.xpose.msra.mxu0 0.0
    %3869 = vmatprep.subr.mxu0 0.0
    %3870 = vmatpush1.xpose.msra.mxu0 0.0
    %3871 = vmatprep.subr.mxu0 0.0
    %3872 = vmatpush1.xpose.msra.mxu0 0.0
    %3873 = vmatprep.subr.mxu0 0.0
    %3874 = vmatpush1.xpose.msra.mxu0 0.0
    %3875 = vmatprep.subr.mxu0 0.0
    %3876 = vmatpush1.xpose.msra.mxu0 0.0
    %3877 = vmatprep.subr.mxu0 0.0
    %3878 = vmatpush1.xpose.msra.mxu0 0.0
    %3879 = vmatprep.subr.mxu0 0.0
    %3880 = vmatpush1.xpose.msra.mxu0 0.0
    %3881 = vmatprep.subr.mxu0 0.0
    %3882 = vmatpush1.xpose.msra.mxu0 0.0
    %3883 = vmatprep.mubr.f32.mxu0 0.0
    %v3884 = vand.u32 %v3809, 4294901760
    %v3885 = vsub.f32 %v3809, %v3884
    %v3886 = vand.u32 %v3885, 4294901760
    %v3887 = vsub.f32 %v3885, %v3886
    %v3888 = vand.u32 %v3887, 4294901760
    %3889 = vmatmul.mubr.f32.gmra.mrb[0].mxu0 %v3888
    %v3890 = vpop.f32.mrb[0].mxu0
    %v3891 = vadd.f32 %v55, %v3890
    %v3892 = vpop.f32.mrb[0].mxu0
    %3893 = vmatprep.mubr.f32.mxu0 0.0
    %v3894 = vand.u32 %v3811, 4294901760
    %v3895 = vsub.f32 %v3811, %v3894
    %v3896 = vand.u32 %v3895, 4294901760
    %v3897 = vsub.f32 %v3895, %v3896
    %v3898 = vand.u32 %v3897, 4294901760
    %3899 = vmatmul.mubr.f32.gmra.mrb[0].mxu0 %v3898
    %v3900 = vpop.f32.mrb[0].mxu0
    %v3901 = vadd.f32 %v56, %v3900
    %v3902 = vpop.f32.mrb[0].mxu0
    %3903 = vdwg.mxu0
    %3904 = vmatprep.subr.mxu0 0.0
    %v3905 = vand.u32 %v3813, 4294901760
    %v3906 = vsub.f32 %v3813, %v3905
    %v3907 = vand.u32 %v3906, 4294901760
    %v3908 = vsub.f32 %v3906, %v3907
    %v3909 = vand.u32 %v3908, 4294901760
    %3910 = vmatpush1.xpose.msra.mxu0 %v3909
    %3911 = vmatprep.subr.mxu0 0.0
    %v3912 = vand.u32 %v3815, 4294901760
    %v3913 = vsub.f32 %v3815, %v3912
    %v3914 = vand.u32 %v3913, 4294901760
    %v3915 = vsub.f32 %v3913, %v3914
    %v3916 = vand.u32 %v3915, 4294901760
    %3917 = vmatpush1.xpose.msra.mxu0 %v3916
    %3918 = vmatprep.subr.mxu0 0.0
    %3919 = vmatpush1.xpose.msra.mxu0 0.0
    %3920 = vmatprep.subr.mxu0 0.0
    %3921 = vmatpush1.xpose.msra.mxu0 0.0
    %3922 = vmatprep.subr.mxu0 0.0
    %3923 = vmatpush1.xpose.msra.mxu0 0.0
    %3924 = vmatprep.subr.mxu0 0.0
    %3925 = vmatpush1.xpose.msra.mxu0 0.0
    %3926 = vmatprep.subr.mxu0 0.0
    %3927 = vmatpush1.xpose.msra.mxu0 0.0
    %3928 = vmatprep.subr.mxu0 0.0
    %3929 = vmatpush1.xpose.msra.mxu0 0.0
    %3930 = vmatprep.subr.mxu0 0.0
    %3931 = vmatpush1.xpose.msra.mxu0 0.0
    %3932 = vmatprep.subr.mxu0 0.0
    %3933 = vmatpush1.xpose.msra.mxu0 0.0
    %3934 = vmatprep.subr.mxu0 0.0
    %3935 = vmatpush1.xpose.msra.mxu0 0.0
    %3936 = vmatprep.subr.mxu0 0.0
    %3937 = vmatpush1.xpose.msra.mxu0 0.0
    %3938 = vmatprep.subr.mxu0 0.0
    %3939 = vmatpush1.xpose.msra.mxu0 0.0
    %3940 = vmatprep.subr.mxu0 0.0
    %3941 = vmatpush1.xpose.msra.mxu0 0.0
    %3942 = vmatprep.subr.mxu0 0.0
    %3943 = vmatpush1.xpose.msra.mxu0 0.0
    %3944 = vmatprep.subr.mxu0 0.0
    %3945 = vmatpush1.xpose.msra.mxu0 0.0
    %3946 = vmatprep.subr.mxu0 0.0
    %3947 = vmatpush1.xpose.msra.mxu0 0.0
    %3948 = vmatprep.subr.mxu0 0.0
    %3949 = vmatpush1.xpose.msra.mxu0 0.0
    %3950 = vmatprep.subr.mxu0 0.0
    %3951 = vmatpush1.xpose.msra.mxu0 0.0
    %3952 = vmatprep.subr.mxu0 0.0
    %3953 = vmatpush1.xpose.msra.mxu0 0.0
    %3954 = vmatprep.subr.mxu0 0.0
    %3955 = vmatpush1.xpose.msra.mxu0 0.0
    %3956 = vmatprep.subr.mxu0 0.0
    %3957 = vmatpush1.xpose.msra.mxu0 0.0
    %3958 = vmatprep.subr.mxu0 0.0
    %3959 = vmatpush1.xpose.msra.mxu0 0.0
    %3960 = vmatprep.subr.mxu0 0.0
    %3961 = vmatpush1.xpose.msra.mxu0 0.0
    %3962 = vmatprep.subr.mxu0 0.0
    %3963 = vmatpush1.xpose.msra.mxu0 0.0
    %3964 = vmatprep.subr.mxu0 0.0
    %3965 = vmatpush1.xpose.msra.mxu0 0.0
    %3966 = vmatprep.subr.mxu0 0.0
    %3967 = vmatpush1.xpose.msra.mxu0 0.0
    %3968 = vmatprep.subr.mxu0 0.0
    %3969 = vmatpush1.xpose.msra.mxu0 0.0
    %3970 = vmatprep.subr.mxu0 0.0
    %3971 = vmatpush1.xpose.msra.mxu0 0.0
    %3972 = vmatprep.subr.mxu0 0.0
    %3973 = vmatpush1.xpose.msra.mxu0 0.0
    %3974 = vmatprep.subr.mxu0 0.0
    %3975 = vmatpush1.xpose.msra.mxu0 0.0
    %3976 = vmatprep.subr.mxu0 0.0
    %3977 = vmatpush1.xpose.msra.mxu0 0.0
    %3978 = vmatprep.mubr.f32.mxu0 0.0
    %v3979 = vand.u32 %v3809, 4294901760
    %3980 = vmatmul.mubr.f32.gmra.mrb[0].mxu0 %v3979
    %v3981 = vpop.f32.mrb[0].mxu0
    %v3982 = vadd.f32 %v3891, %v3981
    %v3983 = vpop.f32.mrb[0].mxu0
    %3984 = vmatprep.mubr.f32.mxu0 0.0
    %v3985 = vand.u32 %v3811, 4294901760
    %3986 = vmatmul.mubr.f32.gmra.mrb[0].mxu0 %v3985
    %v3987 = vpop.f32.mrb[0].mxu0
    %v3988 = vadd.f32 %v3901, %v3987
    %v3989 = vpop.f32.mrb[0].mxu0
    %3990 = vdwg.mxu0
    %3991 = vmatprep.subr.mxu0 0.0
    %v3992 = vand.u32 %v3813, 4294901760
    %v3993 = vsub.f32 %v3813, %v3992
    %3994 = vmatpush1.xpose.msra.mxu0 %v3993
    %3995 = vmatprep.subr.mxu0 0.0
    %v3996 = vand.u32 %v3815, 4294901760
    %v3997 = vsub.f32 %v3815, %v3996
    %3998 = vmatpush1.xpose.msra.mxu0 %v3997
    %3999 = vmatprep.subr.mxu0 0.0
    %4000 = vmatpush1.xpose.msra.mxu0 0.0
    %4001 = vmatprep.subr.mxu0 0.0
    %4002 = vmatpush1.xpose.msra.mxu0 0.0
    %4003 = vmatprep.subr.mxu0 0.0
    %4004 = vmatpush1.xpose.msra.mxu0 0.0
    %4005 = vmatprep.subr.mxu0 0.0
    %4006 = vmatpush1.xpose.msra.mxu0 0.0
    %4007 = vmatprep.subr.mxu0 0.0
    %4008 = vmatpush1.xpose.msra.mxu0 0.0
    %4009 = vmatprep.subr.mxu0 0.0
    %4010 = vmatpush1.xpose.msra.mxu0 0.0
    %4011 = vmatprep.subr.mxu0 0.0
    %4012 = vmatpush1.xpose.msra.mxu0 0.0
    %4013 = vmatprep.subr.mxu0 0.0
    %4014 = vmatpush1.xpose.msra.mxu0 0.0
    %4015 = vmatprep.subr.mxu0 0.0
    %4016 = vmatpush1.xpose.msra.mxu0 0.0
    %4017 = vmatprep.subr.mxu0 0.0
    %4018 = vmatpush1.xpose.msra.mxu0 0.0
    %4019 = vmatprep.subr.mxu0 0.0
    %4020 = vmatpush1.xpose.msra.mxu0 0.0
    %4021 = vmatprep.subr.mxu0 0.0
    %4022 = vmatpush1.xpose.msra.mxu0 0.0
    %4023 = vmatprep.subr.mxu0 0.0
    %4024 = vmatpush1.xpose.msra.mxu0 0.0
    %4025 = vmatprep.subr.mxu0 0.0
    %4026 = vmatpush1.xpose.msra.mxu0 0.0
    %4027 = vmatprep.subr.mxu0 0.0
    %4028 = vmatpush1.xpose.msra.mxu0 0.0
    %4029 = vmatprep.subr.mxu0 0.0
    %4030 = vmatpush1.xpose.msra.mxu0 0.0
    %4031 = vmatprep.subr.mxu0 0.0
    %4032 = vmatpush1.xpose.msra.mxu0 0.0
    %4033 = vmatprep.subr.mxu0 0.0
    %4034 = vmatpush1.xpose.msra.mxu0 0.0
    %4035 = vmatprep.subr.mxu0 0.0
    %4036 = vmatpush1.xpose.msra.mxu0 0.0
    %4037 = vmatprep.subr.mxu0 0.0
    %4038 = vmatpush1.xpose.msra.mxu0 0.0
    %4039 = vmatprep.subr.mxu0 0.0
    %4040 = vmatpush1.xpose.msra.mxu0 0.0
    %4041 = vmatprep.subr.mxu0 0.0
    %4042 = vmatpush1.xpose.msra.mxu0 0.0
    %4043 = vmatprep.subr.mxu0 0.0
    %4044 = vmatpush1.xpose.msra.mxu0 0.0
    %4045 = vmatprep.subr.mxu0 0.0
    %4046 = vmatpush1.xpose.msra.mxu0 0.0
    %4047 = vmatprep.subr.mxu0 0.0
    %4048 = vmatpush1.xpose.msra.mxu0 0.0
    %4049 = vmatprep.subr.mxu0 0.0
    %4050 = vmatpush1.xpose.msra.mxu0 0.0
    %4051 = vmatprep.subr.mxu0 0.0
    %4052 = vmatpush1.xpose.msra.mxu0 0.0
    %4053 = vmatprep.subr.mxu0 0.0
    %4054 = vmatpush1.xpose.msra.mxu0 0.0
    %4055 = vmatprep.subr.mxu0 0.0
    %4056 = vmatpush1.xpose.msra.mxu0 0.0
    %4057 = vmatprep.subr.mxu0 0.0
    %4058 = vmatpush1.xpose.msra.mxu0 0.0
    %4059 = vmatprep.mubr.f32.mxu0 0.0
    %v4060 = vand.u32 %v3809, 4294901760
    %v4061 = vsub.f32 %v3809, %v4060
    %4062 = vmatmul.mubr.f32.gmra.mrb[0].mxu0 %v4061
    %v4063 = vpop.f32.mrb[0].mxu0
    %v4064 = vadd.f32 %v3982, %v4063
    %v4065 = vpop.f32.mrb[0].mxu0
    %4066 = vmatprep.mubr.f32.mxu0 0.0
    %v4067 = vand.u32 %v3811, 4294901760
    %v4068 = vsub.f32 %v3811, %v4067
    %4069 = vmatmul.mubr.f32.gmra.mrb[0].mxu0 %v4068
    %v4070 = vpop.f32.mrb[0].mxu0
    %v4071 = vadd.f32 %v3988, %v4070
    %v4072 = vpop.f32.mrb[0].mxu0
    %4073 = vdwg.mxu0
    %4074 = vmatprep.subr.mxu0 0.0
    %v4075 = vand.u32 %v3813, 4294901760
    %4076 = vmatpush1.xpose.msra.mxu0 %v4075
    %4077 = vmatprep.subr.mxu0 0.0
    %v4078 = vand.u32 %v3815, 4294901760
    %4079 = vmatpush1.xpose.msra.mxu0 %v4078
    %4080 = vmatprep.subr.mxu0 0.0
    %4081 = vmatpush1.xpose.msra.mxu0 0.0
    %4082 = vmatprep.subr.mxu0 0.0
    %4083 = vmatpush1.xpose.msra.mxu0 0.0
    %4084 = vmatprep.subr.mxu0 0.0
    %4085 = vmatpush1.xpose.msra.mxu0 0.0
    %4086 = vmatprep.subr.mxu0 0.0
    %4087 = vmatpush1.xpose.msra.mxu0 0.0
    %4088 = vmatprep.subr.mxu0 0.0
    %4089 = vmatpush1.xpose.msra.mxu0 0.0
    %4090 = vmatprep.subr.mxu0 0.0
    %4091 = vmatpush1.xpose.msra.mxu0 0.0
    %4092 = vmatprep.subr.mxu0 0.0
    %4093 = vmatpush1.xpose.msra.mxu0 0.0
    %4094 = vmatprep.subr.mxu0 0.0
    %4095 = vmatpush1.xpose.msra.mxu0 0.0
    %4096 = vmatprep.subr.mxu0 0.0
    %4097 = vmatpush1.xpose.msra.mxu0 0.0
    %4098 = vmatprep.subr.mxu0 0.0
    %4099 = vmatpush1.xpose.msra.mxu0 0.0
    %4100 = vmatprep.subr.mxu0 0.0
    %4101 = vmatpush1.xpose.msra.mxu0 0.0
    %4102 = vmatprep.subr.mxu0 0.0
    %4103 = vmatpush1.xpose.msra.mxu0 0.0
    %4104 = vmatprep.subr.mxu0 0.0
    %4105 = vmatpush1.xpose.msra.mxu0 0.0
    %4106 = vmatprep.subr.mxu0 0.0
    %4107 = vmatpush1.xpose.msra.mxu0 0.0
    %4108 = vmatprep.subr.mxu0 0.0
    %4109 = vmatpush1.xpose.msra.mxu0 0.0
    %4110 = vmatprep.subr.mxu0 0.0
    %4111 = vmatpush1.xpose.msra.mxu0 0.0
    %4112 = vmatprep.subr.mxu0 0.0
    %4113 = vmatpush1.xpose.msra.mxu0 0.0
    %4114 = vmatprep.subr.mxu0 0.0
    %4115 = vmatpush1.xpose.msra.mxu0 0.0
    %4116 = vmatprep.subr.mxu0 0.0
    %4117 = vmatpush1.xpose.msra.mxu0 0.0
    %4118 = vmatprep.subr.mxu0 0.0
    %4119 = vmatpush1.xpose.msra.mxu0 0.0
    %4120 = vmatprep.subr.mxu0 0.0
    %4121 = vmatpush1.xpose.msra.mxu0 0.0
    %4122 = vmatprep.subr.mxu0 0.0
    %4123 = vmatpush1.xpose.msra.mxu0 0.0
    %4124 = vmatprep.subr.mxu0 0.0
    %4125 = vmatpush1.xpose.msra.mxu0 0.0
    %4126 = vmatprep.subr.mxu0 0.0
    %4127 = vmatpush1.xpose.msra.mxu0 0.0
    %4128 = vmatprep.subr.mxu0 0.0
    %4129 = vmatpush1.xpose.msra.mxu0 0.0
    %4130 = vmatprep.subr.mxu0 0.0
    %4131 = vmatpush1.xpose.msra.mxu0 0.0
    %4132 = vmatprep.subr.mxu0 0.0
    %4133 = vmatpush1.xpose.msra.mxu0 0.0
    %4134 = vmatprep.subr.mxu0 0.0
    %4135 = vmatpush1.xpose.msra.mxu0 0.0
    %4136 = vmatprep.subr.mxu0 0.0
    %4137 = vmatpush1.xpose.msra.mxu0 0.0
    %4138 = vmatprep.subr.mxu0 0.0
    %4139 = vmatpush1.xpose.msra.mxu0 0.0
    %4140 = vmatprep.mubr.f32.mxu0 0.0
    %v4141 = vand.u32 %v3809, 4294901760
    %v4142 = vsub.f32 %v3809, %v4141
    %v4143 = vand.u32 %v4142, 4294901760
    %4144 = vmatmul.mubr.f32.gmra.mrb[0].mxu0 %v4143
    %v4145 = vpop.f32.mrb[0].mxu0
    %v4146 = vadd.f32 %v4064, %v4145
    %v4147 = vpop.f32.mrb[0].mxu0
    %4148 = vmatprep.mubr.f32.mxu0 0.0
    %v4149 = vand.u32 %v3811, 4294901760
    %v4150 = vsub.f32 %v3811, %v4149
    %v4151 = vand.u32 %v4150, 4294901760
    %4152 = vmatmul.mubr.f32.gmra.mrb[0].mxu0 %v4151
    %v4153 = vpop.f32.mrb[0].mxu0
    %v4154 = vadd.f32 %v4071, %v4153
    %v4155 = vpop.f32.mrb[0].mxu0
    %4156 = vdwg.mxu0
    %4157 = vmatprep.subr.mxu0 0.0
    %v4158 = vand.u32 %v3813, 4294901760
    %v4159 = vsub.f32 %v3813, %v4158
    %v4160 = vand.u32 %v4159, 4294901760
    %4161 = vmatpush1.xpose.msra.mxu0 %v4160
    %4162 = vmatprep.subr.mxu0 0.0
    %v4163 = vand.u32 %v3815, 4294901760
    %v4164 = vsub.f32 %v3815, %v4163
    %v4165 = vand.u32 %v4164, 4294901760
    %4166 = vmatpush1.xpose.msra.mxu0 %v4165
    %4167 = vmatprep.subr.mxu0 0.0
    %4168 = vmatpush1.xpose.msra.mxu0 0.0
    %4169 = vmatprep.subr.mxu0 0.0
    %4170 = vmatpush1.xpose.msra.mxu0 0.0
    %4171 = vmatprep.subr.mxu0 0.0
    %4172 = vmatpush1.xpose.msra.mxu0 0.0
    %4173 = vmatprep.subr.mxu0 0.0
    %4174 = vmatpush1.xpose.msra.mxu0 0.0
    %4175 = vmatprep.subr.mxu0 0.0
    %4176 = vmatpush1.xpose.msra.mxu0 0.0
    %4177 = vmatprep.subr.mxu0 0.0
    %4178 = vmatpush1.xpose.msra.mxu0 0.0
    %4179 = vmatprep.subr.mxu0 0.0
    %4180 = vmatpush1.xpose.msra.mxu0 0.0
    %4181 = vmatprep.subr.mxu0 0.0
    %4182 = vmatpush1.xpose.msra.mxu0 0.0
    %4183 = vmatprep.subr.mxu0 0.0
    %4184 = vmatpush1.xpose.msra.mxu0 0.0
    %4185 = vmatprep.subr.mxu0 0.0
    %4186 = vmatpush1.xpose.msra.mxu0 0.0
    %4187 = vmatprep.subr.mxu0 0.0
    %4188 = vmatpush1.xpose.msra.mxu0 0.0
    %4189 = vmatprep.subr.mxu0 0.0
    %4190 = vmatpush1.xpose.msra.mxu0 0.0
    %4191 = vmatprep.subr.mxu0 0.0
    %4192 = vmatpush1.xpose.msra.mxu0 0.0
    %4193 = vmatprep.subr.mxu0 0.0
    %4194 = vmatpush1.xpose.msra.mxu0 0.0
    %4195 = vmatprep.subr.mxu0 0.0
    %4196 = vmatpush1.xpose.msra.mxu0 0.0
    %4197 = vmatprep.subr.mxu0 0.0
    %4198 = vmatpush1.xpose.msra.mxu0 0.0
    %4199 = vmatprep.subr.mxu0 0.0
    %4200 = vmatpush1.xpose.msra.mxu0 0.0
    %4201 = vmatprep.subr.mxu0 0.0
    %4202 = vmatpush1.xpose.msra.mxu0 0.0
    %4203 = vmatprep.subr.mxu0 0.0
    %4204 = vmatpush1.xpose.msra.mxu0 0.0
    %4205 = vmatprep.subr.mxu0 0.0
    %4206 = vmatpush1.xpose.msra.mxu0 0.0
    %4207 = vmatprep.subr.mxu0 0.0
    %4208 = vmatpush1.xpose.msra.mxu0 0.0
    %4209 = vmatprep.subr.mxu0 0.0
    %4210 = vmatpush1.xpose.msra.mxu0 0.0
    %4211 = vmatprep.subr.mxu0 0.0
    %4212 = vmatpush1.xpose.msra.mxu0 0.0
    %4213 = vmatprep.subr.mxu0 0.0
    %4214 = vmatpush1.xpose.msra.mxu0 0.0
    %4215 = vmatprep.subr.mxu0 0.0
    %4216 = vmatpush1.xpose.msra.mxu0 0.0
    %4217 = vmatprep.subr.mxu0 0.0
    %4218 = vmatpush1.xpose.msra.mxu0 0.0
    %4219 = vmatprep.subr.mxu0 0.0
    %4220 = vmatpush1.xpose.msra.mxu0 0.0
    %4221 = vmatprep.subr.mxu0 0.0
    %4222 = vmatpush1.xpose.msra.mxu0 0.0
    %4223 = vmatprep.subr.mxu0 0.0
    %4224 = vmatpush1.xpose.msra.mxu0 0.0
    %4225 = vmatprep.subr.mxu0 0.0
    %4226 = vmatpush1.xpose.msra.mxu0 0.0
    %4227 = vmatprep.mubr.f32.mxu0 0.0
    %v4228 = vand.u32 %v3809, 4294901760
    %4229 = vmatmul.mubr.f32.gmra.mrb[0].mxu0 %v4228
    %v4230 = vpop.f32.mrb[0].mxu0
    %v4231 = vadd.f32 %v4146, %v4230
    %v4232 = vpop.f32.mrb[0].mxu0
    %4233 = vmatprep.mubr.f32.mxu0 0.0
    %v4234 = vand.u32 %v3811, 4294901760
    %4235 = vmatmul.mubr.f32.gmra.mrb[0].mxu0 %v4234
    %v4236 = vpop.f32.mrb[0].mxu0
    %v4237 = vadd.f32 %v4154, %v4236
    %v4238 = vpop.f32.mrb[0].mxu0
    %4239 = vdwg.mxu0
    %4240 = vmatprep.subr.mxu0 0.0
    %v4241 = vand.u32 %v3813, 4294901760
    %4242 = vmatpush1.xpose.msra.mxu0 %v4241
    %4243 = vmatprep.subr.mxu0 0.0
    %v4244 = vand.u32 %v3815, 4294901760
    %4245 = vmatpush1.xpose.msra.mxu0 %v4244
    %4246 = vmatprep.subr.mxu0 0.0
    %4247 = vmatpush1.xpose.msra.mxu0 0.0
    %4248 = vmatprep.subr.mxu0 0.0
    %4249 = vmatpush1.xpose.msra.mxu0 0.0
    %4250 = vmatprep.subr.mxu0 0.0
    %4251 = vmatpush1.xpose.msra.mxu0 0.0
    %4252 = vmatprep.subr.mxu0 0.0
    %4253 = vmatpush1.xpose.msra.mxu0 0.0
    %4254 = vmatprep.subr.mxu0 0.0
    %4255 = vmatpush1.xpose.msra.mxu0 0.0
    %4256 = vmatprep.subr.mxu0 0.0
    %4257 = vmatpush1.xpose.msra.mxu0 0.0
    %4258 = vmatprep.subr.mxu0 0.0
    %4259 = vmatpush1.xpose.msra.mxu0 0.0
    %4260 = vmatprep.subr.mxu0 0.0
    %4261 = vmatpush1.xpose.msra.mxu0 0.0
    %4262 = vmatprep.subr.mxu0 0.0
    %4263 = vmatpush1.xpose.msra.mxu0 0.0
    %4264 = vmatprep.subr.mxu0 0.0
    %4265 = vmatpush1.xpose.msra.mxu0 0.0
    %4266 = vmatprep.subr.mxu0 0.0
    %4267 = vmatpush1.xpose.msra.mxu0 0.0
    %4268 = vmatprep.subr.mxu0 0.0
    %4269 = vmatpush1.xpose.msra.mxu0 0.0
    %4270 = vmatprep.subr.mxu0 0.0
    %4271 = vmatpush1.xpose.msra.mxu0 0.0
    %4272 = vmatprep.subr.mxu0 0.0
    %4273 = vmatpush1.xpose.msra.mxu0 0.0
    %4274 = vmatprep.subr.mxu0 0.0
    %4275 = vmatpush1.xpose.msra.mxu0 0.0
    %4276 = vmatprep.subr.mxu0 0.0
    %4277 = vmatpush1.xpose.msra.mxu0 0.0
    %4278 = vmatprep.subr.mxu0 0.0
    %4279 = vmatpush1.xpose.msra.mxu0 0.0
    %4280 = vmatprep.subr.mxu0 0.0
    %4281 = vmatpush1.xpose.msra.mxu0 0.0
    %4282 = vmatprep.subr.mxu0 0.0
    %4283 = vmatpush1.xpose.msra.mxu0 0.0
    %4284 = vmatprep.subr.mxu0 0.0
    %4285 = vmatpush1.xpose.msra.mxu0 0.0
    %4286 = vmatprep.subr.mxu0 0.0
    %4287 = vmatpush1.xpose.msra.mxu0 0.0
    %4288 = vmatprep.subr.mxu0 0.0
    %4289 = vmatpush1.xpose.msra.mxu0 0.0
    %4290 = vmatprep.subr.mxu0 0.0
    %4291 = vmatpush1.xpose.msra.mxu0 0.0
    %4292 = vmatprep.subr.mxu0 0.0
    %4293 = vmatpush1.xpose.msra.mxu0 0.0
    %4294 = vmatprep.subr.mxu0 0.0
    %4295 = vmatpush1.xpose.msra.mxu0 0.0
    %4296 = vmatprep.subr.mxu0 0.0
    %4297 = vmatpush1.xpose.msra.mxu0 0.0
    %4298 = vmatprep.subr.mxu0 0.0
    %4299 = vmatpush1.xpose.msra.mxu0 0.0
    %4300 = vmatprep.subr.mxu0 0.0
    %4301 = vmatpush1.xpose.msra.mxu0 0.0
    %4302 = vmatprep.subr.mxu0 0.0
    %4303 = vmatpush1.xpose.msra.mxu0 0.0
    %4304 = vmatprep.subr.mxu0 0.0
    %4305 = vmatpush1.xpose.msra.mxu0 0.0
    %4306 = vmatprep.mubr.f32.mxu0 0.0
    %v4307 = vand.u32 %v3809, 4294901760
    %4308 = vmatmul.mubr.f32.gmra.mrb[0].mxu0 %v4307
    %v4309 = vpop.f32.mrb[0].mxu0
    %v4310 = vadd.f32 %v4231, %v4309
    %v4311 = vpop.f32.mrb[0].mxu0
    %4312 = vmatprep.mubr.f32.mxu0 0.0
    %v4313 = vand.u32 %v3811, 4294901760
    %4314 = vmatmul.mubr.f32.gmra.mrb[0].mxu0 %v4313
    %v4315 = vpop.f32.mrb[0].mxu0
    %v4316 = vadd.f32 %v4237, %v4315
    %v4317 = vpop.f32.mrb[0].mxu0
    %4318 = vdwg.mxu0
    %v4319 = vsel %vm1156, %v4310, -inf
    %4320 = vmax.xlane.f32.xlu0 %v4319
    %v4321 = vpop.xlane.xlu0 %4320
    %v4322 = vsel %vm1156, %v4316, -inf
    %4323 = vmax.xlane.f32.xlu0 %v4322
    %v4324 = vpop.xlane.xlu0 %4323
    %v4325 = vsub.f32 %v4310, %v4321
    %v4326 = vsub.f32 %v4316, %v4324
    %v4327 = vmul.f32 %v4325, 1.442695
    %v4328 = vpow.pop %v4327
    %v4329 = vmul.f32 %v4326, 1.442695
    %v4330 = vpow.pop %v4329
    %v4331 = vsel %vm1156, %v4328, 0.0
    %4332 = vadd.xlane.f32.xlu0 %v4331
    %v4333 = vpop.xlane.xlu0 %4332
    %v4334 = vsel %vm1156, %v4330, 0.0
    %4335 = vadd.xlane.f32.xlu0 %v4334
    %v4336 = vpop.xlane.xlu0 %4335
    %v4337 = vrcp.pop %v4333
    %v4338 = vrcp.pop %v4336
    %v4339 = vmul.f32 %v4328, %v4337
    %v4340 = vmul.f32 %v4330, %v4338
    %4341 = vrot.lane.b32.xlu0 %v630, 40
    %v4342 = vpop.permute.xlu0 %4341
    %4343 = vrot.lane.b32.xlu0 %v636, 40
    %v4344 = vpop.permute.xlu0 %4343
    %v4348 = vsel %vm1156, %v4339, 0
    %v4351 = vsel %vm1156, %v4340, 0
    %4353 = vmatprep.subr.mxu0 0.0
    %v4354 = vand.u32 %v4342, 4294901760
    %4355 = vmatpush1.msra.mxu0 %v4354
    %4356 = vmatprep.subr.mxu0 0.0
    %v4357 = vand.u32 %v4344, 4294901760
    %4358 = vmatpush1.msra.mxu0 %v4357
    %4359 = vmatprep.subr.mxu0 0.0
    %4360 = vmatpush1.msra.mxu0 0.0
    %4361 = vmatprep.subr.mxu0 0.0
    %4362 = vmatpush1.msra.mxu0 0.0
    %4363 = vmatprep.subr.mxu0 0.0
    %4364 = vmatpush1.msra.mxu0 0.0
    %4365 = vmatprep.subr.mxu0 0.0
    %4366 = vmatpush1.msra.mxu0 0.0
    %4367 = vmatprep.subr.mxu0 0.0
    %4368 = vmatpush1.msra.mxu0 0.0
    %4369 = vmatprep.subr.mxu0 0.0
    %4370 = vmatpush1.msra.mxu0 0.0
    %4371 = vmatprep.subr.mxu0 0.0
    %4372 = vmatpush1.msra.mxu0 0.0
    %4373 = vmatprep.subr.mxu0 0.0
    %4374 = vmatpush1.msra.mxu0 0.0
    %4375 = vmatprep.subr.mxu0 0.0
    %4376 = vmatpush1.msra.mxu0 0.0
    %4377 = vmatprep.subr.mxu0 0.0
    %4378 = vmatpush1.msra.mxu0 0.0
    %4379 = vmatprep.subr.mxu0 0.0
    %4380 = vmatpush1.msra.mxu0 0.0
    %4381 = vmatprep.subr.mxu0 0.0
    %4382 = vmatpush1.msra.mxu0 0.0
    %4383 = vmatprep.subr.mxu0 0.0
    %4384 = vmatpush1.msra.mxu0 0.0
    %4385 = vmatprep.subr.mxu0 0.0
    %4386 = vmatpush1.msra.mxu0 0.0
    %4387 = vmatprep.subr.mxu0 0.0
    %4388 = vmatpush1.msra.mxu0 0.0
    %4389 = vmatprep.subr.mxu0 0.0
    %4390 = vmatpush1.msra.mxu0 0.0
    %4391 = vmatprep.subr.mxu0 0.0
    %4392 = vmatpush1.msra.mxu0 0.0
    %4393 = vmatprep.subr.mxu0 0.0
    %4394 = vmatpush1.msra.mxu0 0.0
    %4395 = vmatprep.subr.mxu0 0.0
    %4396 = vmatpush1.msra.mxu0 0.0
    %4397 = vmatprep.subr.mxu0 0.0
    %4398 = vmatpush1.msra.mxu0 0.0
    %4399 = vmatprep.subr.mxu0 0.0
    %4400 = vmatpush1.msra.mxu0 0.0
    %4401 = vmatprep.subr.mxu0 0.0
    %4402 = vmatpush1.msra.mxu0 0.0
    %4403 = vmatprep.subr.mxu0 0.0
    %4404 = vmatpush1.msra.mxu0 0.0
    %4405 = vmatprep.subr.mxu0 0.0
    %4406 = vmatpush1.msra.mxu0 0.0
    %4407 = vmatprep.subr.mxu0 0.0
    %4408 = vmatpush1.msra.mxu0 0.0
    %4409 = vmatprep.subr.mxu0 0.0
    %4410 = vmatpush1.msra.mxu0 0.0
    %4411 = vmatprep.subr.mxu0 0.0
    %4412 = vmatpush1.msra.mxu0 0.0
    %4413 = vmatprep.subr.mxu0 0.0
    %4414 = vmatpush1.msra.mxu0 0.0
    %4415 = vmatprep.subr.mxu0 0.0
    %4416 = vmatpush1.msra.mxu0 0.0
    %4417 = vmatprep.subr.mxu0 0.0
    %4418 = vmatpush1.msra.mxu0 0.0
    %4419 = vmatprep.mubr.f32.mxu0 0.0
    %v4420 = vand.u32 %v4348, 4294901760
    %v4421 = vsub.f32 %v4348, %v4420
    %v4422 = vand.u32 %v4421, 4294901760
    %v4423 = vsub.f32 %v4421, %v4422
    %v4424 = vand.u32 %v4423, 4294901760
    %4425 = vmatmul.mubr.f32.gmra.mrb[0].mxu0 %v4424
    %v4426 = vpop.f32.mrb[0].mxu0
    %v4427 = vadd.f32 0.0, %v4426
    %v4428 = vpop.f32.mrb[0].mxu0
    %4429 = vmatprep.mubr.f32.mxu0 0.0
    %v4430 = vand.u32 %v4351, 4294901760
    %v4431 = vsub.f32 %v4351, %v4430
    %v4432 = vand.u32 %v4431, 4294901760
    %v4433 = vsub.f32 %v4431, %v4432
    %v4434 = vand.u32 %v4433, 4294901760
    %4435 = vmatmul.mubr.f32.gmra.mrb[0].mxu0 %v4434
    %v4436 = vpop.f32.mrb[0].mxu0
    %v4437 = vadd.f32 0.0, %v4436
    %v4438 = vpop.f32.mrb[0].mxu0
    %4439 = vdwg.mxu0
    %4440 = vmatprep.subr.mxu0 0.0
    %v4441 = vand.u32 %v4342, 4294901760
    %v4442 = vsub.f32 %v4342, %v4441
    %v4443 = vand.u32 %v4442, 4294901760
    %v4444 = vsub.f32 %v4442, %v4443
    %v4445 = vand.u32 %v4444, 4294901760
    %4446 = vmatpush1.msra.mxu0 %v4445
    %4447 = vmatprep.subr.mxu0 0.0
    %v4448 = vand.u32 %v4344, 4294901760
    %v4449 = vsub.f32 %v4344, %v4448
    %v4450 = vand.u32 %v4449, 4294901760
    %v4451 = vsub.f32 %v4449, %v4450
    %v4452 = vand.u32 %v4451, 4294901760
    %4453 = vmatpush1.msra.mxu0 %v4452
    %4454 = vmatprep.subr.mxu0 0.0
    %4455 = vmatpush1.msra.mxu0 0.0
    %4456 = vmatprep.subr.mxu0 0.0
    %4457 = vmatpush1.msra.mxu0 0.0
    %4458 = vmatprep.subr.mxu0 0.0
    %4459 = vmatpush1.msra.mxu0 0.0
    %4460 = vmatprep.subr.mxu0 0.0
    %4461 = vmatpush1.msra.mxu0 0.0
    %4462 = vmatprep.subr.mxu0 0.0
    %4463 = vmatpush1.msra.mxu0 0.0
    %4464 = vmatprep.subr.mxu0 0.0
    %4465 = vmatpush1.msra.mxu0 0.0
    %4466 = vmatprep.subr.mxu0 0.0
    %4467 = vmatpush1.msra.mxu0 0.0
    %4468 = vmatprep.subr.mxu0 0.0
    %4469 = vmatpush1.msra.mxu0 0.0
    %4470 = vmatprep.subr.mxu0 0.0
    %4471 = vmatpush1.msra.mxu0 0.0
    %4472 = vmatprep.subr.mxu0 0.0
    %4473 = vmatpush1.msra.mxu0 0.0
    %4474 = vmatprep.subr.mxu0 0.0
    %4475 = vmatpush1.msra.mxu0 0.0
    %4476 = vmatprep.subr.mxu0 0.0
    %4477 = vmatpush1.msra.mxu0 0.0
    %4478 = vmatprep.subr.mxu0 0.0
    %4479 = vmatpush1.msra.mxu0 0.0
    %4480 = vmatprep.subr.mxu0 0.0
    %4481 = vmatpush1.msra.mxu0 0.0
    %4482 = vmatprep.subr.mxu0 0.0
    %4483 = vmatpush1.msra.mxu0 0.0
    %4484 = vmatprep.subr.mxu0 0.0
    %4485 = vmatpush1.msra.mxu0 0.0
    %4486 = vmatprep.subr.mxu0 0.0
    %4487 = vmatpush1.msra.mxu0 0.0
    %4488 = vmatprep.subr.mxu0 0.0
    %4489 = vmatpush1.msra.mxu0 0.0
    %4490 = vmatprep.subr.mxu0 0.0
    %4491 = vmatpush1.msra.mxu0 0.0
    %4492 = vmatprep.subr.mxu0 0.0
    %4493 = vmatpush1.msra.mxu0 0.0
    %4494 = vmatprep.subr.mxu0 0.0
    %4495 = vmatpush1.msra.mxu0 0.0
    %4496 = vmatprep.subr.mxu0 0.0
    %4497 = vmatpush1.msra.mxu0 0.0
    %4498 = vmatprep.subr.mxu0 0.0
    %4499 = vmatpush1.msra.mxu0 0.0
    %4500 = vmatprep.subr.mxu0 0.0
    %4501 = vmatpush1.msra.mxu0 0.0
    %4502 = vmatprep.subr.mxu0 0.0
    %4503 = vmatpush1.msra.mxu0 0.0
    %4504 = vmatprep.subr.mxu0 0.0
    %4505 = vmatpush1.msra.mxu0 0.0
    %4506 = vmatprep.subr.mxu0 0.0
    %4507 = vmatpush1.msra.mxu0 0.0
    %4508 = vmatprep.subr.mxu0 0.0
    %4509 = vmatpush1.msra.mxu0 0.0
    %4510 = vmatprep.subr.mxu0 0.0
    %4511 = vmatpush1.msra.mxu0 0.0
    %4512 = vmatprep.subr.mxu0 0.0
    %4513 = vmatpush1.msra.mxu0 0.0
    %4514 = vmatprep.mubr.f32.mxu0 0.0
    %v4515 = vand.u32 %v4348, 4294901760
    %4516 = vmatmul.mubr.f32.gmra.mrb[0].mxu0 %v4515
    %v4517 = vpop.f32.mrb[0].mxu0
    %v4518 = vadd.f32 %v4427, %v4517
    %v4519 = vpop.f32.mrb[0].mxu0
    %4520 = vmatprep.mubr.f32.mxu0 0.0
    %v4521 = vand.u32 %v4351, 4294901760
    %4522 = vmatmul.mubr.f32.gmra.mrb[0].mxu0 %v4521
    %v4523 = vpop.f32.mrb[0].mxu0
    %v4524 = vadd.f32 %v4437, %v4523
    %v4525 = vpop.f32.mrb[0].mxu0
    %4526 = vdwg.mxu0
    %4527 = vmatprep.subr.mxu0 0.0
    %v4528 = vand.u32 %v4342, 4294901760
    %v4529 = vsub.f32 %v4342, %v4528
    %4530 = vmatpush1.msra.mxu0 %v4529
    %4531 = vmatprep.subr.mxu0 0.0
    %v4532 = vand.u32 %v4344, 4294901760
    %v4533 = vsub.f32 %v4344, %v4532
    %4534 = vmatpush1.msra.mxu0 %v4533
    %4535 = vmatprep.subr.mxu0 0.0
    %4536 = vmatpush1.msra.mxu0 0.0
    %4537 = vmatprep.subr.mxu0 0.0
    %4538 = vmatpush1.msra.mxu0 0.0
    %4539 = vmatprep.subr.mxu0 0.0
    %4540 = vmatpush1.msra.mxu0 0.0
    %4541 = vmatprep.subr.mxu0 0.0
    %4542 = vmatpush1.msra.mxu0 0.0
    %4543 = vmatprep.subr.mxu0 0.0
    %4544 = vmatpush1.msra.mxu0 0.0
    %4545 = vmatprep.subr.mxu0 0.0
    %4546 = vmatpush1.msra.mxu0 0.0
    %4547 = vmatprep.subr.mxu0 0.0
    %4548 = vmatpush1.msra.mxu0 0.0
    %4549 = vmatprep.subr.mxu0 0.0
    %4550 = vmatpush1.msra.mxu0 0.0
    %4551 = vmatprep.subr.mxu0 0.0
    %4552 = vmatpush1.msra.mxu0 0.0
    %4553 = vmatprep.subr.mxu0 0.0
    %4554 = vmatpush1.msra.mxu0 0.0
    %4555 = vmatprep.subr.mxu0 0.0
    %4556 = vmatpush1.msra.mxu0 0.0
    %4557 = vmatprep.subr.mxu0 0.0
    %4558 = vmatpush1.msra.mxu0 0.0
    %4559 = vmatprep.subr.mxu0 0.0
    %4560 = vmatpush1.msra.mxu0 0.0
    %4561 = vmatprep.subr.mxu0 0.0
    %4562 = vmatpush1.msra.mxu0 0.0
    %4563 = vmatprep.subr.mxu0 0.0
    %4564 = vmatpush1.msra.mxu0 0.0
    %4565 = vmatprep.subr.mxu0 0.0
    %4566 = vmatpush1.msra.mxu0 0.0
    %4567 = vmatprep.subr.mxu0 0.0
    %4568 = vmatpush1.msra.mxu0 0.0
    %4569 = vmatprep.subr.mxu0 0.0
    %4570 = vmatpush1.msra.mxu0 0.0
    %4571 = vmatprep.subr.mxu0 0.0
    %4572 = vmatpush1.msra.mxu0 0.0
    %4573 = vmatprep.subr.mxu0 0.0
    %4574 = vmatpush1.msra.mxu0 0.0
    %4575 = vmatprep.subr.mxu0 0.0
    %4576 = vmatpush1.msra.mxu0 0.0
    %4577 = vmatprep.subr.mxu0 0.0
    %4578 = vmatpush1.msra.mxu0 0.0
    %4579 = vmatprep.subr.mxu0 0.0
    %4580 = vmatpush1.msra.mxu0 0.0
    %4581 = vmatprep.subr.mxu0 0.0
    %4582 = vmatpush1.msra.mxu0 0.0
    %4583 = vmatprep.subr.mxu0 0.0
    %4584 = vmatpush1.msra.mxu0 0.0
    %4585 = vmatprep.subr.mxu0 0.0
    %4586 = vmatpush1.msra.mxu0 0.0
    %4587 = vmatprep.subr.mxu0 0.0
    %4588 = vmatpush1.msra.mxu0 0.0
    %4589 = vmatprep.subr.mxu0 0.0
    %4590 = vmatpush1.msra.mxu0 0.0
    %4591 = vmatprep.subr.mxu0 0.0
    %4592 = vmatpush1.msra.mxu0 0.0
    %4593 = vmatprep.subr.mxu0 0.0
    %4594 = vmatpush1.msra.mxu0 0.0
    %4595 = vmatprep.mubr.f32.mxu0 0.0
    %v4596 = vand.u32 %v4348, 4294901760
    %v4597 = vsub.f32 %v4348, %v4596
    %4598 = vmatmul.mubr.f32.gmra.mrb[0].mxu0 %v4597
    %v4599 = vpop.f32.mrb[0].mxu0
    %v4600 = vadd.f32 %v4518, %v4599
    %v4601 = vpop.f32.mrb[0].mxu0
    %4602 = vmatprep.mubr.f32.mxu0 0.0
    %v4603 = vand.u32 %v4351, 4294901760
    %v4604 = vsub.f32 %v4351, %v4603
    %4605 = vmatmul.mubr.f32.gmra.mrb[0].mxu0 %v4604
    %v4606 = vpop.f32.mrb[0].mxu0
    %v4607 = vadd.f32 %v4524, %v4606
    %v4608 = vpop.f32.mrb[0].mxu0
    %4609 = vdwg.mxu0
    %4610 = vmatprep.subr.mxu0 0.0
    %v4611 = vand.u32 %v4342, 4294901760
    %4612 = vmatpush1.msra.mxu0 %v4611
    %4613 = vmatprep.subr.mxu0 0.0
    %v4614 = vand.u32 %v4344, 4294901760
    %4615 = vmatpush1.msra.mxu0 %v4614
    %4616 = vmatprep.subr.mxu0 0.0
    %4617 = vmatpush1.msra.mxu0 0.0
    %4618 = vmatprep.subr.mxu0 0.0
    %4619 = vmatpush1.msra.mxu0 0.0
    %4620 = vmatprep.subr.mxu0 0.0
    %4621 = vmatpush1.msra.mxu0 0.0
    %4622 = vmatprep.subr.mxu0 0.0
    %4623 = vmatpush1.msra.mxu0 0.0
    %4624 = vmatprep.subr.mxu0 0.0
    %4625 = vmatpush1.msra.mxu0 0.0
    %4626 = vmatprep.subr.mxu0 0.0
    %4627 = vmatpush1.msra.mxu0 0.0
    %4628 = vmatprep.subr.mxu0 0.0
    %4629 = vmatpush1.msra.mxu0 0.0
    %4630 = vmatprep.subr.mxu0 0.0
    %4631 = vmatpush1.msra.mxu0 0.0
    %4632 = vmatprep.subr.mxu0 0.0
    %4633 = vmatpush1.msra.mxu0 0.0
    %4634 = vmatprep.subr.mxu0 0.0
    %4635 = vmatpush1.msra.mxu0 0.0
    %4636 = vmatprep.subr.mxu0 0.0
    %4637 = vmatpush1.msra.mxu0 0.0
    %4638 = vmatprep.subr.mxu0 0.0
    %4639 = vmatpush1.msra.mxu0 0.0
    %4640 = vmatprep.subr.mxu0 0.0
    %4641 = vmatpush1.msra.mxu0 0.0
    %4642 = vmatprep.subr.mxu0 0.0
    %4643 = vmatpush1.msra.mxu0 0.0
    %4644 = vmatprep.subr.mxu0 0.0
    %4645 = vmatpush1.msra.mxu0 0.0
    %4646 = vmatprep.subr.mxu0 0.0
    %4647 = vmatpush1.msra.mxu0 0.0
    %4648 = vmatprep.subr.mxu0 0.0
    %4649 = vmatpush1.msra.mxu0 0.0
    %4650 = vmatprep.subr.mxu0 0.0
    %4651 = vmatpush1.msra.mxu0 0.0
    %4652 = vmatprep.subr.mxu0 0.0
    %4653 = vmatpush1.msra.mxu0 0.0
    %4654 = vmatprep.subr.mxu0 0.0
    %4655 = vmatpush1.msra.mxu0 0.0
    %4656 = vmatprep.subr.mxu0 0.0
    %4657 = vmatpush1.msra.mxu0 0.0
    %4658 = vmatprep.subr.mxu0 0.0
    %4659 = vmatpush1.msra.mxu0 0.0
    %4660 = vmatprep.subr.mxu0 0.0
    %4661 = vmatpush1.msra.mxu0 0.0
    %4662 = vmatprep.subr.mxu0 0.0
    %4663 = vmatpush1.msra.mxu0 0.0
    %4664 = vmatprep.subr.mxu0 0.0
    %4665 = vmatpush1.msra.mxu0 0.0
    %4666 = vmatprep.subr.mxu0 0.0
    %4667 = vmatpush1.msra.mxu0 0.0
    %4668 = vmatprep.subr.mxu0 0.0
    %4669 = vmatpush1.msra.mxu0 0.0
    %4670 = vmatprep.subr.mxu0 0.0
    %4671 = vmatpush1.msra.mxu0 0.0
    %4672 = vmatprep.subr.mxu0 0.0
    %4673 = vmatpush1.msra.mxu0 0.0
    %4674 = vmatprep.subr.mxu0 0.0
    %4675 = vmatpush1.msra.mxu0 0.0
    %4676 = vmatprep.mubr.f32.mxu0 0.0
    %v4677 = vand.u32 %v4348, 4294901760
    %v4678 = vsub.f32 %v4348, %v4677
    %v4679 = vand.u32 %v4678, 4294901760
    %4680 = vmatmul.mubr.f32.gmra.mrb[0].mxu0 %v4679
    %v4681 = vpop.f32.mrb[0].mxu0
    %v4682 = vadd.f32 %v4600, %v4681
    %v4683 = vpop.f32.mrb[0].mxu0
    %4684 = vmatprep.mubr.f32.mxu0 0.0
    %v4685 = vand.u32 %v4351, 4294901760
    %v4686 = vsub.f32 %v4351, %v4685
    %v4687 = vand.u32 %v4686, 4294901760
    %4688 = vmatmul.mubr.f32.gmra.mrb[0].mxu0 %v4687
    %v4689 = vpop.f32.mrb[0].mxu0
    %v4690 = vadd.f32 %v4607, %v4689
    %v4691 = vpop.f32.mrb[0].mxu0
    %4692 = vdwg.mxu0
    %4693 = vmatprep.subr.mxu0 0.0
    %v4694 = vand.u32 %v4342, 4294901760
    %v4695 = vsub.f32 %v4342, %v4694
    %v4696 = vand.u32 %v4695, 4294901760
    %4697 = vmatpush1.msra.mxu0 %v4696
    %4698 = vmatprep.subr.mxu0 0.0
    %v4699 = vand.u32 %v4344, 4294901760
    %v4700 = vsub.f32 %v4344, %v4699
    %v4701 = vand.u32 %v4700, 4294901760
    %4702 = vmatpush1.msra.mxu0 %v4701
    %4703 = vmatprep.subr.mxu0 0.0
    %4704 = vmatpush1.msra.mxu0 0.0
    %4705 = vmatprep.subr.mxu0 0.0
    %4706 = vmatpush1.msra.mxu0 0.0
    %4707 = vmatprep.subr.mxu0 0.0
    %4708 = vmatpush1.msra.mxu0 0.0
    %4709 = vmatprep.subr.mxu0 0.0
    %4710 = vmatpush1.msra.mxu0 0.0
    %4711 = vmatprep.subr.mxu0 0.0
    %4712 = vmatpush1.msra.mxu0 0.0
    %4713 = vmatprep.subr.mxu0 0.0
    %4714 = vmatpush1.msra.mxu0 0.0
    %4715 = vmatprep.subr.mxu0 0.0
    %4716 = vmatpush1.msra.mxu0 0.0
    %4717 = vmatprep.subr.mxu0 0.0
    %4718 = vmatpush1.msra.mxu0 0.0
    %4719 = vmatprep.subr.mxu0 0.0
    %4720 = vmatpush1.msra.mxu0 0.0
    %4721 = vmatprep.subr.mxu0 0.0
    %4722 = vmatpush1.msra.mxu0 0.0
    %4723 = vmatprep.subr.mxu0 0.0
    %4724 = vmatpush1.msra.mxu0 0.0
    %4725 = vmatprep.subr.mxu0 0.0
    %4726 = vmatpush1.msra.mxu0 0.0
    %4727 = vmatprep.subr.mxu0 0.0
    %4728 = vmatpush1.msra.mxu0 0.0
    %4729 = vmatprep.subr.mxu0 0.0
    %4730 = vmatpush1.msra.mxu0 0.0
    %4731 = vmatprep.subr.mxu0 0.0
    %4732 = vmatpush1.msra.mxu0 0.0
    %4733 = vmatprep.subr.mxu0 0.0
    %4734 = vmatpush1.msra.mxu0 0.0
    %4735 = vmatprep.subr.mxu0 0.0
    %4736 = vmatpush1.msra.mxu0 0.0
    %4737 = vmatprep.subr.mxu0 0.0
    %4738 = vmatpush1.msra.mxu0 0.0
    %4739 = vmatprep.subr.mxu0 0.0
    %4740 = vmatpush1.msra.mxu0 0.0
    %4741 = vmatprep.subr.mxu0 0.0
    %4742 = vmatpush1.msra.mxu0 0.0
    %4743 = vmatprep.subr.mxu0 0.0
    %4744 = vmatpush1.msra.mxu0 0.0
    %4745 = vmatprep.subr.mxu0 0.0
    %4746 = vmatpush1.msra.mxu0 0.0
    %4747 = vmatprep.subr.mxu0 0.0
    %4748 = vmatpush1.msra.mxu0 0.0
    %4749 = vmatprep.subr.mxu0 0.0
    %4750 = vmatpush1.msra.mxu0 0.0
    %4751 = vmatprep.subr.mxu0 0.0
    %4752 = vmatpush1.msra.mxu0 0.0
    %4753 = vmatprep.subr.mxu0 0.0
    %4754 = vmatpush1.msra.mxu0 0.0
    %4755 = vmatprep.subr.mxu0 0.0
    %4756 = vmatpush1.msra.mxu0 0.0
    %4757 = vmatprep.subr.mxu0 0.0
    %4758 = vmatpush1.msra.mxu0 0.0
    %4759 = vmatprep.subr.mxu0 0.0
    %4760 = vmatpush1.msra.mxu0 0.0
    %4761 = vmatprep.subr.mxu0 0.0
    %4762 = vmatpush1.msra.mxu0 0.0
    %4763 = vmatprep.mubr.f32.mxu0 0.0
    %v4764 = vand.u32 %v4348, 4294901760
    %4765 = vmatmul.mubr.f32.gmra.mrb[0].mxu0 %v4764
    %v4766 = vpop.f32.mrb[0].mxu0
    %v4767 = vadd.f32 %v4682, %v4766
    %v4768 = vpop.f32.mrb[0].mxu0
    %4769 = vmatprep.mubr.f32.mxu0 0.0
    %v4770 = vand.u32 %v4351, 4294901760
    %4771 = vmatmul.mubr.f32.gmra.mrb[0].mxu0 %v4770
    %v4772 = vpop.f32.mrb[0].mxu0
    %v4773 = vadd.f32 %v4690, %v4772
    %v4774 = vpop.f32.mrb[0].mxu0
    %4775 = vdwg.mxu0
    %4776 = vmatprep.subr.mxu0 0.0
    %v4777 = vand.u32 %v4342, 4294901760
    %4778 = vmatpush1.msra.mxu0 %v4777
    %4779 = vmatprep.subr.mxu0 0.0
    %v4780 = vand.u32 %v4344, 4294901760
    %4781 = vmatpush1.msra.mxu0 %v4780
    %4782 = vmatprep.subr.mxu0 0.0
    %4783 = vmatpush1.msra.mxu0 0.0
    %4784 = vmatprep.subr.mxu0 0.0
    %4785 = vmatpush1.msra.mxu0 0.0
    %4786 = vmatprep.subr.mxu0 0.0
    %4787 = vmatpush1.msra.mxu0 0.0
    %4788 = vmatprep.subr.mxu0 0.0
    %4789 = vmatpush1.msra.mxu0 0.0
    %4790 = vmatprep.subr.mxu0 0.0
    %4791 = vmatpush1.msra.mxu0 0.0
    %4792 = vmatprep.subr.mxu0 0.0
    %4793 = vmatpush1.msra.mxu0 0.0
    %4794 = vmatprep.subr.mxu0 0.0
    %4795 = vmatpush1.msra.mxu0 0.0
    %4796 = vmatprep.subr.mxu0 0.0
    %4797 = vmatpush1.msra.mxu0 0.0
    %4798 = vmatprep.subr.mxu0 0.0
    %4799 = vmatpush1.msra.mxu0 0.0
    %4800 = vmatprep.subr.mxu0 0.0
    %4801 = vmatpush1.msra.mxu0 0.0
    %4802 = vmatprep.subr.mxu0 0.0
    %4803 = vmatpush1.msra.mxu0 0.0
    %4804 = vmatprep.subr.mxu0 0.0
    %4805 = vmatpush1.msra.mxu0 0.0
    %4806 = vmatprep.subr.mxu0 0.0
    %4807 = vmatpush1.msra.mxu0 0.0
    %4808 = vmatprep.subr.mxu0 0.0
    %4809 = vmatpush1.msra.mxu0 0.0
    %4810 = vmatprep.subr.mxu0 0.0
    %4811 = vmatpush1.msra.mxu0 0.0
    %4812 = vmatprep.subr.mxu0 0.0
    %4813 = vmatpush1.msra.mxu0 0.0
    %4814 = vmatprep.subr.mxu0 0.0
    %4815 = vmatpush1.msra.mxu0 0.0
    %4816 = vmatprep.subr.mxu0 0.0
    %4817 = vmatpush1.msra.mxu0 0.0
    %4818 = vmatprep.subr.mxu0 0.0
    %4819 = vmatpush1.msra.mxu0 0.0
    %4820 = vmatprep.subr.mxu0 0.0
    %4821 = vmatpush1.msra.mxu0 0.0
    %4822 = vmatprep.subr.mxu0 0.0
    %4823 = vmatpush1.msra.mxu0 0.0
    %4824 = vmatprep.subr.mxu0 0.0
    %4825 = vmatpush1.msra.mxu0 0.0
    %4826 = vmatprep.subr.mxu0 0.0
    %4827 = vmatpush1.msra.mxu0 0.0
    %4828 = vmatprep.subr.mxu0 0.0
    %4829 = vmatpush1.msra.mxu0 0.0
    %4830 = vmatprep.subr.mxu0 0.0
    %4831 = vmatpush1.msra.mxu0 0.0
    %4832 = vmatprep.subr.mxu0 0.0
    %4833 = vmatpush1.msra.mxu0 0.0
    %4834 = vmatprep.subr.mxu0 0.0
    %4835 = vmatpush1.msra.mxu0 0.0
    %4836 = vmatprep.subr.mxu0 0.0
    %4837 = vmatpush1.msra.mxu0 0.0
    %4838 = vmatprep.subr.mxu0 0.0
    %4839 = vmatpush1.msra.mxu0 0.0
    %4840 = vmatprep.subr.mxu0 0.0
    %4841 = vmatpush1.msra.mxu0 0.0
    %4842 = vmatprep.mubr.f32.mxu0 0.0
    %v4843 = vand.u32 %v4348, 4294901760
    %4844 = vmatmul.mubr.f32.gmra.mrb[0].mxu0 %v4843
    %v4845 = vpop.f32.mrb[0].mxu0
    %v4846 = vadd.f32 %v4767, %v4845
    %v4847 = vpop.f32.mrb[0].mxu0
    %4848 = vmatprep.mubr.f32.mxu0 0.0
    %v4849 = vand.u32 %v4351, 4294901760
    %4850 = vmatmul.mubr.f32.gmra.mrb[0].mxu0 %v4849
    %v4851 = vpop.f32.mrb[0].mxu0
    %v4852 = vadd.f32 %v4773, %v4851
    %v4853 = vpop.f32.mrb[0].mxu0
    %4854 = vdwg.mxu0
    %4857 = vrot.lane.b32.xlu0 %v2738, 8
    %v4858 = vpop.permute.xlu0 %4857
    %4859 = vrot.lane.b32.xlu0 %v2744, 8
    %v4860 = vpop.permute.xlu0 %4859
    %4865 = vrot.lane.b32.xlu0 %v3792, 16
    %v4866 = vpop.permute.xlu0 %4865
    %4867 = vrot.lane.b32.xlu0 %v3798, 16
    %v4868 = vpop.permute.xlu0 %4867
    %4873 = vrot.lane.b32.xlu0 %v4846, 24
    %v4874 = vpop.permute.xlu0 %4873
    %4875 = vrot.lane.b32.xlu0 %v4852, 24
    %v4876 = vpop.permute.xlu0 %4875
    %v4879 = vsel %vm645, %v1684, %v4858
    %v4880 = vsel %vm645, %v1690, %v4860
    %v4881 = vsel %vm1156, %v4879, %v4866
    %v4882 = vsel %vm1156, %v4880, %v4868
    %vm4883 = vcmask 195584
    %v4884 = vsel %vm4883, %v4881, %v4874
    %v4885 = vsel %vm4883, %v4882, %v4876
    %v4886 = vld [vmem:[%s3] sm:$0xff]
    %v4887 = vld [vmem:[%s3 + $0x8] sm:$0xff]
    %v4888 = vld [vmem:[%s3 + $0x10] sm:$0xff]
    %v4889 = vld [vmem:[%s3 + $0x18] sm:$0xff]
    %v4890 = vlaneseq
    %v4891 = vshrl.u32 %v4890, 7
    %v4892 = vsub.s32 3, %v4891
    %v4893 = vrot.slane %v54, %v4892
    %v4895 = vsel %vm57, %v4884, 0
    %v4898 = vsel %vm57, %v4885, 0
    %4900 = vmatprep.subr.mxu0 0.0
    %v4901 = vand.u32 %v4886, 4294901760
    %4902 = vmatpush1.msra.mxu0 %v4901
    %4903 = vmatprep.subr.mxu0 0.0
    %v4904 = vand.u32 %v4887, 4294901760
    %4905 = vmatpush1.msra.mxu0 %v4904
    %4906 = vmatprep.subr.mxu0 0.0
    %v4907 = vand.u32 %v4888, 4294901760
    %4908 = vmatpush1.msra.mxu0 %v4907
    %4909 = vmatprep.subr.mxu0 0.0
    %v4910 = vand.u32 %v4889, 4294901760
    %4911 = vmatpush1.msra.mxu0 %v4910
    %4912 = vmatprep.subr.mxu0 0.0
    %4913 = vmatpush1.msra.mxu0 0.0
    %4914 = vmatprep.subr.mxu0 0.0
    %4915 = vmatpush1.msra.mxu0 0.0
    %4916 = vmatprep.subr.mxu0 0.0
    %4917 = vmatpush1.msra.mxu0 0.0
    %4918 = vmatprep.subr.mxu0 0.0
    %4919 = vmatpush1.msra.mxu0 0.0
    %4920 = vmatprep.subr.mxu0 0.0
    %4921 = vmatpush1.msra.mxu0 0.0
    %4922 = vmatprep.subr.mxu0 0.0
    %4923 = vmatpush1.msra.mxu0 0.0
    %4924 = vmatprep.subr.mxu0 0.0
    %4925 = vmatpush1.msra.mxu0 0.0
    %4926 = vmatprep.subr.mxu0 0.0
    %4927 = vmatpush1.msra.mxu0 0.0
    %4928 = vmatprep.subr.mxu0 0.0
    %4929 = vmatpush1.msra.mxu0 0.0
    %4930 = vmatprep.subr.mxu0 0.0
    %4931 = vmatpush1.msra.mxu0 0.0
    %4932 = vmatprep.subr.mxu0 0.0
    %4933 = vmatpush1.msra.mxu0 0.0
    %4934 = vmatprep.subr.mxu0 0.0
    %4935 = vmatpush1.msra.mxu0 0.0
    %4936 = vmatprep.subr.mxu0 0.0
    %4937 = vmatpush1.msra.mxu0 0.0
    %4938 = vmatprep.subr.mxu0 0.0
    %4939 = vmatpush1.msra.mxu0 0.0
    %4940 = vmatprep.subr.mxu0 0.0
    %4941 = vmatpush1.msra.mxu0 0.0
    %4942 = vmatprep.subr.mxu0 0.0
    %4943 = vmatpush1.msra.mxu0 0.0
    %4944 = vmatprep.subr.mxu0 0.0
    %4945 = vmatpush1.msra.mxu0 0.0
    %4946 = vmatprep.subr.mxu0 0.0
    %4947 = vmatpush1.msra.mxu0 0.0
    %4948 = vmatprep.subr.mxu0 0.0
    %4949 = vmatpush1.msra.mxu0 0.0
    %4950 = vmatprep.subr.mxu0 0.0
    %4951 = vmatpush1.msra.mxu0 0.0
    %4952 = vmatprep.subr.mxu0 0.0
    %4953 = vmatpush1.msra.mxu0 0.0
    %4954 = vmatprep.subr.mxu0 0.0
    %4955 = vmatpush1.msra.mxu0 0.0
    %4956 = vmatprep.subr.mxu0 0.0
    %4957 = vmatpush1.msra.mxu0 0.0
    %4958 = vmatprep.subr.mxu0 0.0
    %4959 = vmatpush1.msra.mxu0 0.0
    %4960 = vmatprep.subr.mxu0 0.0
    %4961 = vmatpush1.msra.mxu0 0.0
    %4962 = vmatprep.subr.mxu0 0.0
    %4963 = vmatpush1.msra.mxu0 0.0
    %4964 = vmatprep.subr.mxu0 0.0
    %4965 = vmatpush1.msra.mxu0 0.0
    %4966 = vmatprep.subr.mxu0 0.0
    %4967 = vmatpush1.msra.mxu0 0.0
    %4968 = vmatprep.mubr.f32.mxu0 0.0
    %v4969 = vand.u32 %v4895, 4294901760
    %v4970 = vsub.f32 %v4895, %v4969
    %v4971 = vand.u32 %v4970, 4294901760
    %v4972 = vsub.f32 %v4970, %v4971
    %v4973 = vand.u32 %v4972, 4294901760
    %4974 = vmatmul.mubr.f32.gmra.mrb[0].mxu0 %v4973
    %v4975 = vpop.f32.mrb[0].mxu0
    %v4976 = vadd.f32 %v4893, %v4975
    %v4977 = vpop.f32.mrb[0].mxu0
    %4978 = vmatprep.mubr.f32.mxu0 0.0
    %v4979 = vand.u32 %v4898, 4294901760
    %v4980 = vsub.f32 %v4898, %v4979
    %v4981 = vand.u32 %v4980, 4294901760
    %v4982 = vsub.f32 %v4980, %v4981
    %v4983 = vand.u32 %v4982, 4294901760
    %4984 = vmatmul.mubr.f32.gmra.mrb[0].mxu0 %v4983
    %v4985 = vpop.f32.mrb[0].mxu0
    %v4986 = vadd.f32 %v4893, %v4985
    %v4987 = vpop.f32.mrb[0].mxu0
    %4988 = vdwg.mxu0
    %4989 = vmatprep.subr.mxu0 0.0
    %v4990 = vand.u32 %v4886, 4294901760
    %v4991 = vsub.f32 %v4886, %v4990
    %v4992 = vand.u32 %v4991, 4294901760
    %v4993 = vsub.f32 %v4991, %v4992
    %v4994 = vand.u32 %v4993, 4294901760
    %4995 = vmatpush1.msra.mxu0 %v4994
    %4996 = vmatprep.subr.mxu0 0.0
    %v4997 = vand.u32 %v4887, 4294901760
    %v4998 = vsub.f32 %v4887, %v4997
    %v4999 = vand.u32 %v4998, 4294901760
    %v5000 = vsub.f32 %v4998, %v4999
    %v5001 = vand.u32 %v5000, 4294901760
    %5002 = vmatpush1.msra.mxu0 %v5001
    %5003 = vmatprep.subr.mxu0 0.0
    %v5004 = vand.u32 %v4888, 4294901760
    %v5005 = vsub.f32 %v4888, %v5004
    %v5006 = vand.u32 %v5005, 4294901760
    %v5007 = vsub.f32 %v5005, %v5006
    %v5008 = vand.u32 %v5007, 4294901760
    %5009 = vmatpush1.msra.mxu0 %v5008
    %5010 = vmatprep.subr.mxu0 0.0
    %v5011 = vand.u32 %v4889, 4294901760
    %v5012 = vsub.f32 %v4889, %v5011
    %v5013 = vand.u32 %v5012, 4294901760
    %v5014 = vsub.f32 %v5012, %v5013
    %v5015 = vand.u32 %v5014, 4294901760
    %5016 = vmatpush1.msra.mxu0 %v5015
    %5017 = vmatprep.subr.mxu0 0.0
    %5018 = vmatpush1.msra.mxu0 0.0
    %5019 = vmatprep.subr.mxu0 0.0
    %5020 = vmatpush1.msra.mxu0 0.0
    %5021 = vmatprep.subr.mxu0 0.0
    %5022 = vmatpush1.msra.mxu0 0.0
    %5023 = vmatprep.subr.mxu0 0.0
    %5024 = vmatpush1.msra.mxu0 0.0
    %5025 = vmatprep.subr.mxu0 0.0
    %5026 = vmatpush1.msra.mxu0 0.0
    %5027 = vmatprep.subr.mxu0 0.0
    %5028 = vmatpush1.msra.mxu0 0.0
    %5029 = vmatprep.subr.mxu0 0.0
    %5030 = vmatpush1.msra.mxu0 0.0
    %5031 = vmatprep.subr.mxu0 0.0
    %5032 = vmatpush1.msra.mxu0 0.0
    %5033 = vmatprep.subr.mxu0 0.0
    %5034 = vmatpush1.msra.mxu0 0.0
    %5035 = vmatprep.subr.mxu0 0.0
    %5036 = vmatpush1.msra.mxu0 0.0
    %5037 = vmatprep.subr.mxu0 0.0
    %5038 = vmatpush1.msra.mxu0 0.0
    %5039 = vmatprep.subr.mxu0 0.0
    %5040 = vmatpush1.msra.mxu0 0.0
    %5041 = vmatprep.subr.mxu0 0.0
    %5042 = vmatpush1.msra.mxu0 0.0
    %5043 = vmatprep.subr.mxu0 0.0
    %5044 = vmatpush1.msra.mxu0 0.0
    %5045 = vmatprep.subr.mxu0 0.0
    %5046 = vmatpush1.msra.mxu0 0.0
    %5047 = vmatprep.subr.mxu0 0.0
    %5048 = vmatpush1.msra.mxu0 0.0
    %5049 = vmatprep.subr.mxu0 0.0
    %5050 = vmatpush1.msra.mxu0 0.0
    %5051 = vmatprep.subr.mxu0 0.0
    %5052 = vmatpush1.msra.mxu0 0.0
    %5053 = vmatprep.subr.mxu0 0.0
    %5054 = vmatpush1.msra.mxu0 0.0
    %5055 = vmatprep.subr.mxu0 0.0
    %5056 = vmatpush1.msra.mxu0 0.0
    %5057 = vmatprep.subr.mxu0 0.0
    %5058 = vmatpush1.msra.mxu0 0.0
    %5059 = vmatprep.subr.mxu0 0.0
    %5060 = vmatpush1.msra.mxu0 0.0
    %5061 = vmatprep.subr.mxu0 0.0
    %5062 = vmatpush1.msra.mxu0 0.0
    %5063 = vmatprep.subr.mxu0 0.0
    %5064 = vmatpush1.msra.mxu0 0.0
    %5065 = vmatprep.subr.mxu0 0.0
    %5066 = vmatpush1.msra.mxu0 0.0
    %5067 = vmatprep.subr.mxu0 0.0
    %5068 = vmatpush1.msra.mxu0 0.0
    %5069 = vmatprep.subr.mxu0 0.0
    %5070 = vmatpush1.msra.mxu0 0.0
    %5071 = vmatprep.subr.mxu0 0.0
    %5072 = vmatpush1.msra.mxu0 0.0
    %5073 = vmatprep.mubr.f32.mxu0 0.0
    %v5074 = vand.u32 %v4895, 4294901760
    %5075 = vmatmul.mubr.f32.gmra.mrb[0].mxu0 %v5074
    %v5076 = vpop.f32.mrb[0].mxu0
    %v5077 = vadd.f32 %v4976, %v5076
    %v5078 = vpop.f32.mrb[0].mxu0
    %5079 = vmatprep.mubr.f32.mxu0 0.0
    %v5080 = vand.u32 %v4898, 4294901760
    %5081 = vmatmul.mubr.f32.gmra.mrb[0].mxu0 %v5080
    %v5082 = vpop.f32.mrb[0].mxu0
    %v5083 = vadd.f32 %v4986, %v5082
    %v5084 = vpop.f32.mrb[0].mxu0
    %5085 = vdwg.mxu0
    %5086 = vmatprep.subr.mxu0 0.0
    %v5087 = vand.u32 %v4886, 4294901760
    %v5088 = vsub.f32 %v4886, %v5087
    %5089 = vmatpush1.msra.mxu0 %v5088
    %5090 = vmatprep.subr.mxu0 0.0
    %v5091 = vand.u32 %v4887, 4294901760
    %v5092 = vsub.f32 %v4887, %v5091
    %5093 = vmatpush1.msra.mxu0 %v5092
    %5094 = vmatprep.subr.mxu0 0.0
    %v5095 = vand.u32 %v4888, 4294901760
    %v5096 = vsub.f32 %v4888, %v5095
    %5097 = vmatpush1.msra.mxu0 %v5096
    %5098 = vmatprep.subr.mxu0 0.0
    %v5099 = vand.u32 %v4889, 4294901760
    %v5100 = vsub.f32 %v4889, %v5099
    %5101 = vmatpush1.msra.mxu0 %v5100
    %5102 = vmatprep.subr.mxu0 0.0
    %5103 = vmatpush1.msra.mxu0 0.0
    %5104 = vmatprep.subr.mxu0 0.0
    %5105 = vmatpush1.msra.mxu0 0.0
    %5106 = vmatprep.subr.mxu0 0.0
    %5107 = vmatpush1.msra.mxu0 0.0
    %5108 = vmatprep.subr.mxu0 0.0
    %5109 = vmatpush1.msra.mxu0 0.0
    %5110 = vmatprep.subr.mxu0 0.0
    %5111 = vmatpush1.msra.mxu0 0.0
    %5112 = vmatprep.subr.mxu0 0.0
    %5113 = vmatpush1.msra.mxu0 0.0
    %5114 = vmatprep.subr.mxu0 0.0
    %5115 = vmatpush1.msra.mxu0 0.0
    %5116 = vmatprep.subr.mxu0 0.0
    %5117 = vmatpush1.msra.mxu0 0.0
    %5118 = vmatprep.subr.mxu0 0.0
    %5119 = vmatpush1.msra.mxu0 0.0
    %5120 = vmatprep.subr.mxu0 0.0
    %5121 = vmatpush1.msra.mxu0 0.0
    %5122 = vmatprep.subr.mxu0 0.0
    %5123 = vmatpush1.msra.mxu0 0.0
    %5124 = vmatprep.subr.mxu0 0.0
    %5125 = vmatpush1.msra.mxu0 0.0
    %5126 = vmatprep.subr.mxu0 0.0
    %5127 = vmatpush1.msra.mxu0 0.0
    %5128 = vmatprep.subr.mxu0 0.0
    %5129 = vmatpush1.msra.mxu0 0.0
    %5130 = vmatprep.subr.mxu0 0.0
    %5131 = vmatpush1.msra.mxu0 0.0
    %5132 = vmatprep.subr.mxu0 0.0
    %5133 = vmatpush1.msra.mxu0 0.0
    %5134 = vmatprep.subr.mxu0 0.0
    %5135 = vmatpush1.msra.mxu0 0.0
    %5136 = vmatprep.subr.mxu0 0.0
    %5137 = vmatpush1.msra.mxu0 0.0
    %5138 = vmatprep.subr.mxu0 0.0
    %5139 = vmatpush1.msra.mxu0 0.0
    %5140 = vmatprep.subr.mxu0 0.0
    %5141 = vmatpush1.msra.mxu0 0.0
    %5142 = vmatprep.subr.mxu0 0.0
    %5143 = vmatpush1.msra.mxu0 0.0
    %5144 = vmatprep.subr.mxu0 0.0
    %5145 = vmatpush1.msra.mxu0 0.0
    %5146 = vmatprep.subr.mxu0 0.0
    %5147 = vmatpush1.msra.mxu0 0.0
    %5148 = vmatprep.subr.mxu0 0.0
    %5149 = vmatpush1.msra.mxu0 0.0
    %5150 = vmatprep.subr.mxu0 0.0
    %5151 = vmatpush1.msra.mxu0 0.0
    %5152 = vmatprep.subr.mxu0 0.0
    %5153 = vmatpush1.msra.mxu0 0.0
    %5154 = vmatprep.subr.mxu0 0.0
    %5155 = vmatpush1.msra.mxu0 0.0
    %5156 = vmatprep.subr.mxu0 0.0
    %5157 = vmatpush1.msra.mxu0 0.0
    %5158 = vmatprep.mubr.f32.mxu0 0.0
    %v5159 = vand.u32 %v4895, 4294901760
    %v5160 = vsub.f32 %v4895, %v5159
    %5161 = vmatmul.mubr.f32.gmra.mrb[0].mxu0 %v5160
    %v5162 = vpop.f32.mrb[0].mxu0
    %v5163 = vadd.f32 %v5077, %v5162
    %v5164 = vpop.f32.mrb[0].mxu0
    %5165 = vmatprep.mubr.f32.mxu0 0.0
    %v5166 = vand.u32 %v4898, 4294901760
    %v5167 = vsub.f32 %v4898, %v5166
    %5168 = vmatmul.mubr.f32.gmra.mrb[0].mxu0 %v5167
    %v5169 = vpop.f32.mrb[0].mxu0
    %v5170 = vadd.f32 %v5083, %v5169
    %v5171 = vpop.f32.mrb[0].mxu0
    %5172 = vdwg.mxu0
    %5173 = vmatprep.subr.mxu0 0.0
    %v5174 = vand.u32 %v4886, 4294901760
    %5175 = vmatpush1.msra.mxu0 %v5174
    %5176 = vmatprep.subr.mxu0 0.0
    %v5177 = vand.u32 %v4887, 4294901760
    %5178 = vmatpush1.msra.mxu0 %v5177
    %5179 = vmatprep.subr.mxu0 0.0
    %v5180 = vand.u32 %v4888, 4294901760
    %5181 = vmatpush1.msra.mxu0 %v5180
    %5182 = vmatprep.subr.mxu0 0.0
    %v5183 = vand.u32 %v4889, 4294901760
    %5184 = vmatpush1.msra.mxu0 %v5183
    %5185 = vmatprep.subr.mxu0 0.0
    %5186 = vmatpush1.msra.mxu0 0.0
    %5187 = vmatprep.subr.mxu0 0.0
    %5188 = vmatpush1.msra.mxu0 0.0
    %5189 = vmatprep.subr.mxu0 0.0
    %5190 = vmatpush1.msra.mxu0 0.0
    %5191 = vmatprep.subr.mxu0 0.0
    %5192 = vmatpush1.msra.mxu0 0.0
    %5193 = vmatprep.subr.mxu0 0.0
    %5194 = vmatpush1.msra.mxu0 0.0
    %5195 = vmatprep.subr.mxu0 0.0
    %5196 = vmatpush1.msra.mxu0 0.0
    %5197 = vmatprep.subr.mxu0 0.0
    %5198 = vmatpush1.msra.mxu0 0.0
    %5199 = vmatprep.subr.mxu0 0.0
    %5200 = vmatpush1.msra.mxu0 0.0
    %5201 = vmatprep.subr.mxu0 0.0
    %5202 = vmatpush1.msra.mxu0 0.0
    %5203 = vmatprep.subr.mxu0 0.0
    %5204 = vmatpush1.msra.mxu0 0.0
    %5205 = vmatprep.subr.mxu0 0.0
    %5206 = vmatpush1.msra.mxu0 0.0
    %5207 = vmatprep.subr.mxu0 0.0
    %5208 = vmatpush1.msra.mxu0 0.0
    %5209 = vmatprep.subr.mxu0 0.0
    %5210 = vmatpush1.msra.mxu0 0.0
    %5211 = vmatprep.subr.mxu0 0.0
    %5212 = vmatpush1.msra.mxu0 0.0
    %5213 = vmatprep.subr.mxu0 0.0
    %5214 = vmatpush1.msra.mxu0 0.0
    %5215 = vmatprep.subr.mxu0 0.0
    %5216 = vmatpush1.msra.mxu0 0.0
    %5217 = vmatprep.subr.mxu0 0.0
    %5218 = vmatpush1.msra.mxu0 0.0
    %5219 = vmatprep.subr.mxu0 0.0
    %5220 = vmatpush1.msra.mxu0 0.0
    %5221 = vmatprep.subr.mxu0 0.0
    %5222 = vmatpush1.msra.mxu0 0.0
    %5223 = vmatprep.subr.mxu0 0.0
    %5224 = vmatpush1.msra.mxu0 0.0
    %5225 = vmatprep.subr.mxu0 0.0
    %5226 = vmatpush1.msra.mxu0 0.0
    %5227 = vmatprep.subr.mxu0 0.0
    %5228 = vmatpush1.msra.mxu0 0.0
    %5229 = vmatprep.subr.mxu0 0.0
    %5230 = vmatpush1.msra.mxu0 0.0
    %5231 = vmatprep.subr.mxu0 0.0
    %5232 = vmatpush1.msra.mxu0 0.0
    %5233 = vmatprep.subr.mxu0 0.0
    %5234 = vmatpush1.msra.mxu0 0.0
    %5235 = vmatprep.subr.mxu0 0.0
    %5236 = vmatpush1.msra.mxu0 0.0
    %5237 = vmatprep.subr.mxu0 0.0
    %5238 = vmatpush1.msra.mxu0 0.0
    %5239 = vmatprep.subr.mxu0 0.0
    %5240 = vmatpush1.msra.mxu0 0.0
    %5241 = vmatprep.mubr.f32.mxu0 0.0
    %v5242 = vand.u32 %v4895, 4294901760
    %v5243 = vsub.f32 %v4895, %v5242
    %v5244 = vand.u32 %v5243, 4294901760
    %5245 = vmatmul.mubr.f32.gmra.mrb[0].mxu0 %v5244
    %v5246 = vpop.f32.mrb[0].mxu0
    %v5247 = vadd.f32 %v5163, %v5246
    %v5248 = vpop.f32.mrb[0].mxu0
    %5249 = vmatprep.mubr.f32.mxu0 0.0
    %v5250 = vand.u32 %v4898, 4294901760
    %v5251 = vsub.f32 %v4898, %v5250
    %v5252 = vand.u32 %v5251, 4294901760
    %5253 = vmatmul.mubr.f32.gmra.mrb[0].mxu0 %v5252
    %v5254 = vpop.f32.mrb[0].mxu0
    %v5255 = vadd.f32 %v5170, %v5254
    %v5256 = vpop.f32.mrb[0].mxu0
    %5257 = vdwg.mxu0
    %5258 = vmatprep.subr.mxu0 0.0
    %v5259 = vand.u32 %v4886, 4294901760
    %v5260 = vsub.f32 %v4886, %v5259
    %v5261 = vand.u32 %v5260, 4294901760
    %5262 = vmatpush1.msra.mxu0 %v5261
    %5263 = vmatprep.subr.mxu0 0.0
    %v5264 = vand.u32 %v4887, 4294901760
    %v5265 = vsub.f32 %v4887, %v5264
    %v5266 = vand.u32 %v5265, 4294901760
    %5267 = vmatpush1.msra.mxu0 %v5266
    %5268 = vmatprep.subr.mxu0 0.0
    %v5269 = vand.u32 %v4888, 4294901760
    %v5270 = vsub.f32 %v4888, %v5269
    %v5271 = vand.u32 %v5270, 4294901760
    %5272 = vmatpush1.msra.mxu0 %v5271
    %5273 = vmatprep.subr.mxu0 0.0
    %v5274 = vand.u32 %v4889, 4294901760
    %v5275 = vsub.f32 %v4889, %v5274
    %v5276 = vand.u32 %v5275, 4294901760
    %5277 = vmatpush1.msra.mxu0 %v5276
    %5278 = vmatprep.subr.mxu0 0.0
    %5279 = vmatpush1.msra.mxu0 0.0
    %5280 = vmatprep.subr.mxu0 0.0
    %5281 = vmatpush1.msra.mxu0 0.0
    %5282 = vmatprep.subr.mxu0 0.0
    %5283 = vmatpush1.msra.mxu0 0.0
    %5284 = vmatprep.subr.mxu0 0.0
    %5285 = vmatpush1.msra.mxu0 0.0
    %5286 = vmatprep.subr.mxu0 0.0
    %5287 = vmatpush1.msra.mxu0 0.0
    %5288 = vmatprep.subr.mxu0 0.0
    %5289 = vmatpush1.msra.mxu0 0.0
    %5290 = vmatprep.subr.mxu0 0.0
    %5291 = vmatpush1.msra.mxu0 0.0
    %5292 = vmatprep.subr.mxu0 0.0
    %5293 = vmatpush1.msra.mxu0 0.0
    %5294 = vmatprep.subr.mxu0 0.0
    %5295 = vmatpush1.msra.mxu0 0.0
    %5296 = vmatprep.subr.mxu0 0.0
    %5297 = vmatpush1.msra.mxu0 0.0
    %5298 = vmatprep.subr.mxu0 0.0
    %5299 = vmatpush1.msra.mxu0 0.0
    %5300 = vmatprep.subr.mxu0 0.0
    %5301 = vmatpush1.msra.mxu0 0.0
    %5302 = vmatprep.subr.mxu0 0.0
    %5303 = vmatpush1.msra.mxu0 0.0
    %5304 = vmatprep.subr.mxu0 0.0
    %5305 = vmatpush1.msra.mxu0 0.0
    %5306 = vmatprep.subr.mxu0 0.0
    %5307 = vmatpush1.msra.mxu0 0.0
    %5308 = vmatprep.subr.mxu0 0.0
    %5309 = vmatpush1.msra.mxu0 0.0
    %5310 = vmatprep.subr.mxu0 0.0
    %5311 = vmatpush1.msra.mxu0 0.0
    %5312 = vmatprep.subr.mxu0 0.0
    %5313 = vmatpush1.msra.mxu0 0.0
    %5314 = vmatprep.subr.mxu0 0.0
    %5315 = vmatpush1.msra.mxu0 0.0
    %5316 = vmatprep.subr.mxu0 0.0
    %5317 = vmatpush1.msra.mxu0 0.0
    %5318 = vmatprep.subr.mxu0 0.0
    %5319 = vmatpush1.msra.mxu0 0.0
    %5320 = vmatprep.subr.mxu0 0.0
    %5321 = vmatpush1.msra.mxu0 0.0
    %5322 = vmatprep.subr.mxu0 0.0
    %5323 = vmatpush1.msra.mxu0 0.0
    %5324 = vmatprep.subr.mxu0 0.0
    %5325 = vmatpush1.msra.mxu0 0.0
    %5326 = vmatprep.subr.mxu0 0.0
    %5327 = vmatpush1.msra.mxu0 0.0
    %5328 = vmatprep.subr.mxu0 0.0
    %5329 = vmatpush1.msra.mxu0 0.0
    %5330 = vmatprep.subr.mxu0 0.0
    %5331 = vmatpush1.msra.mxu0 0.0
    %5332 = vmatprep.subr.mxu0 0.0
    %5333 = vmatpush1.msra.mxu0 0.0
    %5334 = vmatprep.mubr.f32.mxu0 0.0
    %v5335 = vand.u32 %v4895, 4294901760
    %5336 = vmatmul.mubr.f32.gmra.mrb[0].mxu0 %v5335
    %v5337 = vpop.f32.mrb[0].mxu0
    %v5338 = vadd.f32 %v5247, %v5337
    %v5339 = vpop.f32.mrb[0].mxu0
    %5340 = vmatprep.mubr.f32.mxu0 0.0
    %v5341 = vand.u32 %v4898, 4294901760
    %5342 = vmatmul.mubr.f32.gmra.mrb[0].mxu0 %v5341
    %v5343 = vpop.f32.mrb[0].mxu0
    %v5344 = vadd.f32 %v5255, %v5343
    %v5345 = vpop.f32.mrb[0].mxu0
    %5346 = vdwg.mxu0
    %5347 = vmatprep.subr.mxu0 0.0
    %v5348 = vand.u32 %v4886, 4294901760
    %5349 = vmatpush1.msra.mxu0 %v5348
    %5350 = vmatprep.subr.mxu0 0.0
    %v5351 = vand.u32 %v4887, 4294901760
    %5352 = vmatpush1.msra.mxu0 %v5351
    %5353 = vmatprep.subr.mxu0 0.0
    %v5354 = vand.u32 %v4888, 4294901760
    %5355 = vmatpush1.msra.mxu0 %v5354
    %5356 = vmatprep.subr.mxu0 0.0
    %v5357 = vand.u32 %v4889, 4294901760
    %5358 = vmatpush1.msra.mxu0 %v5357
    %5359 = vmatprep.subr.mxu0 0.0
    %5360 = vmatpush1.msra.mxu0 0.0
    %5361 = vmatprep.subr.mxu0 0.0
    %5362 = vmatpush1.msra.mxu0 0.0
    %5363 = vmatprep.subr.mxu0 0.0
    %5364 = vmatpush1.msra.mxu0 0.0
    %5365 = vmatprep.subr.mxu0 0.0
    %5366 = vmatpush1.msra.mxu0 0.0
    %5367 = vmatprep.subr.mxu0 0.0
    %5368 = vmatpush1.msra.mxu0 0.0
    %5369 = vmatprep.subr.mxu0 0.0
    %5370 = vmatpush1.msra.mxu0 0.0
    %5371 = vmatprep.subr.mxu0 0.0
    %5372 = vmatpush1.msra.mxu0 0.0
    %5373 = vmatprep.subr.mxu0 0.0
    %5374 = vmatpush1.msra.mxu0 0.0
    %5375 = vmatprep.subr.mxu0 0.0
    %5376 = vmatpush1.msra.mxu0 0.0
    %5377 = vmatprep.subr.mxu0 0.0
    %5378 = vmatpush1.msra.mxu0 0.0
    %5379 = vmatprep.subr.mxu0 0.0
    %5380 = vmatpush1.msra.mxu0 0.0
    %5381 = vmatprep.subr.mxu0 0.0
    %5382 = vmatpush1.msra.mxu0 0.0
    %5383 = vmatprep.subr.mxu0 0.0
    %5384 = vmatpush1.msra.mxu0 0.0
    %5385 = vmatprep.subr.mxu0 0.0
    %5386 = vmatpush1.msra.mxu0 0.0
    %5387 = vmatprep.subr.mxu0 0.0
    %5388 = vmatpush1.msra.mxu0 0.0
    %5389 = vmatprep.subr.mxu0 0.0
    %5390 = vmatpush1.msra.mxu0 0.0
    %5391 = vmatprep.subr.mxu0 0.0
    %5392 = vmatpush1.msra.mxu0 0.0
    %5393 = vmatprep.subr.mxu0 0.0
    %5394 = vmatpush1.msra.mxu0 0.0
    %5395 = vmatprep.subr.mxu0 0.0
    %5396 = vmatpush1.msra.mxu0 0.0
    %5397 = vmatprep.subr.mxu0 0.0
    %5398 = vmatpush1.msra.mxu0 0.0
    %5399 = vmatprep.subr.mxu0 0.0
    %5400 = vmatpush1.msra.mxu0 0.0
    %5401 = vmatprep.subr.mxu0 0.0
    %5402 = vmatpush1.msra.mxu0 0.0
    %5403 = vmatprep.subr.mxu0 0.0
    %5404 = vmatpush1.msra.mxu0 0.0
    %5405 = vmatprep.subr.mxu0 0.0
    %5406 = vmatpush1.msra.mxu0 0.0
    %5407 = vmatprep.subr.mxu0 0.0
    %5408 = vmatpush1.msra.mxu0 0.0
    %5409 = vmatprep.subr.mxu0 0.0
    %5410 = vmatpush1.msra.mxu0 0.0
    %5411 = vmatprep.subr.mxu0 0.0
    %5412 = vmatpush1.msra.mxu0 0.0
    %5413 = vmatprep.subr.mxu0 0.0
    %5414 = vmatpush1.msra.mxu0 0.0
    %5415 = vmatprep.mubr.f32.mxu0 0.0
    %v5416 = vand.u32 %v4895, 4294901760
    %5417 = vmatmul.mubr.f32.gmra.mrb[0].mxu0 %v5416
    %v5418 = vpop.f32.mrb[0].mxu0
    %v5419 = vadd.f32 %v5338, %v5418
    %v5420 = vpop.f32.mrb[0].mxu0
    %5421 = vmatprep.mubr.f32.mxu0 0.0
    %v5422 = vand.u32 %v4898, 4294901760
    %5423 = vmatmul.mubr.f32.gmra.mrb[0].mxu0 %v5422
    %v5424 = vpop.f32.mrb[0].mxu0
    %v5425 = vadd.f32 %v5344, %v5424
    %v5426 = vpop.f32.mrb[0].mxu0
    %5427 = vdwg.mxu0
    %v5428 = vadd.f32 %v5419, %v52
    %v5429 = vadd.f32 %v5425, %v53
    %v5430 = vsel %vm57, %v5428, 0.0
    %5431 = vadd.xlane.f32.xlu0 %v5430
    %v5432 = vpop.xlane.xlu0 %5431
    %v5433 = vsel %vm57, %v5429, 0.0
    %5434 = vadd.xlane.f32.xlu0 %v5433
    %v5435 = vpop.xlane.xlu0 %5434
    %v5436 = vmul.f32 %v5432, %v64
    %v5437 = vmul.f32 %v5435, %v64
    %v5438 = vsub.f32 %v5428, %v5436
    %v5439 = vsub.f32 %v5429, %v5437
    %v5440 = vmul.f32 %v5438, %v5438
    %v5441 = vmul.f32 %v5439, %v5439
    %v5442 = vsel %vm57, %v5440, 0.0
    %5443 = vadd.xlane.f32.xlu0 %v5442
    %v5444 = vpop.xlane.xlu0 %5443
    %v5445 = vsel %vm57, %v5441, 0.0
    %5446 = vadd.xlane.f32.xlu0 %v5445
    %v5447 = vpop.xlane.xlu0 %5446
    %v5448 = vmul.f32 %v5444, %v64
    %v5449 = vmul.f32 %v5447, %v64
    %v5450 = vadd.f32 %v5448, 1e-06
    %v5451 = vadd.f32 %v5449, 1e-06
    %v5452 = vrsqrt.pop %v5450
    %v5453 = vrsqrt.pop %v5451
    %v5454 = vmul.f32 %v5438, %v5452
    %v5455 = vmul.f32 %v5439, %v5453
    %v5456 = vlaneseq
    %v5457 = vshrl.u32 %v5456, 7
    %v5458 = vsub.s32 4, %v5457
    %v5459 = vrot.slane %v54, %v5458
    %v5460 = vmul.f32 %v5454, %v5459
    %v5461 = vmul.f32 %v5455, %v5459
    %v5462 = vlaneseq
    %v5463 = vshrl.u32 %v5462, 7
    %v5464 = vsub.s32 5, %v5463
    %v5465 = vrot.slane %v54, %v5464
    %v5466 = vadd.f32 %v5460, %v5465
    %v5467 = vadd.f32 %v5461, %v5465
    %v5468 = vld [vmem:[%s4] sm:$0xff]
    %v5469 = vld [vmem:[%s4 + $0x8] sm:$0xff]
    %v5470 = vld [vmem:[%s4 + $0x10] sm:$0xff]
    %v5471 = vld [vmem:[%s4 + $0x18] sm:$0xff]
    %v5472 = vlaneseq
    %v5473 = vshrl.u32 %v5472, 7
    %v5474 = vsub.s32 6, %v5473
    %v5475 = vrot.slane %v54, %v5474
    %v5477 = vsel %vm57, %v5466, 0
    %v5480 = vsel %vm57, %v5467, 0
    %5482 = vmatprep.subr.mxu0 0.0
    %v5483 = vand.u32 %v5468, 4294901760
    %5484 = vmatpush1.msra.mxu0 %v5483
    %5485 = vmatprep.subr.mxu0 0.0
    %v5486 = vand.u32 %v5469, 4294901760
    %5487 = vmatpush1.msra.mxu0 %v5486
    %5488 = vmatprep.subr.mxu0 0.0
    %v5489 = vand.u32 %v5470, 4294901760
    %5490 = vmatpush1.msra.mxu0 %v5489
    %5491 = vmatprep.subr.mxu0 0.0
    %v5492 = vand.u32 %v5471, 4294901760
    %5493 = vmatpush1.msra.mxu0 %v5492
    %5494 = vmatprep.subr.mxu0 0.0
    %5495 = vmatpush1.msra.mxu0 0.0
    %5496 = vmatprep.subr.mxu0 0.0
    %5497 = vmatpush1.msra.mxu0 0.0
    %5498 = vmatprep.subr.mxu0 0.0
    %5499 = vmatpush1.msra.mxu0 0.0
    %5500 = vmatprep.subr.mxu0 0.0
    %5501 = vmatpush1.msra.mxu0 0.0
    %5502 = vmatprep.subr.mxu0 0.0
    %5503 = vmatpush1.msra.mxu0 0.0
    %5504 = vmatprep.subr.mxu0 0.0
    %5505 = vmatpush1.msra.mxu0 0.0
    %5506 = vmatprep.subr.mxu0 0.0
    %5507 = vmatpush1.msra.mxu0 0.0
    %5508 = vmatprep.subr.mxu0 0.0
    %5509 = vmatpush1.msra.mxu0 0.0
    %5510 = vmatprep.subr.mxu0 0.0
    %5511 = vmatpush1.msra.mxu0 0.0
    %5512 = vmatprep.subr.mxu0 0.0
    %5513 = vmatpush1.msra.mxu0 0.0
    %5514 = vmatprep.subr.mxu0 0.0
    %5515 = vmatpush1.msra.mxu0 0.0
    %5516 = vmatprep.subr.mxu0 0.0
    %5517 = vmatpush1.msra.mxu0 0.0
    %5518 = vmatprep.subr.mxu0 0.0
    %5519 = vmatpush1.msra.mxu0 0.0
    %5520 = vmatprep.subr.mxu0 0.0
    %5521 = vmatpush1.msra.mxu0 0.0
    %5522 = vmatprep.subr.mxu0 0.0
    %5523 = vmatpush1.msra.mxu0 0.0
    %5524 = vmatprep.subr.mxu0 0.0
    %5525 = vmatpush1.msra.mxu0 0.0
    %5526 = vmatprep.subr.mxu0 0.0
    %5527 = vmatpush1.msra.mxu0 0.0
    %5528 = vmatprep.subr.mxu0 0.0
    %5529 = vmatpush1.msra.mxu0 0.0
    %5530 = vmatprep.subr.mxu0 0.0
    %5531 = vmatpush1.msra.mxu0 0.0
    %5532 = vmatprep.subr.mxu0 0.0
    %5533 = vmatpush1.msra.mxu0 0.0
    %5534 = vmatprep.subr.mxu0 0.0
    %5535 = vmatpush1.msra.mxu0 0.0
    %5536 = vmatprep.subr.mxu0 0.0
    %5537 = vmatpush1.msra.mxu0 0.0
    %5538 = vmatprep.subr.mxu0 0.0
    %5539 = vmatpush1.msra.mxu0 0.0
    %5540 = vmatprep.subr.mxu0 0.0
    %5541 = vmatpush1.msra.mxu0 0.0
    %5542 = vmatprep.subr.mxu0 0.0
    %5543 = vmatpush1.msra.mxu0 0.0
    %5544 = vmatprep.subr.mxu0 0.0
    %5545 = vmatpush1.msra.mxu0 0.0
    %5546 = vmatprep.subr.mxu0 0.0
    %5547 = vmatpush1.msra.mxu0 0.0
    %5548 = vmatprep.subr.mxu0 0.0
    %5549 = vmatpush1.msra.mxu0 0.0
    %5550 = vmatprep.mubr.f32.mxu0 0.0
    %v5551 = vand.u32 %v5477, 4294901760
    %v5552 = vsub.f32 %v5477, %v5551
    %v5553 = vand.u32 %v5552, 4294901760
    %v5554 = vsub.f32 %v5552, %v5553
    %v5555 = vand.u32 %v5554, 4294901760
    %5556 = vmatmul.mubr.f32.gmra.mrb[0].mxu0 %v5555
    %v5557 = vpop.f32.mrb[0].mxu0
    %v5558 = vadd.f32 %v5475, %v5557
    %v5559 = vpop.f32.mrb[0].mxu0
    %5560 = vmatprep.mubr.f32.mxu0 0.0
    %v5561 = vand.u32 %v5480, 4294901760
    %v5562 = vsub.f32 %v5480, %v5561
    %v5563 = vand.u32 %v5562, 4294901760
    %v5564 = vsub.f32 %v5562, %v5563
    %v5565 = vand.u32 %v5564, 4294901760
    %5566 = vmatmul.mubr.f32.gmra.mrb[0].mxu0 %v5565
    %v5567 = vpop.f32.mrb[0].mxu0
    %v5568 = vadd.f32 %v5475, %v5567
    %v5569 = vpop.f32.mrb[0].mxu0
    %5570 = vdwg.mxu0
    %5571 = vmatprep.subr.mxu0 0.0
    %v5572 = vand.u32 %v5468, 4294901760
    %v5573 = vsub.f32 %v5468, %v5572
    %v5574 = vand.u32 %v5573, 4294901760
    %v5575 = vsub.f32 %v5573, %v5574
    %v5576 = vand.u32 %v5575, 4294901760
    %5577 = vmatpush1.msra.mxu0 %v5576
    %5578 = vmatprep.subr.mxu0 0.0
    %v5579 = vand.u32 %v5469, 4294901760
    %v5580 = vsub.f32 %v5469, %v5579
    %v5581 = vand.u32 %v5580, 4294901760
    %v5582 = vsub.f32 %v5580, %v5581
    %v5583 = vand.u32 %v5582, 4294901760
    %5584 = vmatpush1.msra.mxu0 %v5583
    %5585 = vmatprep.subr.mxu0 0.0
    %v5586 = vand.u32 %v5470, 4294901760
    %v5587 = vsub.f32 %v5470, %v5586
    %v5588 = vand.u32 %v5587, 4294901760
    %v5589 = vsub.f32 %v5587, %v5588
    %v5590 = vand.u32 %v5589, 4294901760
    %5591 = vmatpush1.msra.mxu0 %v5590
    %5592 = vmatprep.subr.mxu0 0.0
    %v5593 = vand.u32 %v5471, 4294901760
    %v5594 = vsub.f32 %v5471, %v5593
    %v5595 = vand.u32 %v5594, 4294901760
    %v5596 = vsub.f32 %v5594, %v5595
    %v5597 = vand.u32 %v5596, 4294901760
    %5598 = vmatpush1.msra.mxu0 %v5597
    %5599 = vmatprep.subr.mxu0 0.0
    %5600 = vmatpush1.msra.mxu0 0.0
    %5601 = vmatprep.subr.mxu0 0.0
    %5602 = vmatpush1.msra.mxu0 0.0
    %5603 = vmatprep.subr.mxu0 0.0
    %5604 = vmatpush1.msra.mxu0 0.0
    %5605 = vmatprep.subr.mxu0 0.0
    %5606 = vmatpush1.msra.mxu0 0.0
    %5607 = vmatprep.subr.mxu0 0.0
    %5608 = vmatpush1.msra.mxu0 0.0
    %5609 = vmatprep.subr.mxu0 0.0
    %5610 = vmatpush1.msra.mxu0 0.0
    %5611 = vmatprep.subr.mxu0 0.0
    %5612 = vmatpush1.msra.mxu0 0.0
    %5613 = vmatprep.subr.mxu0 0.0
    %5614 = vmatpush1.msra.mxu0 0.0
    %5615 = vmatprep.subr.mxu0 0.0
    %5616 = vmatpush1.msra.mxu0 0.0
    %5617 = vmatprep.subr.mxu0 0.0
    %5618 = vmatpush1.msra.mxu0 0.0
    %5619 = vmatprep.subr.mxu0 0.0
    %5620 = vmatpush1.msra.mxu0 0.0
    %5621 = vmatprep.subr.mxu0 0.0
    %5622 = vmatpush1.msra.mxu0 0.0
    %5623 = vmatprep.subr.mxu0 0.0
    %5624 = vmatpush1.msra.mxu0 0.0
    %5625 = vmatprep.subr.mxu0 0.0
    %5626 = vmatpush1.msra.mxu0 0.0
    %5627 = vmatprep.subr.mxu0 0.0
    %5628 = vmatpush1.msra.mxu0 0.0
    %5629 = vmatprep.subr.mxu0 0.0
    %5630 = vmatpush1.msra.mxu0 0.0
    %5631 = vmatprep.subr.mxu0 0.0
    %5632 = vmatpush1.msra.mxu0 0.0
    %5633 = vmatprep.subr.mxu0 0.0
    %5634 = vmatpush1.msra.mxu0 0.0
    %5635 = vmatprep.subr.mxu0 0.0
    %5636 = vmatpush1.msra.mxu0 0.0
    %5637 = vmatprep.subr.mxu0 0.0
    %5638 = vmatpush1.msra.mxu0 0.0
    %5639 = vmatprep.subr.mxu0 0.0
    %5640 = vmatpush1.msra.mxu0 0.0
    %5641 = vmatprep.subr.mxu0 0.0
    %5642 = vmatpush1.msra.mxu0 0.0
    %5643 = vmatprep.subr.mxu0 0.0
    %5644 = vmatpush1.msra.mxu0 0.0
    %5645 = vmatprep.subr.mxu0 0.0
    %5646 = vmatpush1.msra.mxu0 0.0
    %5647 = vmatprep.subr.mxu0 0.0
    %5648 = vmatpush1.msra.mxu0 0.0
    %5649 = vmatprep.subr.mxu0 0.0
    %5650 = vmatpush1.msra.mxu0 0.0
    %5651 = vmatprep.subr.mxu0 0.0
    %5652 = vmatpush1.msra.mxu0 0.0
    %5653 = vmatprep.subr.mxu0 0.0
    %5654 = vmatpush1.msra.mxu0 0.0
    %5655 = vmatprep.mubr.f32.mxu0 0.0
    %v5656 = vand.u32 %v5477, 4294901760
    %5657 = vmatmul.mubr.f32.gmra.mrb[0].mxu0 %v5656
    %v5658 = vpop.f32.mrb[0].mxu0
    %v5659 = vadd.f32 %v5558, %v5658
    %v5660 = vpop.f32.mrb[0].mxu0
    %5661 = vmatprep.mubr.f32.mxu0 0.0
    %v5662 = vand.u32 %v5480, 4294901760
    %5663 = vmatmul.mubr.f32.gmra.mrb[0].mxu0 %v5662
    %v5664 = vpop.f32.mrb[0].mxu0
    %v5665 = vadd.f32 %v5568, %v5664
    %v5666 = vpop.f32.mrb[0].mxu0
    %5667 = vdwg.mxu0
    %5668 = vmatprep.subr.mxu0 0.0
    %v5669 = vand.u32 %v5468, 4294901760
    %v5670 = vsub.f32 %v5468, %v5669
    %5671 = vmatpush1.msra.mxu0 %v5670
    %5672 = vmatprep.subr.mxu0 0.0
    %v5673 = vand.u32 %v5469, 4294901760
    %v5674 = vsub.f32 %v5469, %v5673
    %5675 = vmatpush1.msra.mxu0 %v5674
    %5676 = vmatprep.subr.mxu0 0.0
    %v5677 = vand.u32 %v5470, 4294901760
    %v5678 = vsub.f32 %v5470, %v5677
    %5679 = vmatpush1.msra.mxu0 %v5678
    %5680 = vmatprep.subr.mxu0 0.0
    %v5681 = vand.u32 %v5471, 4294901760
    %v5682 = vsub.f32 %v5471, %v5681
    %5683 = vmatpush1.msra.mxu0 %v5682
    %5684 = vmatprep.subr.mxu0 0.0
    %5685 = vmatpush1.msra.mxu0 0.0
    %5686 = vmatprep.subr.mxu0 0.0
    %5687 = vmatpush1.msra.mxu0 0.0
    %5688 = vmatprep.subr.mxu0 0.0
    %5689 = vmatpush1.msra.mxu0 0.0
    %5690 = vmatprep.subr.mxu0 0.0
    %5691 = vmatpush1.msra.mxu0 0.0
    %5692 = vmatprep.subr.mxu0 0.0
    %5693 = vmatpush1.msra.mxu0 0.0
    %5694 = vmatprep.subr.mxu0 0.0
    %5695 = vmatpush1.msra.mxu0 0.0
    %5696 = vmatprep.subr.mxu0 0.0
    %5697 = vmatpush1.msra.mxu0 0.0
    %5698 = vmatprep.subr.mxu0 0.0
    %5699 = vmatpush1.msra.mxu0 0.0
    %5700 = vmatprep.subr.mxu0 0.0
    %5701 = vmatpush1.msra.mxu0 0.0
    %5702 = vmatprep.subr.mxu0 0.0
    %5703 = vmatpush1.msra.mxu0 0.0
    %5704 = vmatprep.subr.mxu0 0.0
    %5705 = vmatpush1.msra.mxu0 0.0
    %5706 = vmatprep.subr.mxu0 0.0
    %5707 = vmatpush1.msra.mxu0 0.0
    %5708 = vmatprep.subr.mxu0 0.0
    %5709 = vmatpush1.msra.mxu0 0.0
    %5710 = vmatprep.subr.mxu0 0.0
    %5711 = vmatpush1.msra.mxu0 0.0
    %5712 = vmatprep.subr.mxu0 0.0
    %5713 = vmatpush1.msra.mxu0 0.0
    %5714 = vmatprep.subr.mxu0 0.0
    %5715 = vmatpush1.msra.mxu0 0.0
    %5716 = vmatprep.subr.mxu0 0.0
    %5717 = vmatpush1.msra.mxu0 0.0
    %5718 = vmatprep.subr.mxu0 0.0
    %5719 = vmatpush1.msra.mxu0 0.0
    %5720 = vmatprep.subr.mxu0 0.0
    %5721 = vmatpush1.msra.mxu0 0.0
    %5722 = vmatprep.subr.mxu0 0.0
    %5723 = vmatpush1.msra.mxu0 0.0
    %5724 = vmatprep.subr.mxu0 0.0
    %5725 = vmatpush1.msra.mxu0 0.0
    %5726 = vmatprep.subr.mxu0 0.0
    %5727 = vmatpush1.msra.mxu0 0.0
    %5728 = vmatprep.subr.mxu0 0.0
    %5729 = vmatpush1.msra.mxu0 0.0
    %5730 = vmatprep.subr.mxu0 0.0
    %5731 = vmatpush1.msra.mxu0 0.0
    %5732 = vmatprep.subr.mxu0 0.0
    %5733 = vmatpush1.msra.mxu0 0.0
    %5734 = vmatprep.subr.mxu0 0.0
    %5735 = vmatpush1.msra.mxu0 0.0
    %5736 = vmatprep.subr.mxu0 0.0
    %5737 = vmatpush1.msra.mxu0 0.0
    %5738 = vmatprep.subr.mxu0 0.0
    %5739 = vmatpush1.msra.mxu0 0.0
    %5740 = vmatprep.mubr.f32.mxu0 0.0
    %v5741 = vand.u32 %v5477, 4294901760
    %v5742 = vsub.f32 %v5477, %v5741
    %5743 = vmatmul.mubr.f32.gmra.mrb[0].mxu0 %v5742
    %v5744 = vpop.f32.mrb[0].mxu0
    %v5745 = vadd.f32 %v5659, %v5744
    %v5746 = vpop.f32.mrb[0].mxu0
    %5747 = vmatprep.mubr.f32.mxu0 0.0
    %v5748 = vand.u32 %v5480, 4294901760
    %v5749 = vsub.f32 %v5480, %v5748
    %5750 = vmatmul.mubr.f32.gmra.mrb[0].mxu0 %v5749
    %v5751 = vpop.f32.mrb[0].mxu0
    %v5752 = vadd.f32 %v5665, %v5751
    %v5753 = vpop.f32.mrb[0].mxu0
    %5754 = vdwg.mxu0
    %5755 = vmatprep.subr.mxu0 0.0
    %v5756 = vand.u32 %v5468, 4294901760
    %5757 = vmatpush1.msra.mxu0 %v5756
    %5758 = vmatprep.subr.mxu0 0.0
    %v5759 = vand.u32 %v5469, 4294901760
    %5760 = vmatpush1.msra.mxu0 %v5759
    %5761 = vmatprep.subr.mxu0 0.0
    %v5762 = vand.u32 %v5470, 4294901760
    %5763 = vmatpush1.msra.mxu0 %v5762
    %5764 = vmatprep.subr.mxu0 0.0
    %v5765 = vand.u32 %v5471, 4294901760
    %5766 = vmatpush1.msra.mxu0 %v5765
    %5767 = vmatprep.subr.mxu0 0.0
    %5768 = vmatpush1.msra.mxu0 0.0
    %5769 = vmatprep.subr.mxu0 0.0
    %5770 = vmatpush1.msra.mxu0 0.0
    %5771 = vmatprep.subr.mxu0 0.0
    %5772 = vmatpush1.msra.mxu0 0.0
    %5773 = vmatprep.subr.mxu0 0.0
    %5774 = vmatpush1.msra.mxu0 0.0
    %5775 = vmatprep.subr.mxu0 0.0
    %5776 = vmatpush1.msra.mxu0 0.0
    %5777 = vmatprep.subr.mxu0 0.0
    %5778 = vmatpush1.msra.mxu0 0.0
    %5779 = vmatprep.subr.mxu0 0.0
    %5780 = vmatpush1.msra.mxu0 0.0
    %5781 = vmatprep.subr.mxu0 0.0
    %5782 = vmatpush1.msra.mxu0 0.0
    %5783 = vmatprep.subr.mxu0 0.0
    %5784 = vmatpush1.msra.mxu0 0.0
    %5785 = vmatprep.subr.mxu0 0.0
    %5786 = vmatpush1.msra.mxu0 0.0
    %5787 = vmatprep.subr.mxu0 0.0
    %5788 = vmatpush1.msra.mxu0 0.0
    %5789 = vmatprep.subr.mxu0 0.0
    %5790 = vmatpush1.msra.mxu0 0.0
    %5791 = vmatprep.subr.mxu0 0.0
    %5792 = vmatpush1.msra.mxu0 0.0
    %5793 = vmatprep.subr.mxu0 0.0
    %5794 = vmatpush1.msra.mxu0 0.0
    %5795 = vmatprep.subr.mxu0 0.0
    %5796 = vmatpush1.msra.mxu0 0.0
    %5797 = vmatprep.subr.mxu0 0.0
    %5798 = vmatpush1.msra.mxu0 0.0
    %5799 = vmatprep.subr.mxu0 0.0
    %5800 = vmatpush1.msra.mxu0 0.0
    %5801 = vmatprep.subr.mxu0 0.0
    %5802 = vmatpush1.msra.mxu0 0.0
    %5803 = vmatprep.subr.mxu0 0.0
    %5804 = vmatpush1.msra.mxu0 0.0
    %5805 = vmatprep.subr.mxu0 0.0
    %5806 = vmatpush1.msra.mxu0 0.0
    %5807 = vmatprep.subr.mxu0 0.0
    %5808 = vmatpush1.msra.mxu0 0.0
    %5809 = vmatprep.subr.mxu0 0.0
    %5810 = vmatpush1.msra.mxu0 0.0
    %5811 = vmatprep.subr.mxu0 0.0
    %5812 = vmatpush1.msra.mxu0 0.0
    %5813 = vmatprep.subr.mxu0 0.0
    %5814 = vmatpush1.msra.mxu0 0.0
    %5815 = vmatprep.subr.mxu0 0.0
    %5816 = vmatpush1.msra.mxu0 0.0
    %5817 = vmatprep.subr.mxu0 0.0
    %5818 = vmatpush1.msra.mxu0 0.0
    %5819 = vmatprep.subr.mxu0 0.0
    %5820 = vmatpush1.msra.mxu0 0.0
    %5821 = vmatprep.subr.mxu0 0.0
    %5822 = vmatpush1.msra.mxu0 0.0
    %5823 = vmatprep.mubr.f32.mxu0 0.0
    %v5824 = vand.u32 %v5477, 4294901760
    %v5825 = vsub.f32 %v5477, %v5824
    %v5826 = vand.u32 %v5825, 4294901760
    %5827 = vmatmul.mubr.f32.gmra.mrb[0].mxu0 %v5826
    %v5828 = vpop.f32.mrb[0].mxu0
    %v5829 = vadd.f32 %v5745, %v5828
    %v5830 = vpop.f32.mrb[0].mxu0
    %5831 = vmatprep.mubr.f32.mxu0 0.0
    %v5832 = vand.u32 %v5480, 4294901760
    %v5833 = vsub.f32 %v5480, %v5832
    %v5834 = vand.u32 %v5833, 4294901760
    %5835 = vmatmul.mubr.f32.gmra.mrb[0].mxu0 %v5834
    %v5836 = vpop.f32.mrb[0].mxu0
    %v5837 = vadd.f32 %v5752, %v5836
    %v5838 = vpop.f32.mrb[0].mxu0
    %5839 = vdwg.mxu0
    %5840 = vmatprep.subr.mxu0 0.0
    %v5841 = vand.u32 %v5468, 4294901760
    %v5842 = vsub.f32 %v5468, %v5841
    %v5843 = vand.u32 %v5842, 4294901760
    %5844 = vmatpush1.msra.mxu0 %v5843
    %5845 = vmatprep.subr.mxu0 0.0
    %v5846 = vand.u32 %v5469, 4294901760
    %v5847 = vsub.f32 %v5469, %v5846
    %v5848 = vand.u32 %v5847, 4294901760
    %5849 = vmatpush1.msra.mxu0 %v5848
    %5850 = vmatprep.subr.mxu0 0.0
    %v5851 = vand.u32 %v5470, 4294901760
    %v5852 = vsub.f32 %v5470, %v5851
    %v5853 = vand.u32 %v5852, 4294901760
    %5854 = vmatpush1.msra.mxu0 %v5853
    %5855 = vmatprep.subr.mxu0 0.0
    %v5856 = vand.u32 %v5471, 4294901760
    %v5857 = vsub.f32 %v5471, %v5856
    %v5858 = vand.u32 %v5857, 4294901760
    %5859 = vmatpush1.msra.mxu0 %v5858
    %5860 = vmatprep.subr.mxu0 0.0
    %5861 = vmatpush1.msra.mxu0 0.0
    %5862 = vmatprep.subr.mxu0 0.0
    %5863 = vmatpush1.msra.mxu0 0.0
    %5864 = vmatprep.subr.mxu0 0.0
    %5865 = vmatpush1.msra.mxu0 0.0
    %5866 = vmatprep.subr.mxu0 0.0
    %5867 = vmatpush1.msra.mxu0 0.0
    %5868 = vmatprep.subr.mxu0 0.0
    %5869 = vmatpush1.msra.mxu0 0.0
    %5870 = vmatprep.subr.mxu0 0.0
    %5871 = vmatpush1.msra.mxu0 0.0
    %5872 = vmatprep.subr.mxu0 0.0
    %5873 = vmatpush1.msra.mxu0 0.0
    %5874 = vmatprep.subr.mxu0 0.0
    %5875 = vmatpush1.msra.mxu0 0.0
    %5876 = vmatprep.subr.mxu0 0.0
    %5877 = vmatpush1.msra.mxu0 0.0
    %5878 = vmatprep.subr.mxu0 0.0
    %5879 = vmatpush1.msra.mxu0 0.0
    %5880 = vmatprep.subr.mxu0 0.0
    %5881 = vmatpush1.msra.mxu0 0.0
    %5882 = vmatprep.subr.mxu0 0.0
    %5883 = vmatpush1.msra.mxu0 0.0
    %5884 = vmatprep.subr.mxu0 0.0
    %5885 = vmatpush1.msra.mxu0 0.0
    %5886 = vmatprep.subr.mxu0 0.0
    %5887 = vmatpush1.msra.mxu0 0.0
    %5888 = vmatprep.subr.mxu0 0.0
    %5889 = vmatpush1.msra.mxu0 0.0
    %5890 = vmatprep.subr.mxu0 0.0
    %5891 = vmatpush1.msra.mxu0 0.0
    %5892 = vmatprep.subr.mxu0 0.0
    %5893 = vmatpush1.msra.mxu0 0.0
    %5894 = vmatprep.subr.mxu0 0.0
    %5895 = vmatpush1.msra.mxu0 0.0
    %5896 = vmatprep.subr.mxu0 0.0
    %5897 = vmatpush1.msra.mxu0 0.0
    %5898 = vmatprep.subr.mxu0 0.0
    %5899 = vmatpush1.msra.mxu0 0.0
    %5900 = vmatprep.subr.mxu0 0.0
    %5901 = vmatpush1.msra.mxu0 0.0
    %5902 = vmatprep.subr.mxu0 0.0
    %5903 = vmatpush1.msra.mxu0 0.0
    %5904 = vmatprep.subr.mxu0 0.0
    %5905 = vmatpush1.msra.mxu0 0.0
    %5906 = vmatprep.subr.mxu0 0.0
    %5907 = vmatpush1.msra.mxu0 0.0
    %5908 = vmatprep.subr.mxu0 0.0
    %5909 = vmatpush1.msra.mxu0 0.0
    %5910 = vmatprep.subr.mxu0 0.0
    %5911 = vmatpush1.msra.mxu0 0.0
    %5912 = vmatprep.subr.mxu0 0.0
    %5913 = vmatpush1.msra.mxu0 0.0
    %5914 = vmatprep.subr.mxu0 0.0
    %5915 = vmatpush1.msra.mxu0 0.0
    %5916 = vmatprep.mubr.f32.mxu0 0.0
    %v5917 = vand.u32 %v5477, 4294901760
    %5918 = vmatmul.mubr.f32.gmra.mrb[0].mxu0 %v5917
    %v5919 = vpop.f32.mrb[0].mxu0
    %v5920 = vadd.f32 %v5829, %v5919
    %v5921 = vpop.f32.mrb[0].mxu0
    %5922 = vmatprep.mubr.f32.mxu0 0.0
    %v5923 = vand.u32 %v5480, 4294901760
    %5924 = vmatmul.mubr.f32.gmra.mrb[0].mxu0 %v5923
    %v5925 = vpop.f32.mrb[0].mxu0
    %v5926 = vadd.f32 %v5837, %v5925
    %v5927 = vpop.f32.mrb[0].mxu0
    %5928 = vdwg.mxu0
    %5929 = vmatprep.subr.mxu0 0.0
    %v5930 = vand.u32 %v5468, 4294901760
    %5931 = vmatpush1.msra.mxu0 %v5930
    %5932 = vmatprep.subr.mxu0 0.0
    %v5933 = vand.u32 %v5469, 4294901760
    %5934 = vmatpush1.msra.mxu0 %v5933
    %5935 = vmatprep.subr.mxu0 0.0
    %v5936 = vand.u32 %v5470, 4294901760
    %5937 = vmatpush1.msra.mxu0 %v5936
    %5938 = vmatprep.subr.mxu0 0.0
    %v5939 = vand.u32 %v5471, 4294901760
    %5940 = vmatpush1.msra.mxu0 %v5939
    %5941 = vmatprep.subr.mxu0 0.0
    %5942 = vmatpush1.msra.mxu0 0.0
    %5943 = vmatprep.subr.mxu0 0.0
    %5944 = vmatpush1.msra.mxu0 0.0
    %5945 = vmatprep.subr.mxu0 0.0
    %5946 = vmatpush1.msra.mxu0 0.0
    %5947 = vmatprep.subr.mxu0 0.0
    %5948 = vmatpush1.msra.mxu0 0.0
    %5949 = vmatprep.subr.mxu0 0.0
    %5950 = vmatpush1.msra.mxu0 0.0
    %5951 = vmatprep.subr.mxu0 0.0
    %5952 = vmatpush1.msra.mxu0 0.0
    %5953 = vmatprep.subr.mxu0 0.0
    %5954 = vmatpush1.msra.mxu0 0.0
    %5955 = vmatprep.subr.mxu0 0.0
    %5956 = vmatpush1.msra.mxu0 0.0
    %5957 = vmatprep.subr.mxu0 0.0
    %5958 = vmatpush1.msra.mxu0 0.0
    %5959 = vmatprep.subr.mxu0 0.0
    %5960 = vmatpush1.msra.mxu0 0.0
    %5961 = vmatprep.subr.mxu0 0.0
    %5962 = vmatpush1.msra.mxu0 0.0
    %5963 = vmatprep.subr.mxu0 0.0
    %5964 = vmatpush1.msra.mxu0 0.0
    %5965 = vmatprep.subr.mxu0 0.0
    %5966 = vmatpush1.msra.mxu0 0.0
    %5967 = vmatprep.subr.mxu0 0.0
    %5968 = vmatpush1.msra.mxu0 0.0
    %5969 = vmatprep.subr.mxu0 0.0
    %5970 = vmatpush1.msra.mxu0 0.0
    %5971 = vmatprep.subr.mxu0 0.0
    %5972 = vmatpush1.msra.mxu0 0.0
    %5973 = vmatprep.subr.mxu0 0.0
    %5974 = vmatpush1.msra.mxu0 0.0
    %5975 = vmatprep.subr.mxu0 0.0
    %5976 = vmatpush1.msra.mxu0 0.0
    %5977 = vmatprep.subr.mxu0 0.0
    %5978 = vmatpush1.msra.mxu0 0.0
    %5979 = vmatprep.subr.mxu0 0.0
    %5980 = vmatpush1.msra.mxu0 0.0
    %5981 = vmatprep.subr.mxu0 0.0
    %5982 = vmatpush1.msra.mxu0 0.0
    %5983 = vmatprep.subr.mxu0 0.0
    %5984 = vmatpush1.msra.mxu0 0.0
    %5985 = vmatprep.subr.mxu0 0.0
    %5986 = vmatpush1.msra.mxu0 0.0
    %5987 = vmatprep.subr.mxu0 0.0
    %5988 = vmatpush1.msra.mxu0 0.0
    %5989 = vmatprep.subr.mxu0 0.0
    %5990 = vmatpush1.msra.mxu0 0.0
    %5991 = vmatprep.subr.mxu0 0.0
    %5992 = vmatpush1.msra.mxu0 0.0
    %5993 = vmatprep.subr.mxu0 0.0
    %5994 = vmatpush1.msra.mxu0 0.0
    %5995 = vmatprep.subr.mxu0 0.0
    %5996 = vmatpush1.msra.mxu0 0.0
    %5997 = vmatprep.mubr.f32.mxu0 0.0
    %v5998 = vand.u32 %v5477, 4294901760
    %5999 = vmatmul.mubr.f32.gmra.mrb[0].mxu0 %v5998
    %v6000 = vpop.f32.mrb[0].mxu0
    %v6001 = vadd.f32 %v5920, %v6000
    %v6002 = vpop.f32.mrb[0].mxu0
    %6003 = vmatprep.mubr.f32.mxu0 0.0
    %v6004 = vand.u32 %v5480, 4294901760
    %6005 = vmatmul.mubr.f32.gmra.mrb[0].mxu0 %v6004
    %v6006 = vpop.f32.mrb[0].mxu0
    %v6007 = vadd.f32 %v5926, %v6006
    %v6008 = vpop.f32.mrb[0].mxu0
    %6009 = vdwg.mxu0
    %v6010 = vmul.f32 %v6001, 0.5
    %v6011 = vmul.f32 %v6007, 0.5
    %v6012 = vmul.f32 %v6001, 0.70710677
    %v6013 = vmul.f32 %v6007, 0.70710677
    %v6014 = verf.f32.pop %v6012
    %v6015 = verf.f32.pop %v6013
    %v6016 = vadd.f32 %v6014, 1.0
    %v6017 = vadd.f32 %v6015, 1.0
    %v6018 = vmul.f32 %v6010, %v6016
    %v6019 = vmul.f32 %v6011, %v6017
    %v6020 = vld [vmem:[%s5] sm:$0xff]
    %v6021 = vld [vmem:[%s5 + $0x8] sm:$0xff]
    %v6022 = vld [vmem:[%s5 + $0x10] sm:$0xff]
    %v6023 = vld [vmem:[%s5 + $0x18] sm:$0xff]
    %v6024 = vld [vmem:[%s5 + $0x20] sm:$0xff]
    %v6025 = vld [vmem:[%s5 + $0x28] sm:$0xff]
    %v6026 = vld [vmem:[%s5 + $0x30] sm:$0xff]
    %v6027 = vld [vmem:[%s5 + $0x38] sm:$0xff]
    %v6028 = vlaneseq
    %v6029 = vshrl.u32 %v6028, 7
    %v6030 = vsub.s32 7, %v6029
    %v6031 = vrot.slane %v54, %v6030
    %vm6032 = vcmask 523264
    %v6034 = vsel %vm6032, %v6018, 0
    %v6037 = vsel %vm6032, %v6019, 0
    %6039 = vmatprep.subr.mxu0 0.0
    %v6040 = vand.u32 %v6020, 4294901760
    %6041 = vmatpush1.msra.mxu0 %v6040
    %6042 = vmatprep.subr.mxu0 0.0
    %v6043 = vand.u32 %v6021, 4294901760
    %6044 = vmatpush1.msra.mxu0 %v6043
    %6045 = vmatprep.subr.mxu0 0.0
    %v6046 = vand.u32 %v6022, 4294901760
    %6047 = vmatpush1.msra.mxu0 %v6046
    %6048 = vmatprep.subr.mxu0 0.0
    %v6049 = vand.u32 %v6023, 4294901760
    %6050 = vmatpush1.msra.mxu0 %v6049
    %6051 = vmatprep.subr.mxu0 0.0
    %v6052 = vand.u32 %v6024, 4294901760
    %6053 = vmatpush1.msra.mxu0 %v6052
    %6054 = vmatprep.subr.mxu0 0.0
    %v6055 = vand.u32 %v6025, 4294901760
    %6056 = vmatpush1.msra.mxu0 %v6055
    %6057 = vmatprep.subr.mxu0 0.0
    %v6058 = vand.u32 %v6026, 4294901760
    %6059 = vmatpush1.msra.mxu0 %v6058
    %6060 = vmatprep.subr.mxu0 0.0
    %v6061 = vand.u32 %v6027, 4294901760
    %6062 = vmatpush1.msra.mxu0 %v6061
    %6063 = vmatprep.subr.mxu0 0.0
    %6064 = vmatpush1.msra.mxu0 0.0
    %6065 = vmatprep.subr.mxu0 0.0
    %6066 = vmatpush1.msra.mxu0 0.0
    %6067 = vmatprep.subr.mxu0 0.0
    %6068 = vmatpush1.msra.mxu0 0.0
    %6069 = vmatprep.subr.mxu0 0.0
    %6070 = vmatpush1.msra.mxu0 0.0
    %6071 = vmatprep.subr.mxu0 0.0
    %6072 = vmatpush1.msra.mxu0 0.0
    %6073 = vmatprep.subr.mxu0 0.0
    %6074 = vmatpush1.msra.mxu0 0.0
    %6075 = vmatprep.subr.mxu0 0.0
    %6076 = vmatpush1.msra.mxu0 0.0
    %6077 = vmatprep.subr.mxu0 0.0
    %6078 = vmatpush1.msra.mxu0 0.0
    %6079 = vmatprep.subr.mxu0 0.0
    %6080 = vmatpush1.msra.mxu0 0.0
    %6081 = vmatprep.subr.mxu0 0.0
    %6082 = vmatpush1.msra.mxu0 0.0
    %6083 = vmatprep.subr.mxu0 0.0
    %6084 = vmatpush1.msra.mxu0 0.0
    %6085 = vmatprep.subr.mxu0 0.0
    %6086 = vmatpush1.msra.mxu0 0.0
    %6087 = vmatprep.subr.mxu0 0.0
    %6088 = vmatpush1.msra.mxu0 0.0
    %6089 = vmatprep.subr.mxu0 0.0
    %6090 = vmatpush1.msra.mxu0 0.0
    %6091 = vmatprep.subr.mxu0 0.0
    %6092 = vmatpush1.msra.mxu0 0.0
    %6093 = vmatprep.subr.mxu0 0.0
    %6094 = vmatpush1.msra.mxu0 0.0
    %6095 = vmatprep.subr.mxu0 0.0
    %6096 = vmatpush1.msra.mxu0 0.0
    %6097 = vmatprep.subr.mxu0 0.0
    %6098 = vmatpush1.msra.mxu0 0.0
    %6099 = vmatprep.subr.mxu0 0.0
    %6100 = vmatpush1.msra.mxu0 0.0
    %6101 = vmatprep.subr.mxu0 0.0
    %6102 = vmatpush1.msra.mxu0 0.0
    %6103 = vmatprep.subr.mxu0 0.0
    %6104 = vmatpush1.msra.mxu0 0.0
    %6105 = vmatprep.subr.mxu0 0.0
    %6106 = vmatpush1.msra.mxu0 0.0
    %6107 = vmatprep.subr.mxu0 0.0
    %6108 = vmatpush1.msra.mxu0 0.0
    %6109 = vmatprep.subr.mxu0 0.0
    %6110 = vmatpush1.msra.mxu0 0.0
    %6111 = vmatprep.mubr.f32.mxu0 0.0
    %v6112 = vand.u32 %v6034, 4294901760
    %v6113 = vsub.f32 %v6034, %v6112
    %v6114 = vand.u32 %v6113, 4294901760
    %v6115 = vsub.f32 %v6113, %v6114
    %v6116 = vand.u32 %v6115, 4294901760
    %6117 = vmatmul.mubr.f32.gmra.mrb[0].mxu0 %v6116
    %v6118 = vpop.f32.mrb[0].mxu0
    %v6119 = vadd.f32 %v6031, %v6118
    %v6120 = vpop.f32.mrb[0].mxu0
    %6121 = vmatprep.mubr.f32.mxu0 0.0
    %v6122 = vand.u32 %v6037, 4294901760
    %v6123 = vsub.f32 %v6037, %v6122
    %v6124 = vand.u32 %v6123, 4294901760
    %v6125 = vsub.f32 %v6123, %v6124
    %v6126 = vand.u32 %v6125, 4294901760
    %6127 = vmatmul.mubr.f32.gmra.mrb[0].mxu0 %v6126
    %v6128 = vpop.f32.mrb[0].mxu0
    %v6129 = vadd.f32 %v6031, %v6128
    %v6130 = vpop.f32.mrb[0].mxu0
    %6131 = vdwg.mxu0
    %6132 = vmatprep.subr.mxu0 0.0
    %v6133 = vand.u32 %v6020, 4294901760
    %v6134 = vsub.f32 %v6020, %v6133
    %v6135 = vand.u32 %v6134, 4294901760
    %v6136 = vsub.f32 %v6134, %v6135
    %v6137 = vand.u32 %v6136, 4294901760
    %6138 = vmatpush1.msra.mxu0 %v6137
    %6139 = vmatprep.subr.mxu0 0.0
    %v6140 = vand.u32 %v6021, 4294901760
    %v6141 = vsub.f32 %v6021, %v6140
    %v6142 = vand.u32 %v6141, 4294901760
    %v6143 = vsub.f32 %v6141, %v6142
    %v6144 = vand.u32 %v6143, 4294901760
    %6145 = vmatpush1.msra.mxu0 %v6144
    %6146 = vmatprep.subr.mxu0 0.0
    %v6147 = vand.u32 %v6022, 4294901760
    %v6148 = vsub.f32 %v6022, %v6147
    %v6149 = vand.u32 %v6148, 4294901760
    %v6150 = vsub.f32 %v6148, %v6149
    %v6151 = vand.u32 %v6150, 4294901760
    %6152 = vmatpush1.msra.mxu0 %v6151
    %6153 = vmatprep.subr.mxu0 0.0
    %v6154 = vand.u32 %v6023, 4294901760
    %v6155 = vsub.f32 %v6023, %v6154
    %v6156 = vand.u32 %v6155, 4294901760
    %v6157 = vsub.f32 %v6155, %v6156
    %v6158 = vand.u32 %v6157, 4294901760
    %6159 = vmatpush1.msra.mxu0 %v6158
    %6160 = vmatprep.subr.mxu0 0.0
    %v6161 = vand.u32 %v6024, 4294901760
    %v6162 = vsub.f32 %v6024, %v6161
    %v6163 = vand.u32 %v6162, 4294901760
    %v6164 = vsub.f32 %v6162, %v6163
    %v6165 = vand.u32 %v6164, 4294901760
    %6166 = vmatpush1.msra.mxu0 %v6165
    %6167 = vmatprep.subr.mxu0 0.0
    %v6168 = vand.u32 %v6025, 4294901760
    %v6169 = vsub.f32 %v6025, %v6168
    %v6170 = vand.u32 %v6169, 4294901760
    %v6171 = vsub.f32 %v6169, %v6170
    %v6172 = vand.u32 %v6171, 4294901760
    %6173 = vmatpush1.msra.mxu0 %v6172
    %6174 = vmatprep.subr.mxu0 0.0
    %v6175 = vand.u32 %v6026, 4294901760
    %v6176 = vsub.f32 %v6026, %v6175
    %v6177 = vand.u32 %v6176, 4294901760
    %v6178 = vsub.f32 %v6176, %v6177
    %v6179 = vand.u32 %v6178, 4294901760
    %6180 = vmatpush1.msra.mxu0 %v6179
    %6181 = vmatprep.subr.mxu0 0.0
    %v6182 = vand.u32 %v6027, 4294901760
    %v6183 = vsub.f32 %v6027, %v6182
    %v6184 = vand.u32 %v6183, 4294901760
    %v6185 = vsub.f32 %v6183, %v6184
    %v6186 = vand.u32 %v6185, 4294901760
    %6187 = vmatpush1.msra.mxu0 %v6186
    %6188 = vmatprep.subr.mxu0 0.0
    %6189 = vmatpush1.msra.mxu0 0.0
    %6190 = vmatprep.subr.mxu0 0.0
    %6191 = vmatpush1.msra.mxu0 0.0
    %6192 = vmatprep.subr.mxu0 0.0
    %6193 = vmatpush1.msra.mxu0 0.0
    %6194 = vmatprep.subr.mxu0 0.0
    %6195 = vmatpush1.msra.mxu0 0.0
    %6196 = vmatprep.subr.mxu0 0.0
    %6197 = vmatpush1.msra.mxu0 0.0
    %6198 = vmatprep.subr.mxu0 0.0
    %6199 = vmatpush1.msra.mxu0 0.0
    %6200 = vmatprep.subr.mxu0 0.0
    %6201 = vmatpush1.msra.mxu0 0.0
    %6202 = vmatprep.subr.mxu0 0.0
    %6203 = vmatpush1.msra.mxu0 0.0
    %6204 = vmatprep.subr.mxu0 0.0
    %6205 = vmatpush1.msra.mxu0 0.0
    %6206 = vmatprep.subr.mxu0 0.0
    %6207 = vmatpush1.msra.mxu0 0.0
    %6208 = vmatprep.subr.mxu0 0.0
    %6209 = vmatpush1.msra.mxu0 0.0
    %6210 = vmatprep.subr.mxu0 0.0
    %6211 = vmatpush1.msra.mxu0 0.0
    %6212 = vmatprep.subr.mxu0 0.0
    %6213 = vmatpush1.msra.mxu0 0.0
    %6214 = vmatprep.subr.mxu0 0.0
    %6215 = vmatpush1.msra.mxu0 0.0
    %6216 = vmatprep.subr.mxu0 0.0
    %6217 = vmatpush1.msra.mxu0 0.0
    %6218 = vmatprep.subr.mxu0 0.0
    %6219 = vmatpush1.msra.mxu0 0.0
    %6220 = vmatprep.subr.mxu0 0.0
    %6221 = vmatpush1.msra.mxu0 0.0
    %6222 = vmatprep.subr.mxu0 0.0
    %6223 = vmatpush1.msra.mxu0 0.0
    %6224 = vmatprep.subr.mxu0 0.0
    %6225 = vmatpush1.msra.mxu0 0.0
    %6226 = vmatprep.subr.mxu0 0.0
    %6227 = vmatpush1.msra.mxu0 0.0
    %6228 = vmatprep.subr.mxu0 0.0
    %6229 = vmatpush1.msra.mxu0 0.0
    %6230 = vmatprep.subr.mxu0 0.0
    %6231 = vmatpush1.msra.mxu0 0.0
    %6232 = vmatprep.subr.mxu0 0.0
    %6233 = vmatpush1.msra.mxu0 0.0
    %6234 = vmatprep.subr.mxu0 0.0
    %6235 = vmatpush1.msra.mxu0 0.0
    %6236 = vmatprep.mubr.f32.mxu0 0.0
    %v6237 = vand.u32 %v6034, 4294901760
    %6238 = vmatmul.mubr.f32.gmra.mrb[0].mxu0 %v6237
    %v6239 = vpop.f32.mrb[0].mxu0
    %v6240 = vadd.f32 %v6119, %v6239
    %v6241 = vpop.f32.mrb[0].mxu0
    %6242 = vmatprep.mubr.f32.mxu0 0.0
    %v6243 = vand.u32 %v6037, 4294901760
    %6244 = vmatmul.mubr.f32.gmra.mrb[0].mxu0 %v6243
    %v6245 = vpop.f32.mrb[0].mxu0
    %v6246 = vadd.f32 %v6129, %v6245
    %v6247 = vpop.f32.mrb[0].mxu0
    %6248 = vdwg.mxu0
    %6249 = vmatprep.subr.mxu0 0.0
    %v6250 = vand.u32 %v6020, 4294901760
    %v6251 = vsub.f32 %v6020, %v6250
    %6252 = vmatpush1.msra.mxu0 %v6251
    %6253 = vmatprep.subr.mxu0 0.0
    %v6254 = vand.u32 %v6021, 4294901760
    %v6255 = vsub.f32 %v6021, %v6254
    %6256 = vmatpush1.msra.mxu0 %v6255
    %6257 = vmatprep.subr.mxu0 0.0
    %v6258 = vand.u32 %v6022, 4294901760
    %v6259 = vsub.f32 %v6022, %v6258
    %6260 = vmatpush1.msra.mxu0 %v6259
    %6261 = vmatprep.subr.mxu0 0.0
    %v6262 = vand.u32 %v6023, 4294901760
    %v6263 = vsub.f32 %v6023, %v6262
    %6264 = vmatpush1.msra.mxu0 %v6263
    %6265 = vmatprep.subr.mxu0 0.0
    %v6266 = vand.u32 %v6024, 4294901760
    %v6267 = vsub.f32 %v6024, %v6266
    %6268 = vmatpush1.msra.mxu0 %v6267
    %6269 = vmatprep.subr.mxu0 0.0
    %v6270 = vand.u32 %v6025, 4294901760
    %v6271 = vsub.f32 %v6025, %v6270
    %6272 = vmatpush1.msra.mxu0 %v6271
    %6273 = vmatprep.subr.mxu0 0.0
    %v6274 = vand.u32 %v6026, 4294901760
    %v6275 = vsub.f32 %v6026, %v6274
    %6276 = vmatpush1.msra.mxu0 %v6275
    %6277 = vmatprep.subr.mxu0 0.0
    %v6278 = vand.u32 %v6027, 4294901760
    %v6279 = vsub.f32 %v6027, %v6278
    %6280 = vmatpush1.msra.mxu0 %v6279
    %6281 = vmatprep.subr.mxu0 0.0
    %6282 = vmatpush1.msra.mxu0 0.0
    %6283 = vmatprep.subr.mxu0 0.0
    %6284 = vmatpush1.msra.mxu0 0.0
    %6285 = vmatprep.subr.mxu0 0.0
    %6286 = vmatpush1.msra.mxu0 0.0
    %6287 = vmatprep.subr.mxu0 0.0
    %6288 = vmatpush1.msra.mxu0 0.0
    %6289 = vmatprep.subr.mxu0 0.0
    %6290 = vmatpush1.msra.mxu0 0.0
    %6291 = vmatprep.subr.mxu0 0.0
    %6292 = vmatpush1.msra.mxu0 0.0
    %6293 = vmatprep.subr.mxu0 0.0
    %6294 = vmatpush1.msra.mxu0 0.0
    %6295 = vmatprep.subr.mxu0 0.0
    %6296 = vmatpush1.msra.mxu0 0.0
    %6297 = vmatprep.subr.mxu0 0.0
    %6298 = vmatpush1.msra.mxu0 0.0
    %6299 = vmatprep.subr.mxu0 0.0
    %6300 = vmatpush1.msra.mxu0 0.0
    %6301 = vmatprep.subr.mxu0 0.0
    %6302 = vmatpush1.msra.mxu0 0.0
    %6303 = vmatprep.subr.mxu0 0.0
    %6304 = vmatpush1.msra.mxu0 0.0
    %6305 = vmatprep.subr.mxu0 0.0
    %6306 = vmatpush1.msra.mxu0 0.0
    %6307 = vmatprep.subr.mxu0 0.0
    %6308 = vmatpush1.msra.mxu0 0.0
    %6309 = vmatprep.subr.mxu0 0.0
    %6310 = vmatpush1.msra.mxu0 0.0
    %6311 = vmatprep.subr.mxu0 0.0
    %6312 = vmatpush1.msra.mxu0 0.0
    %6313 = vmatprep.subr.mxu0 0.0
    %6314 = vmatpush1.msra.mxu0 0.0
    %6315 = vmatprep.subr.mxu0 0.0
    %6316 = vmatpush1.msra.mxu0 0.0
    %6317 = vmatprep.subr.mxu0 0.0
    %6318 = vmatpush1.msra.mxu0 0.0
    %6319 = vmatprep.subr.mxu0 0.0
    %6320 = vmatpush1.msra.mxu0 0.0
    %6321 = vmatprep.subr.mxu0 0.0
    %6322 = vmatpush1.msra.mxu0 0.0
    %6323 = vmatprep.subr.mxu0 0.0
    %6324 = vmatpush1.msra.mxu0 0.0
    %6325 = vmatprep.subr.mxu0 0.0
    %6326 = vmatpush1.msra.mxu0 0.0
    %6327 = vmatprep.subr.mxu0 0.0
    %6328 = vmatpush1.msra.mxu0 0.0
    %6329 = vmatprep.mubr.f32.mxu0 0.0
    %v6330 = vand.u32 %v6034, 4294901760
    %v6331 = vsub.f32 %v6034, %v6330
    %6332 = vmatmul.mubr.f32.gmra.mrb[0].mxu0 %v6331
    %v6333 = vpop.f32.mrb[0].mxu0
    %v6334 = vadd.f32 %v6240, %v6333
    %v6335 = vpop.f32.mrb[0].mxu0
    %6336 = vmatprep.mubr.f32.mxu0 0.0
    %v6337 = vand.u32 %v6037, 4294901760
    %v6338 = vsub.f32 %v6037, %v6337
    %6339 = vmatmul.mubr.f32.gmra.mrb[0].mxu0 %v6338
    %v6340 = vpop.f32.mrb[0].mxu0
    %v6341 = vadd.f32 %v6246, %v6340
    %v6342 = vpop.f32.mrb[0].mxu0
    %6343 = vdwg.mxu0
    %6344 = vmatprep.subr.mxu0 0.0
    %v6345 = vand.u32 %v6020, 4294901760
    %6346 = vmatpush1.msra.mxu0 %v6345
    %6347 = vmatprep.subr.mxu0 0.0
    %v6348 = vand.u32 %v6021, 4294901760
    %6349 = vmatpush1.msra.mxu0 %v6348
    %6350 = vmatprep.subr.mxu0 0.0
    %v6351 = vand.u32 %v6022, 4294901760
    %6352 = vmatpush1.msra.mxu0 %v6351
    %6353 = vmatprep.subr.mxu0 0.0
    %v6354 = vand.u32 %v6023, 4294901760
    %6355 = vmatpush1.msra.mxu0 %v6354
    %6356 = vmatprep.subr.mxu0 0.0
    %v6357 = vand.u32 %v6024, 4294901760
    %6358 = vmatpush1.msra.mxu0 %v6357
    %6359 = vmatprep.subr.mxu0 0.0
    %v6360 = vand.u32 %v6025, 4294901760
    %6361 = vmatpush1.msra.mxu0 %v6360
    %6362 = vmatprep.subr.mxu0 0.0
    %v6363 = vand.u32 %v6026, 4294901760
    %6364 = vmatpush1.msra.mxu0 %v6363
    %6365 = vmatprep.subr.mxu0 0.0
    %v6366 = vand.u32 %v6027, 4294901760
    %6367 = vmatpush1.msra.mxu0 %v6366
    %6368 = vmatprep.subr.mxu0 0.0
    %6369 = vmatpush1.msra.mxu0 0.0
    %6370 = vmatprep.subr.mxu0 0.0
    %6371 = vmatpush1.msra.mxu0 0.0
    %6372 = vmatprep.subr.mxu0 0.0
    %6373 = vmatpush1.msra.mxu0 0.0
    %6374 = vmatprep.subr.mxu0 0.0
    %6375 = vmatpush1.msra.mxu0 0.0
    %6376 = vmatprep.subr.mxu0 0.0
    %6377 = vmatpush1.msra.mxu0 0.0
    %6378 = vmatprep.subr.mxu0 0.0
    %6379 = vmatpush1.msra.mxu0 0.0
    %6380 = vmatprep.subr.mxu0 0.0
    %6381 = vmatpush1.msra.mxu0 0.0
    %6382 = vmatprep.subr.mxu0 0.0
    %6383 = vmatpush1.msra.mxu0 0.0
    %6384 = vmatprep.subr.mxu0 0.0
    %6385 = vmatpush1.msra.mxu0 0.0
    %6386 = vmatprep.subr.mxu0 0.0
    %6387 = vmatpush1.msra.mxu0 0.0
    %6388 = vmatprep.subr.mxu0 0.0
    %6389 = vmatpush1.msra.mxu0 0.0
    %6390 = vmatprep.subr.mxu0 0.0
    %6391 = vmatpush1.msra.mxu0 0.0
    %6392 = vmatprep.subr.mxu0 0.0
    %6393 = vmatpush1.msra.mxu0 0.0
    %6394 = vmatprep.subr.mxu0 0.0
    %6395 = vmatpush1.msra.mxu0 0.0
    %6396 = vmatprep.subr.mxu0 0.0
    %6397 = vmatpush1.msra.mxu0 0.0
    %6398 = vmatprep.subr.mxu0 0.0
    %6399 = vmatpush1.msra.mxu0 0.0
    %6400 = vmatprep.subr.mxu0 0.0
    %6401 = vmatpush1.msra.mxu0 0.0
    %6402 = vmatprep.subr.mxu0 0.0
    %6403 = vmatpush1.msra.mxu0 0.0
    %6404 = vmatprep.subr.mxu0 0.0
    %6405 = vmatpush1.msra.mxu0 0.0
    %6406 = vmatprep.subr.mxu0 0.0
    %6407 = vmatpush1.msra.mxu0 0.0
    %6408 = vmatprep.subr.mxu0 0.0
    %6409 = vmatpush1.msra.mxu0 0.0
    %6410 = vmatprep.subr.mxu0 0.0
    %6411 = vmatpush1.msra.mxu0 0.0
    %6412 = vmatprep.subr.mxu0 0.0
    %6413 = vmatpush1.msra.mxu0 0.0
    %6414 = vmatprep.subr.mxu0 0.0
    %6415 = vmatpush1.msra.mxu0 0.0
    %6416 = vmatprep.mubr.f32.mxu0 0.0
    %v6417 = vand.u32 %v6034, 4294901760
    %v6418 = vsub.f32 %v6034, %v6417
    %v6419 = vand.u32 %v6418, 4294901760
    %6420 = vmatmul.mubr.f32.gmra.mrb[0].mxu0 %v6419
    %v6421 = vpop.f32.mrb[0].mxu0
    %v6422 = vadd.f32 %v6334, %v6421
    %v6423 = vpop.f32.mrb[0].mxu0
    %6424 = vmatprep.mubr.f32.mxu0 0.0
    %v6425 = vand.u32 %v6037, 4294901760
    %v6426 = vsub.f32 %v6037, %v6425
    %v6427 = vand.u32 %v6426, 4294901760
    %6428 = vmatmul.mubr.f32.gmra.mrb[0].mxu0 %v6427
    %v6429 = vpop.f32.mrb[0].mxu0
    %v6430 = vadd.f32 %v6341, %v6429
    %v6431 = vpop.f32.mrb[0].mxu0
    %6432 = vdwg.mxu0
    %6433 = vmatprep.subr.mxu0 0.0
    %v6434 = vand.u32 %v6020, 4294901760
    %v6435 = vsub.f32 %v6020, %v6434
    %v6436 = vand.u32 %v6435, 4294901760
    %6437 = vmatpush1.msra.mxu0 %v6436
    %6438 = vmatprep.subr.mxu0 0.0
    %v6439 = vand.u32 %v6021, 4294901760
    %v6440 = vsub.f32 %v6021, %v6439
    %v6441 = vand.u32 %v6440, 4294901760
    %6442 = vmatpush1.msra.mxu0 %v6441
    %6443 = vmatprep.subr.mxu0 0.0
    %v6444 = vand.u32 %v6022, 4294901760
    %v6445 = vsub.f32 %v6022, %v6444
    %v6446 = vand.u32 %v6445, 4294901760
    %6447 = vmatpush1.msra.mxu0 %v6446
    %6448 = vmatprep.subr.mxu0 0.0
    %v6449 = vand.u32 %v6023, 4294901760
    %v6450 = vsub.f32 %v6023, %v6449
    %v6451 = vand.u32 %v6450, 4294901760
    %6452 = vmatpush1.msra.mxu0 %v6451
    %6453 = vmatprep.subr.mxu0 0.0
    %v6454 = vand.u32 %v6024, 4294901760
    %v6455 = vsub.f32 %v6024, %v6454
    %v6456 = vand.u32 %v6455, 4294901760
    %6457 = vmatpush1.msra.mxu0 %v6456
    %6458 = vmatprep.subr.mxu0 0.0
    %v6459 = vand.u32 %v6025, 4294901760
    %v6460 = vsub.f32 %v6025, %v6459
    %v6461 = vand.u32 %v6460, 4294901760
    %6462 = vmatpush1.msra.mxu0 %v6461
    %6463 = vmatprep.subr.mxu0 0.0
    %v6464 = vand.u32 %v6026, 4294901760
    %v6465 = vsub.f32 %v6026, %v6464
    %v6466 = vand.u32 %v6465, 4294901760
    %6467 = vmatpush1.msra.mxu0 %v6466
    %6468 = vmatprep.subr.mxu0 0.0
    %v6469 = vand.u32 %v6027, 4294901760
    %v6470 = vsub.f32 %v6027, %v6469
    %v6471 = vand.u32 %v6470, 4294901760
    %6472 = vmatpush1.msra.mxu0 %v6471
    %6473 = vmatprep.subr.mxu0 0.0
    %6474 = vmatpush1.msra.mxu0 0.0
    %6475 = vmatprep.subr.mxu0 0.0
    %6476 = vmatpush1.msra.mxu0 0.0
    %6477 = vmatprep.subr.mxu0 0.0
    %6478 = vmatpush1.msra.mxu0 0.0
    %6479 = vmatprep.subr.mxu0 0.0
    %6480 = vmatpush1.msra.mxu0 0.0
    %6481 = vmatprep.subr.mxu0 0.0
    %6482 = vmatpush1.msra.mxu0 0.0
    %6483 = vmatprep.subr.mxu0 0.0
    %6484 = vmatpush1.msra.mxu0 0.0
    %6485 = vmatprep.subr.mxu0 0.0
    %6486 = vmatpush1.msra.mxu0 0.0
    %6487 = vmatprep.subr.mxu0 0.0
    %6488 = vmatpush1.msra.mxu0 0.0
    %6489 = vmatprep.subr.mxu0 0.0
    %6490 = vmatpush1.msra.mxu0 0.0
    %6491 = vmatprep.subr.mxu0 0.0
    %6492 = vmatpush1.msra.mxu0 0.0
    %6493 = vmatprep.subr.mxu0 0.0
    %6494 = vmatpush1.msra.mxu0 0.0
    %6495 = vmatprep.subr.mxu0 0.0
    %6496 = vmatpush1.msra.mxu0 0.0
    %6497 = vmatprep.subr.mxu0 0.0
    %6498 = vmatpush1.msra.mxu0 0.0
    %6499 = vmatprep.subr.mxu0 0.0
    %6500 = vmatpush1.msra.mxu0 0.0
    %6501 = vmatprep.subr.mxu0 0.0
    %6502 = vmatpush1.msra.mxu0 0.0
    %6503 = vmatprep.subr.mxu0 0.0
    %6504 = vmatpush1.msra.mxu0 0.0
    %6505 = vmatprep.subr.mxu0 0.0
    %6506 = vmatpush1.msra.mxu0 0.0
    %6507 = vmatprep.subr.mxu0 0.0
    %6508 = vmatpush1.msra.mxu0 0.0
    %6509 = vmatprep.subr.mxu0 0.0
    %6510 = vmatpush1.msra.mxu0 0.0
    %6511 = vmatprep.subr.mxu0 0.0
    %6512 = vmatpush1.msra.mxu0 0.0
    %6513 = vmatprep.subr.mxu0 0.0
    %6514 = vmatpush1.msra.mxu0 0.0
    %6515 = vmatprep.subr.mxu0 0.0
    %6516 = vmatpush1.msra.mxu0 0.0
    %6517 = vmatprep.subr.mxu0 0.0
    %6518 = vmatpush1.msra.mxu0 0.0
    %6519 = vmatprep.subr.mxu0 0.0
    %6520 = vmatpush1.msra.mxu0 0.0
    %6521 = vmatprep.mubr.f32.mxu0 0.0
    %v6522 = vand.u32 %v6034, 4294901760
    %6523 = vmatmul.mubr.f32.gmra.mrb[0].mxu0 %v6522
    %v6524 = vpop.f32.mrb[0].mxu0
    %v6525 = vadd.f32 %v6422, %v6524
    %v6526 = vpop.f32.mrb[0].mxu0
    %6527 = vmatprep.mubr.f32.mxu0 0.0
    %v6528 = vand.u32 %v6037, 4294901760
    %6529 = vmatmul.mubr.f32.gmra.mrb[0].mxu0 %v6528
    %v6530 = vpop.f32.mrb[0].mxu0
    %v6531 = vadd.f32 %v6430, %v6530
    %v6532 = vpop.f32.mrb[0].mxu0
    %6533 = vdwg.mxu0
    %6534 = vmatprep.subr.mxu0 0.0
    %v6535 = vand.u32 %v6020, 4294901760
    %6536 = vmatpush1.msra.mxu0 %v6535
    %6537 = vmatprep.subr.mxu0 0.0
    %v6538 = vand.u32 %v6021, 4294901760
    %6539 = vmatpush1.msra.mxu0 %v6538
    %6540 = vmatprep.subr.mxu0 0.0
    %v6541 = vand.u32 %v6022, 4294901760
    %6542 = vmatpush1.msra.mxu0 %v6541
    %6543 = vmatprep.subr.mxu0 0.0
    %v6544 = vand.u32 %v6023, 4294901760
    %6545 = vmatpush1.msra.mxu0 %v6544
    %6546 = vmatprep.subr.mxu0 0.0
    %v6547 = vand.u32 %v6024, 4294901760
    %6548 = vmatpush1.msra.mxu0 %v6547
    %6549 = vmatprep.subr.mxu0 0.0
    %v6550 = vand.u32 %v6025, 4294901760
    %6551 = vmatpush1.msra.mxu0 %v6550
    %6552 = vmatprep.subr.mxu0 0.0
    %v6553 = vand.u32 %v6026, 4294901760
    %6554 = vmatpush1.msra.mxu0 %v6553
    %6555 = vmatprep.subr.mxu0 0.0
    %v6556 = vand.u32 %v6027, 4294901760
    %6557 = vmatpush1.msra.mxu0 %v6556
    %6558 = vmatprep.subr.mxu0 0.0
    %6559 = vmatpush1.msra.mxu0 0.0
    %6560 = vmatprep.subr.mxu0 0.0
    %6561 = vmatpush1.msra.mxu0 0.0
    %6562 = vmatprep.subr.mxu0 0.0
    %6563 = vmatpush1.msra.mxu0 0.0
    %6564 = vmatprep.subr.mxu0 0.0
    %6565 = vmatpush1.msra.mxu0 0.0
    %6566 = vmatprep.subr.mxu0 0.0
    %6567 = vmatpush1.msra.mxu0 0.0
    %6568 = vmatprep.subr.mxu0 0.0
    %6569 = vmatpush1.msra.mxu0 0.0
    %6570 = vmatprep.subr.mxu0 0.0
    %6571 = vmatpush1.msra.mxu0 0.0
    %6572 = vmatprep.subr.mxu0 0.0
    %6573 = vmatpush1.msra.mxu0 0.0
    %6574 = vmatprep.subr.mxu0 0.0
    %6575 = vmatpush1.msra.mxu0 0.0
    %6576 = vmatprep.subr.mxu0 0.0
    %6577 = vmatpush1.msra.mxu0 0.0
    %6578 = vmatprep.subr.mxu0 0.0
    %6579 = vmatpush1.msra.mxu0 0.0
    %6580 = vmatprep.subr.mxu0 0.0
    %6581 = vmatpush1.msra.mxu0 0.0
    %6582 = vmatprep.subr.mxu0 0.0
    %6583 = vmatpush1.msra.mxu0 0.0
    %6584 = vmatprep.subr.mxu0 0.0
    %6585 = vmatpush1.msra.mxu0 0.0
    %6586 = vmatprep.subr.mxu0 0.0
    %6587 = vmatpush1.msra.mxu0 0.0
    %6588 = vmatprep.subr.mxu0 0.0
    %6589 = vmatpush1.msra.mxu0 0.0
    %6590 = vmatprep.subr.mxu0 0.0
    %6591 = vmatpush1.msra.mxu0 0.0
    %6592 = vmatprep.subr.mxu0 0.0
    %6593 = vmatpush1.msra.mxu0 0.0
    %6594 = vmatprep.subr.mxu0 0.0
    %6595 = vmatpush1.msra.mxu0 0.0
    %6596 = vmatprep.subr.mxu0 0.0
    %6597 = vmatpush1.msra.mxu0 0.0
    %6598 = vmatprep.subr.mxu0 0.0
    %6599 = vmatpush1.msra.mxu0 0.0
    %6600 = vmatprep.subr.mxu0 0.0
    %6601 = vmatpush1.msra.mxu0 0.0
    %6602 = vmatprep.subr.mxu0 0.0
    %6603 = vmatpush1.msra.mxu0 0.0
    %6604 = vmatprep.subr.mxu0 0.0
    %6605 = vmatpush1.msra.mxu0 0.0
    %6606 = vmatprep.mubr.f32.mxu0 0.0
    %v6607 = vand.u32 %v6034, 4294901760
    %6608 = vmatmul.mubr.f32.gmra.mrb[0].mxu0 %v6607
    %v6609 = vpop.f32.mrb[0].mxu0
    %v6610 = vadd.f32 %v6525, %v6609
    %v6611 = vpop.f32.mrb[0].mxu0
    %6612 = vmatprep.mubr.f32.mxu0 0.0
    %v6613 = vand.u32 %v6037, 4294901760
    %6614 = vmatmul.mubr.f32.gmra.mrb[0].mxu0 %v6613
    %v6615 = vpop.f32.mrb[0].mxu0
    %v6616 = vadd.f32 %v6531, %v6615
    %v6617 = vpop.f32.mrb[0].mxu0
    %6618 = vdwg.mxu0
    %v6619 = vadd.f32 %v5428, %v6610
    %v6620 = vadd.f32 %v5429, %v6616
    %6621 = vst.msk [vmem:[#allocation7] sm:$0xff] %vm57, %v6619
    %6622 = vst.msk [vmem:[#allocation7 + $0x8] sm:$0xff] %vm57, %v6620
    // Predicated region
    $region34: #{tpu_custom_call.1} parent=1 // pred_check
      _
    $region35: #{tpu_custom_call.1} parent=1 // pred_check_branch
      %6624 = sbr.rel (0) target = $region37
    $region36: #{tpu_custom_call.1} parent=1 // pred_region
      %s6626 = ssub.s32 256, 256
      %6627 = vsyncadd [#allocation4], %s6626
      %s6628 = sshll.u32 [#allocation7], 4
      %s6629 = int_to_ptr.vmem [resolvable:$true] %s6628
      %6634 = dma.vmem_to_hbm [thread:$0]  %s6629, 256, %s6, [#allocation4], 128, 128, 8
    $region37: #{tpu_custom_call.1} parent=1 // pred_fallthru
      _
    // Predicated region
    $region38: #{tpu_custom_call.1} parent=1 // pred_check
      _
    $region39: #{tpu_custom_call.1} parent=1 // pred_check_branch
      %6636 = sbr.rel (0) target = $region41
    $region40: #{tpu_custom_call.1} parent=1 // pred_region
      %6637 = dma.done [#allocation4], 256
    $region41: #{tpu_custom_call.1} parent=1 // pred_fallthru
      _
    %6638 = vsyncpa [#allocation3], 1
    %6639 = vsyncpa [#allocation6], 1
    %6640 = vsyncpa [#allocation4], 1

</llo_original>
